<compile_context>
chip_gen: v7x
topology: tpu7x:2x2x1
jax: 0.10.0
libtpu: 0.0.40
codegen_flags: <defaults>
</compile_context>

<pallas_src>
import jax
import jax.numpy as jnp
from jax.experimental import pallas as pl
from jax.experimental.pallas import tpu as pltpu


def convgru_kernel(hxpad_ref, h_ref, wzrx_ref, bzrx_ref, wqh_ref,
                   out_ref, rhpad):
    _, Hp, Wp, C = hxpad_ref.shape
    H, W = Hp - 2, Wp - 2
    Ch = out_ref.shape[-1]
    HW = H * W
    Nf = 3 * Ch

    # Zero only the 1-element border of the r*h pad buffer (the interior is fully
    # overwritten below).  Done every grid step so it is megacore-safe.
    zrow = jnp.zeros((1, Wp, Ch), rhpad.dtype)
    zcol = jnp.zeros((Hp, 1, Ch), rhpad.dtype)
    rhpad[0:1, :, :] = zrow
    rhpad[Hp - 1:Hp, :, :] = zrow
    rhpad[:, 0:1, :] = zcol
    rhpad[:, Wp - 1:Wp, :] = zcol

    hxpad = hxpad_ref[0]                          # (Hp, Wp, C) bf16

    # Fused conv producing [ z | r | x-part of q ]:
    # 9 shifted matmuls, K = C = Ch+Cx, N = 3*Ch, f32 accumulation.
    acc = jnp.broadcast_to(bzrx_ref[...], (HW, Nf)).astype(jnp.float32)
    for dy in range(3):
        for dx in range(3):
            patch = hxpad[dy:dy + H, dx:dx + W, :].reshape(HW, C)
            acc = acc + jnp.dot(patch, wzrx_ref[dy, dx],
                                preferred_element_type=jnp.float32)

    zr = jax.nn.sigmoid(acc[:, :2 * Ch])          # joint sigmoid on [z|r]
    z = zr[:, :Ch]
    r = zr[:, Ch:]
    q_acc = acc[:, 2 * Ch:]                       # bq + x-contribution of q (f32)

    h_int = h_ref[0].reshape(HW, Ch)              # f32 hidden state
    rhpad[1:1 + H, 1:1 + W, :] = (
        (r * h_int).astype(rhpad.dtype).reshape(H, W, Ch))

    # Second conv: the (r*h) contribution of q.  9 matmuls, K = Ch, N = Ch.
    rhp = rhpad[...]
    for dy in range(3):
        for dx in range(3):
            patch = rhp[dy:dy + H, dx:dx + W, :].reshape(HW, Ch)
            q_acc = q_acc + jnp.dot(patch, wqh_ref[dy, dx],
                                    preferred_element_type=jnp.float32)
    q = jnp.tanh(q_acc)

    h_new = h_int + z * (q - h_int)               # == (1 - z) * h + z * q   (f32)
    out_ref[0] = h_new.reshape(H, W, Ch).astype(out_ref.dtype)


def convgru_pallas(h_nchw, x_nchw, Wz, bz, Wr, br, Wq, bq):
    """h: (B, Ch, H, W), x: (B, Cx, H, W); conv weights OIHW (Ch, Ch+Cx, 3, 3)."""
    B, Ch, H, W = h_nchw.shape
    Cx = x_nchw.shape[1]
    C = Ch + Cx
    Hp, Wp = H + 2, W + 2
    Nf = 3 * Ch

    # NCHW -> NHWC, concat channels once, SAME-pad spatially, cast conv input to bf16.
    h_nhwc = jnp.transpose(h_nchw, (0, 2, 3, 1))
    x_nhwc = jnp.transpose(x_nchw, (0, 2, 3, 1))
    hx = jnp.concatenate([h_nhwc, x_nhwc], axis=-1)
    hxpad = jnp.pad(hx, ((0, 0), (1, 1), (1, 1), (0, 0))).astype(jnp.bfloat16)

    def hwio(W_oihw):                              # (Cout,Cin,3,3) -> (3,3,Cin,Cout)
        return jnp.transpose(W_oihw, (2, 3, 1, 0))

    wz, wr, wq = hwio(Wz), hwio(Wr), hwio(Wq)
    # Fold the x-part of Wq into the fused conv over hxpad (h-input rows zeroed).
    wq_x_full = jnp.concatenate(
        [jnp.zeros((3, 3, Ch, Ch), wq.dtype), wq[:, :, Ch:, :]], axis=2)
    w_fused = jnp.concatenate([wz, wr, wq_x_full], axis=3).astype(jnp.bfloat16)
    b_fused = jnp.concatenate([bz, br, bq]).reshape(1, Nf).astype(jnp.float32)
    wq_h = wq[:, :, :Ch, :].astype(jnp.bfloat16)

    grid_spec = pltpu.PrefetchScalarGridSpec(
        num_scalar_prefetch=0,
        grid=(B,),
        in_specs=[
            pl.BlockSpec((1, Hp, Wp, C), lambda b: (b, 0, 0, 0)),   # padded [h|x] bf16
            pl.BlockSpec((1, H, W, Ch), lambda b: (b, 0, 0, 0)),    # h (f32, exact)
            pl.BlockSpec((3, 3, C, Nf), lambda b: (0, 0, 0, 0)),    # fused W (z|r|qx)
            pl.BlockSpec((1, Nf), lambda b: (0, 0)),                # fused bias
            pl.BlockSpec((3, 3, Ch, Ch), lambda b: (0, 0, 0, 0)),   # Wq (h part)
        ],
        out_specs=pl.BlockSpec((1, H, W, Ch), lambda b: (b, 0, 0, 0)),
        scratch_shapes=[pltpu.VMEM((Hp, Wp, Ch), jnp.bfloat16)],    # padded r*h
    )

    out_nhwc = pl.pallas_call(
        convgru_kernel,
        out_shape=jax.ShapeDtypeStruct((B, H, W, Ch), h_nchw.dtype),
        grid_spec=grid_spec,
        compiler_params=pltpu.CompilerParams(
            dimension_semantics=("parallel",),
            vmem_limit_bytes=32 * 1024 * 1024),
    )(hxpad, h_nhwc, w_fused, b_fused, wq_h)

    return jnp.transpose(out_nhwc, (0, 3, 1, 2))   # back to NCHW


def convgru_ref(h, x, Wz, bz, Wr, br, Wq, bq):
    """Pure-JAX f32 reference matching the PyTorch ConvGRU (NCHW / OIHW)."""
    def conv(inp, w, b):
        out = jax.lax.conv_general_dilated(
            inp, w, window_strides=(1, 1), padding="SAME",
            dimension_numbers=("NCHW", "OIHW", "NCHW"))
        return out + b[None, :, None, None]
    hx = jnp.concatenate([h, x], axis=1)
    z = jax.nn.sigmoid(conv(hx, Wz, bz))
    r = jax.nn.sigmoid(conv(hx, Wr, br))
    q = jnp.tanh(conv(jnp.concatenate([r * h, x], axis=1), Wq, bq))
    return (1.0 - z) * h + z * q


if __name__ == "__main__":
    # Small shapes consistent with the module's GRU update (B kept even for v7x).
    B, hidden_dim, input_dim, H, W = 2, 32, 32, 16, 16
    Ctot = hidden_dim + input_dim

    key = jax.random.PRNGKey(0)
    ks = jax.random.split(key, 8)
    h = jax.random.normal(ks[0], (B, hidden_dim, H, W), jnp.float32)
    x = jax.random.normal(ks[1], (B, input_dim, H, W), jnp.float32)

    # Deterministic synthetic conv parameters (PyTorch OIHW convention).
    Wz = 0.1 * jax.random.normal(ks[2], (hidden_dim, Ctot, 3, 3), jnp.float32)
    Wr = 0.1 * jax.random.normal(ks[3], (hidden_dim, Ctot, 3, 3), jnp.float32)
    Wq = 0.1 * jax.random.normal(ks[4], (hidden_dim, Ctot, 3, 3), jnp.float32)
    bz = 0.1 * jax.random.normal(ks[5], (hidden_dim,), jnp.float32)
    br = 0.1 * jax.random.normal(ks[6], (hidden_dim,), jnp.float32)
    bq = 0.1 * jax.random.normal(ks[7], (hidden_dim,), jnp.float32)

    out = jax.block_until_ready(convgru_pallas(h, x, Wz, bz, Wr, br, Wq, bq))
    ref = jax.block_until_ready(convgru_ref(h, x, Wz, bz, Wr, br, Wq, bq))

    assert out.shape == (B, hidden_dim, H, W)
    # bf16 MXU inputs with f32 accumulation: loosened tolerance vs f32 reference.
    assert jnp.allclose(out, ref, atol=5e-2, rtol=5e-2), (
        float(jnp.max(jnp.abs(out - ref))))

    print("KERNEL_OK")
</pallas_src>

<mosaic_0001>
module attributes {stable_mosaic.version = 11 : i64} {
  func.func @convgru_kernel(%arg0: i32, %arg1: memref<1x18x18x64xbf16, #tpu.memory_space<vmem>>, %arg2: memref<1x16x16x32xf32, #tpu.memory_space<vmem>>, %arg3: memref<3x3x64x96xbf16, #tpu.memory_space<vmem>>, %arg4: memref<1x96xf32, #tpu.memory_space<vmem>>, %arg5: memref<3x3x32x32xbf16, #tpu.memory_space<vmem>>, %arg6: memref<1x16x16x32xf32, #tpu.memory_space<vmem>>, %arg7: memref<18x18x32xbf16, #tpu.memory_space<vmem>>) attributes {dimension_semantics = [#tpu.dimension_semantics<parallel>], iteration_bounds = array<i64: 2>, scalar_prefetch = 0 : i64, scratch_operands = 1 : i64, tpu.core_type = #tpu.core_type<tc>, window_params = [{transform_indices = @transform_0, window_bounds = array<i64: 1, 18, 18, 64>}, {transform_indices = @transform_1, window_bounds = array<i64: 1, 16, 16, 32>}, {pipeline_mode = #tpu.pipeline_mode<synchronous>, transform_indices = @transform_2, window_bounds = array<i64: 3, 3, 64, 96>}, {pipeline_mode = #tpu.pipeline_mode<synchronous>, transform_indices = @transform_3, window_bounds = array<i64: 1, 96>}, {pipeline_mode = #tpu.pipeline_mode<synchronous>, transform_indices = @transform_4, window_bounds = array<i64: 3, 3, 32, 32>}, {transform_indices = @transform_5, window_bounds = array<i64: 1, 16, 16, 32>}]} {
    %cst = arith.constant 0.000000e+00 : bf16
    %0 = vector.broadcast %cst : bf16 to vector<1x18x32xbf16>
    %cst_0 = arith.constant 0.000000e+00 : bf16
    %1 = vector.broadcast %cst_0 : bf16 to vector<18x1x32xbf16>
    %c0 = arith.constant 0 : index
    %c0_1 = arith.constant 0 : index
    %c0_2 = arith.constant 0 : index
    %2 = vector.load %arg7[%c0, %c0_1, %c0_2] : memref<18x18x32xbf16, #tpu.memory_space<vmem>>, vector<1x18x32xbf16>
    tpu.vector_store %arg7[%c0, %c0_1, %c0_2], %0 {strides = array<i32>} : memref<18x18x32xbf16, #tpu.memory_space<vmem>>, vector<1x18x32xbf16>,
    %c17 = arith.constant 17 : index
    %c0_3 = arith.constant 0 : index
    %c0_4 = arith.constant 0 : index
    %3 = vector.load %arg7[%c17, %c0_3, %c0_4] : memref<18x18x32xbf16, #tpu.memory_space<vmem>>, vector<1x18x32xbf16>
    tpu.vector_store %arg7[%c17, %c0_3, %c0_4], %0 {strides = array<i32>} : memref<18x18x32xbf16, #tpu.memory_space<vmem>>, vector<1x18x32xbf16>,
    %c0_5 = arith.constant 0 : index
    %c0_6 = arith.constant 0 : index
    %c0_7 = arith.constant 0 : index
    %4 = vector.load %arg7[%c0_5, %c0_6, %c0_7] : memref<18x18x32xbf16, #tpu.memory_space<vmem>>, vector<18x1x32xbf16>
    tpu.vector_store %arg7[%c0_5, %c0_6, %c0_7], %1 {strides = array<i32>} : memref<18x18x32xbf16, #tpu.memory_space<vmem>>, vector<18x1x32xbf16>,
    %c0_8 = arith.constant 0 : index
    %c17_9 = arith.constant 17 : index
    %c0_10 = arith.constant 0 : index
    %5 = vector.load %arg7[%c0_8, %c17_9, %c0_10] : memref<18x18x32xbf16, #tpu.memory_space<vmem>>, vector<18x1x32xbf16>
    tpu.vector_store %arg7[%c0_8, %c17_9, %c0_10], %1 {strides = array<i32>} : memref<18x18x32xbf16, #tpu.memory_space<vmem>>, vector<18x1x32xbf16>,
    %c0_11 = arith.constant 0 : index
    %c0_12 = arith.constant 0 : index
    %c0_13 = arith.constant 0 : index
    %c0_14 = arith.constant 0 : index
    %6 = vector.load %arg1[%c0_11, %c0_12, %c0_13, %c0_14] : memref<1x18x18x64xbf16, #tpu.memory_space<vmem>>, vector<1x18x18x64xbf16>
    %7 = vector.shape_cast %6 : vector<1x18x18x64xbf16> to vector<18x18x64xbf16>
    %c0_15 = arith.constant 0 : index
    %c0_16 = arith.constant 0 : index
    %8 = vector.load %arg4[%c0_15, %c0_16] : memref<1x96xf32, #tpu.memory_space<vmem>>, vector<1x96xf32>
    %9 = vector.shape_cast %8 : vector<1x96xf32> to vector<1x96xf32>
    %10 = vector.broadcast %9 : vector<1x96xf32> to vector<256x96xf32>
    %11 = vector.extract_strided_slice %7 {offsets = [0, 0, 0], sizes = [16, 16, 64], strides = [1, 1, 1]} : vector<18x18x64xbf16> to vector<16x16x64xbf16>
    %12 = vector.shape_cast %11 : vector<16x16x64xbf16> to vector<256x64xbf16>
    %c0_17 = arith.constant 0 : index
    %c0_18 = arith.constant 0 : index
    %c0_19 = arith.constant 0 : index
    %c0_20 = arith.constant 0 : index
    %13 = vector.load %arg3[%c0_17, %c0_18, %c0_19, %c0_20] : memref<3x3x64x96xbf16, #tpu.memory_space<vmem>>, vector<1x1x64x96xbf16>
    %14 = vector.shape_cast %13 : vector<1x1x64x96xbf16> to vector<64x96xbf16>
    %cst_21 = arith.constant dense<0.000000e+00> : vector<256x96xf32>
    %15 = tpu.matmul %12, %14, %cst_21 {dimension_numbers = #tpu.dot_dimension_numbers<[1], [0], [0], [1], [0, 0, 1, 1], [], []>} : vector<256x64xbf16>, vector<64x96xbf16>, vector<256x96xf32> -> vector<256x96xf32>
    %16 = arith.addf %10, %15 : vector<256x96xf32>
    %17 = vector.extract_strided_slice %7 {offsets = [0, 1, 0], sizes = [16, 16, 64], strides = [1, 1, 1]} : vector<18x18x64xbf16> to vector<16x16x64xbf16>
    %18 = vector.shape_cast %17 : vector<16x16x64xbf16> to vector<256x64xbf16>
    %c0_22 = arith.constant 0 : index
    %c1 = arith.constant 1 : index
    %c0_23 = arith.constant 0 : index
    %c0_24 = arith.constant 0 : index
    %19 = vector.load %arg3[%c0_22, %c1, %c0_23, %c0_24] : memref<3x3x64x96xbf16, #tpu.memory_space<vmem>>, vector<1x1x64x96xbf16>
    %20 = vector.shape_cast %19 : vector<1x1x64x96xbf16> to vector<64x96xbf16>
    %cst_25 = arith.constant dense<0.000000e+00> : vector<256x96xf32>
    %21 = tpu.matmul %18, %20, %cst_25 {dimension_numbers = #tpu.dot_dimension_numbers<[1], [0], [0], [1], [0, 0, 1, 1], [], []>} : vector<256x64xbf16>, vector<64x96xbf16>, vector<256x96xf32> -> vector<256x96xf32>
    %22 = arith.addf %16, %21 : vector<256x96xf32>
    %23 = vector.extract_strided_slice %7 {offsets = [0, 2, 0], sizes = [16, 16, 64], strides = [1, 1, 1]} : vector<18x18x64xbf16> to vector<16x16x64xbf16>
    %24 = vector.shape_cast %23 : vector<16x16x64xbf16> to vector<256x64xbf16>
    %c0_26 = arith.constant 0 : index
    %c2 = arith.constant 2 : index
    %c0_27 = arith.constant 0 : index
    %c0_28 = arith.constant 0 : index
    %25 = vector.load %arg3[%c0_26, %c2, %c0_27, %c0_28] : memref<3x3x64x96xbf16, #tpu.memory_space<vmem>>, vector<1x1x64x96xbf16>
    %26 = vector.shape_cast %25 : vector<1x1x64x96xbf16> to vector<64x96xbf16>
    %cst_29 = arith.constant dense<0.000000e+00> : vector<256x96xf32>
    %27 = tpu.matmul %24, %26, %cst_29 {dimension_numbers = #tpu.dot_dimension_numbers<[1], [0], [0], [1], [0, 0, 1, 1], [], []>} : vector<256x64xbf16>, vector<64x96xbf16>, vector<256x96xf32> -> vector<256x96xf32>
    %28 = arith.addf %22, %27 : vector<256x96xf32>
    %29 = vector.extract_strided_slice %7 {offsets = [1, 0, 0], sizes = [16, 16, 64], strides = [1, 1, 1]} : vector<18x18x64xbf16> to vector<16x16x64xbf16>
    %30 = vector.shape_cast %29 : vector<16x16x64xbf16> to vector<256x64xbf16>
    %c1_30 = arith.constant 1 : index
    %c0_31 = arith.constant 0 : index
    %c0_32 = arith.constant 0 : index
    %c0_33 = arith.constant 0 : index
    %31 = vector.load %arg3[%c1_30, %c0_31, %c0_32, %c0_33] : memref<3x3x64x96xbf16, #tpu.memory_space<vmem>>, vector<1x1x64x96xbf16>
    %32 = vector.shape_cast %31 : vector<1x1x64x96xbf16> to vector<64x96xbf16>
    %cst_34 = arith.constant dense<0.000000e+00> : vector<256x96xf32>
    %33 = tpu.matmul %30, %32, %cst_34 {dimension_numbers = #tpu.dot_dimension_numbers<[1], [0], [0], [1], [0, 0, 1, 1], [], []>} : vector<256x64xbf16>, vector<64x96xbf16>, vector<256x96xf32> -> vector<256x96xf32>
    %34 = arith.addf %28, %33 : vector<256x96xf32>
    %35 = vector.extract_strided_slice %7 {offsets = [1, 1, 0], sizes = [16, 16, 64], strides = [1, 1, 1]} : vector<18x18x64xbf16> to vector<16x16x64xbf16>
    %36 = vector.shape_cast %35 : vector<16x16x64xbf16> to vector<256x64xbf16>
    %c1_35 = arith.constant 1 : index
    %c1_36 = arith.constant 1 : index
    %c0_37 = arith.constant 0 : index
    %c0_38 = arith.constant 0 : index
    %37 = vector.load %arg3[%c1_35, %c1_36, %c0_37, %c0_38] : memref<3x3x64x96xbf16, #tpu.memory_space<vmem>>, vector<1x1x64x96xbf16>
    %38 = vector.shape_cast %37 : vector<1x1x64x96xbf16> to vector<64x96xbf16>
    %cst_39 = arith.constant dense<0.000000e+00> : vector<256x96xf32>
    %39 = tpu.matmul %36, %38, %cst_39 {dimension_numbers = #tpu.dot_dimension_numbers<[1], [0], [0], [1], [0, 0, 1, 1], [], []>} : vector<256x64xbf16>, vector<64x96xbf16>, vector<256x96xf32> -> vector<256x96xf32>
    %40 = arith.addf %34, %39 : vector<256x96xf32>
    %41 = vector.extract_strided_slice %7 {offsets = [1, 2, 0], sizes = [16, 16, 64], strides = [1, 1, 1]} : vector<18x18x64xbf16> to vector<16x16x64xbf16>
    %42 = vector.shape_cast %41 : vector<16x16x64xbf16> to vector<256x64xbf16>
    %c1_40 = arith.constant 1 : index
    %c2_41 = arith.constant 2 : index
    %c0_42 = arith.constant 0 : index
    %c0_43 = arith.constant 0 : index
    %43 = vector.load %arg3[%c1_40, %c2_41, %c0_42, %c0_43] : memref<3x3x64x96xbf16, #tpu.memory_space<vmem>>, vector<1x1x64x96xbf16>
    %44 = vector.shape_cast %43 : vector<1x1x64x96xbf16> to vector<64x96xbf16>
    %cst_44 = arith.constant dense<0.000000e+00> : vector<256x96xf32>
    %45 = tpu.matmul %42, %44, %cst_44 {dimension_numbers = #tpu.dot_dimension_numbers<[1], [0], [0], [1], [0, 0, 1, 1], [], []>} : vector<256x64xbf16>, vector<64x96xbf16>, vector<256x96xf32> -> vector<256x96xf32>
    %46 = arith.addf %40, %45 : vector<256x96xf32>
    %47 = vector.extract_strided_slice %7 {offsets = [2, 0, 0], sizes = [16, 16, 64], strides = [1, 1, 1]} : vector<18x18x64xbf16> to vector<16x16x64xbf16>
    %48 = vector.shape_cast %47 : vector<16x16x64xbf16> to vector<256x64xbf16>
    %c2_45 = arith.constant 2 : index
    %c0_46 = arith.constant 0 : index
    %c0_47 = arith.constant 0 : index
    %c0_48 = arith.constant 0 : index
    %49 = vector.load %arg3[%c2_45, %c0_46, %c0_47, %c0_48] : memref<3x3x64x96xbf16, #tpu.memory_space<vmem>>, vector<1x1x64x96xbf16>
    %50 = vector.shape_cast %49 : vector<1x1x64x96xbf16> to vector<64x96xbf16>
    %cst_49 = arith.constant dense<0.000000e+00> : vector<256x96xf32>
    %51 = tpu.matmul %48, %50, %cst_49 {dimension_numbers = #tpu.dot_dimension_numbers<[1], [0], [0], [1], [0, 0, 1, 1], [], []>} : vector<256x64xbf16>, vector<64x96xbf16>, vector<256x96xf32> -> vector<256x96xf32>
    %52 = arith.addf %46, %51 : vector<256x96xf32>
    %53 = vector.extract_strided_slice %7 {offsets = [2, 1, 0], sizes = [16, 16, 64], strides = [1, 1, 1]} : vector<18x18x64xbf16> to vector<16x16x64xbf16>
    %54 = vector.shape_cast %53 : vector<16x16x64xbf16> to vector<256x64xbf16>
    %c2_50 = arith.constant 2 : index
    %c1_51 = arith.constant 1 : index
    %c0_52 = arith.constant 0 : index
    %c0_53 = arith.constant 0 : index
    %55 = vector.load %arg3[%c2_50, %c1_51, %c0_52, %c0_53] : memref<3x3x64x96xbf16, #tpu.memory_space<vmem>>, vector<1x1x64x96xbf16>
    %56 = vector.shape_cast %55 : vector<1x1x64x96xbf16> to vector<64x96xbf16>
    %cst_54 = arith.constant dense<0.000000e+00> : vector<256x96xf32>
    %57 = tpu.matmul %54, %56, %cst_54 {dimension_numbers = #tpu.dot_dimension_numbers<[1], [0], [0], [1], [0, 0, 1, 1], [], []>} : vector<256x64xbf16>, vector<64x96xbf16>, vector<256x96xf32> -> vector<256x96xf32>
    %58 = arith.addf %52, %57 : vector<256x96xf32>
    %59 = vector.extract_strided_slice %7 {offsets = [2, 2, 0], sizes = [16, 16, 64], strides = [1, 1, 1]} : vector<18x18x64xbf16> to vector<16x16x64xbf16>
    %60 = vector.shape_cast %59 : vector<16x16x64xbf16> to vector<256x64xbf16>
    %c2_55 = arith.constant 2 : index
    %c2_56 = arith.constant 2 : index
    %c0_57 = arith.constant 0 : index
    %c0_58 = arith.constant 0 : index
    %61 = vector.load %arg3[%c2_55, %c2_56, %c0_57, %c0_58] : memref<3x3x64x96xbf16, #tpu.memory_space<vmem>>, vector<1x1x64x96xbf16>
    %62 = vector.shape_cast %61 : vector<1x1x64x96xbf16> to vector<64x96xbf16>
    %cst_59 = arith.constant dense<0.000000e+00> : vector<256x96xf32>
    %63 = tpu.matmul %60, %62, %cst_59 {dimension_numbers = #tpu.dot_dimension_numbers<[1], [0], [0], [1], [0, 0, 1, 1], [], []>} : vector<256x64xbf16>, vector<64x96xbf16>, vector<256x96xf32> -> vector<256x96xf32>
    %64 = arith.addf %58, %63 : vector<256x96xf32>
    %65 = vector.extract_strided_slice %64 {offsets = [0, 0], sizes = [256, 64], strides = [1, 1]} : vector<256x96xf32> to vector<256x64xf32>
    %66 = arith.negf %65 : vector<256x64xf32>
    %67 = math.exp %66 : vector<256x64xf32>
    %cst_60 = arith.constant 1.000000e+00 : f32
    %68 = vector.broadcast %cst_60 : f32 to vector<256x64xf32>
    %69 = arith.addf %68, %67 : vector<256x64xf32>
    %70 = arith.divf %68, %69 : vector<256x64xf32>
    %71 = vector.extract_strided_slice %70 {offsets = [0, 0], sizes = [256, 32], strides = [1, 1]} : vector<256x64xf32> to vector<256x32xf32>
    %72 = vector.extract_strided_slice %70 {offsets = [0, 32], sizes = [256, 32], strides = [1, 1]} : vector<256x64xf32> to vector<256x32xf32>
    %73 = vector.extract_strided_slice %64 {offsets = [0, 64], sizes = [256, 32], strides = [1, 1]} : vector<256x96xf32> to vector<256x32xf32>
    %c0_61 = arith.constant 0 : index
    %c0_62 = arith.constant 0 : index
    %c0_63 = arith.constant 0 : index
    %c0_64 = arith.constant 0 : index
    %74 = vector.load %arg2[%c0_61, %c0_62, %c0_63, %c0_64] : memref<1x16x16x32xf32, #tpu.memory_space<vmem>>, vector<1x16x16x32xf32>
    %75 = vector.shape_cast %74 : vector<1x16x16x32xf32> to vector<16x16x32xf32>
    %76 = vector.shape_cast %75 : vector<16x16x32xf32> to vector<256x32xf32>
    %77 = arith.mulf %72, %76 : vector<256x32xf32>
    %78 = arith.truncf %77 : vector<256x32xf32> to vector<256x32xbf16>
    %79 = vector.shape_cast %78 : vector<256x32xbf16> to vector<16x16x32xbf16>
    %c1_65 = arith.constant 1 : index
    %c1_66 = arith.constant 1 : index
    %c0_67 = arith.constant 0 : index
    %80 = vector.load %arg7[%c1_65, %c1_66, %c0_67] : memref<18x18x32xbf16, #tpu.memory_space<vmem>>, vector<16x16x32xbf16>
    tpu.vector_store %arg7[%c1_65, %c1_66, %c0_67], %79 {strides = array<i32>} : memref<18x18x32xbf16, #tpu.memory_space<vmem>>, vector<16x16x32xbf16>,
    %c0_68 = arith.constant 0 : index
    %c0_69 = arith.constant 0 : index
    %c0_70 = arith.constant 0 : index
    %81 = vector.load %arg7[%c0_68, %c0_69, %c0_70] : memref<18x18x32xbf16, #tpu.memory_space<vmem>>, vector<18x18x32xbf16>
    %82 = vector.extract_strided_slice %81 {offsets = [0, 0, 0], sizes = [16, 16, 32], strides = [1, 1, 1]} : vector<18x18x32xbf16> to vector<16x16x32xbf16>
    %83 = vector.shape_cast %82 : vector<16x16x32xbf16> to vector<256x32xbf16>
    %c0_71 = arith.constant 0 : index
    %c0_72 = arith.constant 0 : index
    %c0_73 = arith.constant 0 : index
    %c0_74 = arith.constant 0 : index
    %84 = vector.load %arg5[%c0_71, %c0_72, %c0_73, %c0_74] : memref<3x3x32x32xbf16, #tpu.memory_space<vmem>>, vector<1x1x32x32xbf16>
    %85 = vector.shape_cast %84 : vector<1x1x32x32xbf16> to vector<32x32xbf16>
    %cst_75 = arith.constant dense<0.000000e+00> : vector<256x32xf32>
    %86 = tpu.matmul %83, %85, %cst_75 {dimension_numbers = #tpu.dot_dimension_numbers<[1], [0], [0], [1], [0, 0, 1, 1], [], []>} : vector<256x32xbf16>, vector<32x32xbf16>, vector<256x32xf32> -> vector<256x32xf32>
    %87 = arith.addf %73, %86 : vector<256x32xf32>
    %88 = vector.extract_strided_slice %81 {offsets = [0, 1, 0], sizes = [16, 16, 32], strides = [1, 1, 1]} : vector<18x18x32xbf16> to vector<16x16x32xbf16>
    %89 = vector.shape_cast %88 : vector<16x16x32xbf16> to vector<256x32xbf16>
    %c0_76 = arith.constant 0 : index
    %c1_77 = arith.constant 1 : index
    %c0_78 = arith.constant 0 : index
    %c0_79 = arith.constant 0 : index
    %90 = vector.load %arg5[%c0_76, %c1_77, %c0_78, %c0_79] : memref<3x3x32x32xbf16, #tpu.memory_space<vmem>>, vector<1x1x32x32xbf16>
    %91 = vector.shape_cast %90 : vector<1x1x32x32xbf16> to vector<32x32xbf16>
    %cst_80 = arith.constant dense<0.000000e+00> : vector<256x32xf32>
    %92 = tpu.matmul %89, %91, %cst_80 {dimension_numbers = #tpu.dot_dimension_numbers<[1], [0], [0], [1], [0, 0, 1, 1], [], []>} : vector<256x32xbf16>, vector<32x32xbf16>, vector<256x32xf32> -> vector<256x32xf32>
    %93 = arith.addf %87, %92 : vector<256x32xf32>
    %94 = vector.extract_strided_slice %81 {offsets = [0, 2, 0], sizes = [16, 16, 32], strides = [1, 1, 1]} : vector<18x18x32xbf16> to vector<16x16x32xbf16>
    %95 = vector.shape_cast %94 : vector<16x16x32xbf16> to vector<256x32xbf16>
    %c0_81 = arith.constant 0 : index
    %c2_82 = arith.constant 2 : index
    %c0_83 = arith.constant 0 : index
    %c0_84 = arith.constant 0 : index
    %96 = vector.load %arg5[%c0_81, %c2_82, %c0_83, %c0_84] : memref<3x3x32x32xbf16, #tpu.memory_space<vmem>>, vector<1x1x32x32xbf16>
    %97 = vector.shape_cast %96 : vector<1x1x32x32xbf16> to vector<32x32xbf16>
    %cst_85 = arith.constant dense<0.000000e+00> : vector<256x32xf32>
    %98 = tpu.matmul %95, %97, %cst_85 {dimension_numbers = #tpu.dot_dimension_numbers<[1], [0], [0], [1], [0, 0, 1, 1], [], []>} : vector<256x32xbf16>, vector<32x32xbf16>, vector<256x32xf32> -> vector<256x32xf32>
    %99 = arith.addf %93, %98 : vector<256x32xf32>
    %100 = vector.extract_strided_slice %81 {offsets = [1, 0, 0], sizes = [16, 16, 32], strides = [1, 1, 1]} : vector<18x18x32xbf16> to vector<16x16x32xbf16>
    %101 = vector.shape_cast %100 : vector<16x16x32xbf16> to vector<256x32xbf16>
    %c1_86 = arith.constant 1 : index
    %c0_87 = arith.constant 0 : index
    %c0_88 = arith.constant 0 : index
    %c0_89 = arith.constant 0 : index
    %102 = vector.load %arg5[%c1_86, %c0_87, %c0_88, %c0_89] : memref<3x3x32x32xbf16, #tpu.memory_space<vmem>>, vector<1x1x32x32xbf16>
    %103 = vector.shape_cast %102 : vector<1x1x32x32xbf16> to vector<32x32xbf16>
    %cst_90 = arith.constant dense<0.000000e+00> : vector<256x32xf32>
    %104 = tpu.matmul %101, %103, %cst_90 {dimension_numbers = #tpu.dot_dimension_numbers<[1], [0], [0], [1], [0, 0, 1, 1], [], []>} : vector<256x32xbf16>, vector<32x32xbf16>, vector<256x32xf32> -> vector<256x32xf32>
    %105 = arith.addf %99, %104 : vector<256x32xf32>
    %106 = vector.extract_strided_slice %81 {offsets = [1, 1, 0], sizes = [16, 16, 32], strides = [1, 1, 1]} : vector<18x18x32xbf16> to vector<16x16x32xbf16>
    %107 = vector.shape_cast %106 : vector<16x16x32xbf16> to vector<256x32xbf16>
    %c1_91 = arith.constant 1 : index
    %c1_92 = arith.constant 1 : index
    %c0_93 = arith.constant 0 : index
    %c0_94 = arith.constant 0 : index
    %108 = vector.load %arg5[%c1_91, %c1_92, %c0_93, %c0_94] : memref<3x3x32x32xbf16, #tpu.memory_space<vmem>>, vector<1x1x32x32xbf16>
    %109 = vector.shape_cast %108 : vector<1x1x32x32xbf16> to vector<32x32xbf16>
    %cst_95 = arith.constant dense<0.000000e+00> : vector<256x32xf32>
    %110 = tpu.matmul %107, %109, %cst_95 {dimension_numbers = #tpu.dot_dimension_numbers<[1], [0], [0], [1], [0, 0, 1, 1], [], []>} : vector<256x32xbf16>, vector<32x32xbf16>, vector<256x32xf32> -> vector<256x32xf32>
    %111 = arith.addf %105, %110 : vector<256x32xf32>
    %112 = vector.extract_strided_slice %81 {offsets = [1, 2, 0], sizes = [16, 16, 32], strides = [1, 1, 1]} : vector<18x18x32xbf16> to vector<16x16x32xbf16>
    %113 = vector.shape_cast %112 : vector<16x16x32xbf16> to vector<256x32xbf16>
    %c1_96 = arith.constant 1 : index
    %c2_97 = arith.constant 2 : index
    %c0_98 = arith.constant 0 : index
    %c0_99 = arith.constant 0 : index
    %114 = vector.load %arg5[%c1_96, %c2_97, %c0_98, %c0_99] : memref<3x3x32x32xbf16, #tpu.memory_space<vmem>>, vector<1x1x32x32xbf16>
    %115 = vector.shape_cast %114 : vector<1x1x32x32xbf16> to vector<32x32xbf16>
    %cst_100 = arith.constant dense<0.000000e+00> : vector<256x32xf32>
    %116 = tpu.matmul %113, %115, %cst_100 {dimension_numbers = #tpu.dot_dimension_numbers<[1], [0], [0], [1], [0, 0, 1, 1], [], []>} : vector<256x32xbf16>, vector<32x32xbf16>, vector<256x32xf32> -> vector<256x32xf32>
    %117 = arith.addf %111, %116 : vector<256x32xf32>
    %118 = vector.extract_strided_slice %81 {offsets = [2, 0, 0], sizes = [16, 16, 32], strides = [1, 1, 1]} : vector<18x18x32xbf16> to vector<16x16x32xbf16>
    %119 = vector.shape_cast %118 : vector<16x16x32xbf16> to vector<256x32xbf16>
    %c2_101 = arith.constant 2 : index
    %c0_102 = arith.constant 0 : index
    %c0_103 = arith.constant 0 : index
    %c0_104 = arith.constant 0 : index
    %120 = vector.load %arg5[%c2_101, %c0_102, %c0_103, %c0_104] : memref<3x3x32x32xbf16, #tpu.memory_space<vmem>>, vector<1x1x32x32xbf16>
    %121 = vector.shape_cast %120 : vector<1x1x32x32xbf16> to vector<32x32xbf16>
    %cst_105 = arith.constant dense<0.000000e+00> : vector<256x32xf32>
    %122 = tpu.matmul %119, %121, %cst_105 {dimension_numbers = #tpu.dot_dimension_numbers<[1], [0], [0], [1], [0, 0, 1, 1], [], []>} : vector<256x32xbf16>, vector<32x32xbf16>, vector<256x32xf32> -> vector<256x32xf32>
    %123 = arith.addf %117, %122 : vector<256x32xf32>
    %124 = vector.extract_strided_slice %81 {offsets = [2, 1, 0], sizes = [16, 16, 32], strides = [1, 1, 1]} : vector<18x18x32xbf16> to vector<16x16x32xbf16>
    %125 = vector.shape_cast %124 : vector<16x16x32xbf16> to vector<256x32xbf16>
    %c2_106 = arith.constant 2 : index
    %c1_107 = arith.constant 1 : index
    %c0_108 = arith.constant 0 : index
    %c0_109 = arith.constant 0 : index
    %126 = vector.load %arg5[%c2_106, %c1_107, %c0_108, %c0_109] : memref<3x3x32x32xbf16, #tpu.memory_space<vmem>>, vector<1x1x32x32xbf16>
    %127 = vector.shape_cast %126 : vector<1x1x32x32xbf16> to vector<32x32xbf16>
    %cst_110 = arith.constant dense<0.000000e+00> : vector<256x32xf32>
    %128 = tpu.matmul %125, %127, %cst_110 {dimension_numbers = #tpu.dot_dimension_numbers<[1], [0], [0], [1], [0, 0, 1, 1], [], []>} : vector<256x32xbf16>, vector<32x32xbf16>, vector<256x32xf32> -> vector<256x32xf32>
    %129 = arith.addf %123, %128 : vector<256x32xf32>
    %130 = vector.extract_strided_slice %81 {offsets = [2, 2, 0], sizes = [16, 16, 32], strides = [1, 1, 1]} : vector<18x18x32xbf16> to vector<16x16x32xbf16>
    %131 = vector.shape_cast %130 : vector<16x16x32xbf16> to vector<256x32xbf16>
    %c2_111 = arith.constant 2 : index
    %c2_112 = arith.constant 2 : index
    %c0_113 = arith.constant 0 : index
    %c0_114 = arith.constant 0 : index
    %132 = vector.load %arg5[%c2_111, %c2_112, %c0_113, %c0_114] : memref<3x3x32x32xbf16, #tpu.memory_space<vmem>>, vector<1x1x32x32xbf16>
    %133 = vector.shape_cast %132 : vector<1x1x32x32xbf16> to vector<32x32xbf16>
    %cst_115 = arith.constant dense<0.000000e+00> : vector<256x32xf32>
    %134 = tpu.matmul %131, %133, %cst_115 {dimension_numbers = #tpu.dot_dimension_numbers<[1], [0], [0], [1], [0, 0, 1, 1], [], []>} : vector<256x32xbf16>, vector<32x32xbf16>, vector<256x32xf32> -> vector<256x32xf32>
    %135 = arith.addf %129, %134 : vector<256x32xf32>
    %136 = math.tanh %135 : vector<256x32xf32>
    %137 = arith.subf %136, %76 : vector<256x32xf32>
    %138 = arith.mulf %71, %137 : vector<256x32xf32>
    %139 = arith.addf %76, %138 : vector<256x32xf32>
    %140 = vector.shape_cast %139 : vector<256x32xf32> to vector<16x16x32xf32>
    %c0_116 = arith.constant 0 : index
    %c0_117 = arith.constant 0 : index
    %c0_118 = arith.constant 0 : index
    %c0_119 = arith.constant 0 : index
    %141 = vector.load %arg6[%c0_116, %c0_117, %c0_118, %c0_119] : memref<1x16x16x32xf32, #tpu.memory_space<vmem>>, vector<1x16x16x32xf32>
    %142 = vector.shape_cast %141 : vector<1x16x16x32xf32> to vector<16x16x32xf32>
    %143 = vector.shape_cast %140 : vector<16x16x32xf32> to vector<1x16x16x32xf32>
    tpu.vector_store %arg6[%c0_116, %c0_117, %c0_118, %c0_119], %143 {strides = array<i32>} : memref<1x16x16x32xf32, #tpu.memory_space<vmem>>, vector<1x16x16x32xf32>,
    return
  }
  func.func @transform_0(%arg0: i32) -> (i32, i32, i32, i32) {
    %c0_i32 = arith.constant 0 : i32
    %c0_i32_0 = arith.constant 0 : i32
    %c0_i32_1 = arith.constant 0 : i32
    %c0_i32_2 = arith.constant 0 : i32
    return %arg0, %c0_i32, %c0_i32_0, %c0_i32_1 : i32, i32, i32, i32
  }
  func.func @transform_1(%arg0: i32) -> (i32, i32, i32, i32) {
    %c0_i32 = arith.constant 0 : i32
    %c0_i32_0 = arith.constant 0 : i32
    %c0_i32_1 = arith.constant 0 : i32
    %c0_i32_2 = arith.constant 0 : i32
    return %arg0, %c0_i32, %c0_i32_0, %c0_i32_1 : i32, i32, i32, i32
  }
  func.func @transform_2(%arg0: i32) -> (i32, i32, i32, i32) {
    %c0_i32 = arith.constant 0 : i32
    %c0_i32_0 = arith.constant 0 : i32
    %c0_i32_1 = arith.constant 0 : i32
    %c0_i32_2 = arith.constant 0 : i32
    %c0_i32_3 = arith.constant 0 : i32
    return %c0_i32, %c0_i32_0, %c0_i32_1, %c0_i32_2 : i32, i32, i32, i32
  }
  func.func @transform_3(%arg0: i32) -> (i32, i32) {
    %c0_i32 = arith.constant 0 : i32
    %c0_i32_0 = arith.constant 0 : i32
    %c0_i32_1 = arith.constant 0 : i32
    return %c0_i32, %c0_i32_0 : i32, i32
  }
  func.func @transform_4(%arg0: i32) -> (i32, i32, i32, i32) {
    %c0_i32 = arith.constant 0 : i32
    %c0_i32_0 = arith.constant 0 : i32
    %c0_i32_1 = arith.constant 0 : i32
    %c0_i32_2 = arith.constant 0 : i32
    %c0_i32_3 = arith.constant 0 : i32
    return %c0_i32, %c0_i32_0, %c0_i32_1, %c0_i32_2 : i32, i32, i32, i32
  }
  func.func @transform_5(%arg0: i32) -> (i32, i32, i32, i32) {
    %c0_i32 = arith.constant 0 : i32
    %c0_i32_0 = arith.constant 0 : i32
    %c0_i32_1 = arith.constant 0 : i32
    %c0_i32_2 = arith.constant 0 : i32
    return %arg0, %c0_i32, %c0_i32_0, %c0_i32_1 : i32, i32, i32, i32
  }
}

</mosaic_0001>

<llo_original>
// kernel: tpu_custom_call.1
$region0: #{tpu_custom_call.1}
  #allocation0 [shape = 'u32[]', space=smem, size = 0x4, offset = 0x4, fixed_abs, tag = 'smem constant byte address 0x4 - core index']
  #allocation1 [shape = 'u32[144,128]{1,0:T(1,128)}', space=vmem, size = 0x12000, scoped, tag = 'internal scratch']
  #allocation2 [shape = 'bf16[18,18,32]{2,1,0:T(8,128)(2,1)}', space=vmem, size = 0x1b000, scoped, tag = 'scratch operand']
  %s0 = inlined_call_operand.vmem [shape: bf16[2,18,18,64], index: 0, kind: input, shape index: {}]
  %s1 = inlined_call_operand.vmem [shape: f32[2,16,16,32], index: 1, kind: input, shape index: {}]
  %s2 = inlined_call_operand.hbm [shape: bf16[3,3,64,96], index: 2, kind: input, shape index: {}]
  %s3 = inlined_call_operand.vmem [shape: f32[1,96], index: 3, kind: input, shape index: {}]
  %s4 = inlined_call_operand.vmem [shape: bf16[3,3,32,32], index: 4, kind: input, shape index: {}]
  %s5 = inlined_call_operand.hbm [shape: f32[2,16,16,32], index: 5, kind: output, shape index: {}]
  %s6 = sld [smem:[#allocation0]]
  $region57: #{tpu_custom_call.1} parent=0
    _
  %s8 = ssub.s32 1, %s6
  %s9 = scalar_select 0, %s8, %s6
  $region1: #{tpu_custom_call.1} parent=0
    #allocation3 [shape = 'u8[147456]{0}', space=vmem, size = 0x24000, scoped, tag = 'input window, operand 2, single buffered']
    #allocation4 [shape = 's32[2]{0}', space=sflag, size = 0x8, scoped, tag = 'scoped memory for tpu_custom_call.1']
    #allocation5 [shape = 's32[2]{0}', space=sflag, size = 0x8, scoped, tag = 'scoped memory for tpu_custom_call.1']
    #allocation6 [shape = 'u8[262144]{0}', space=vmem, size = 0x40000, scoped, tag = 'output window, operand 0']
    %10 = vsyncpa [#allocation4], 0
    %11 = vsyncpa [#allocation5], 0
    %s12 = scalar_lea.sflag [#allocation5], 1
    %13 = vsyncpa %s12, 0
    loop: start=0, step=1, limit=4
    $region2: #{tpu_custom_call.1} parent=1 // loop_pre_header
      _
    $region3: #{tpu_custom_call.1} parent=1 // loop_header
      %s15 = sphi 0, %s19
      %p16 = scmp.ge.s32.totalorder %s15, 4
      %s25 = sphi 0, %s27
      %s28 = sphi 0, %s25
      %s29 = sphi 0, %s28
      %s45 = sphi 0, %s29
      %s51 = sphi 0, %s53
      %s54 = sphi 0, %s51
      %s55 = sphi 0, %s54
      %s71 = sphi 0, %s55
      %s75 = sphi 0, %s75
      %s77 = sphi 0, %s75
      %s78 = sphi 0, %s77
      %s92 = sphi 0, %s78
      %s96 = sphi 0, %s96
      %s98 = sphi 0, %s96
      %s99 = sphi 0, %s98
      %s113 = sphi 0, %s99
      %s117 = sphi 0, %s117
      %s119 = sphi 0, %s117
      %s120 = sphi 0, %s119
      %s134 = sphi 0, %s120
      %s140 = sphi 0, %s142
      %s143 = sphi 0, %s140
      %s144 = sphi 0, %s143
      %s160 = sphi 0, %s144
    $region4: #{tpu_custom_call.1} parent=1 // loop_header_branch
      %18 = sbr.rel (%p16) target = $region8
    $region5: #{tpu_custom_call.1} parent=1 // loop_body
      %s20 = ssub.s32 %s15, 1
      %s21 = ssub.s32 %s15, 2
      %s22 = sadd.s32 %s15, 1
      %s23 = ssub.s32 %s15, %s22
      %p24 = scmp.eq.s32.totalorder %s23, 0
      %s26 = sadd.s32 %s25, 1
      %s27 = scalar_select %p24, %s25, %s26
      %p30 = pneg %p24
      %p31 = scmp.eq.s32.totalorder %s15, 1
      %p32 = por %p30, %p31
      %p33 = scmp.ne.s32.totalorder %s25, %s28
      %p34 = scmp.eq.s32.totalorder %s15, 0
      %p35 = por %p33, %p34
      %p36 = scmp.ne.s32.totalorder %s25, %s28
      %p37 = scmp.eq.s32.totalorder %s20, 1
      %p38 = por %p36, %p37
      %p39 = scmp.ne.s32.totalorder %s28, %s29
      %p40 = scmp.eq.s32.totalorder %s20, 0
      %p41 = por %p39, %p40
      %p42 = scmp.ne.s32.totalorder %s28, %s29
      %p43 = scmp.eq.s32.totalorder %s21, 1
      %p44 = por %p42, %p43
      %p46 = scmp.ne.s32.totalorder %s29, %s45
      %p47 = scmp.eq.s32.totalorder %s21, 0
      %p48 = por %p46, %p47
      %s49 = ssub.s32 %s15, %s22
      %p50 = scmp.eq.s32.totalorder %s49, 0
      %s52 = sadd.s32 %s51, 1
      %s53 = scalar_select %p50, %s51, %s52
      %p56 = pneg %p50
      %p57 = scmp.eq.s32.totalorder %s15, 1
      %p58 = por %p56, %p57
      %p59 = scmp.ne.s32.totalorder %s51, %s54
      %p60 = scmp.eq.s32.totalorder %s15, 0
      %p61 = por %p59, %p60
      %p62 = scmp.ne.s32.totalorder %s51, %s54
      %p63 = scmp.eq.s32.totalorder %s20, 1
      %p64 = por %p62, %p63
      %p65 = scmp.ne.s32.totalorder %s54, %s55
      %p66 = scmp.eq.s32.totalorder %s20, 0
      %p67 = por %p65, %p66
      %p68 = scmp.ne.s32.totalorder %s54, %s55
      %p69 = scmp.eq.s32.totalorder %s21, 1
      %p70 = por %p68, %p69
      %p72 = scmp.ne.s32.totalorder %s55, %s71
      %p73 = scmp.eq.s32.totalorder %s21, 0
      %p74 = por %p72, %p73
      %s76 = sadd.s32 %s75, 1
      %p79 = scmp.eq.s32.totalorder %s15, 1
      %p80 = scmp.ne.s32.totalorder %s75, %s77
      %p81 = scmp.eq.s32.totalorder %s15, 0
      %p82 = por %p80, %p81
      %p83 = scmp.ne.s32.totalorder %s75, %s77
      %p84 = scmp.eq.s32.totalorder %s20, 1
      %p85 = por %p83, %p84
      %p86 = scmp.ne.s32.totalorder %s77, %s78
      %p87 = scmp.eq.s32.totalorder %s20, 0
      %p88 = por %p86, %p87
      %p89 = scmp.ne.s32.totalorder %s77, %s78
      %p90 = scmp.eq.s32.totalorder %s21, 1
      %p91 = por %p89, %p90
      %p93 = scmp.ne.s32.totalorder %s78, %s92
      %p94 = scmp.eq.s32.totalorder %s21, 0
      %p95 = por %p93, %p94
      %s97 = sadd.s32 %s96, 1
      %p100 = scmp.eq.s32.totalorder %s15, 1
      %p101 = scmp.ne.s32.totalorder %s96, %s98
      %p102 = scmp.eq.s32.totalorder %s15, 0
      %p103 = por %p101, %p102
      %p104 = scmp.ne.s32.totalorder %s96, %s98
      %p105 = scmp.eq.s32.totalorder %s20, 1
      %p106 = por %p104, %p105
      %p107 = scmp.ne.s32.totalorder %s98, %s99
      %p108 = scmp.eq.s32.totalorder %s20, 0
      %p109 = por %p107, %p108
      %p110 = scmp.ne.s32.totalorder %s98, %s99
      %p111 = scmp.eq.s32.totalorder %s21, 1
      %p112 = por %p110, %p111
      %p114 = scmp.ne.s32.totalorder %s99, %s113
      %p115 = scmp.eq.s32.totalorder %s21, 0
      %p116 = por %p114, %p115
      %s118 = sadd.s32 %s117, 1
      %p121 = scmp.eq.s32.totalorder %s15, 1
      %p122 = scmp.ne.s32.totalorder %s117, %s119
      %p123 = scmp.eq.s32.totalorder %s15, 0
      %p124 = por %p122, %p123
      %p125 = scmp.ne.s32.totalorder %s117, %s119
      %p126 = scmp.eq.s32.totalorder %s20, 1
      %p127 = por %p125, %p126
      %p128 = scmp.ne.s32.totalorder %s119, %s120
      %p129 = scmp.eq.s32.totalorder %s20, 0
      %p130 = por %p128, %p129
      %p131 = scmp.ne.s32.totalorder %s119, %s120
      %p132 = scmp.eq.s32.totalorder %s21, 1
      %p133 = por %p131, %p132
      %p135 = scmp.ne.s32.totalorder %s120, %s134
      %p136 = scmp.eq.s32.totalorder %s21, 0
      %p137 = por %p135, %p136
      %s138 = ssub.s32 %s15, %s22
      %p139 = scmp.eq.s32.totalorder %s138, 0
      %s141 = sadd.s32 %s140, 1
      %s142 = scalar_select %p139, %s140, %s141
      %p145 = pneg %p139
      %p146 = scmp.eq.s32.totalorder %s15, 1
      %p147 = por %p145, %p146
      %p148 = scmp.ne.s32.totalorder %s140, %s143
      %p149 = scmp.eq.s32.totalorder %s15, 0
      %p150 = por %p148, %p149
      %p151 = scmp.ne.s32.totalorder %s140, %s143
      %p152 = scmp.eq.s32.totalorder %s20, 1
      %p153 = por %p151, %p152
      %p154 = scmp.ne.s32.totalorder %s143, %s144
      %p155 = scmp.eq.s32.totalorder %s20, 0
      %p156 = por %p154, %p155
      %p157 = scmp.ne.s32.totalorder %s143, %s144
      %p158 = scmp.eq.s32.totalorder %s21, 1
      %p159 = por %p157, %p158
      %p161 = scmp.ne.s32.totalorder %s144, %s160
      %p162 = scmp.eq.s32.totalorder %s21, 0
      %p163 = por %p161, %p162
      %p164 = scmp.le.s32.totalorder 1, %s15
      %p165 = scmp.lt.s32.totalorder %s15, 3
      %p166 = pnand %p164, %p165
      %p167 = pneg %p166
      // Predicated region
      $region9: #{tpu_custom_call.1} parent=5 // pred_check
        _
      $region10: #{tpu_custom_call.1} parent=5 // pred_check_branch
        %169 = sbr.rel (%p166) target = $region12
      $region11: #{tpu_custom_call.1} parent=5 // pred_region
        %s170 = ssub.s32 %s15, 1
        // Predicated region
        $region13: #{tpu_custom_call.1} parent=11 // pred_check
          %p171 = pneg %p88
        $region14: #{tpu_custom_call.1} parent=11 // pred_check_branch
          %173 = sbr.rel (%p171) target = $region16
        $region15: #{tpu_custom_call.1} parent=11 // pred_region
          %s175 = ssub.s32 4608, 4608
          %176 = vsyncadd [#allocation4], %s175
          %s177 = sshll.u32 [#allocation3], 4
          %s178 = int_to_ptr.vmem [resolvable:$true] %s177
          %183 = dma.hbm_to_vmem [thread:$0]  %s2, 4608, %s178, [#allocation4], 64, 64, 4
        $region16: #{tpu_custom_call.1} parent=11 // pred_fallthru
          _
        // Predicated region
        $region17: #{tpu_custom_call.1} parent=11 // pred_check
          %p184 = pneg %p109
        $region18: #{tpu_custom_call.1} parent=11 // pred_check_branch
          %186 = sbr.rel (%p184) target = $region20
        $region19: #{tpu_custom_call.1} parent=11 // pred_region
          _
        $region20: #{tpu_custom_call.1} parent=11 // pred_fallthru
          _
        // Predicated region
        $region21: #{tpu_custom_call.1} parent=11 // pred_check
          %p187 = pneg %p130
        $region22: #{tpu_custom_call.1} parent=11 // pred_check_branch
          %189 = sbr.rel (%p187) target = $region24
        $region23: #{tpu_custom_call.1} parent=11 // pred_region
          _
        $region24: #{tpu_custom_call.1} parent=11 // pred_fallthru
          _
      $region12: #{tpu_custom_call.1} parent=5 // pred_fallthru
        _
      %p190 = scmp.lt.s32.totalorder %s15, 2
      // Predicated region
      $region25: #{tpu_custom_call.1} parent=5 // pred_check
        %p191 = pneg %p190
      $region26: #{tpu_custom_call.1} parent=5 // pred_check_branch
        %193 = sbr.rel (%p191) target = $region28
      $region27: #{tpu_custom_call.1} parent=5 // pred_region
        // Predicated region
        $region29: #{tpu_custom_call.1} parent=27 // pred_check
          %p194 = pneg %p35
        $region30: #{tpu_custom_call.1} parent=27 // pred_check_branch
          %196 = sbr.rel (%p194) target = $region32
        $region31: #{tpu_custom_call.1} parent=27 // pred_region
          %p197 = scmp.lt.s32.totalorder %s15, 1
          %s198 = scalar_select %p197, %s15, 1
          %s199 = smul.addr %s198, 54
          %s200 = smul.addr %s199, 4
          %s201 = scalar_lea.vmem %s0, %s200
        $region32: #{tpu_custom_call.1} parent=27 // pred_fallthru
          _
        // Predicated region
        $region33: #{tpu_custom_call.1} parent=27 // pred_check
          %p202 = pneg %p61
        $region34: #{tpu_custom_call.1} parent=27 // pred_check_branch
          %204 = sbr.rel (%p202) target = $region36
        $region35: #{tpu_custom_call.1} parent=27 // pred_region
          %p205 = scmp.lt.s32.totalorder %s15, 1
          %s206 = scalar_select %p205, %s15, 1
          %s207 = smul.addr %s206, 32
          %s208 = smul.addr %s207, 8
          %s209 = scalar_lea.vmem %s1, %s208
        $region36: #{tpu_custom_call.1} parent=27 // pred_fallthru
          _
      $region28: #{tpu_custom_call.1} parent=5 // pred_fallthru
        _
      %p210 = scmp.le.s32.totalorder 1, %s15
      %p211 = scmp.lt.s32.totalorder %s15, 3
      %p212 = pnand %p210, %p211
      %p213 = pneg %p212
      // Predicated region
      $region37: #{tpu_custom_call.1} parent=5 // pred_check
        _
      $region38: #{tpu_custom_call.1} parent=5 // pred_check_branch
        %215 = sbr.rel (%p212) target = $region40
      $region39: #{tpu_custom_call.1} parent=5 // pred_region
        %s216 = ssub.s32 %s15, 1
        // Predicated region
        $region41: #{tpu_custom_call.1} parent=39 // pred_check
          %p217 = pneg %p88
        $region42: #{tpu_custom_call.1} parent=39 // pred_check_branch
          %219 = sbr.rel (%p217) target = $region44
        $region43: #{tpu_custom_call.1} parent=39 // pred_region
          %220 = dma.done [#allocation4], 4608
        $region44: #{tpu_custom_call.1} parent=39 // pred_fallthru
          _
        %p221 = scmp.lt.s32.totalorder %s20, 1
        %s222 = scalar_select %p221, %s20, 1
        %s223 = smul.addr %s222, 54
        %s224 = smul.addr %s223, 4
        %s225 = scalar_lea.vmem %s0, %s224
        %p226 = pneg %p41
        %p227 = pneg %p38
        %p228 = scmp.lt.s32.totalorder %s20, 1
        %s229 = scalar_select %p228, %s20, 1
        %s230 = smul.addr %s229, 32
        %s231 = smul.addr %s230, 8
        %s232 = scalar_lea.vmem %s1, %s231
        %p233 = pneg %p67
        %p234 = pneg %p64
        %p235 = pneg %p88
        %p236 = pneg %p85
        %p237 = pneg %p109
        %p238 = pneg %p106
        %p239 = pneg %p130
        %p240 = pneg %p127
        %p241 = pneg %p156
        %p242 = pneg %p153
        %s243 = sand.u32 %s143, 1
        %s244 = scalar_lea.sflag [#allocation5], %s243
        %s245 = sand.u32 %s143, 1
        %s246 = smul.addr %s245, 256
        %s247 = scalar_lea.vmem [#allocation6], %s246
        %p248 = scmp.lt.s32.totalorder %s20, 1
        %s249 = scalar_select %p248, %s20, 1
        %s250 = smul.addr %s249, 54
        %s251 = smul.addr %s250, 4
        %s252 = scalar_lea.vmem %s0, %s251
        %p253 = scmp.lt.s32.totalorder %s20, 1
        %s254 = scalar_select %p253, %s20, 1
        %s255 = smul.addr %s254, 32
        %s256 = smul.addr %s255, 8
        %s257 = scalar_lea.vmem %s1, %s256
        %vm259 = vcmask 257024
        %260 = vst.msk [vmem:[#allocation2] sm:$0xf] %vm259, 0
        %261 = vst.msk [vmem:[#allocation2 + $0x4] sm:$0xf] %vm259, 0
        %vm262 = vcmask 253952
        %263 = vst.msk [vmem:[#allocation2 + $0x8] sm:$0x1] %vm262, 0
        %s264 = scalar_lea.vmem [#allocation2], 204
        %265 = vst.msk [vmem:[%s264] sm:$0xf] %vm259, 0
        %266 = vst.msk [vmem:[%s264 + $0x4] sm:$0xf] %vm259, 0
        %267 = vst.msk [vmem:[%s264 + $0x8] sm:$0x1] %vm262, 0
        %vm268 = vcmask 253952
        %vm269 = vsmask.f32 256
        %vm270 = vmand %vm268, %vm269
        %v271 = vld [vmem:[#allocation2] sm:$0x1]
        %v272 = vsel %vm270, 0, %v271
        %273 = vst [vmem:[#allocation2] sm:$0x1] %v272
        %v274 = vld [vmem:[#allocation2 + $0xc] sm:$0x1]
        %v275 = vsel %vm270, 0, %v274
        %276 = vst [vmem:[#allocation2 + $0xc] sm:$0x1] %v275
        %v277 = vld [vmem:[#allocation2 + $0x18] sm:$0x1]
        %v278 = vsel %vm270, 0, %v277
        %279 = vst [vmem:[#allocation2 + $0x18] sm:$0x1] %v278
        %v280 = vld [vmem:[#allocation2 + $0x24] sm:$0x1]
        %v281 = vsel %vm270, 0, %v280
        %282 = vst [vmem:[#allocation2 + $0x24] sm:$0x1] %v281
        %v283 = vld [vmem:[#allocation2 + $0x30] sm:$0x1]
        %v284 = vsel %vm270, 0, %v283
        %285 = vst [vmem:[#allocation2 + $0x30] sm:$0x1] %v284
        %v286 = vld [vmem:[#allocation2 + $0x3c] sm:$0x1]
        %v287 = vsel %vm270, 0, %v286
        %288 = vst [vmem:[#allocation2 + $0x3c] sm:$0x1] %v287
        %v289 = vld [vmem:[#allocation2 + $0x48] sm:$0x1]
        %v290 = vsel %vm270, 0, %v289
        %291 = vst [vmem:[#allocation2 + $0x48] sm:$0x1] %v290
        %v292 = vld [vmem:[#allocation2 + $0x54] sm:$0x1]
        %v293 = vsel %vm270, 0, %v292
        %294 = vst [vmem:[#allocation2 + $0x54] sm:$0x1] %v293
        %v295 = vld [vmem:[#allocation2 + $0x60] sm:$0x1]
        %v296 = vsel %vm270, 0, %v295
        %297 = vst [vmem:[#allocation2 + $0x60] sm:$0x1] %v296
        %v298 = vld [vmem:[#allocation2 + $0x6c] sm:$0x1]
        %v299 = vsel %vm270, 0, %v298
        %300 = vst [vmem:[#allocation2 + $0x6c] sm:$0x1] %v299
        %v301 = vld [vmem:[#allocation2 + $0x78] sm:$0x1]
        %v302 = vsel %vm270, 0, %v301
        %303 = vst [vmem:[#allocation2 + $0x78] sm:$0x1] %v302
        %v304 = vld [vmem:[#allocation2 + $0x84] sm:$0x1]
        %v305 = vsel %vm270, 0, %v304
        %306 = vst [vmem:[#allocation2 + $0x84] sm:$0x1] %v305
        %v307 = vld [vmem:[#allocation2 + $0x90] sm:$0x1]
        %v308 = vsel %vm270, 0, %v307
        %309 = vst [vmem:[#allocation2 + $0x90] sm:$0x1] %v308
        %v310 = vld [vmem:[#allocation2 + $0x9c] sm:$0x1]
        %v311 = vsel %vm270, 0, %v310
        %312 = vst [vmem:[#allocation2 + $0x9c] sm:$0x1] %v311
        %v313 = vld [vmem:[#allocation2 + $0xa8] sm:$0x1]
        %v314 = vsel %vm270, 0, %v313
        %315 = vst [vmem:[#allocation2 + $0xa8] sm:$0x1] %v314
        %v316 = vld [vmem:[#allocation2 + $0xb4] sm:$0x1]
        %v317 = vsel %vm270, 0, %v316
        %318 = vst [vmem:[#allocation2 + $0xb4] sm:$0x1] %v317
        %v319 = vld [vmem:[#allocation2 + $0xc0] sm:$0x1]
        %v320 = vsel %vm270, 0, %v319
        %321 = vst [vmem:[#allocation2 + $0xc0] sm:$0x1] %v320
        %v322 = vld [vmem:[#allocation2 + $0xcc] sm:$0x1]
        %v323 = vsel %vm270, 0, %v322
        %324 = vst [vmem:[#allocation2 + $0xcc] sm:$0x1] %v323
        %vm325 = vsmask.f32 7938
        %vm326 = vmand %vm268, %vm325
        %v327 = vld [vmem:[#allocation2 + $0x8] sm:$0x1]
        %v328 = vsel %vm326, 0, %v327
        %329 = vst [vmem:[#allocation2 + $0x8] sm:$0x1] %v328
        %v330 = vld [vmem:[#allocation2 + $0x14] sm:$0x1]
        %v331 = vsel %vm326, 0, %v330
        %332 = vst [vmem:[#allocation2 + $0x14] sm:$0x1] %v331
        %v333 = vld [vmem:[#allocation2 + $0x20] sm:$0x1]
        %v334 = vsel %vm326, 0, %v333
        %335 = vst [vmem:[#allocation2 + $0x20] sm:$0x1] %v334
        %v336 = vld [vmem:[#allocation2 + $0x2c] sm:$0x1]
        %v337 = vsel %vm326, 0, %v336
        %338 = vst [vmem:[#allocation2 + $0x2c] sm:$0x1] %v337
        %v339 = vld [vmem:[#allocation2 + $0x38] sm:$0x1]
        %v340 = vsel %vm326, 0, %v339
        %341 = vst [vmem:[#allocation2 + $0x38] sm:$0x1] %v340
        %v342 = vld [vmem:[#allocation2 + $0x44] sm:$0x1]
        %v343 = vsel %vm326, 0, %v342
        %344 = vst [vmem:[#allocation2 + $0x44] sm:$0x1] %v343
        %v345 = vld [vmem:[#allocation2 + $0x50] sm:$0x1]
        %v346 = vsel %vm326, 0, %v345
        %347 = vst [vmem:[#allocation2 + $0x50] sm:$0x1] %v346
        %v348 = vld [vmem:[#allocation2 + $0x5c] sm:$0x1]
        %v349 = vsel %vm326, 0, %v348
        %350 = vst [vmem:[#allocation2 + $0x5c] sm:$0x1] %v349
        %v351 = vld [vmem:[#allocation2 + $0x68] sm:$0x1]
        %v352 = vsel %vm326, 0, %v351
        %353 = vst [vmem:[#allocation2 + $0x68] sm:$0x1] %v352
        %v354 = vld [vmem:[#allocation2 + $0x74] sm:$0x1]
        %v355 = vsel %vm326, 0, %v354
        %356 = vst [vmem:[#allocation2 + $0x74] sm:$0x1] %v355
        %v357 = vld [vmem:[#allocation2 + $0x80] sm:$0x1]
        %v358 = vsel %vm326, 0, %v357
        %359 = vst [vmem:[#allocation2 + $0x80] sm:$0x1] %v358
        %v360 = vld [vmem:[#allocation2 + $0x8c] sm:$0x1]
        %v361 = vsel %vm326, 0, %v360
        %362 = vst [vmem:[#allocation2 + $0x8c] sm:$0x1] %v361
        %v363 = vld [vmem:[#allocation2 + $0x98] sm:$0x1]
        %v364 = vsel %vm326, 0, %v363
        %365 = vst [vmem:[#allocation2 + $0x98] sm:$0x1] %v364
        %v366 = vld [vmem:[#allocation2 + $0xa4] sm:$0x1]
        %v367 = vsel %vm326, 0, %v366
        %368 = vst [vmem:[#allocation2 + $0xa4] sm:$0x1] %v367
        %v369 = vld [vmem:[#allocation2 + $0xb0] sm:$0x1]
        %v370 = vsel %vm326, 0, %v369
        %371 = vst [vmem:[#allocation2 + $0xb0] sm:$0x1] %v370
        %v372 = vld [vmem:[#allocation2 + $0xbc] sm:$0x1]
        %v373 = vsel %vm326, 0, %v372
        %374 = vst [vmem:[#allocation2 + $0xbc] sm:$0x1] %v373
        %v375 = vld [vmem:[#allocation2 + $0xc8] sm:$0x1]
        %v376 = vsel %vm326, 0, %v375
        %377 = vst [vmem:[#allocation2 + $0xc8] sm:$0x1] %v376
        %v378 = vld [vmem:[#allocation2 + $0xd4] sm:$0x1]
        %v379 = vsel %vm326, 0, %v378
        %380 = vst [vmem:[#allocation2 + $0xd4] sm:$0x1] %v379
        %v381 = vld [vmem:[%s252] sm:$0xf]
        %v382 = vld [vmem:[%s252 + $0x4] sm:$0xf]
        %v383 = vld [vmem:[%s252 + $0x8] sm:$0x1]
        %v384 = vld [vmem:[%s252 + $0xc] sm:$0xf]
        %v385 = vld [vmem:[%s252 + $0x10] sm:$0xf]
        %v386 = vld [vmem:[%s252 + $0x14] sm:$0x1]
        %v387 = vld [vmem:[%s252 + $0x18] sm:$0xf]
        %v388 = vld [vmem:[%s252 + $0x1c] sm:$0xf]
        %v389 = vld [vmem:[%s252 + $0x20] sm:$0x1]
        %v390 = vld [vmem:[%s252 + $0x24] sm:$0xf]
        %v391 = vld [vmem:[%s252 + $0x28] sm:$0xf]
        %v392 = vld [vmem:[%s252 + $0x2c] sm:$0x1]
        %v393 = vld [vmem:[%s252 + $0x30] sm:$0xf]
        %v394 = vld [vmem:[%s252 + $0x34] sm:$0xf]
        %v395 = vld [vmem:[%s252 + $0x38] sm:$0x1]
        %v396 = vld [vmem:[%s252 + $0x3c] sm:$0xf]
        %v397 = vld [vmem:[%s252 + $0x40] sm:$0xf]
        %v398 = vld [vmem:[%s252 + $0x44] sm:$0x1]
        %v399 = vld [vmem:[%s252 + $0x48] sm:$0xf]
        %v400 = vld [vmem:[%s252 + $0x4c] sm:$0xf]
        %v401 = vld [vmem:[%s252 + $0x50] sm:$0x1]
        %v402 = vld [vmem:[%s252 + $0x54] sm:$0xf]
        %v403 = vld [vmem:[%s252 + $0x58] sm:$0xf]
        %v404 = vld [vmem:[%s252 + $0x5c] sm:$0x1]
        %v405 = vld [vmem:[%s252 + $0x60] sm:$0xf]
        %v406 = vld [vmem:[%s252 + $0x64] sm:$0xf]
        %v407 = vld [vmem:[%s252 + $0x68] sm:$0x1]
        %v408 = vld [vmem:[%s252 + $0x6c] sm:$0xf]
        %v409 = vld [vmem:[%s252 + $0x70] sm:$0xf]
        %v410 = vld [vmem:[%s252 + $0x74] sm:$0x1]
        %v411 = vld [vmem:[%s252 + $0x78] sm:$0xf]
        %v412 = vld [vmem:[%s252 + $0x7c] sm:$0xf]
        %v413 = vld [vmem:[%s252 + $0x80] sm:$0x1]
        %v414 = vld [vmem:[%s252 + $0x84] sm:$0xf]
        %v415 = vld [vmem:[%s252 + $0x88] sm:$0xf]
        %v416 = vld [vmem:[%s252 + $0x8c] sm:$0x1]
        %v417 = vld [vmem:[%s252 + $0x90] sm:$0xf]
        %v418 = vld [vmem:[%s252 + $0x94] sm:$0xf]
        %v419 = vld [vmem:[%s252 + $0x98] sm:$0x1]
        %v420 = vld [vmem:[%s252 + $0x9c] sm:$0xf]
        %v421 = vld [vmem:[%s252 + $0xa0] sm:$0xf]
        %v422 = vld [vmem:[%s252 + $0xa4] sm:$0x1]
        %v423 = vld [vmem:[%s252 + $0xa8] sm:$0xf]
        %v424 = vld [vmem:[%s252 + $0xac] sm:$0xf]
        %v425 = vld [vmem:[%s252 + $0xb0] sm:$0x1]
        %v426 = vld [vmem:[%s252 + $0xb4] sm:$0xf]
        %v427 = vld [vmem:[%s252 + $0xb8] sm:$0xf]
        %v428 = vld [vmem:[%s252 + $0xbc] sm:$0x1]
        %v429 = vld [vmem:[%s252 + $0xc0] sm:$0xf]
        %v430 = vld [vmem:[%s252 + $0xc4] sm:$0xf]
        %v431 = vld [vmem:[%s252 + $0xc8] sm:$0x1]
        %v432 = vld [vmem:[%s252 + $0xcc] sm:$0xf]
        %v433 = vld [vmem:[%s252 + $0xd0] sm:$0xf]
        %v434 = vld [vmem:[%s252 + $0xd4] sm:$0x1]
        %v435 = vld [vmem:[%s3] sm:$0x1]
        %v437 = vlaneseq
        %v438 = vshrl.u32 %v437, 7
        %v439 = vsub.s32 0, %v438
        %v440 = vrot.slane %v435, %v439
        %v442 = vld [vmem:[#allocation3] sm:$0xf]
        %v443 = vld [vmem:[#allocation3 + $0x4] sm:$0xf]
        %v444 = vld [vmem:[#allocation3 + $0x8] sm:$0xf]
        %v445 = vld [vmem:[#allocation3 + $0xc] sm:$0xf]
        %v446 = vld [vmem:[#allocation3 + $0x10] sm:$0xf]
        %v447 = vld [vmem:[#allocation3 + $0x14] sm:$0xf]
        %v448 = vld [vmem:[#allocation3 + $0x18] sm:$0xf]
        %v449 = vld [vmem:[#allocation3 + $0x1c] sm:$0xf]
        %v482 = vunpack.c.l.b16 %v381
        %v483 = vunpack.c.l.b16 %v382
        %v484 = vunpack.c.l.b16 %v384
        %v485 = vunpack.c.l.b16 %v385
        %v486 = vunpack.c.l.b16 %v387
        %v487 = vunpack.c.l.b16 %v388
        %v488 = vunpack.c.l.b16 %v390
        %v489 = vunpack.c.l.b16 %v391
        %v490 = vunpack.c.l.b16 %v393
        %v491 = vunpack.c.l.b16 %v394
        %v492 = vunpack.c.l.b16 %v396
        %v493 = vunpack.c.l.b16 %v397
        %v494 = vunpack.c.l.b16 %v399
        %v495 = vunpack.c.l.b16 %v400
        %v496 = vunpack.c.l.b16 %v402
        %v497 = vunpack.c.l.b16 %v403
        %v498 = vunpack.c.l.b16 %v405
        %v499 = vunpack.c.l.b16 %v406
        %v500 = vunpack.c.l.b16 %v408
        %v501 = vunpack.c.l.b16 %v409
        %v502 = vunpack.c.l.b16 %v411
        %v503 = vunpack.c.l.b16 %v412
        %v504 = vunpack.c.l.b16 %v414
        %v505 = vunpack.c.l.b16 %v415
        %v506 = vunpack.c.l.b16 %v417
        %v507 = vunpack.c.l.b16 %v418
        %v508 = vunpack.c.l.b16 %v420
        %v509 = vunpack.c.l.b16 %v421
        %v510 = vunpack.c.l.b16 %v423
        %v511 = vunpack.c.l.b16 %v424
        %v512 = vunpack.c.l.b16 %v426
        %v513 = vunpack.c.l.b16 %v427
        %v514 = vpack.c.b16 %v483, %v482
        %v515 = vpack.c.b16 %v485, %v484
        %v516 = vpack.c.b16 %v487, %v486
        %v517 = vpack.c.b16 %v489, %v488
        %v518 = vpack.c.b16 %v491, %v490
        %v519 = vpack.c.b16 %v493, %v492
        %v520 = vpack.c.b16 %v495, %v494
        %v521 = vpack.c.b16 %v497, %v496
        %v522 = vpack.c.b16 %v499, %v498
        %v523 = vpack.c.b16 %v501, %v500
        %v524 = vpack.c.b16 %v503, %v502
        %v525 = vpack.c.b16 %v505, %v504
        %v526 = vpack.c.b16 %v507, %v506
        %v527 = vpack.c.b16 %v509, %v508
        %v528 = vpack.c.b16 %v511, %v510
        %v529 = vpack.c.b16 %v513, %v512
        %v538 = vunpack.c.l.b16 %v442
        %v539 = vunpack.c.l.b16 %v443
        %v540 = vunpack.c.l.b16 %v444
        %v541 = vunpack.c.l.b16 %v445
        %v542 = vunpack.c.l.b16 %v446
        %v543 = vunpack.c.l.b16 %v447
        %v544 = vunpack.c.l.b16 %v448
        %v545 = vunpack.c.l.b16 %v449
        %v546 = vpack.c.b16 %v539, %v538
        %v547 = vpack.c.b16 %v541, %v540
        %v548 = vpack.c.b16 %v543, %v542
        %v549 = vpack.c.b16 %v545, %v544
        %vm554 = vcmask 523264
        %v556 = vsel %vm554, %v514, 0
        %v559 = vsel %vm554, %v515, 0
        %v562 = vsel %vm554, %v516, 0
        %v565 = vsel %vm554, %v517, 0
        %v568 = vsel %vm554, %v518, 0
        %v571 = vsel %vm554, %v519, 0
        %v574 = vsel %vm554, %v520, 0
        %v577 = vsel %vm554, %v521, 0
        %v580 = vsel %vm554, %v522, 0
        %v583 = vsel %vm554, %v523, 0
        %v586 = vsel %vm554, %v524, 0
        %v589 = vsel %vm554, %v525, 0
        %v592 = vsel %vm554, %v526, 0
        %v595 = vsel %vm554, %v527, 0
        %v598 = vsel %vm554, %v528, 0
        %v601 = vsel %vm554, %v529, 0
        %603 = vmatprep.subr.bf16.mxu0 0
        %604 = vmatpush1.bf16.msra.mxu0 %v546
        %605 = vmatprep.subr.bf16.mxu0 0
        %606 = vmatpush1.bf16.msra.mxu0 %v547
        %607 = vmatprep.subr.bf16.mxu0 0
        %608 = vmatpush1.bf16.msra.mxu0 %v548
        %609 = vmatprep.subr.bf16.mxu0 0
        %610 = vmatpush1.bf16.msra.mxu0 %v549
        %611 = vmatprep.subr.bf16.mxu0 0
        %612 = vmatpush1.bf16.msra.mxu0 0
        %613 = vmatprep.subr.bf16.mxu0 0
        %614 = vmatpush1.bf16.msra.mxu0 0
        %615 = vmatprep.subr.bf16.mxu0 0
        %616 = vmatpush1.bf16.msra.mxu0 0
        %617 = vmatprep.subr.bf16.mxu0 0
        %618 = vmatpush1.bf16.msra.mxu0 0
        %619 = vmatprep.subr.bf16.mxu0 0
        %620 = vmatpush1.bf16.msra.mxu0 0
        %621 = vmatprep.subr.bf16.mxu0 0
        %622 = vmatpush1.bf16.msra.mxu0 0
        %623 = vmatprep.subr.bf16.mxu0 0
        %624 = vmatpush1.bf16.msra.mxu0 0
        %625 = vmatprep.subr.bf16.mxu0 0
        %626 = vmatpush1.bf16.msra.mxu0 0
        %627 = vmatprep.subr.bf16.mxu0 0
        %628 = vmatpush1.bf16.msra.mxu0 0
        %629 = vmatprep.subr.bf16.mxu0 0
        %630 = vmatpush1.bf16.msra.mxu0 0
        %631 = vmatprep.subr.bf16.mxu0 0
        %632 = vmatpush1.bf16.msra.mxu0 0
        %633 = vmatprep.subr.bf16.mxu0 0
        %634 = vmatpush1.bf16.msra.mxu0 0
        %635 = vmatprep.mubr.bf16.mxu0 0
        %636 = vmatmul.mubr.bf16.gmra.mrb[0].mxu0 %v556
        %v637 = vpop.f32.mrb[0].mxu0
        %v638 = vadd.f32 0.0, %v637
        %v639 = vpop.f32.mrb[0].mxu0
        %v640 = vpop.f32.mrb[0].mxu0
        %v641 = vadd.f32 0.0, %v640
        %v642 = vpop.f32.mrb[0].mxu0
        %643 = vmatprep.mubr.bf16.mxu0 0
        %644 = vmatmul.mubr.bf16.gmra.mrb[0].mxu0 %v559
        %v645 = vpop.f32.mrb[0].mxu0
        %v646 = vadd.f32 0.0, %v645
        %v647 = vpop.f32.mrb[0].mxu0
        %v648 = vpop.f32.mrb[0].mxu0
        %v649 = vadd.f32 0.0, %v648
        %v650 = vpop.f32.mrb[0].mxu0
        %651 = vmatprep.mubr.bf16.mxu0 0
        %652 = vmatmul.mubr.bf16.gmra.mrb[0].mxu0 %v562
        %v653 = vpop.f32.mrb[0].mxu0
        %v654 = vadd.f32 0.0, %v653
        %v655 = vpop.f32.mrb[0].mxu0
        %v656 = vpop.f32.mrb[0].mxu0
        %v657 = vadd.f32 0.0, %v656
        %v658 = vpop.f32.mrb[0].mxu0
        %659 = vmatprep.mubr.bf16.mxu0 0
        %660 = vmatmul.mubr.bf16.gmra.mrb[0].mxu0 %v565
        %v661 = vpop.f32.mrb[0].mxu0
        %v662 = vadd.f32 0.0, %v661
        %v663 = vpop.f32.mrb[0].mxu0
        %v664 = vpop.f32.mrb[0].mxu0
        %v665 = vadd.f32 0.0, %v664
        %v666 = vpop.f32.mrb[0].mxu0
        %667 = vmatprep.mubr.bf16.mxu0 0
        %668 = vmatmul.mubr.bf16.gmra.mrb[0].mxu0 %v568
        %v669 = vpop.f32.mrb[0].mxu0
        %v670 = vadd.f32 0.0, %v669
        %v671 = vpop.f32.mrb[0].mxu0
        %v672 = vpop.f32.mrb[0].mxu0
        %v673 = vadd.f32 0.0, %v672
        %v674 = vpop.f32.mrb[0].mxu0
        %675 = vmatprep.mubr.bf16.mxu0 0
        %676 = vmatmul.mubr.bf16.gmra.mrb[0].mxu0 %v571
        %v677 = vpop.f32.mrb[0].mxu0
        %v678 = vadd.f32 0.0, %v677
        %v679 = vpop.f32.mrb[0].mxu0
        %v680 = vpop.f32.mrb[0].mxu0
        %v681 = vadd.f32 0.0, %v680
        %v682 = vpop.f32.mrb[0].mxu0
        %683 = vmatprep.mubr.bf16.mxu0 0
        %684 = vmatmul.mubr.bf16.gmra.mrb[0].mxu0 %v574
        %v685 = vpop.f32.mrb[0].mxu0
        %v686 = vadd.f32 0.0, %v685
        %v687 = vpop.f32.mrb[0].mxu0
        %v688 = vpop.f32.mrb[0].mxu0
        %v689 = vadd.f32 0.0, %v688
        %v690 = vpop.f32.mrb[0].mxu0
        %691 = vmatprep.mubr.bf16.mxu0 0
        %692 = vmatmul.mubr.bf16.gmra.mrb[0].mxu0 %v577
        %v693 = vpop.f32.mrb[0].mxu0
        %v694 = vadd.f32 0.0, %v693
        %v695 = vpop.f32.mrb[0].mxu0
        %v696 = vpop.f32.mrb[0].mxu0
        %v697 = vadd.f32 0.0, %v696
        %v698 = vpop.f32.mrb[0].mxu0
        %699 = vmatprep.mubr.bf16.mxu0 0
        %700 = vmatmul.mubr.bf16.gmra.mrb[0].mxu0 %v580
        %v701 = vpop.f32.mrb[0].mxu0
        %v702 = vadd.f32 0.0, %v701
        %v703 = vpop.f32.mrb[0].mxu0
        %v704 = vpop.f32.mrb[0].mxu0
        %v705 = vadd.f32 0.0, %v704
        %v706 = vpop.f32.mrb[0].mxu0
        %707 = vmatprep.mubr.bf16.mxu0 0
        %708 = vmatmul.mubr.bf16.gmra.mrb[0].mxu0 %v583
        %v709 = vpop.f32.mrb[0].mxu0
        %v710 = vadd.f32 0.0, %v709
        %v711 = vpop.f32.mrb[0].mxu0
        %v712 = vpop.f32.mrb[0].mxu0
        %v713 = vadd.f32 0.0, %v712
        %v714 = vpop.f32.mrb[0].mxu0
        %715 = vmatprep.mubr.bf16.mxu0 0
        %716 = vmatmul.mubr.bf16.gmra.mrb[0].mxu0 %v586
        %v717 = vpop.f32.mrb[0].mxu0
        %v718 = vadd.f32 0.0, %v717
        %v719 = vpop.f32.mrb[0].mxu0
        %v720 = vpop.f32.mrb[0].mxu0
        %v721 = vadd.f32 0.0, %v720
        %v722 = vpop.f32.mrb[0].mxu0
        %723 = vmatprep.mubr.bf16.mxu0 0
        %724 = vmatmul.mubr.bf16.gmra.mrb[0].mxu0 %v589
        %v725 = vpop.f32.mrb[0].mxu0
        %v726 = vadd.f32 0.0, %v725
        %v727 = vpop.f32.mrb[0].mxu0
        %v728 = vpop.f32.mrb[0].mxu0
        %v729 = vadd.f32 0.0, %v728
        %v730 = vpop.f32.mrb[0].mxu0
        %731 = vmatprep.mubr.bf16.mxu0 0
        %732 = vmatmul.mubr.bf16.gmra.mrb[0].mxu0 %v592
        %v733 = vpop.f32.mrb[0].mxu0
        %v734 = vadd.f32 0.0, %v733
        %v735 = vpop.f32.mrb[0].mxu0
        %v736 = vpop.f32.mrb[0].mxu0
        %v737 = vadd.f32 0.0, %v736
        %v738 = vpop.f32.mrb[0].mxu0
        %739 = vmatprep.mubr.bf16.mxu0 0
        %740 = vmatmul.mubr.bf16.gmra.mrb[0].mxu0 %v595
        %v741 = vpop.f32.mrb[0].mxu0
        %v742 = vadd.f32 0.0, %v741
        %v743 = vpop.f32.mrb[0].mxu0
        %v744 = vpop.f32.mrb[0].mxu0
        %v745 = vadd.f32 0.0, %v744
        %v746 = vpop.f32.mrb[0].mxu0
        %747 = vmatprep.mubr.bf16.mxu0 0
        %748 = vmatmul.mubr.bf16.gmra.mrb[0].mxu0 %v598
        %v749 = vpop.f32.mrb[0].mxu0
        %v750 = vadd.f32 0.0, %v749
        %v751 = vpop.f32.mrb[0].mxu0
        %v752 = vpop.f32.mrb[0].mxu0
        %v753 = vadd.f32 0.0, %v752
        %v754 = vpop.f32.mrb[0].mxu0
        %755 = vmatprep.mubr.bf16.mxu0 0
        %756 = vmatmul.mubr.bf16.gmra.mrb[0].mxu0 %v601
        %v757 = vpop.f32.mrb[0].mxu0
        %v758 = vadd.f32 0.0, %v757
        %v759 = vpop.f32.mrb[0].mxu0
        %v760 = vpop.f32.mrb[0].mxu0
        %v761 = vadd.f32 0.0, %v760
        %v762 = vpop.f32.mrb[0].mxu0
        %763 = vdwg.mxu0
        %v764 = vadd.f32 %v440, %v638
        %v765 = vadd.f32 %v440, %v641
        %v766 = vadd.f32 %v440, %v646
        %v767 = vadd.f32 %v440, %v649
        %v768 = vadd.f32 %v440, %v654
        %v769 = vadd.f32 %v440, %v657
        %v770 = vadd.f32 %v440, %v662
        %v771 = vadd.f32 %v440, %v665
        %v772 = vadd.f32 %v440, %v670
        %v773 = vadd.f32 %v440, %v673
        %v774 = vadd.f32 %v440, %v678
        %v775 = vadd.f32 %v440, %v681
        %v776 = vadd.f32 %v440, %v686
        %v777 = vadd.f32 %v440, %v689
        %v778 = vadd.f32 %v440, %v694
        %v779 = vadd.f32 %v440, %v697
        %v780 = vadd.f32 %v440, %v702
        %v781 = vadd.f32 %v440, %v705
        %v782 = vadd.f32 %v440, %v710
        %v783 = vadd.f32 %v440, %v713
        %v784 = vadd.f32 %v440, %v718
        %v785 = vadd.f32 %v440, %v721
        %v786 = vadd.f32 %v440, %v726
        %v787 = vadd.f32 %v440, %v729
        %v788 = vadd.f32 %v440, %v734
        %v789 = vadd.f32 %v440, %v737
        %v790 = vadd.f32 %v440, %v742
        %v791 = vadd.f32 %v440, %v745
        %v792 = vadd.f32 %v440, %v750
        %v793 = vadd.f32 %v440, %v753
        %v794 = vadd.f32 %v440, %v758
        %v795 = vadd.f32 %v440, %v761
        %vm796 = vsmask.f32 3328
        %vm797 = vsmask.f32 7440
        %vm798 = vmor %vm796, %vm797
        %v800 = vshrl.u32 %v381, 16
        %v802 = vrot.slane %v800, 4
        %v803 = vshll.u32 %v381, 16
        %v805 = vrot.slane %v803, 5
        %v806 = vor.u32 %v802, %v805
        %v807 = vrot.slane %v806, 4
        %v809 = vshll.u32 %v382, 16
        %v811 = vrot.slane %v809, 5
        %v812 = vsel %vm798, %v807, %v811
        %v813 = vshrl.u32 %v382, 16
        %v815 = vrot.slane %v813, 4
        %v816 = vor.u32 %v815, %v811
        %v817 = vrot.slane %v816, 4
        %v819 = vshll.u32 %v383, 16
        %v821 = vrot.slane %v819, 5
        %v822 = vsel %vm798, %v817, %v821
        %v824 = vshrl.u32 %v384, 16
        %v826 = vrot.slane %v824, 4
        %v827 = vshll.u32 %v384, 16
        %v829 = vrot.slane %v827, 5
        %v830 = vor.u32 %v826, %v829
        %v831 = vrot.slane %v830, 4
        %v833 = vshll.u32 %v385, 16
        %v835 = vrot.slane %v833, 5
        %v836 = vsel %vm798, %v831, %v835
        %v837 = vshrl.u32 %v385, 16
        %v839 = vrot.slane %v837, 4
        %v840 = vor.u32 %v839, %v835
        %v841 = vrot.slane %v840, 4
        %v843 = vshll.u32 %v386, 16
        %v845 = vrot.slane %v843, 5
        %v846 = vsel %vm798, %v841, %v845
        %v848 = vshrl.u32 %v387, 16
        %v850 = vrot.slane %v848, 4
        %v851 = vshll.u32 %v387, 16
        %v853 = vrot.slane %v851, 5
        %v854 = vor.u32 %v850, %v853
        %v855 = vrot.slane %v854, 4
        %v857 = vshll.u32 %v388, 16
        %v859 = vrot.slane %v857, 5
        %v860 = vsel %vm798, %v855, %v859
        %v861 = vshrl.u32 %v388, 16
        %v863 = vrot.slane %v861, 4
        %v864 = vor.u32 %v863, %v859
        %v865 = vrot.slane %v864, 4
        %v867 = vshll.u32 %v389, 16
        %v869 = vrot.slane %v867, 5
        %v870 = vsel %vm798, %v865, %v869
        %v872 = vshrl.u32 %v390, 16
        %v874 = vrot.slane %v872, 4
        %v875 = vshll.u32 %v390, 16
        %v877 = vrot.slane %v875, 5
        %v878 = vor.u32 %v874, %v877
        %v879 = vrot.slane %v878, 4
        %v881 = vshll.u32 %v391, 16
        %v883 = vrot.slane %v881, 5
        %v884 = vsel %vm798, %v879, %v883
        %v885 = vshrl.u32 %v391, 16
        %v887 = vrot.slane %v885, 4
        %v888 = vor.u32 %v887, %v883
        %v889 = vrot.slane %v888, 4
        %v891 = vshll.u32 %v392, 16
        %v893 = vrot.slane %v891, 5
        %v894 = vsel %vm798, %v889, %v893
        %v896 = vshrl.u32 %v393, 16
        %v898 = vrot.slane %v896, 4
        %v899 = vshll.u32 %v393, 16
        %v901 = vrot.slane %v899, 5
        %v902 = vor.u32 %v898, %v901
        %v903 = vrot.slane %v902, 4
        %v905 = vshll.u32 %v394, 16
        %v907 = vrot.slane %v905, 5
        %v908 = vsel %vm798, %v903, %v907
        %v909 = vshrl.u32 %v394, 16
        %v911 = vrot.slane %v909, 4
        %v912 = vor.u32 %v911, %v907
        %v913 = vrot.slane %v912, 4
        %v915 = vshll.u32 %v395, 16
        %v917 = vrot.slane %v915, 5
        %v918 = vsel %vm798, %v913, %v917
        %v920 = vshrl.u32 %v396, 16
        %v922 = vrot.slane %v920, 4
        %v923 = vshll.u32 %v396, 16
        %v925 = vrot.slane %v923, 5
        %v926 = vor.u32 %v922, %v925
        %v927 = vrot.slane %v926, 4
        %v929 = vshll.u32 %v397, 16
        %v931 = vrot.slane %v929, 5
        %v932 = vsel %vm798, %v927, %v931
        %v933 = vshrl.u32 %v397, 16
        %v935 = vrot.slane %v933, 4
        %v936 = vor.u32 %v935, %v931
        %v937 = vrot.slane %v936, 4
        %v939 = vshll.u32 %v398, 16
        %v941 = vrot.slane %v939, 5
        %v942 = vsel %vm798, %v937, %v941
        %v944 = vshrl.u32 %v399, 16
        %v946 = vrot.slane %v944, 4
        %v947 = vshll.u32 %v399, 16
        %v949 = vrot.slane %v947, 5
        %v950 = vor.u32 %v946, %v949
        %v951 = vrot.slane %v950, 4
        %v953 = vshll.u32 %v400, 16
        %v955 = vrot.slane %v953, 5
        %v956 = vsel %vm798, %v951, %v955
        %v957 = vshrl.u32 %v400, 16
        %v959 = vrot.slane %v957, 4
        %v960 = vor.u32 %v959, %v955
        %v961 = vrot.slane %v960, 4
        %v963 = vshll.u32 %v401, 16
        %v965 = vrot.slane %v963, 5
        %v966 = vsel %vm798, %v961, %v965
        %v968 = vshrl.u32 %v402, 16
        %v970 = vrot.slane %v968, 4
        %v971 = vshll.u32 %v402, 16
        %v973 = vrot.slane %v971, 5
        %v974 = vor.u32 %v970, %v973
        %v975 = vrot.slane %v974, 4
        %v977 = vshll.u32 %v403, 16
        %v979 = vrot.slane %v977, 5
        %v980 = vsel %vm798, %v975, %v979
        %v981 = vshrl.u32 %v403, 16
        %v983 = vrot.slane %v981, 4
        %v984 = vor.u32 %v983, %v979
        %v985 = vrot.slane %v984, 4
        %v987 = vshll.u32 %v404, 16
        %v989 = vrot.slane %v987, 5
        %v990 = vsel %vm798, %v985, %v989
        %v992 = vshrl.u32 %v405, 16
        %v994 = vrot.slane %v992, 4
        %v995 = vshll.u32 %v405, 16
        %v997 = vrot.slane %v995, 5
        %v998 = vor.u32 %v994, %v997
        %v999 = vrot.slane %v998, 4
        %v1001 = vshll.u32 %v406, 16
        %v1003 = vrot.slane %v1001, 5
        %v1004 = vsel %vm798, %v999, %v1003
        %v1005 = vshrl.u32 %v406, 16
        %v1007 = vrot.slane %v1005, 4
        %v1008 = vor.u32 %v1007, %v1003
        %v1009 = vrot.slane %v1008, 4
        %v1011 = vshll.u32 %v407, 16
        %v1013 = vrot.slane %v1011, 5
        %v1014 = vsel %vm798, %v1009, %v1013
        %v1016 = vshrl.u32 %v408, 16
        %v1018 = vrot.slane %v1016, 4
        %v1019 = vshll.u32 %v408, 16
        %v1021 = vrot.slane %v1019, 5
        %v1022 = vor.u32 %v1018, %v1021
        %v1023 = vrot.slane %v1022, 4
        %v1025 = vshll.u32 %v409, 16
        %v1027 = vrot.slane %v1025, 5
        %v1028 = vsel %vm798, %v1023, %v1027
        %v1029 = vshrl.u32 %v409, 16
        %v1031 = vrot.slane %v1029, 4
        %v1032 = vor.u32 %v1031, %v1027
        %v1033 = vrot.slane %v1032, 4
        %v1035 = vshll.u32 %v410, 16
        %v1037 = vrot.slane %v1035, 5
        %v1038 = vsel %vm798, %v1033, %v1037
        %v1040 = vshrl.u32 %v411, 16
        %v1042 = vrot.slane %v1040, 4
        %v1043 = vshll.u32 %v411, 16
        %v1045 = vrot.slane %v1043, 5
        %v1046 = vor.u32 %v1042, %v1045
        %v1047 = vrot.slane %v1046, 4
        %v1049 = vshll.u32 %v412, 16
        %v1051 = vrot.slane %v1049, 5
        %v1052 = vsel %vm798, %v1047, %v1051
        %v1053 = vshrl.u32 %v412, 16
        %v1055 = vrot.slane %v1053, 4
        %v1056 = vor.u32 %v1055, %v1051
        %v1057 = vrot.slane %v1056, 4
        %v1059 = vshll.u32 %v413, 16
        %v1061 = vrot.slane %v1059, 5
        %v1062 = vsel %vm798, %v1057, %v1061
        %v1064 = vshrl.u32 %v414, 16
        %v1066 = vrot.slane %v1064, 4
        %v1067 = vshll.u32 %v414, 16
        %v1069 = vrot.slane %v1067, 5
        %v1070 = vor.u32 %v1066, %v1069
        %v1071 = vrot.slane %v1070, 4
        %v1073 = vshll.u32 %v415, 16
        %v1075 = vrot.slane %v1073, 5
        %v1076 = vsel %vm798, %v1071, %v1075
        %v1077 = vshrl.u32 %v415, 16
        %v1079 = vrot.slane %v1077, 4
        %v1080 = vor.u32 %v1079, %v1075
        %v1081 = vrot.slane %v1080, 4
        %v1083 = vshll.u32 %v416, 16
        %v1085 = vrot.slane %v1083, 5
        %v1086 = vsel %vm798, %v1081, %v1085
        %v1088 = vshrl.u32 %v417, 16
        %v1090 = vrot.slane %v1088, 4
        %v1091 = vshll.u32 %v417, 16
        %v1093 = vrot.slane %v1091, 5
        %v1094 = vor.u32 %v1090, %v1093
        %v1095 = vrot.slane %v1094, 4
        %v1097 = vshll.u32 %v418, 16
        %v1099 = vrot.slane %v1097, 5
        %v1100 = vsel %vm798, %v1095, %v1099
        %v1101 = vshrl.u32 %v418, 16
        %v1103 = vrot.slane %v1101, 4
        %v1104 = vor.u32 %v1103, %v1099
        %v1105 = vrot.slane %v1104, 4
        %v1107 = vshll.u32 %v419, 16
        %v1109 = vrot.slane %v1107, 5
        %v1110 = vsel %vm798, %v1105, %v1109
        %v1112 = vshrl.u32 %v420, 16
        %v1114 = vrot.slane %v1112, 4
        %v1115 = vshll.u32 %v420, 16
        %v1117 = vrot.slane %v1115, 5
        %v1118 = vor.u32 %v1114, %v1117
        %v1119 = vrot.slane %v1118, 4
        %v1121 = vshll.u32 %v421, 16
        %v1123 = vrot.slane %v1121, 5
        %v1124 = vsel %vm798, %v1119, %v1123
        %v1125 = vshrl.u32 %v421, 16
        %v1127 = vrot.slane %v1125, 4
        %v1128 = vor.u32 %v1127, %v1123
        %v1129 = vrot.slane %v1128, 4
        %v1131 = vshll.u32 %v422, 16
        %v1133 = vrot.slane %v1131, 5
        %v1134 = vsel %vm798, %v1129, %v1133
        %v1136 = vshrl.u32 %v423, 16
        %v1138 = vrot.slane %v1136, 4
        %v1139 = vshll.u32 %v423, 16
        %v1141 = vrot.slane %v1139, 5
        %v1142 = vor.u32 %v1138, %v1141
        %v1143 = vrot.slane %v1142, 4
        %v1145 = vshll.u32 %v424, 16
        %v1147 = vrot.slane %v1145, 5
        %v1148 = vsel %vm798, %v1143, %v1147
        %v1149 = vshrl.u32 %v424, 16
        %v1151 = vrot.slane %v1149, 4
        %v1152 = vor.u32 %v1151, %v1147
        %v1153 = vrot.slane %v1152, 4
        %v1155 = vshll.u32 %v425, 16
        %v1157 = vrot.slane %v1155, 5
        %v1158 = vsel %vm798, %v1153, %v1157
        %v1160 = vshrl.u32 %v426, 16
        %v1162 = vrot.slane %v1160, 4
        %v1163 = vshll.u32 %v426, 16
        %v1165 = vrot.slane %v1163, 5
        %v1166 = vor.u32 %v1162, %v1165
        %v1167 = vrot.slane %v1166, 4
        %v1169 = vshll.u32 %v427, 16
        %v1171 = vrot.slane %v1169, 5
        %v1172 = vsel %vm798, %v1167, %v1171
        %v1173 = vshrl.u32 %v427, 16
        %v1175 = vrot.slane %v1173, 4
        %v1176 = vor.u32 %v1175, %v1171
        %v1177 = vrot.slane %v1176, 4
        %v1179 = vshll.u32 %v428, 16
        %v1181 = vrot.slane %v1179, 5
        %v1182 = vsel %vm798, %v1177, %v1181
        %s1183 = scalar_lea.vmem [#allocation3], 32
        %v1184 = vld [vmem:[%s1183] sm:$0xf]
        %v1185 = vld [vmem:[%s1183 + $0x4] sm:$0xf]
        %v1186 = vld [vmem:[%s1183 + $0x8] sm:$0xf]
        %v1187 = vld [vmem:[%s1183 + $0xc] sm:$0xf]
        %v1188 = vld [vmem:[%s1183 + $0x10] sm:$0xf]
        %v1189 = vld [vmem:[%s1183 + $0x14] sm:$0xf]
        %v1190 = vld [vmem:[%s1183 + $0x18] sm:$0xf]
        %v1191 = vld [vmem:[%s1183 + $0x1c] sm:$0xf]
        %v1192 = vunpack.c.l.b16 %v812
        %v1193 = vunpack.c.l.b16 %v822
        %v1194 = vunpack.c.l.b16 %v836
        %v1195 = vunpack.c.l.b16 %v846
        %v1196 = vunpack.c.l.b16 %v860
        %v1197 = vunpack.c.l.b16 %v870
        %v1198 = vunpack.c.l.b16 %v884
        %v1199 = vunpack.c.l.b16 %v894
        %v1200 = vunpack.c.l.b16 %v908
        %v1201 = vunpack.c.l.b16 %v918
        %v1202 = vunpack.c.l.b16 %v932
        %v1203 = vunpack.c.l.b16 %v942
        %v1204 = vunpack.c.l.b16 %v956
        %v1205 = vunpack.c.l.b16 %v966
        %v1206 = vunpack.c.l.b16 %v980
        %v1207 = vunpack.c.l.b16 %v990
        %v1208 = vunpack.c.l.b16 %v1004
        %v1209 = vunpack.c.l.b16 %v1014
        %v1210 = vunpack.c.l.b16 %v1028
        %v1211 = vunpack.c.l.b16 %v1038
        %v1212 = vunpack.c.l.b16 %v1052
        %v1213 = vunpack.c.l.b16 %v1062
        %v1214 = vunpack.c.l.b16 %v1076
        %v1215 = vunpack.c.l.b16 %v1086
        %v1216 = vunpack.c.l.b16 %v1100
        %v1217 = vunpack.c.l.b16 %v1110
        %v1218 = vunpack.c.l.b16 %v1124
        %v1219 = vunpack.c.l.b16 %v1134
        %v1220 = vunpack.c.l.b16 %v1148
        %v1221 = vunpack.c.l.b16 %v1158
        %v1222 = vunpack.c.l.b16 %v1172
        %v1223 = vunpack.c.l.b16 %v1182
        %v1224 = vpack.c.b16 %v1193, %v1192
        %v1225 = vpack.c.b16 %v1195, %v1194
        %v1226 = vpack.c.b16 %v1197, %v1196
        %v1227 = vpack.c.b16 %v1199, %v1198
        %v1228 = vpack.c.b16 %v1201, %v1200
        %v1229 = vpack.c.b16 %v1203, %v1202
        %v1230 = vpack.c.b16 %v1205, %v1204
        %v1231 = vpack.c.b16 %v1207, %v1206
        %v1232 = vpack.c.b16 %v1209, %v1208
        %v1233 = vpack.c.b16 %v1211, %v1210
        %v1234 = vpack.c.b16 %v1213, %v1212
        %v1235 = vpack.c.b16 %v1215, %v1214
        %v1236 = vpack.c.b16 %v1217, %v1216
        %v1237 = vpack.c.b16 %v1219, %v1218
        %v1238 = vpack.c.b16 %v1221, %v1220
        %v1239 = vpack.c.b16 %v1223, %v1222
        %v1248 = vunpack.c.l.b16 %v1184
        %v1249 = vunpack.c.l.b16 %v1185
        %v1250 = vunpack.c.l.b16 %v1186
        %v1251 = vunpack.c.l.b16 %v1187
        %v1252 = vunpack.c.l.b16 %v1188
        %v1253 = vunpack.c.l.b16 %v1189
        %v1254 = vunpack.c.l.b16 %v1190
        %v1255 = vunpack.c.l.b16 %v1191
        %v1256 = vpack.c.b16 %v1249, %v1248
        %v1257 = vpack.c.b16 %v1251, %v1250
        %v1258 = vpack.c.b16 %v1253, %v1252
        %v1259 = vpack.c.b16 %v1255, %v1254
        %v1265 = vsel %vm554, %v1224, 0
        %v1268 = vsel %vm554, %v1225, 0
        %v1271 = vsel %vm554, %v1226, 0
        %v1274 = vsel %vm554, %v1227, 0
        %v1277 = vsel %vm554, %v1228, 0
        %v1280 = vsel %vm554, %v1229, 0
        %v1283 = vsel %vm554, %v1230, 0
        %v1286 = vsel %vm554, %v1231, 0
        %v1289 = vsel %vm554, %v1232, 0
        %v1292 = vsel %vm554, %v1233, 0
        %v1295 = vsel %vm554, %v1234, 0
        %v1298 = vsel %vm554, %v1235, 0
        %v1301 = vsel %vm554, %v1236, 0
        %v1304 = vsel %vm554, %v1237, 0
        %v1307 = vsel %vm554, %v1238, 0
        %v1310 = vsel %vm554, %v1239, 0
        %1312 = vmatprep.subr.bf16.mxu0 0
        %1313 = vmatpush1.bf16.msra.mxu0 %v1256
        %1314 = vmatprep.subr.bf16.mxu0 0
        %1315 = vmatpush1.bf16.msra.mxu0 %v1257
        %1316 = vmatprep.subr.bf16.mxu0 0
        %1317 = vmatpush1.bf16.msra.mxu0 %v1258
        %1318 = vmatprep.subr.bf16.mxu0 0
        %1319 = vmatpush1.bf16.msra.mxu0 %v1259
        %1320 = vmatprep.subr.bf16.mxu0 0
        %1321 = vmatpush1.bf16.msra.mxu0 0
        %1322 = vmatprep.subr.bf16.mxu0 0
        %1323 = vmatpush1.bf16.msra.mxu0 0
        %1324 = vmatprep.subr.bf16.mxu0 0
        %1325 = vmatpush1.bf16.msra.mxu0 0
        %1326 = vmatprep.subr.bf16.mxu0 0
        %1327 = vmatpush1.bf16.msra.mxu0 0
        %1328 = vmatprep.subr.bf16.mxu0 0
        %1329 = vmatpush1.bf16.msra.mxu0 0
        %1330 = vmatprep.subr.bf16.mxu0 0
        %1331 = vmatpush1.bf16.msra.mxu0 0
        %1332 = vmatprep.subr.bf16.mxu0 0
        %1333 = vmatpush1.bf16.msra.mxu0 0
        %1334 = vmatprep.subr.bf16.mxu0 0
        %1335 = vmatpush1.bf16.msra.mxu0 0
        %1336 = vmatprep.subr.bf16.mxu0 0
        %1337 = vmatpush1.bf16.msra.mxu0 0
        %1338 = vmatprep.subr.bf16.mxu0 0
        %1339 = vmatpush1.bf16.msra.mxu0 0
        %1340 = vmatprep.subr.bf16.mxu0 0
        %1341 = vmatpush1.bf16.msra.mxu0 0
        %1342 = vmatprep.subr.bf16.mxu0 0
        %1343 = vmatpush1.bf16.msra.mxu0 0
        %1344 = vmatprep.mubr.bf16.mxu0 0
        %1345 = vmatmul.mubr.bf16.gmra.mrb[0].mxu0 %v1265
        %v1346 = vpop.f32.mrb[0].mxu0
        %v1347 = vadd.f32 0.0, %v1346
        %v1348 = vpop.f32.mrb[0].mxu0
        %v1349 = vpop.f32.mrb[0].mxu0
        %v1350 = vadd.f32 0.0, %v1349
        %v1351 = vpop.f32.mrb[0].mxu0
        %1352 = vmatprep.mubr.bf16.mxu0 0
        %1353 = vmatmul.mubr.bf16.gmra.mrb[0].mxu0 %v1268
        %v1354 = vpop.f32.mrb[0].mxu0
        %v1355 = vadd.f32 0.0, %v1354
        %v1356 = vpop.f32.mrb[0].mxu0
        %v1357 = vpop.f32.mrb[0].mxu0
        %v1358 = vadd.f32 0.0, %v1357
        %v1359 = vpop.f32.mrb[0].mxu0
        %1360 = vmatprep.mubr.bf16.mxu0 0
        %1361 = vmatmul.mubr.bf16.gmra.mrb[0].mxu0 %v1271
        %v1362 = vpop.f32.mrb[0].mxu0
        %v1363 = vadd.f32 0.0, %v1362
        %v1364 = vpop.f32.mrb[0].mxu0
        %v1365 = vpop.f32.mrb[0].mxu0
        %v1366 = vadd.f32 0.0, %v1365
        %v1367 = vpop.f32.mrb[0].mxu0
        %1368 = vmatprep.mubr.bf16.mxu0 0
        %1369 = vmatmul.mubr.bf16.gmra.mrb[0].mxu0 %v1274
        %v1370 = vpop.f32.mrb[0].mxu0
        %v1371 = vadd.f32 0.0, %v1370
        %v1372 = vpop.f32.mrb[0].mxu0
        %v1373 = vpop.f32.mrb[0].mxu0
        %v1374 = vadd.f32 0.0, %v1373
        %v1375 = vpop.f32.mrb[0].mxu0
        %1376 = vmatprep.mubr.bf16.mxu0 0
        %1377 = vmatmul.mubr.bf16.gmra.mrb[0].mxu0 %v1277
        %v1378 = vpop.f32.mrb[0].mxu0
        %v1379 = vadd.f32 0.0, %v1378
        %v1380 = vpop.f32.mrb[0].mxu0
        %v1381 = vpop.f32.mrb[0].mxu0
        %v1382 = vadd.f32 0.0, %v1381
        %v1383 = vpop.f32.mrb[0].mxu0
        %1384 = vmatprep.mubr.bf16.mxu0 0
        %1385 = vmatmul.mubr.bf16.gmra.mrb[0].mxu0 %v1280
        %v1386 = vpop.f32.mrb[0].mxu0
        %v1387 = vadd.f32 0.0, %v1386
        %v1388 = vpop.f32.mrb[0].mxu0
        %v1389 = vpop.f32.mrb[0].mxu0
        %v1390 = vadd.f32 0.0, %v1389
        %v1391 = vpop.f32.mrb[0].mxu0
        %1392 = vmatprep.mubr.bf16.mxu0 0
        %1393 = vmatmul.mubr.bf16.gmra.mrb[0].mxu0 %v1283
        %v1394 = vpop.f32.mrb[0].mxu0
        %v1395 = vadd.f32 0.0, %v1394
        %v1396 = vpop.f32.mrb[0].mxu0
        %v1397 = vpop.f32.mrb[0].mxu0
        %v1398 = vadd.f32 0.0, %v1397
        %v1399 = vpop.f32.mrb[0].mxu0
        %1400 = vmatprep.mubr.bf16.mxu0 0
        %1401 = vmatmul.mubr.bf16.gmra.mrb[0].mxu0 %v1286
        %v1402 = vpop.f32.mrb[0].mxu0
        %v1403 = vadd.f32 0.0, %v1402
        %v1404 = vpop.f32.mrb[0].mxu0
        %v1405 = vpop.f32.mrb[0].mxu0
        %v1406 = vadd.f32 0.0, %v1405
        %v1407 = vpop.f32.mrb[0].mxu0
        %1408 = vmatprep.mubr.bf16.mxu0 0
        %1409 = vmatmul.mubr.bf16.gmra.mrb[0].mxu0 %v1289
        %v1410 = vpop.f32.mrb[0].mxu0
        %v1411 = vadd.f32 0.0, %v1410
        %v1412 = vpop.f32.mrb[0].mxu0
        %v1413 = vpop.f32.mrb[0].mxu0
        %v1414 = vadd.f32 0.0, %v1413
        %v1415 = vpop.f32.mrb[0].mxu0
        %1416 = vmatprep.mubr.bf16.mxu0 0
        %1417 = vmatmul.mubr.bf16.gmra.mrb[0].mxu0 %v1292
        %v1418 = vpop.f32.mrb[0].mxu0
        %v1419 = vadd.f32 0.0, %v1418
        %v1420 = vpop.f32.mrb[0].mxu0
        %v1421 = vpop.f32.mrb[0].mxu0
        %v1422 = vadd.f32 0.0, %v1421
        %v1423 = vpop.f32.mrb[0].mxu0
        %1424 = vmatprep.mubr.bf16.mxu0 0
        %1425 = vmatmul.mubr.bf16.gmra.mrb[0].mxu0 %v1295
        %v1426 = vpop.f32.mrb[0].mxu0
        %v1427 = vadd.f32 0.0, %v1426
        %v1428 = vpop.f32.mrb[0].mxu0
        %v1429 = vpop.f32.mrb[0].mxu0
        %v1430 = vadd.f32 0.0, %v1429
        %v1431 = vpop.f32.mrb[0].mxu0
        %1432 = vmatprep.mubr.bf16.mxu0 0
        %1433 = vmatmul.mubr.bf16.gmra.mrb[0].mxu0 %v1298
        %v1434 = vpop.f32.mrb[0].mxu0
        %v1435 = vadd.f32 0.0, %v1434
        %v1436 = vpop.f32.mrb[0].mxu0
        %v1437 = vpop.f32.mrb[0].mxu0
        %v1438 = vadd.f32 0.0, %v1437
        %v1439 = vpop.f32.mrb[0].mxu0
        %1440 = vmatprep.mubr.bf16.mxu0 0
        %1441 = vmatmul.mubr.bf16.gmra.mrb[0].mxu0 %v1301
        %v1442 = vpop.f32.mrb[0].mxu0
        %v1443 = vadd.f32 0.0, %v1442
        %v1444 = vpop.f32.mrb[0].mxu0
        %v1445 = vpop.f32.mrb[0].mxu0
        %v1446 = vadd.f32 0.0, %v1445
        %v1447 = vpop.f32.mrb[0].mxu0
        %1448 = vmatprep.mubr.bf16.mxu0 0
        %1449 = vmatmul.mubr.bf16.gmra.mrb[0].mxu0 %v1304
        %v1450 = vpop.f32.mrb[0].mxu0
        %v1451 = vadd.f32 0.0, %v1450
        %v1452 = vpop.f32.mrb[0].mxu0
        %v1453 = vpop.f32.mrb[0].mxu0
        %v1454 = vadd.f32 0.0, %v1453
        %v1455 = vpop.f32.mrb[0].mxu0
        %1456 = vmatprep.mubr.bf16.mxu0 0
        %1457 = vmatmul.mubr.bf16.gmra.mrb[0].mxu0 %v1307
        %v1458 = vpop.f32.mrb[0].mxu0
        %v1459 = vadd.f32 0.0, %v1458
        %v1460 = vpop.f32.mrb[0].mxu0
        %v1461 = vpop.f32.mrb[0].mxu0
        %v1462 = vadd.f32 0.0, %v1461
        %v1463 = vpop.f32.mrb[0].mxu0
        %1464 = vmatprep.mubr.bf16.mxu0 0
        %1465 = vmatmul.mubr.bf16.gmra.mrb[0].mxu0 %v1310
        %v1466 = vpop.f32.mrb[0].mxu0
        %v1467 = vadd.f32 0.0, %v1466
        %v1468 = vpop.f32.mrb[0].mxu0
        %v1469 = vpop.f32.mrb[0].mxu0
        %v1470 = vadd.f32 0.0, %v1469
        %v1471 = vpop.f32.mrb[0].mxu0
        %1472 = vdwg.mxu0
        %v1473 = vadd.f32 %v764, %v1347
        %v1474 = vadd.f32 %v765, %v1350
        %v1475 = vadd.f32 %v766, %v1355
        %v1476 = vadd.f32 %v767, %v1358
        %v1477 = vadd.f32 %v768, %v1363
        %v1478 = vadd.f32 %v769, %v1366
        %v1479 = vadd.f32 %v770, %v1371
        %v1480 = vadd.f32 %v771, %v1374
        %v1481 = vadd.f32 %v772, %v1379
        %v1482 = vadd.f32 %v773, %v1382
        %v1483 = vadd.f32 %v774, %v1387
        %v1484 = vadd.f32 %v775, %v1390
        %v1485 = vadd.f32 %v776, %v1395
        %v1486 = vadd.f32 %v777, %v1398
        %v1487 = vadd.f32 %v778, %v1403
        %v1488 = vadd.f32 %v779, %v1406
        %v1489 = vadd.f32 %v780, %v1411
        %v1490 = vadd.f32 %v781, %v1414
        %v1491 = vadd.f32 %v782, %v1419
        %v1492 = vadd.f32 %v783, %v1422
        %v1493 = vadd.f32 %v784, %v1427
        %v1494 = vadd.f32 %v785, %v1430
        %v1495 = vadd.f32 %v786, %v1435
        %v1496 = vadd.f32 %v787, %v1438
        %v1497 = vadd.f32 %v788, %v1443
        %v1498 = vadd.f32 %v789, %v1446
        %v1499 = vadd.f32 %v790, %v1451
        %v1500 = vadd.f32 %v791, %v1454
        %v1501 = vadd.f32 %v792, %v1459
        %v1502 = vadd.f32 %v793, %v1462
        %v1503 = vadd.f32 %v794, %v1467
        %v1504 = vadd.f32 %v795, %v1470
        %vm1521 = vcmask 1042432
        %vm1522 = vcmask 1046532
        %vm1523 = vmor %vm1521, %vm1522
        %v1524 = vrot.slane %v381, 5
        %v1525 = vrot.slane %v1524, 4
        %v1526 = vrot.slane %v382, 5
        %v1527 = vsel %vm1523, %v1525, %v1526
        %v1528 = vrot.slane %v1526, 4
        %v1529 = vrot.slane %v383, 5
        %v1530 = vsel %vm1523, %v1528, %v1529
        %v1531 = vrot.slane %v384, 5
        %v1532 = vrot.slane %v1531, 4
        %v1533 = vrot.slane %v385, 5
        %v1534 = vsel %vm1523, %v1532, %v1533
        %v1535 = vrot.slane %v1533, 4
        %v1536 = vrot.slane %v386, 5
        %v1537 = vsel %vm1523, %v1535, %v1536
        %v1538 = vrot.slane %v387, 5
        %v1539 = vrot.slane %v1538, 4
        %v1540 = vrot.slane %v388, 5
        %v1541 = vsel %vm1523, %v1539, %v1540
        %v1542 = vrot.slane %v1540, 4
        %v1543 = vrot.slane %v389, 5
        %v1544 = vsel %vm1523, %v1542, %v1543
        %v1545 = vrot.slane %v390, 5
        %v1546 = vrot.slane %v1545, 4
        %v1547 = vrot.slane %v391, 5
        %v1548 = vsel %vm1523, %v1546, %v1547
        %v1549 = vrot.slane %v1547, 4
        %v1550 = vrot.slane %v392, 5
        %v1551 = vsel %vm1523, %v1549, %v1550
        %v1552 = vrot.slane %v393, 5
        %v1553 = vrot.slane %v1552, 4
        %v1554 = vrot.slane %v394, 5
        %v1555 = vsel %vm1523, %v1553, %v1554
        %v1556 = vrot.slane %v1554, 4
        %v1557 = vrot.slane %v395, 5
        %v1558 = vsel %vm1523, %v1556, %v1557
        %v1559 = vrot.slane %v396, 5
        %v1560 = vrot.slane %v1559, 4
        %v1561 = vrot.slane %v397, 5
        %v1562 = vsel %vm1523, %v1560, %v1561
        %v1563 = vrot.slane %v1561, 4
        %v1564 = vrot.slane %v398, 5
        %v1565 = vsel %vm1523, %v1563, %v1564
        %v1566 = vrot.slane %v399, 5
        %v1567 = vrot.slane %v1566, 4
        %v1568 = vrot.slane %v400, 5
        %v1569 = vsel %vm1523, %v1567, %v1568
        %v1570 = vrot.slane %v1568, 4
        %v1571 = vrot.slane %v401, 5
        %v1572 = vsel %vm1523, %v1570, %v1571
        %v1573 = vrot.slane %v402, 5
        %v1574 = vrot.slane %v1573, 4
        %v1575 = vrot.slane %v403, 5
        %v1576 = vsel %vm1523, %v1574, %v1575
        %v1577 = vrot.slane %v1575, 4
        %v1578 = vrot.slane %v404, 5
        %v1579 = vsel %vm1523, %v1577, %v1578
        %v1580 = vrot.slane %v405, 5
        %v1581 = vrot.slane %v1580, 4
        %v1582 = vrot.slane %v406, 5
        %v1583 = vsel %vm1523, %v1581, %v1582
        %v1584 = vrot.slane %v1582, 4
        %v1585 = vrot.slane %v407, 5
        %v1586 = vsel %vm1523, %v1584, %v1585
        %v1587 = vrot.slane %v408, 5
        %v1588 = vrot.slane %v1587, 4
        %v1589 = vrot.slane %v409, 5
        %v1590 = vsel %vm1523, %v1588, %v1589
        %v1591 = vrot.slane %v1589, 4
        %v1592 = vrot.slane %v410, 5
        %v1593 = vsel %vm1523, %v1591, %v1592
        %v1594 = vrot.slane %v411, 5
        %v1595 = vrot.slane %v1594, 4
        %v1596 = vrot.slane %v412, 5
        %v1597 = vsel %vm1523, %v1595, %v1596
        %v1598 = vrot.slane %v1596, 4
        %v1599 = vrot.slane %v413, 5
        %v1600 = vsel %vm1523, %v1598, %v1599
        %v1601 = vrot.slane %v414, 5
        %v1602 = vrot.slane %v1601, 4
        %v1603 = vrot.slane %v415, 5
        %v1604 = vsel %vm1523, %v1602, %v1603
        %v1605 = vrot.slane %v1603, 4
        %v1606 = vrot.slane %v416, 5
        %v1607 = vsel %vm1523, %v1605, %v1606
        %v1608 = vrot.slane %v417, 5
        %v1609 = vrot.slane %v1608, 4
        %v1610 = vrot.slane %v418, 5
        %v1611 = vsel %vm1523, %v1609, %v1610
        %v1612 = vrot.slane %v1610, 4
        %v1613 = vrot.slane %v419, 5
        %v1614 = vsel %vm1523, %v1612, %v1613
        %v1615 = vrot.slane %v420, 5
        %v1616 = vrot.slane %v1615, 4
        %v1617 = vrot.slane %v421, 5
        %v1618 = vsel %vm1523, %v1616, %v1617
        %v1619 = vrot.slane %v1617, 4
        %v1620 = vrot.slane %v422, 5
        %v1621 = vsel %vm1523, %v1619, %v1620
        %v1622 = vrot.slane %v423, 5
        %v1623 = vrot.slane %v1622, 4
        %v1624 = vrot.slane %v424, 5
        %v1625 = vsel %vm1523, %v1623, %v1624
        %v1626 = vrot.slane %v1624, 4
        %v1627 = vrot.slane %v425, 5
        %v1628 = vsel %vm1523, %v1626, %v1627
        %v1629 = vrot.slane %v426, 5
        %v1630 = vrot.slane %v1629, 4
        %v1631 = vrot.slane %v427, 5
        %v1632 = vsel %vm1523, %v1630, %v1631
        %v1633 = vrot.slane %v1631, 4
        %v1634 = vrot.slane %v428, 5
        %v1635 = vsel %vm1523, %v1633, %v1634
        %s1636 = scalar_lea.vmem [#allocation3], 64
        %v1637 = vld [vmem:[%s1636] sm:$0xf]
        %v1638 = vld [vmem:[%s1636 + $0x4] sm:$0xf]
        %v1639 = vld [vmem:[%s1636 + $0x8] sm:$0xf]
        %v1640 = vld [vmem:[%s1636 + $0xc] sm:$0xf]
        %v1641 = vld [vmem:[%s1636 + $0x10] sm:$0xf]
        %v1642 = vld [vmem:[%s1636 + $0x14] sm:$0xf]
        %v1643 = vld [vmem:[%s1636 + $0x18] sm:$0xf]
        %v1644 = vld [vmem:[%s1636 + $0x1c] sm:$0xf]
        %v1645 = vunpack.c.l.b16 %v1527
        %v1646 = vunpack.c.l.b16 %v1530
        %v1647 = vunpack.c.l.b16 %v1534
        %v1648 = vunpack.c.l.b16 %v1537
        %v1649 = vunpack.c.l.b16 %v1541
        %v1650 = vunpack.c.l.b16 %v1544
        %v1651 = vunpack.c.l.b16 %v1548
        %v1652 = vunpack.c.l.b16 %v1551
        %v1653 = vunpack.c.l.b16 %v1555
        %v1654 = vunpack.c.l.b16 %v1558
        %v1655 = vunpack.c.l.b16 %v1562
        %v1656 = vunpack.c.l.b16 %v1565
        %v1657 = vunpack.c.l.b16 %v1569
        %v1658 = vunpack.c.l.b16 %v1572
        %v1659 = vunpack.c.l.b16 %v1576
        %v1660 = vunpack.c.l.b16 %v1579
        %v1661 = vunpack.c.l.b16 %v1583
        %v1662 = vunpack.c.l.b16 %v1586
        %v1663 = vunpack.c.l.b16 %v1590
        %v1664 = vunpack.c.l.b16 %v1593
        %v1665 = vunpack.c.l.b16 %v1597
        %v1666 = vunpack.c.l.b16 %v1600
        %v1667 = vunpack.c.l.b16 %v1604
        %v1668 = vunpack.c.l.b16 %v1607
        %v1669 = vunpack.c.l.b16 %v1611
        %v1670 = vunpack.c.l.b16 %v1614
        %v1671 = vunpack.c.l.b16 %v1618
        %v1672 = vunpack.c.l.b16 %v1621
        %v1673 = vunpack.c.l.b16 %v1625
        %v1674 = vunpack.c.l.b16 %v1628
        %v1675 = vunpack.c.l.b16 %v1632
        %v1676 = vunpack.c.l.b16 %v1635
        %v1677 = vpack.c.b16 %v1646, %v1645
        %v1678 = vpack.c.b16 %v1648, %v1647
        %v1679 = vpack.c.b16 %v1650, %v1649
        %v1680 = vpack.c.b16 %v1652, %v1651
        %v1681 = vpack.c.b16 %v1654, %v1653
        %v1682 = vpack.c.b16 %v1656, %v1655
        %v1683 = vpack.c.b16 %v1658, %v1657
        %v1684 = vpack.c.b16 %v1660, %v1659
        %v1685 = vpack.c.b16 %v1662, %v1661
        %v1686 = vpack.c.b16 %v1664, %v1663
        %v1687 = vpack.c.b16 %v1666, %v1665
        %v1688 = vpack.c.b16 %v1668, %v1667
        %v1689 = vpack.c.b16 %v1670, %v1669
        %v1690 = vpack.c.b16 %v1672, %v1671
        %v1691 = vpack.c.b16 %v1674, %v1673
        %v1692 = vpack.c.b16 %v1676, %v1675
        %v1701 = vunpack.c.l.b16 %v1637
        %v1702 = vunpack.c.l.b16 %v1638
        %v1703 = vunpack.c.l.b16 %v1639
        %v1704 = vunpack.c.l.b16 %v1640
        %v1705 = vunpack.c.l.b16 %v1641
        %v1706 = vunpack.c.l.b16 %v1642
        %v1707 = vunpack.c.l.b16 %v1643
        %v1708 = vunpack.c.l.b16 %v1644
        %v1709 = vpack.c.b16 %v1702, %v1701
        %v1710 = vpack.c.b16 %v1704, %v1703
        %v1711 = vpack.c.b16 %v1706, %v1705
        %v1712 = vpack.c.b16 %v1708, %v1707
        %v1718 = vsel %vm554, %v1677, 0
        %v1721 = vsel %vm554, %v1678, 0
        %v1724 = vsel %vm554, %v1679, 0
        %v1727 = vsel %vm554, %v1680, 0
        %v1730 = vsel %vm554, %v1681, 0
        %v1733 = vsel %vm554, %v1682, 0
        %v1736 = vsel %vm554, %v1683, 0
        %v1739 = vsel %vm554, %v1684, 0
        %v1742 = vsel %vm554, %v1685, 0
        %v1745 = vsel %vm554, %v1686, 0
        %v1748 = vsel %vm554, %v1687, 0
        %v1751 = vsel %vm554, %v1688, 0
        %v1754 = vsel %vm554, %v1689, 0
        %v1757 = vsel %vm554, %v1690, 0
        %v1760 = vsel %vm554, %v1691, 0
        %v1763 = vsel %vm554, %v1692, 0
        %1765 = vmatprep.subr.bf16.mxu0 0
        %1766 = vmatpush1.bf16.msra.mxu0 %v1709
        %1767 = vmatprep.subr.bf16.mxu0 0
        %1768 = vmatpush1.bf16.msra.mxu0 %v1710
        %1769 = vmatprep.subr.bf16.mxu0 0
        %1770 = vmatpush1.bf16.msra.mxu0 %v1711
        %1771 = vmatprep.subr.bf16.mxu0 0
        %1772 = vmatpush1.bf16.msra.mxu0 %v1712
        %1773 = vmatprep.subr.bf16.mxu0 0
        %1774 = vmatpush1.bf16.msra.mxu0 0
        %1775 = vmatprep.subr.bf16.mxu0 0
        %1776 = vmatpush1.bf16.msra.mxu0 0
        %1777 = vmatprep.subr.bf16.mxu0 0
        %1778 = vmatpush1.bf16.msra.mxu0 0
        %1779 = vmatprep.subr.bf16.mxu0 0
        %1780 = vmatpush1.bf16.msra.mxu0 0
        %1781 = vmatprep.subr.bf16.mxu0 0
        %1782 = vmatpush1.bf16.msra.mxu0 0
        %1783 = vmatprep.subr.bf16.mxu0 0
        %1784 = vmatpush1.bf16.msra.mxu0 0
        %1785 = vmatprep.subr.bf16.mxu0 0
        %1786 = vmatpush1.bf16.msra.mxu0 0
        %1787 = vmatprep.subr.bf16.mxu0 0
        %1788 = vmatpush1.bf16.msra.mxu0 0
        %1789 = vmatprep.subr.bf16.mxu0 0
        %1790 = vmatpush1.bf16.msra.mxu0 0
        %1791 = vmatprep.subr.bf16.mxu0 0
        %1792 = vmatpush1.bf16.msra.mxu0 0
        %1793 = vmatprep.subr.bf16.mxu0 0
        %1794 = vmatpush1.bf16.msra.mxu0 0
        %1795 = vmatprep.subr.bf16.mxu0 0
        %1796 = vmatpush1.bf16.msra.mxu0 0
        %1797 = vmatprep.mubr.bf16.mxu0 0
        %1798 = vmatmul.mubr.bf16.gmra.mrb[0].mxu0 %v1718
        %v1799 = vpop.f32.mrb[0].mxu0
        %v1800 = vadd.f32 0.0, %v1799
        %v1801 = vpop.f32.mrb[0].mxu0
        %v1802 = vpop.f32.mrb[0].mxu0
        %v1803 = vadd.f32 0.0, %v1802
        %v1804 = vpop.f32.mrb[0].mxu0
        %1805 = vmatprep.mubr.bf16.mxu0 0
        %1806 = vmatmul.mubr.bf16.gmra.mrb[0].mxu0 %v1721
        %v1807 = vpop.f32.mrb[0].mxu0
        %v1808 = vadd.f32 0.0, %v1807
        %v1809 = vpop.f32.mrb[0].mxu0
        %v1810 = vpop.f32.mrb[0].mxu0
        %v1811 = vadd.f32 0.0, %v1810
        %v1812 = vpop.f32.mrb[0].mxu0
        %1813 = vmatprep.mubr.bf16.mxu0 0
        %1814 = vmatmul.mubr.bf16.gmra.mrb[0].mxu0 %v1724
        %v1815 = vpop.f32.mrb[0].mxu0
        %v1816 = vadd.f32 0.0, %v1815
        %v1817 = vpop.f32.mrb[0].mxu0
        %v1818 = vpop.f32.mrb[0].mxu0
        %v1819 = vadd.f32 0.0, %v1818
        %v1820 = vpop.f32.mrb[0].mxu0
        %1821 = vmatprep.mubr.bf16.mxu0 0
        %1822 = vmatmul.mubr.bf16.gmra.mrb[0].mxu0 %v1727
        %v1823 = vpop.f32.mrb[0].mxu0
        %v1824 = vadd.f32 0.0, %v1823
        %v1825 = vpop.f32.mrb[0].mxu0
        %v1826 = vpop.f32.mrb[0].mxu0
        %v1827 = vadd.f32 0.0, %v1826
        %v1828 = vpop.f32.mrb[0].mxu0
        %1829 = vmatprep.mubr.bf16.mxu0 0
        %1830 = vmatmul.mubr.bf16.gmra.mrb[0].mxu0 %v1730
        %v1831 = vpop.f32.mrb[0].mxu0
        %v1832 = vadd.f32 0.0, %v1831
        %v1833 = vpop.f32.mrb[0].mxu0
        %v1834 = vpop.f32.mrb[0].mxu0
        %v1835 = vadd.f32 0.0, %v1834
        %v1836 = vpop.f32.mrb[0].mxu0
        %1837 = vmatprep.mubr.bf16.mxu0 0
        %1838 = vmatmul.mubr.bf16.gmra.mrb[0].mxu0 %v1733
        %v1839 = vpop.f32.mrb[0].mxu0
        %v1840 = vadd.f32 0.0, %v1839
        %v1841 = vpop.f32.mrb[0].mxu0
        %v1842 = vpop.f32.mrb[0].mxu0
        %v1843 = vadd.f32 0.0, %v1842
        %v1844 = vpop.f32.mrb[0].mxu0
        %1845 = vmatprep.mubr.bf16.mxu0 0
        %1846 = vmatmul.mubr.bf16.gmra.mrb[0].mxu0 %v1736
        %v1847 = vpop.f32.mrb[0].mxu0
        %v1848 = vadd.f32 0.0, %v1847
        %v1849 = vpop.f32.mrb[0].mxu0
        %v1850 = vpop.f32.mrb[0].mxu0
        %v1851 = vadd.f32 0.0, %v1850
        %v1852 = vpop.f32.mrb[0].mxu0
        %1853 = vmatprep.mubr.bf16.mxu0 0
        %1854 = vmatmul.mubr.bf16.gmra.mrb[0].mxu0 %v1739
        %v1855 = vpop.f32.mrb[0].mxu0
        %v1856 = vadd.f32 0.0, %v1855
        %v1857 = vpop.f32.mrb[0].mxu0
        %v1858 = vpop.f32.mrb[0].mxu0
        %v1859 = vadd.f32 0.0, %v1858
        %v1860 = vpop.f32.mrb[0].mxu0
        %1861 = vmatprep.mubr.bf16.mxu0 0
        %1862 = vmatmul.mubr.bf16.gmra.mrb[0].mxu0 %v1742
        %v1863 = vpop.f32.mrb[0].mxu0
        %v1864 = vadd.f32 0.0, %v1863
        %v1865 = vpop.f32.mrb[0].mxu0
        %v1866 = vpop.f32.mrb[0].mxu0
        %v1867 = vadd.f32 0.0, %v1866
        %v1868 = vpop.f32.mrb[0].mxu0
        %1869 = vmatprep.mubr.bf16.mxu0 0
        %1870 = vmatmul.mubr.bf16.gmra.mrb[0].mxu0 %v1745
        %v1871 = vpop.f32.mrb[0].mxu0
        %v1872 = vadd.f32 0.0, %v1871
        %v1873 = vpop.f32.mrb[0].mxu0
        %v1874 = vpop.f32.mrb[0].mxu0
        %v1875 = vadd.f32 0.0, %v1874
        %v1876 = vpop.f32.mrb[0].mxu0
        %1877 = vmatprep.mubr.bf16.mxu0 0
        %1878 = vmatmul.mubr.bf16.gmra.mrb[0].mxu0 %v1748
        %v1879 = vpop.f32.mrb[0].mxu0
        %v1880 = vadd.f32 0.0, %v1879
        %v1881 = vpop.f32.mrb[0].mxu0
        %v1882 = vpop.f32.mrb[0].mxu0
        %v1883 = vadd.f32 0.0, %v1882
        %v1884 = vpop.f32.mrb[0].mxu0
        %1885 = vmatprep.mubr.bf16.mxu0 0
        %1886 = vmatmul.mubr.bf16.gmra.mrb[0].mxu0 %v1751
        %v1887 = vpop.f32.mrb[0].mxu0
        %v1888 = vadd.f32 0.0, %v1887
        %v1889 = vpop.f32.mrb[0].mxu0
        %v1890 = vpop.f32.mrb[0].mxu0
        %v1891 = vadd.f32 0.0, %v1890
        %v1892 = vpop.f32.mrb[0].mxu0
        %1893 = vmatprep.mubr.bf16.mxu0 0
        %1894 = vmatmul.mubr.bf16.gmra.mrb[0].mxu0 %v1754
        %v1895 = vpop.f32.mrb[0].mxu0
        %v1896 = vadd.f32 0.0, %v1895
        %v1897 = vpop.f32.mrb[0].mxu0
        %v1898 = vpop.f32.mrb[0].mxu0
        %v1899 = vadd.f32 0.0, %v1898
        %v1900 = vpop.f32.mrb[0].mxu0
        %1901 = vmatprep.mubr.bf16.mxu0 0
        %1902 = vmatmul.mubr.bf16.gmra.mrb[0].mxu0 %v1757
        %v1903 = vpop.f32.mrb[0].mxu0
        %v1904 = vadd.f32 0.0, %v1903
        %v1905 = vpop.f32.mrb[0].mxu0
        %v1906 = vpop.f32.mrb[0].mxu0
        %v1907 = vadd.f32 0.0, %v1906
        %v1908 = vpop.f32.mrb[0].mxu0
        %1909 = vmatprep.mubr.bf16.mxu0 0
        %1910 = vmatmul.mubr.bf16.gmra.mrb[0].mxu0 %v1760
        %v1911 = vpop.f32.mrb[0].mxu0
        %v1912 = vadd.f32 0.0, %v1911
        %v1913 = vpop.f32.mrb[0].mxu0
        %v1914 = vpop.f32.mrb[0].mxu0
        %v1915 = vadd.f32 0.0, %v1914
        %v1916 = vpop.f32.mrb[0].mxu0
        %1917 = vmatprep.mubr.bf16.mxu0 0
        %1918 = vmatmul.mubr.bf16.gmra.mrb[0].mxu0 %v1763
        %v1919 = vpop.f32.mrb[0].mxu0
        %v1920 = vadd.f32 0.0, %v1919
        %v1921 = vpop.f32.mrb[0].mxu0
        %v1922 = vpop.f32.mrb[0].mxu0
        %v1923 = vadd.f32 0.0, %v1922
        %v1924 = vpop.f32.mrb[0].mxu0
        %1925 = vdwg.mxu0
        %v1926 = vadd.f32 %v1473, %v1800
        %v1927 = vadd.f32 %v1474, %v1803
        %v1928 = vadd.f32 %v1475, %v1808
        %v1929 = vadd.f32 %v1476, %v1811
        %v1930 = vadd.f32 %v1477, %v1816
        %v1931 = vadd.f32 %v1478, %v1819
        %v1932 = vadd.f32 %v1479, %v1824
        %v1933 = vadd.f32 %v1480, %v1827
        %v1934 = vadd.f32 %v1481, %v1832
        %v1935 = vadd.f32 %v1482, %v1835
        %v1936 = vadd.f32 %v1483, %v1840
        %v1937 = vadd.f32 %v1484, %v1843
        %v1938 = vadd.f32 %v1485, %v1848
        %v1939 = vadd.f32 %v1486, %v1851
        %v1940 = vadd.f32 %v1487, %v1856
        %v1941 = vadd.f32 %v1488, %v1859
        %v1942 = vadd.f32 %v1489, %v1864
        %v1943 = vadd.f32 %v1490, %v1867
        %v1944 = vadd.f32 %v1491, %v1872
        %v1945 = vadd.f32 %v1492, %v1875
        %v1946 = vadd.f32 %v1493, %v1880
        %v1947 = vadd.f32 %v1494, %v1883
        %v1948 = vadd.f32 %v1495, %v1888
        %v1949 = vadd.f32 %v1496, %v1891
        %v1950 = vadd.f32 %v1497, %v1896
        %v1951 = vadd.f32 %v1498, %v1899
        %v1952 = vadd.f32 %v1499, %v1904
        %v1953 = vadd.f32 %v1500, %v1907
        %v1954 = vadd.f32 %v1501, %v1912
        %v1955 = vadd.f32 %v1502, %v1915
        %v1956 = vadd.f32 %v1503, %v1920
        %v1957 = vadd.f32 %v1504, %v1923
        %s1958 = scalar_lea.vmem [#allocation3], 96
        %v1959 = vld [vmem:[%s1958] sm:$0xf]
        %v1960 = vld [vmem:[%s1958 + $0x4] sm:$0xf]
        %v1961 = vld [vmem:[%s1958 + $0x8] sm:$0xf]
        %v1962 = vld [vmem:[%s1958 + $0xc] sm:$0xf]
        %v1963 = vld [vmem:[%s1958 + $0x10] sm:$0xf]
        %v1964 = vld [vmem:[%s1958 + $0x14] sm:$0xf]
        %v1965 = vld [vmem:[%s1958 + $0x18] sm:$0xf]
        %v1966 = vld [vmem:[%s1958 + $0x1c] sm:$0xf]
        %v1969 = vunpack.c.l.b16 %v429
        %v1970 = vunpack.c.l.b16 %v430
        %v1971 = vpack.c.b16 %v1970, %v1969
        %v1980 = vunpack.c.l.b16 %v1959
        %v1981 = vunpack.c.l.b16 %v1960
        %v1982 = vunpack.c.l.b16 %v1961
        %v1983 = vunpack.c.l.b16 %v1962
        %v1984 = vunpack.c.l.b16 %v1963
        %v1985 = vunpack.c.l.b16 %v1964
        %v1986 = vunpack.c.l.b16 %v1965
        %v1987 = vunpack.c.l.b16 %v1966
        %v1988 = vpack.c.b16 %v1981, %v1980
        %v1989 = vpack.c.b16 %v1983, %v1982
        %v1990 = vpack.c.b16 %v1985, %v1984
        %v1991 = vpack.c.b16 %v1987, %v1986
        %v1997 = vsel %vm554, %v1971, 0
        %1999 = vmatprep.subr.bf16.mxu0 0
        %2000 = vmatpush1.bf16.msra.mxu0 %v1988
        %2001 = vmatprep.subr.bf16.mxu0 0
        %2002 = vmatpush1.bf16.msra.mxu0 %v1989
        %2003 = vmatprep.subr.bf16.mxu0 0
        %2004 = vmatpush1.bf16.msra.mxu0 %v1990
        %2005 = vmatprep.subr.bf16.mxu0 0
        %2006 = vmatpush1.bf16.msra.mxu0 %v1991
        %2007 = vmatprep.subr.bf16.mxu0 0
        %2008 = vmatpush1.bf16.msra.mxu0 0
        %2009 = vmatprep.subr.bf16.mxu0 0
        %2010 = vmatpush1.bf16.msra.mxu0 0
        %2011 = vmatprep.subr.bf16.mxu0 0
        %2012 = vmatpush1.bf16.msra.mxu0 0
        %2013 = vmatprep.subr.bf16.mxu0 0
        %2014 = vmatpush1.bf16.msra.mxu0 0
        %2015 = vmatprep.subr.bf16.mxu0 0
        %2016 = vmatpush1.bf16.msra.mxu0 0
        %2017 = vmatprep.subr.bf16.mxu0 0
        %2018 = vmatpush1.bf16.msra.mxu0 0
        %2019 = vmatprep.subr.bf16.mxu0 0
        %2020 = vmatpush1.bf16.msra.mxu0 0
        %2021 = vmatprep.subr.bf16.mxu0 0
        %2022 = vmatpush1.bf16.msra.mxu0 0
        %2023 = vmatprep.subr.bf16.mxu0 0
        %2024 = vmatpush1.bf16.msra.mxu0 0
        %2025 = vmatprep.subr.bf16.mxu0 0
        %2026 = vmatpush1.bf16.msra.mxu0 0
        %2027 = vmatprep.subr.bf16.mxu0 0
        %2028 = vmatpush1.bf16.msra.mxu0 0
        %2029 = vmatprep.subr.bf16.mxu0 0
        %2030 = vmatpush1.bf16.msra.mxu0 0
        %2031 = vmatprep.mubr.bf16.mxu0 0
        %2032 = vmatmul.mubr.bf16.gmra.mrb[0].mxu0 %v559
        %v2033 = vpop.f32.mrb[0].mxu0
        %v2034 = vadd.f32 0.0, %v2033
        %v2035 = vpop.f32.mrb[0].mxu0
        %v2036 = vpop.f32.mrb[0].mxu0
        %v2037 = vadd.f32 0.0, %v2036
        %v2038 = vpop.f32.mrb[0].mxu0
        %2039 = vmatprep.mubr.bf16.mxu0 0
        %2040 = vmatmul.mubr.bf16.gmra.mrb[0].mxu0 %v562
        %v2041 = vpop.f32.mrb[0].mxu0
        %v2042 = vadd.f32 0.0, %v2041
        %v2043 = vpop.f32.mrb[0].mxu0
        %v2044 = vpop.f32.mrb[0].mxu0
        %v2045 = vadd.f32 0.0, %v2044
        %v2046 = vpop.f32.mrb[0].mxu0
        %2047 = vmatprep.mubr.bf16.mxu0 0
        %2048 = vmatmul.mubr.bf16.gmra.mrb[0].mxu0 %v565
        %v2049 = vpop.f32.mrb[0].mxu0
        %v2050 = vadd.f32 0.0, %v2049
        %v2051 = vpop.f32.mrb[0].mxu0
        %v2052 = vpop.f32.mrb[0].mxu0
        %v2053 = vadd.f32 0.0, %v2052
        %v2054 = vpop.f32.mrb[0].mxu0
        %2055 = vmatprep.mubr.bf16.mxu0 0
        %2056 = vmatmul.mubr.bf16.gmra.mrb[0].mxu0 %v568
        %v2057 = vpop.f32.mrb[0].mxu0
        %v2058 = vadd.f32 0.0, %v2057
        %v2059 = vpop.f32.mrb[0].mxu0
        %v2060 = vpop.f32.mrb[0].mxu0
        %v2061 = vadd.f32 0.0, %v2060
        %v2062 = vpop.f32.mrb[0].mxu0
        %2063 = vmatprep.mubr.bf16.mxu0 0
        %2064 = vmatmul.mubr.bf16.gmra.mrb[0].mxu0 %v571
        %v2065 = vpop.f32.mrb[0].mxu0
        %v2066 = vadd.f32 0.0, %v2065
        %v2067 = vpop.f32.mrb[0].mxu0
        %v2068 = vpop.f32.mrb[0].mxu0
        %v2069 = vadd.f32 0.0, %v2068
        %v2070 = vpop.f32.mrb[0].mxu0
        %2071 = vmatprep.mubr.bf16.mxu0 0
        %2072 = vmatmul.mubr.bf16.gmra.mrb[0].mxu0 %v574
        %v2073 = vpop.f32.mrb[0].mxu0
        %v2074 = vadd.f32 0.0, %v2073
        %v2075 = vpop.f32.mrb[0].mxu0
        %v2076 = vpop.f32.mrb[0].mxu0
        %v2077 = vadd.f32 0.0, %v2076
        %v2078 = vpop.f32.mrb[0].mxu0
        %2079 = vmatprep.mubr.bf16.mxu0 0
        %2080 = vmatmul.mubr.bf16.gmra.mrb[0].mxu0 %v577
        %v2081 = vpop.f32.mrb[0].mxu0
        %v2082 = vadd.f32 0.0, %v2081
        %v2083 = vpop.f32.mrb[0].mxu0
        %v2084 = vpop.f32.mrb[0].mxu0
        %v2085 = vadd.f32 0.0, %v2084
        %v2086 = vpop.f32.mrb[0].mxu0
        %2087 = vmatprep.mubr.bf16.mxu0 0
        %2088 = vmatmul.mubr.bf16.gmra.mrb[0].mxu0 %v580
        %v2089 = vpop.f32.mrb[0].mxu0
        %v2090 = vadd.f32 0.0, %v2089
        %v2091 = vpop.f32.mrb[0].mxu0
        %v2092 = vpop.f32.mrb[0].mxu0
        %v2093 = vadd.f32 0.0, %v2092
        %v2094 = vpop.f32.mrb[0].mxu0
        %2095 = vmatprep.mubr.bf16.mxu0 0
        %2096 = vmatmul.mubr.bf16.gmra.mrb[0].mxu0 %v583
        %v2097 = vpop.f32.mrb[0].mxu0
        %v2098 = vadd.f32 0.0, %v2097
        %v2099 = vpop.f32.mrb[0].mxu0
        %v2100 = vpop.f32.mrb[0].mxu0
        %v2101 = vadd.f32 0.0, %v2100
        %v2102 = vpop.f32.mrb[0].mxu0
        %2103 = vmatprep.mubr.bf16.mxu0 0
        %2104 = vmatmul.mubr.bf16.gmra.mrb[0].mxu0 %v586
        %v2105 = vpop.f32.mrb[0].mxu0
        %v2106 = vadd.f32 0.0, %v2105
        %v2107 = vpop.f32.mrb[0].mxu0
        %v2108 = vpop.f32.mrb[0].mxu0
        %v2109 = vadd.f32 0.0, %v2108
        %v2110 = vpop.f32.mrb[0].mxu0
        %2111 = vmatprep.mubr.bf16.mxu0 0
        %2112 = vmatmul.mubr.bf16.gmra.mrb[0].mxu0 %v589
        %v2113 = vpop.f32.mrb[0].mxu0
        %v2114 = vadd.f32 0.0, %v2113
        %v2115 = vpop.f32.mrb[0].mxu0
        %v2116 = vpop.f32.mrb[0].mxu0
        %v2117 = vadd.f32 0.0, %v2116
        %v2118 = vpop.f32.mrb[0].mxu0
        %2119 = vmatprep.mubr.bf16.mxu0 0
        %2120 = vmatmul.mubr.bf16.gmra.mrb[0].mxu0 %v592
        %v2121 = vpop.f32.mrb[0].mxu0
        %v2122 = vadd.f32 0.0, %v2121
        %v2123 = vpop.f32.mrb[0].mxu0
        %v2124 = vpop.f32.mrb[0].mxu0
        %v2125 = vadd.f32 0.0, %v2124
        %v2126 = vpop.f32.mrb[0].mxu0
        %2127 = vmatprep.mubr.bf16.mxu0 0
        %2128 = vmatmul.mubr.bf16.gmra.mrb[0].mxu0 %v595
        %v2129 = vpop.f32.mrb[0].mxu0
        %v2130 = vadd.f32 0.0, %v2129
        %v2131 = vpop.f32.mrb[0].mxu0
        %v2132 = vpop.f32.mrb[0].mxu0
        %v2133 = vadd.f32 0.0, %v2132
        %v2134 = vpop.f32.mrb[0].mxu0
        %2135 = vmatprep.mubr.bf16.mxu0 0
        %2136 = vmatmul.mubr.bf16.gmra.mrb[0].mxu0 %v598
        %v2137 = vpop.f32.mrb[0].mxu0
        %v2138 = vadd.f32 0.0, %v2137
        %v2139 = vpop.f32.mrb[0].mxu0
        %v2140 = vpop.f32.mrb[0].mxu0
        %v2141 = vadd.f32 0.0, %v2140
        %v2142 = vpop.f32.mrb[0].mxu0
        %2143 = vmatprep.mubr.bf16.mxu0 0
        %2144 = vmatmul.mubr.bf16.gmra.mrb[0].mxu0 %v601
        %v2145 = vpop.f32.mrb[0].mxu0
        %v2146 = vadd.f32 0.0, %v2145
        %v2147 = vpop.f32.mrb[0].mxu0
        %v2148 = vpop.f32.mrb[0].mxu0
        %v2149 = vadd.f32 0.0, %v2148
        %v2150 = vpop.f32.mrb[0].mxu0
        %2151 = vmatprep.mubr.bf16.mxu0 0
        %2152 = vmatmul.mubr.bf16.gmra.mrb[0].mxu0 %v1997
        %v2153 = vpop.f32.mrb[0].mxu0
        %v2154 = vadd.f32 0.0, %v2153
        %v2155 = vpop.f32.mrb[0].mxu0
        %v2156 = vpop.f32.mrb[0].mxu0
        %v2157 = vadd.f32 0.0, %v2156
        %v2158 = vpop.f32.mrb[0].mxu0
        %2159 = vdwg.mxu0
        %v2160 = vadd.f32 %v1926, %v2034
        %v2161 = vadd.f32 %v1927, %v2037
        %v2162 = vadd.f32 %v1928, %v2042
        %v2163 = vadd.f32 %v1929, %v2045
        %v2164 = vadd.f32 %v1930, %v2050
        %v2165 = vadd.f32 %v1931, %v2053
        %v2166 = vadd.f32 %v1932, %v2058
        %v2167 = vadd.f32 %v1933, %v2061
        %v2168 = vadd.f32 %v1934, %v2066
        %v2169 = vadd.f32 %v1935, %v2069
        %v2170 = vadd.f32 %v1936, %v2074
        %v2171 = vadd.f32 %v1937, %v2077
        %v2172 = vadd.f32 %v1938, %v2082
        %v2173 = vadd.f32 %v1939, %v2085
        %v2174 = vadd.f32 %v1940, %v2090
        %v2175 = vadd.f32 %v1941, %v2093
        %v2176 = vadd.f32 %v1942, %v2098
        %v2177 = vadd.f32 %v1943, %v2101
        %v2178 = vadd.f32 %v1944, %v2106
        %v2179 = vadd.f32 %v1945, %v2109
        %v2180 = vadd.f32 %v1946, %v2114
        %v2181 = vadd.f32 %v1947, %v2117
        %v2182 = vadd.f32 %v1948, %v2122
        %v2183 = vadd.f32 %v1949, %v2125
        %v2184 = vadd.f32 %v1950, %v2130
        %v2185 = vadd.f32 %v1951, %v2133
        %v2186 = vadd.f32 %v1952, %v2138
        %v2187 = vadd.f32 %v1953, %v2141
        %v2188 = vadd.f32 %v1954, %v2146
        %v2189 = vadd.f32 %v1955, %v2149
        %v2190 = vadd.f32 %v1956, %v2154
        %v2191 = vadd.f32 %v1957, %v2157
        %v2193 = vshrl.u32 %v429, 16
        %v2195 = vrot.slane %v2193, 4
        %v2196 = vshll.u32 %v429, 16
        %v2198 = vrot.slane %v2196, 5
        %v2199 = vor.u32 %v2195, %v2198
        %v2200 = vrot.slane %v2199, 4
        %v2202 = vshll.u32 %v430, 16
        %v2204 = vrot.slane %v2202, 5
        %v2205 = vsel %vm798, %v2200, %v2204
        %v2206 = vshrl.u32 %v430, 16
        %v2208 = vrot.slane %v2206, 4
        %v2209 = vor.u32 %v2208, %v2204
        %v2210 = vrot.slane %v2209, 4
        %v2212 = vshll.u32 %v431, 16
        %v2214 = vrot.slane %v2212, 5
        %v2215 = vsel %vm798, %v2210, %v2214
        %s2216 = scalar_lea.vmem [#allocation3], 128
        %v2217 = vld [vmem:[%s2216] sm:$0xf]
        %v2218 = vld [vmem:[%s2216 + $0x4] sm:$0xf]
        %v2219 = vld [vmem:[%s2216 + $0x8] sm:$0xf]
        %v2220 = vld [vmem:[%s2216 + $0xc] sm:$0xf]
        %v2221 = vld [vmem:[%s2216 + $0x10] sm:$0xf]
        %v2222 = vld [vmem:[%s2216 + $0x14] sm:$0xf]
        %v2223 = vld [vmem:[%s2216 + $0x18] sm:$0xf]
        %v2224 = vld [vmem:[%s2216 + $0x1c] sm:$0xf]
        %v2225 = vunpack.c.l.b16 %v2205
        %v2226 = vunpack.c.l.b16 %v2215
        %v2227 = vpack.c.b16 %v2226, %v2225
        %v2236 = vunpack.c.l.b16 %v2217
        %v2237 = vunpack.c.l.b16 %v2218
        %v2238 = vunpack.c.l.b16 %v2219
        %v2239 = vunpack.c.l.b16 %v2220
        %v2240 = vunpack.c.l.b16 %v2221
        %v2241 = vunpack.c.l.b16 %v2222
        %v2242 = vunpack.c.l.b16 %v2223
        %v2243 = vunpack.c.l.b16 %v2224
        %v2244 = vpack.c.b16 %v2237, %v2236
        %v2245 = vpack.c.b16 %v2239, %v2238
        %v2246 = vpack.c.b16 %v2241, %v2240
        %v2247 = vpack.c.b16 %v2243, %v2242
        %v2253 = vsel %vm554, %v2227, 0
        %2255 = vmatprep.subr.bf16.mxu0 0
        %2256 = vmatpush1.bf16.msra.mxu0 %v2244
        %2257 = vmatprep.subr.bf16.mxu0 0
        %2258 = vmatpush1.bf16.msra.mxu0 %v2245
        %2259 = vmatprep.subr.bf16.mxu0 0
        %2260 = vmatpush1.bf16.msra.mxu0 %v2246
        %2261 = vmatprep.subr.bf16.mxu0 0
        %2262 = vmatpush1.bf16.msra.mxu0 %v2247
        %2263 = vmatprep.subr.bf16.mxu0 0
        %2264 = vmatpush1.bf16.msra.mxu0 0
        %2265 = vmatprep.subr.bf16.mxu0 0
        %2266 = vmatpush1.bf16.msra.mxu0 0
        %2267 = vmatprep.subr.bf16.mxu0 0
        %2268 = vmatpush1.bf16.msra.mxu0 0
        %2269 = vmatprep.subr.bf16.mxu0 0
        %2270 = vmatpush1.bf16.msra.mxu0 0
        %2271 = vmatprep.subr.bf16.mxu0 0
        %2272 = vmatpush1.bf16.msra.mxu0 0
        %2273 = vmatprep.subr.bf16.mxu0 0
        %2274 = vmatpush1.bf16.msra.mxu0 0
        %2275 = vmatprep.subr.bf16.mxu0 0
        %2276 = vmatpush1.bf16.msra.mxu0 0
        %2277 = vmatprep.subr.bf16.mxu0 0
        %2278 = vmatpush1.bf16.msra.mxu0 0
        %2279 = vmatprep.subr.bf16.mxu0 0
        %2280 = vmatpush1.bf16.msra.mxu0 0
        %2281 = vmatprep.subr.bf16.mxu0 0
        %2282 = vmatpush1.bf16.msra.mxu0 0
        %2283 = vmatprep.subr.bf16.mxu0 0
        %2284 = vmatpush1.bf16.msra.mxu0 0
        %2285 = vmatprep.subr.bf16.mxu0 0
        %2286 = vmatpush1.bf16.msra.mxu0 0
        %2287 = vmatprep.mubr.bf16.mxu0 0
        %2288 = vmatmul.mubr.bf16.gmra.mrb[0].mxu0 %v1268
        %v2289 = vpop.f32.mrb[0].mxu0
        %v2290 = vadd.f32 0.0, %v2289
        %v2291 = vpop.f32.mrb[0].mxu0
        %v2292 = vpop.f32.mrb[0].mxu0
        %v2293 = vadd.f32 0.0, %v2292
        %v2294 = vpop.f32.mrb[0].mxu0
        %2295 = vmatprep.mubr.bf16.mxu0 0
        %2296 = vmatmul.mubr.bf16.gmra.mrb[0].mxu0 %v1271
        %v2297 = vpop.f32.mrb[0].mxu0
        %v2298 = vadd.f32 0.0, %v2297
        %v2299 = vpop.f32.mrb[0].mxu0
        %v2300 = vpop.f32.mrb[0].mxu0
        %v2301 = vadd.f32 0.0, %v2300
        %v2302 = vpop.f32.mrb[0].mxu0
        %2303 = vmatprep.mubr.bf16.mxu0 0
        %2304 = vmatmul.mubr.bf16.gmra.mrb[0].mxu0 %v1274
        %v2305 = vpop.f32.mrb[0].mxu0
        %v2306 = vadd.f32 0.0, %v2305
        %v2307 = vpop.f32.mrb[0].mxu0
        %v2308 = vpop.f32.mrb[0].mxu0
        %v2309 = vadd.f32 0.0, %v2308
        %v2310 = vpop.f32.mrb[0].mxu0
        %2311 = vmatprep.mubr.bf16.mxu0 0
        %2312 = vmatmul.mubr.bf16.gmra.mrb[0].mxu0 %v1277
        %v2313 = vpop.f32.mrb[0].mxu0
        %v2314 = vadd.f32 0.0, %v2313
        %v2315 = vpop.f32.mrb[0].mxu0
        %v2316 = vpop.f32.mrb[0].mxu0
        %v2317 = vadd.f32 0.0, %v2316
        %v2318 = vpop.f32.mrb[0].mxu0
        %2319 = vmatprep.mubr.bf16.mxu0 0
        %2320 = vmatmul.mubr.bf16.gmra.mrb[0].mxu0 %v1280
        %v2321 = vpop.f32.mrb[0].mxu0
        %v2322 = vadd.f32 0.0, %v2321
        %v2323 = vpop.f32.mrb[0].mxu0
        %v2324 = vpop.f32.mrb[0].mxu0
        %v2325 = vadd.f32 0.0, %v2324
        %v2326 = vpop.f32.mrb[0].mxu0
        %2327 = vmatprep.mubr.bf16.mxu0 0
        %2328 = vmatmul.mubr.bf16.gmra.mrb[0].mxu0 %v1283
        %v2329 = vpop.f32.mrb[0].mxu0
        %v2330 = vadd.f32 0.0, %v2329
        %v2331 = vpop.f32.mrb[0].mxu0
        %v2332 = vpop.f32.mrb[0].mxu0
        %v2333 = vadd.f32 0.0, %v2332
        %v2334 = vpop.f32.mrb[0].mxu0
        %2335 = vmatprep.mubr.bf16.mxu0 0
        %2336 = vmatmul.mubr.bf16.gmra.mrb[0].mxu0 %v1286
        %v2337 = vpop.f32.mrb[0].mxu0
        %v2338 = vadd.f32 0.0, %v2337
        %v2339 = vpop.f32.mrb[0].mxu0
        %v2340 = vpop.f32.mrb[0].mxu0
        %v2341 = vadd.f32 0.0, %v2340
        %v2342 = vpop.f32.mrb[0].mxu0
        %2343 = vmatprep.mubr.bf16.mxu0 0
        %2344 = vmatmul.mubr.bf16.gmra.mrb[0].mxu0 %v1289
        %v2345 = vpop.f32.mrb[0].mxu0
        %v2346 = vadd.f32 0.0, %v2345
        %v2347 = vpop.f32.mrb[0].mxu0
        %v2348 = vpop.f32.mrb[0].mxu0
        %v2349 = vadd.f32 0.0, %v2348
        %v2350 = vpop.f32.mrb[0].mxu0
        %2351 = vmatprep.mubr.bf16.mxu0 0
        %2352 = vmatmul.mubr.bf16.gmra.mrb[0].mxu0 %v1292
        %v2353 = vpop.f32.mrb[0].mxu0
        %v2354 = vadd.f32 0.0, %v2353
        %v2355 = vpop.f32.mrb[0].mxu0
        %v2356 = vpop.f32.mrb[0].mxu0
        %v2357 = vadd.f32 0.0, %v2356
        %v2358 = vpop.f32.mrb[0].mxu0
        %2359 = vmatprep.mubr.bf16.mxu0 0
        %2360 = vmatmul.mubr.bf16.gmra.mrb[0].mxu0 %v1295
        %v2361 = vpop.f32.mrb[0].mxu0
        %v2362 = vadd.f32 0.0, %v2361
        %v2363 = vpop.f32.mrb[0].mxu0
        %v2364 = vpop.f32.mrb[0].mxu0
        %v2365 = vadd.f32 0.0, %v2364
        %v2366 = vpop.f32.mrb[0].mxu0
        %2367 = vmatprep.mubr.bf16.mxu0 0
        %2368 = vmatmul.mubr.bf16.gmra.mrb[0].mxu0 %v1298
        %v2369 = vpop.f32.mrb[0].mxu0
        %v2370 = vadd.f32 0.0, %v2369
        %v2371 = vpop.f32.mrb[0].mxu0
        %v2372 = vpop.f32.mrb[0].mxu0
        %v2373 = vadd.f32 0.0, %v2372
        %v2374 = vpop.f32.mrb[0].mxu0
        %2375 = vmatprep.mubr.bf16.mxu0 0
        %2376 = vmatmul.mubr.bf16.gmra.mrb[0].mxu0 %v1301
        %v2377 = vpop.f32.mrb[0].mxu0
        %v2378 = vadd.f32 0.0, %v2377
        %v2379 = vpop.f32.mrb[0].mxu0
        %v2380 = vpop.f32.mrb[0].mxu0
        %v2381 = vadd.f32 0.0, %v2380
        %v2382 = vpop.f32.mrb[0].mxu0
        %2383 = vmatprep.mubr.bf16.mxu0 0
        %2384 = vmatmul.mubr.bf16.gmra.mrb[0].mxu0 %v1304
        %v2385 = vpop.f32.mrb[0].mxu0
        %v2386 = vadd.f32 0.0, %v2385
        %v2387 = vpop.f32.mrb[0].mxu0
        %v2388 = vpop.f32.mrb[0].mxu0
        %v2389 = vadd.f32 0.0, %v2388
        %v2390 = vpop.f32.mrb[0].mxu0
        %2391 = vmatprep.mubr.bf16.mxu0 0
        %2392 = vmatmul.mubr.bf16.gmra.mrb[0].mxu0 %v1307
        %v2393 = vpop.f32.mrb[0].mxu0
        %v2394 = vadd.f32 0.0, %v2393
        %v2395 = vpop.f32.mrb[0].mxu0
        %v2396 = vpop.f32.mrb[0].mxu0
        %v2397 = vadd.f32 0.0, %v2396
        %v2398 = vpop.f32.mrb[0].mxu0
        %2399 = vmatprep.mubr.bf16.mxu0 0
        %2400 = vmatmul.mubr.bf16.gmra.mrb[0].mxu0 %v1310
        %v2401 = vpop.f32.mrb[0].mxu0
        %v2402 = vadd.f32 0.0, %v2401
        %v2403 = vpop.f32.mrb[0].mxu0
        %v2404 = vpop.f32.mrb[0].mxu0
        %v2405 = vadd.f32 0.0, %v2404
        %v2406 = vpop.f32.mrb[0].mxu0
        %2407 = vmatprep.mubr.bf16.mxu0 0
        %2408 = vmatmul.mubr.bf16.gmra.mrb[0].mxu0 %v2253
        %v2409 = vpop.f32.mrb[0].mxu0
        %v2410 = vadd.f32 0.0, %v2409
        %v2411 = vpop.f32.mrb[0].mxu0
        %v2412 = vpop.f32.mrb[0].mxu0
        %v2413 = vadd.f32 0.0, %v2412
        %v2414 = vpop.f32.mrb[0].mxu0
        %2415 = vdwg.mxu0
        %v2416 = vadd.f32 %v2160, %v2290
        %v2417 = vadd.f32 %v2161, %v2293
        %v2418 = vadd.f32 %v2162, %v2298
        %v2419 = vadd.f32 %v2163, %v2301
        %v2420 = vadd.f32 %v2164, %v2306
        %v2421 = vadd.f32 %v2165, %v2309
        %v2422 = vadd.f32 %v2166, %v2314
        %v2423 = vadd.f32 %v2167, %v2317
        %v2424 = vadd.f32 %v2168, %v2322
        %v2425 = vadd.f32 %v2169, %v2325
        %v2426 = vadd.f32 %v2170, %v2330
        %v2427 = vadd.f32 %v2171, %v2333
        %v2428 = vadd.f32 %v2172, %v2338
        %v2429 = vadd.f32 %v2173, %v2341
        %v2430 = vadd.f32 %v2174, %v2346
        %v2431 = vadd.f32 %v2175, %v2349
        %v2432 = vadd.f32 %v2176, %v2354
        %v2433 = vadd.f32 %v2177, %v2357
        %v2434 = vadd.f32 %v2178, %v2362
        %v2435 = vadd.f32 %v2179, %v2365
        %v2436 = vadd.f32 %v2180, %v2370
        %v2437 = vadd.f32 %v2181, %v2373
        %v2438 = vadd.f32 %v2182, %v2378
        %v2439 = vadd.f32 %v2183, %v2381
        %v2440 = vadd.f32 %v2184, %v2386
        %v2441 = vadd.f32 %v2185, %v2389
        %v2442 = vadd.f32 %v2186, %v2394
        %v2443 = vadd.f32 %v2187, %v2397
        %v2444 = vadd.f32 %v2188, %v2402
        %v2445 = vadd.f32 %v2189, %v2405
        %v2446 = vadd.f32 %v2190, %v2410
        %v2447 = vadd.f32 %v2191, %v2413
        %v2449 = vrot.slane %v429, 5
        %v2450 = vrot.slane %v2449, 4
        %v2451 = vrot.slane %v430, 5
        %v2452 = vsel %vm1523, %v2450, %v2451
        %v2453 = vrot.slane %v2451, 4
        %v2454 = vrot.slane %v431, 5
        %v2455 = vsel %vm1523, %v2453, %v2454
        %s2456 = scalar_lea.vmem [#allocation3], 160
        %v2457 = vld [vmem:[%s2456] sm:$0xf]
        %v2458 = vld [vmem:[%s2456 + $0x4] sm:$0xf]
        %v2459 = vld [vmem:[%s2456 + $0x8] sm:$0xf]
        %v2460 = vld [vmem:[%s2456 + $0xc] sm:$0xf]
        %v2461 = vld [vmem:[%s2456 + $0x10] sm:$0xf]
        %v2462 = vld [vmem:[%s2456 + $0x14] sm:$0xf]
        %v2463 = vld [vmem:[%s2456 + $0x18] sm:$0xf]
        %v2464 = vld [vmem:[%s2456 + $0x1c] sm:$0xf]
        %v2465 = vunpack.c.l.b16 %v2452
        %v2466 = vunpack.c.l.b16 %v2455
        %v2467 = vpack.c.b16 %v2466, %v2465
        %v2476 = vunpack.c.l.b16 %v2457
        %v2477 = vunpack.c.l.b16 %v2458
        %v2478 = vunpack.c.l.b16 %v2459
        %v2479 = vunpack.c.l.b16 %v2460
        %v2480 = vunpack.c.l.b16 %v2461
        %v2481 = vunpack.c.l.b16 %v2462
        %v2482 = vunpack.c.l.b16 %v2463
        %v2483 = vunpack.c.l.b16 %v2464
        %v2484 = vpack.c.b16 %v2477, %v2476
        %v2485 = vpack.c.b16 %v2479, %v2478
        %v2486 = vpack.c.b16 %v2481, %v2480
        %v2487 = vpack.c.b16 %v2483, %v2482
        %v2493 = vsel %vm554, %v2467, 0
        %2495 = vmatprep.subr.bf16.mxu0 0
        %2496 = vmatpush1.bf16.msra.mxu0 %v2484
        %2497 = vmatprep.subr.bf16.mxu0 0
        %2498 = vmatpush1.bf16.msra.mxu0 %v2485
        %2499 = vmatprep.subr.bf16.mxu0 0
        %2500 = vmatpush1.bf16.msra.mxu0 %v2486
        %2501 = vmatprep.subr.bf16.mxu0 0
        %2502 = vmatpush1.bf16.msra.mxu0 %v2487
        %2503 = vmatprep.subr.bf16.mxu0 0
        %2504 = vmatpush1.bf16.msra.mxu0 0
        %2505 = vmatprep.subr.bf16.mxu0 0
        %2506 = vmatpush1.bf16.msra.mxu0 0
        %2507 = vmatprep.subr.bf16.mxu0 0
        %2508 = vmatpush1.bf16.msra.mxu0 0
        %2509 = vmatprep.subr.bf16.mxu0 0
        %2510 = vmatpush1.bf16.msra.mxu0 0
        %2511 = vmatprep.subr.bf16.mxu0 0
        %2512 = vmatpush1.bf16.msra.mxu0 0
        %2513 = vmatprep.subr.bf16.mxu0 0
        %2514 = vmatpush1.bf16.msra.mxu0 0
        %2515 = vmatprep.subr.bf16.mxu0 0
        %2516 = vmatpush1.bf16.msra.mxu0 0
        %2517 = vmatprep.subr.bf16.mxu0 0
        %2518 = vmatpush1.bf16.msra.mxu0 0
        %2519 = vmatprep.subr.bf16.mxu0 0
        %2520 = vmatpush1.bf16.msra.mxu0 0
        %2521 = vmatprep.subr.bf16.mxu0 0
        %2522 = vmatpush1.bf16.msra.mxu0 0
        %2523 = vmatprep.subr.bf16.mxu0 0
        %2524 = vmatpush1.bf16.msra.mxu0 0
        %2525 = vmatprep.subr.bf16.mxu0 0
        %2526 = vmatpush1.bf16.msra.mxu0 0
        %2527 = vmatprep.mubr.bf16.mxu0 0
        %2528 = vmatmul.mubr.bf16.gmra.mrb[0].mxu0 %v1721
        %v2529 = vpop.f32.mrb[0].mxu0
        %v2530 = vadd.f32 0.0, %v2529
        %v2531 = vpop.f32.mrb[0].mxu0
        %v2532 = vpop.f32.mrb[0].mxu0
        %v2533 = vadd.f32 0.0, %v2532
        %v2534 = vpop.f32.mrb[0].mxu0
        %2535 = vmatprep.mubr.bf16.mxu0 0
        %2536 = vmatmul.mubr.bf16.gmra.mrb[0].mxu0 %v1724
        %v2537 = vpop.f32.mrb[0].mxu0
        %v2538 = vadd.f32 0.0, %v2537
        %v2539 = vpop.f32.mrb[0].mxu0
        %v2540 = vpop.f32.mrb[0].mxu0
        %v2541 = vadd.f32 0.0, %v2540
        %v2542 = vpop.f32.mrb[0].mxu0
        %2543 = vmatprep.mubr.bf16.mxu0 0
        %2544 = vmatmul.mubr.bf16.gmra.mrb[0].mxu0 %v1727
        %v2545 = vpop.f32.mrb[0].mxu0
        %v2546 = vadd.f32 0.0, %v2545
        %v2547 = vpop.f32.mrb[0].mxu0
        %v2548 = vpop.f32.mrb[0].mxu0
        %v2549 = vadd.f32 0.0, %v2548
        %v2550 = vpop.f32.mrb[0].mxu0
        %2551 = vmatprep.mubr.bf16.mxu0 0
        %2552 = vmatmul.mubr.bf16.gmra.mrb[0].mxu0 %v1730
        %v2553 = vpop.f32.mrb[0].mxu0
        %v2554 = vadd.f32 0.0, %v2553
        %v2555 = vpop.f32.mrb[0].mxu0
        %v2556 = vpop.f32.mrb[0].mxu0
        %v2557 = vadd.f32 0.0, %v2556
        %v2558 = vpop.f32.mrb[0].mxu0
        %2559 = vmatprep.mubr.bf16.mxu0 0
        %2560 = vmatmul.mubr.bf16.gmra.mrb[0].mxu0 %v1733
        %v2561 = vpop.f32.mrb[0].mxu0
        %v2562 = vadd.f32 0.0, %v2561
        %v2563 = vpop.f32.mrb[0].mxu0
        %v2564 = vpop.f32.mrb[0].mxu0
        %v2565 = vadd.f32 0.0, %v2564
        %v2566 = vpop.f32.mrb[0].mxu0
        %2567 = vmatprep.mubr.bf16.mxu0 0
        %2568 = vmatmul.mubr.bf16.gmra.mrb[0].mxu0 %v1736
        %v2569 = vpop.f32.mrb[0].mxu0
        %v2570 = vadd.f32 0.0, %v2569
        %v2571 = vpop.f32.mrb[0].mxu0
        %v2572 = vpop.f32.mrb[0].mxu0
        %v2573 = vadd.f32 0.0, %v2572
        %v2574 = vpop.f32.mrb[0].mxu0
        %2575 = vmatprep.mubr.bf16.mxu0 0
        %2576 = vmatmul.mubr.bf16.gmra.mrb[0].mxu0 %v1739
        %v2577 = vpop.f32.mrb[0].mxu0
        %v2578 = vadd.f32 0.0, %v2577
        %v2579 = vpop.f32.mrb[0].mxu0
        %v2580 = vpop.f32.mrb[0].mxu0
        %v2581 = vadd.f32 0.0, %v2580
        %v2582 = vpop.f32.mrb[0].mxu0
        %2583 = vmatprep.mubr.bf16.mxu0 0
        %2584 = vmatmul.mubr.bf16.gmra.mrb[0].mxu0 %v1742
        %v2585 = vpop.f32.mrb[0].mxu0
        %v2586 = vadd.f32 0.0, %v2585
        %v2587 = vpop.f32.mrb[0].mxu0
        %v2588 = vpop.f32.mrb[0].mxu0
        %v2589 = vadd.f32 0.0, %v2588
        %v2590 = vpop.f32.mrb[0].mxu0
        %2591 = vmatprep.mubr.bf16.mxu0 0
        %2592 = vmatmul.mubr.bf16.gmra.mrb[0].mxu0 %v1745
        %v2593 = vpop.f32.mrb[0].mxu0
        %v2594 = vadd.f32 0.0, %v2593
        %v2595 = vpop.f32.mrb[0].mxu0
        %v2596 = vpop.f32.mrb[0].mxu0
        %v2597 = vadd.f32 0.0, %v2596
        %v2598 = vpop.f32.mrb[0].mxu0
        %2599 = vmatprep.mubr.bf16.mxu0 0
        %2600 = vmatmul.mubr.bf16.gmra.mrb[0].mxu0 %v1748
        %v2601 = vpop.f32.mrb[0].mxu0
        %v2602 = vadd.f32 0.0, %v2601
        %v2603 = vpop.f32.mrb[0].mxu0
        %v2604 = vpop.f32.mrb[0].mxu0
        %v2605 = vadd.f32 0.0, %v2604
        %v2606 = vpop.f32.mrb[0].mxu0
        %2607 = vmatprep.mubr.bf16.mxu0 0
        %2608 = vmatmul.mubr.bf16.gmra.mrb[0].mxu0 %v1751
        %v2609 = vpop.f32.mrb[0].mxu0
        %v2610 = vadd.f32 0.0, %v2609
        %v2611 = vpop.f32.mrb[0].mxu0
        %v2612 = vpop.f32.mrb[0].mxu0
        %v2613 = vadd.f32 0.0, %v2612
        %v2614 = vpop.f32.mrb[0].mxu0
        %2615 = vmatprep.mubr.bf16.mxu0 0
        %2616 = vmatmul.mubr.bf16.gmra.mrb[0].mxu0 %v1754
        %v2617 = vpop.f32.mrb[0].mxu0
        %v2618 = vadd.f32 0.0, %v2617
        %v2619 = vpop.f32.mrb[0].mxu0
        %v2620 = vpop.f32.mrb[0].mxu0
        %v2621 = vadd.f32 0.0, %v2620
        %v2622 = vpop.f32.mrb[0].mxu0
        %2623 = vmatprep.mubr.bf16.mxu0 0
        %2624 = vmatmul.mubr.bf16.gmra.mrb[0].mxu0 %v1757
        %v2625 = vpop.f32.mrb[0].mxu0
        %v2626 = vadd.f32 0.0, %v2625
        %v2627 = vpop.f32.mrb[0].mxu0
        %v2628 = vpop.f32.mrb[0].mxu0
        %v2629 = vadd.f32 0.0, %v2628
        %v2630 = vpop.f32.mrb[0].mxu0
        %2631 = vmatprep.mubr.bf16.mxu0 0
        %2632 = vmatmul.mubr.bf16.gmra.mrb[0].mxu0 %v1760
        %v2633 = vpop.f32.mrb[0].mxu0
        %v2634 = vadd.f32 0.0, %v2633
        %v2635 = vpop.f32.mrb[0].mxu0
        %v2636 = vpop.f32.mrb[0].mxu0
        %v2637 = vadd.f32 0.0, %v2636
        %v2638 = vpop.f32.mrb[0].mxu0
        %2639 = vmatprep.mubr.bf16.mxu0 0
        %2640 = vmatmul.mubr.bf16.gmra.mrb[0].mxu0 %v1763
        %v2641 = vpop.f32.mrb[0].mxu0
        %v2642 = vadd.f32 0.0, %v2641
        %v2643 = vpop.f32.mrb[0].mxu0
        %v2644 = vpop.f32.mrb[0].mxu0
        %v2645 = vadd.f32 0.0, %v2644
        %v2646 = vpop.f32.mrb[0].mxu0
        %2647 = vmatprep.mubr.bf16.mxu0 0
        %2648 = vmatmul.mubr.bf16.gmra.mrb[0].mxu0 %v2493
        %v2649 = vpop.f32.mrb[0].mxu0
        %v2650 = vadd.f32 0.0, %v2649
        %v2651 = vpop.f32.mrb[0].mxu0
        %v2652 = vpop.f32.mrb[0].mxu0
        %v2653 = vadd.f32 0.0, %v2652
        %v2654 = vpop.f32.mrb[0].mxu0
        %2655 = vdwg.mxu0
        %v2656 = vadd.f32 %v2416, %v2530
        %v2657 = vadd.f32 %v2417, %v2533
        %v2658 = vadd.f32 %v2418, %v2538
        %v2659 = vadd.f32 %v2419, %v2541
        %v2660 = vadd.f32 %v2420, %v2546
        %v2661 = vadd.f32 %v2421, %v2549
        %v2662 = vadd.f32 %v2422, %v2554
        %v2663 = vadd.f32 %v2423, %v2557
        %v2664 = vadd.f32 %v2424, %v2562
        %v2665 = vadd.f32 %v2425, %v2565
        %v2666 = vadd.f32 %v2426, %v2570
        %v2667 = vadd.f32 %v2427, %v2573
        %v2668 = vadd.f32 %v2428, %v2578
        %v2669 = vadd.f32 %v2429, %v2581
        %v2670 = vadd.f32 %v2430, %v2586
        %v2671 = vadd.f32 %v2431, %v2589
        %v2672 = vadd.f32 %v2432, %v2594
        %v2673 = vadd.f32 %v2433, %v2597
        %v2674 = vadd.f32 %v2434, %v2602
        %v2675 = vadd.f32 %v2435, %v2605
        %v2676 = vadd.f32 %v2436, %v2610
        %v2677 = vadd.f32 %v2437, %v2613
        %v2678 = vadd.f32 %v2438, %v2618
        %v2679 = vadd.f32 %v2439, %v2621
        %v2680 = vadd.f32 %v2440, %v2626
        %v2681 = vadd.f32 %v2441, %v2629
        %v2682 = vadd.f32 %v2442, %v2634
        %v2683 = vadd.f32 %v2443, %v2637
        %v2684 = vadd.f32 %v2444, %v2642
        %v2685 = vadd.f32 %v2445, %v2645
        %v2686 = vadd.f32 %v2446, %v2650
        %v2687 = vadd.f32 %v2447, %v2653
        %s2688 = scalar_lea.vmem [#allocation3], 192
        %v2689 = vld [vmem:[%s2688] sm:$0xf]
        %v2690 = vld [vmem:[%s2688 + $0x4] sm:$0xf]
        %v2691 = vld [vmem:[%s2688 + $0x8] sm:$0xf]
        %v2692 = vld [vmem:[%s2688 + $0xc] sm:$0xf]
        %v2693 = vld [vmem:[%s2688 + $0x10] sm:$0xf]
        %v2694 = vld [vmem:[%s2688 + $0x14] sm:$0xf]
        %v2695 = vld [vmem:[%s2688 + $0x18] sm:$0xf]
        %v2696 = vld [vmem:[%s2688 + $0x1c] sm:$0xf]
        %v2699 = vunpack.c.l.b16 %v432
        %v2700 = vunpack.c.l.b16 %v433
        %v2701 = vpack.c.b16 %v2700, %v2699
        %v2710 = vunpack.c.l.b16 %v2689
        %v2711 = vunpack.c.l.b16 %v2690
        %v2712 = vunpack.c.l.b16 %v2691
        %v2713 = vunpack.c.l.b16 %v2692
        %v2714 = vunpack.c.l.b16 %v2693
        %v2715 = vunpack.c.l.b16 %v2694
        %v2716 = vunpack.c.l.b16 %v2695
        %v2717 = vunpack.c.l.b16 %v2696
        %v2718 = vpack.c.b16 %v2711, %v2710
        %v2719 = vpack.c.b16 %v2713, %v2712
        %v2720 = vpack.c.b16 %v2715, %v2714
        %v2721 = vpack.c.b16 %v2717, %v2716
        %v2727 = vsel %vm554, %v2701, 0
        %2729 = vmatprep.subr.bf16.mxu0 0
        %2730 = vmatpush1.bf16.msra.mxu0 %v2718
        %2731 = vmatprep.subr.bf16.mxu0 0
        %2732 = vmatpush1.bf16.msra.mxu0 %v2719
        %2733 = vmatprep.subr.bf16.mxu0 0
        %2734 = vmatpush1.bf16.msra.mxu0 %v2720
        %2735 = vmatprep.subr.bf16.mxu0 0
        %2736 = vmatpush1.bf16.msra.mxu0 %v2721
        %2737 = vmatprep.subr.bf16.mxu0 0
        %2738 = vmatpush1.bf16.msra.mxu0 0
        %2739 = vmatprep.subr.bf16.mxu0 0
        %2740 = vmatpush1.bf16.msra.mxu0 0
        %2741 = vmatprep.subr.bf16.mxu0 0
        %2742 = vmatpush1.bf16.msra.mxu0 0
        %2743 = vmatprep.subr.bf16.mxu0 0
        %2744 = vmatpush1.bf16.msra.mxu0 0
        %2745 = vmatprep.subr.bf16.mxu0 0
        %2746 = vmatpush1.bf16.msra.mxu0 0
        %2747 = vmatprep.subr.bf16.mxu0 0
        %2748 = vmatpush1.bf16.msra.mxu0 0
        %2749 = vmatprep.subr.bf16.mxu0 0
        %2750 = vmatpush1.bf16.msra.mxu0 0
        %2751 = vmatprep.subr.bf16.mxu0 0
        %2752 = vmatpush1.bf16.msra.mxu0 0
        %2753 = vmatprep.subr.bf16.mxu0 0
        %2754 = vmatpush1.bf16.msra.mxu0 0
        %2755 = vmatprep.subr.bf16.mxu0 0
        %2756 = vmatpush1.bf16.msra.mxu0 0
        %2757 = vmatprep.subr.bf16.mxu0 0
        %2758 = vmatpush1.bf16.msra.mxu0 0
        %2759 = vmatprep.subr.bf16.mxu0 0
        %2760 = vmatpush1.bf16.msra.mxu0 0
        %2761 = vmatprep.mubr.bf16.mxu0 0
        %2762 = vmatmul.mubr.bf16.gmra.mrb[0].mxu0 %v562
        %v2763 = vpop.f32.mrb[0].mxu0
        %v2764 = vadd.f32 0.0, %v2763
        %v2765 = vpop.f32.mrb[0].mxu0
        %v2766 = vpop.f32.mrb[0].mxu0
        %v2767 = vadd.f32 0.0, %v2766
        %v2768 = vpop.f32.mrb[0].mxu0
        %2769 = vmatprep.mubr.bf16.mxu0 0
        %2770 = vmatmul.mubr.bf16.gmra.mrb[0].mxu0 %v565
        %v2771 = vpop.f32.mrb[0].mxu0
        %v2772 = vadd.f32 0.0, %v2771
        %v2773 = vpop.f32.mrb[0].mxu0
        %v2774 = vpop.f32.mrb[0].mxu0
        %v2775 = vadd.f32 0.0, %v2774
        %v2776 = vpop.f32.mrb[0].mxu0
        %2777 = vmatprep.mubr.bf16.mxu0 0
        %2778 = vmatmul.mubr.bf16.gmra.mrb[0].mxu0 %v568
        %v2779 = vpop.f32.mrb[0].mxu0
        %v2780 = vadd.f32 0.0, %v2779
        %v2781 = vpop.f32.mrb[0].mxu0
        %v2782 = vpop.f32.mrb[0].mxu0
        %v2783 = vadd.f32 0.0, %v2782
        %v2784 = vpop.f32.mrb[0].mxu0
        %2785 = vmatprep.mubr.bf16.mxu0 0
        %2786 = vmatmul.mubr.bf16.gmra.mrb[0].mxu0 %v571
        %v2787 = vpop.f32.mrb[0].mxu0
        %v2788 = vadd.f32 0.0, %v2787
        %v2789 = vpop.f32.mrb[0].mxu0
        %v2790 = vpop.f32.mrb[0].mxu0
        %v2791 = vadd.f32 0.0, %v2790
        %v2792 = vpop.f32.mrb[0].mxu0
        %2793 = vmatprep.mubr.bf16.mxu0 0
        %2794 = vmatmul.mubr.bf16.gmra.mrb[0].mxu0 %v574
        %v2795 = vpop.f32.mrb[0].mxu0
        %v2796 = vadd.f32 0.0, %v2795
        %v2797 = vpop.f32.mrb[0].mxu0
        %v2798 = vpop.f32.mrb[0].mxu0
        %v2799 = vadd.f32 0.0, %v2798
        %v2800 = vpop.f32.mrb[0].mxu0
        %2801 = vmatprep.mubr.bf16.mxu0 0
        %2802 = vmatmul.mubr.bf16.gmra.mrb[0].mxu0 %v577
        %v2803 = vpop.f32.mrb[0].mxu0
        %v2804 = vadd.f32 0.0, %v2803
        %v2805 = vpop.f32.mrb[0].mxu0
        %v2806 = vpop.f32.mrb[0].mxu0
        %v2807 = vadd.f32 0.0, %v2806
        %v2808 = vpop.f32.mrb[0].mxu0
        %2809 = vmatprep.mubr.bf16.mxu0 0
        %2810 = vmatmul.mubr.bf16.gmra.mrb[0].mxu0 %v580
        %v2811 = vpop.f32.mrb[0].mxu0
        %v2812 = vadd.f32 0.0, %v2811
        %v2813 = vpop.f32.mrb[0].mxu0
        %v2814 = vpop.f32.mrb[0].mxu0
        %v2815 = vadd.f32 0.0, %v2814
        %v2816 = vpop.f32.mrb[0].mxu0
        %2817 = vmatprep.mubr.bf16.mxu0 0
        %2818 = vmatmul.mubr.bf16.gmra.mrb[0].mxu0 %v583
        %v2819 = vpop.f32.mrb[0].mxu0
        %v2820 = vadd.f32 0.0, %v2819
        %v2821 = vpop.f32.mrb[0].mxu0
        %v2822 = vpop.f32.mrb[0].mxu0
        %v2823 = vadd.f32 0.0, %v2822
        %v2824 = vpop.f32.mrb[0].mxu0
        %2825 = vmatprep.mubr.bf16.mxu0 0
        %2826 = vmatmul.mubr.bf16.gmra.mrb[0].mxu0 %v586
        %v2827 = vpop.f32.mrb[0].mxu0
        %v2828 = vadd.f32 0.0, %v2827
        %v2829 = vpop.f32.mrb[0].mxu0
        %v2830 = vpop.f32.mrb[0].mxu0
        %v2831 = vadd.f32 0.0, %v2830
        %v2832 = vpop.f32.mrb[0].mxu0
        %2833 = vmatprep.mubr.bf16.mxu0 0
        %2834 = vmatmul.mubr.bf16.gmra.mrb[0].mxu0 %v589
        %v2835 = vpop.f32.mrb[0].mxu0
        %v2836 = vadd.f32 0.0, %v2835
        %v2837 = vpop.f32.mrb[0].mxu0
        %v2838 = vpop.f32.mrb[0].mxu0
        %v2839 = vadd.f32 0.0, %v2838
        %v2840 = vpop.f32.mrb[0].mxu0
        %2841 = vmatprep.mubr.bf16.mxu0 0
        %2842 = vmatmul.mubr.bf16.gmra.mrb[0].mxu0 %v592
        %v2843 = vpop.f32.mrb[0].mxu0
        %v2844 = vadd.f32 0.0, %v2843
        %v2845 = vpop.f32.mrb[0].mxu0
        %v2846 = vpop.f32.mrb[0].mxu0
        %v2847 = vadd.f32 0.0, %v2846
        %v2848 = vpop.f32.mrb[0].mxu0
        %2849 = vmatprep.mubr.bf16.mxu0 0
        %2850 = vmatmul.mubr.bf16.gmra.mrb[0].mxu0 %v595
        %v2851 = vpop.f32.mrb[0].mxu0
        %v2852 = vadd.f32 0.0, %v2851
        %v2853 = vpop.f32.mrb[0].mxu0
        %v2854 = vpop.f32.mrb[0].mxu0
        %v2855 = vadd.f32 0.0, %v2854
        %v2856 = vpop.f32.mrb[0].mxu0
        %2857 = vmatprep.mubr.bf16.mxu0 0
        %2858 = vmatmul.mubr.bf16.gmra.mrb[0].mxu0 %v598
        %v2859 = vpop.f32.mrb[0].mxu0
        %v2860 = vadd.f32 0.0, %v2859
        %v2861 = vpop.f32.mrb[0].mxu0
        %v2862 = vpop.f32.mrb[0].mxu0
        %v2863 = vadd.f32 0.0, %v2862
        %v2864 = vpop.f32.mrb[0].mxu0
        %2865 = vmatprep.mubr.bf16.mxu0 0
        %2866 = vmatmul.mubr.bf16.gmra.mrb[0].mxu0 %v601
        %v2867 = vpop.f32.mrb[0].mxu0
        %v2868 = vadd.f32 0.0, %v2867
        %v2869 = vpop.f32.mrb[0].mxu0
        %v2870 = vpop.f32.mrb[0].mxu0
        %v2871 = vadd.f32 0.0, %v2870
        %v2872 = vpop.f32.mrb[0].mxu0
        %2873 = vmatprep.mubr.bf16.mxu0 0
        %2874 = vmatmul.mubr.bf16.gmra.mrb[0].mxu0 %v1997
        %v2875 = vpop.f32.mrb[0].mxu0
        %v2876 = vadd.f32 0.0, %v2875
        %v2877 = vpop.f32.mrb[0].mxu0
        %v2878 = vpop.f32.mrb[0].mxu0
        %v2879 = vadd.f32 0.0, %v2878
        %v2880 = vpop.f32.mrb[0].mxu0
        %2881 = vmatprep.mubr.bf16.mxu0 0
        %2882 = vmatmul.mubr.bf16.gmra.mrb[0].mxu0 %v2727
        %v2883 = vpop.f32.mrb[0].mxu0
        %v2884 = vadd.f32 0.0, %v2883
        %v2885 = vpop.f32.mrb[0].mxu0
        %v2886 = vpop.f32.mrb[0].mxu0
        %v2887 = vadd.f32 0.0, %v2886
        %v2888 = vpop.f32.mrb[0].mxu0
        %2889 = vdwg.mxu0
        %v2890 = vadd.f32 %v2656, %v2764
        %v2891 = vadd.f32 %v2657, %v2767
        %v2892 = vadd.f32 %v2658, %v2772
        %v2893 = vadd.f32 %v2659, %v2775
        %v2894 = vadd.f32 %v2660, %v2780
        %v2895 = vadd.f32 %v2661, %v2783
        %v2896 = vadd.f32 %v2662, %v2788
        %v2897 = vadd.f32 %v2663, %v2791
        %v2898 = vadd.f32 %v2664, %v2796
        %v2899 = vadd.f32 %v2665, %v2799
        %v2900 = vadd.f32 %v2666, %v2804
        %v2901 = vadd.f32 %v2667, %v2807
        %v2902 = vadd.f32 %v2668, %v2812
        %v2903 = vadd.f32 %v2669, %v2815
        %v2904 = vadd.f32 %v2670, %v2820
        %v2905 = vadd.f32 %v2671, %v2823
        %v2906 = vadd.f32 %v2672, %v2828
        %v2907 = vadd.f32 %v2673, %v2831
        %v2908 = vadd.f32 %v2674, %v2836
        %v2909 = vadd.f32 %v2675, %v2839
        %v2910 = vadd.f32 %v2676, %v2844
        %v2911 = vadd.f32 %v2677, %v2847
        %v2912 = vadd.f32 %v2678, %v2852
        %v2913 = vadd.f32 %v2679, %v2855
        %v2914 = vadd.f32 %v2680, %v2860
        %v2915 = vadd.f32 %v2681, %v2863
        %v2916 = vadd.f32 %v2682, %v2868
        %v2917 = vadd.f32 %v2683, %v2871
        %v2918 = vadd.f32 %v2684, %v2876
        %v2919 = vadd.f32 %v2685, %v2879
        %v2920 = vadd.f32 %v2686, %v2884
        %v2921 = vadd.f32 %v2687, %v2887
        %v2923 = vshrl.u32 %v432, 16
        %v2925 = vrot.slane %v2923, 4
        %v2926 = vshll.u32 %v432, 16
        %v2928 = vrot.slane %v2926, 5
        %v2929 = vor.u32 %v2925, %v2928
        %v2930 = vrot.slane %v2929, 4
        %v2932 = vshll.u32 %v433, 16
        %v2934 = vrot.slane %v2932, 5
        %v2935 = vsel %vm798, %v2930, %v2934
        %v2936 = vshrl.u32 %v433, 16
        %v2938 = vrot.slane %v2936, 4
        %v2939 = vor.u32 %v2938, %v2934
        %v2940 = vrot.slane %v2939, 4
        %v2942 = vshll.u32 %v434, 16
        %v2944 = vrot.slane %v2942, 5
        %v2945 = vsel %vm798, %v2940, %v2944
        %s2946 = scalar_lea.vmem [#allocation3], 224
        %v2947 = vld [vmem:[%s2946] sm:$0xf]
        %v2948 = vld [vmem:[%s2946 + $0x4] sm:$0xf]
        %v2949 = vld [vmem:[%s2946 + $0x8] sm:$0xf]
        %v2950 = vld [vmem:[%s2946 + $0xc] sm:$0xf]
        %v2951 = vld [vmem:[%s2946 + $0x10] sm:$0xf]
        %v2952 = vld [vmem:[%s2946 + $0x14] sm:$0xf]
        %v2953 = vld [vmem:[%s2946 + $0x18] sm:$0xf]
        %v2954 = vld [vmem:[%s2946 + $0x1c] sm:$0xf]
        %v2955 = vunpack.c.l.b16 %v2935
        %v2956 = vunpack.c.l.b16 %v2945
        %v2957 = vpack.c.b16 %v2956, %v2955
        %v2966 = vunpack.c.l.b16 %v2947
        %v2967 = vunpack.c.l.b16 %v2948
        %v2968 = vunpack.c.l.b16 %v2949
        %v2969 = vunpack.c.l.b16 %v2950
        %v2970 = vunpack.c.l.b16 %v2951
        %v2971 = vunpack.c.l.b16 %v2952
        %v2972 = vunpack.c.l.b16 %v2953
        %v2973 = vunpack.c.l.b16 %v2954
        %v2974 = vpack.c.b16 %v2967, %v2966
        %v2975 = vpack.c.b16 %v2969, %v2968
        %v2976 = vpack.c.b16 %v2971, %v2970
        %v2977 = vpack.c.b16 %v2973, %v2972
        %v2983 = vsel %vm554, %v2957, 0
        %2985 = vmatprep.subr.bf16.mxu0 0
        %2986 = vmatpush1.bf16.msra.mxu0 %v2974
        %2987 = vmatprep.subr.bf16.mxu0 0
        %2988 = vmatpush1.bf16.msra.mxu0 %v2975
        %2989 = vmatprep.subr.bf16.mxu0 0
        %2990 = vmatpush1.bf16.msra.mxu0 %v2976
        %2991 = vmatprep.subr.bf16.mxu0 0
        %2992 = vmatpush1.bf16.msra.mxu0 %v2977
        %2993 = vmatprep.subr.bf16.mxu0 0
        %2994 = vmatpush1.bf16.msra.mxu0 0
        %2995 = vmatprep.subr.bf16.mxu0 0
        %2996 = vmatpush1.bf16.msra.mxu0 0
        %2997 = vmatprep.subr.bf16.mxu0 0
        %2998 = vmatpush1.bf16.msra.mxu0 0
        %2999 = vmatprep.subr.bf16.mxu0 0
        %3000 = vmatpush1.bf16.msra.mxu0 0
        %3001 = vmatprep.subr.bf16.mxu0 0
        %3002 = vmatpush1.bf16.msra.mxu0 0
        %3003 = vmatprep.subr.bf16.mxu0 0
        %3004 = vmatpush1.bf16.msra.mxu0 0
        %3005 = vmatprep.subr.bf16.mxu0 0
        %3006 = vmatpush1.bf16.msra.mxu0 0
        %3007 = vmatprep.subr.bf16.mxu0 0
        %3008 = vmatpush1.bf16.msra.mxu0 0
        %3009 = vmatprep.subr.bf16.mxu0 0
        %3010 = vmatpush1.bf16.msra.mxu0 0
        %3011 = vmatprep.subr.bf16.mxu0 0
        %3012 = vmatpush1.bf16.msra.mxu0 0
        %3013 = vmatprep.subr.bf16.mxu0 0
        %3014 = vmatpush1.bf16.msra.mxu0 0
        %3015 = vmatprep.subr.bf16.mxu0 0
        %3016 = vmatpush1.bf16.msra.mxu0 0
        %3017 = vmatprep.mubr.bf16.mxu0 0
        %3018 = vmatmul.mubr.bf16.gmra.mrb[0].mxu0 %v1271
        %v3019 = vpop.f32.mrb[0].mxu0
        %v3020 = vadd.f32 0.0, %v3019
        %v3021 = vpop.f32.mrb[0].mxu0
        %v3022 = vpop.f32.mrb[0].mxu0
        %v3023 = vadd.f32 0.0, %v3022
        %v3024 = vpop.f32.mrb[0].mxu0
        %3025 = vmatprep.mubr.bf16.mxu0 0
        %3026 = vmatmul.mubr.bf16.gmra.mrb[0].mxu0 %v1274
        %v3027 = vpop.f32.mrb[0].mxu0
        %v3028 = vadd.f32 0.0, %v3027
        %v3029 = vpop.f32.mrb[0].mxu0
        %v3030 = vpop.f32.mrb[0].mxu0
        %v3031 = vadd.f32 0.0, %v3030
        %v3032 = vpop.f32.mrb[0].mxu0
        %3033 = vmatprep.mubr.bf16.mxu0 0
        %3034 = vmatmul.mubr.bf16.gmra.mrb[0].mxu0 %v1277
        %v3035 = vpop.f32.mrb[0].mxu0
        %v3036 = vadd.f32 0.0, %v3035
        %v3037 = vpop.f32.mrb[0].mxu0
        %v3038 = vpop.f32.mrb[0].mxu0
        %v3039 = vadd.f32 0.0, %v3038
        %v3040 = vpop.f32.mrb[0].mxu0
        %3041 = vmatprep.mubr.bf16.mxu0 0
        %3042 = vmatmul.mubr.bf16.gmra.mrb[0].mxu0 %v1280
        %v3043 = vpop.f32.mrb[0].mxu0
        %v3044 = vadd.f32 0.0, %v3043
        %v3045 = vpop.f32.mrb[0].mxu0
        %v3046 = vpop.f32.mrb[0].mxu0
        %v3047 = vadd.f32 0.0, %v3046
        %v3048 = vpop.f32.mrb[0].mxu0
        %3049 = vmatprep.mubr.bf16.mxu0 0
        %3050 = vmatmul.mubr.bf16.gmra.mrb[0].mxu0 %v1283
        %v3051 = vpop.f32.mrb[0].mxu0
        %v3052 = vadd.f32 0.0, %v3051
        %v3053 = vpop.f32.mrb[0].mxu0
        %v3054 = vpop.f32.mrb[0].mxu0
        %v3055 = vadd.f32 0.0, %v3054
        %v3056 = vpop.f32.mrb[0].mxu0
        %3057 = vmatprep.mubr.bf16.mxu0 0
        %3058 = vmatmul.mubr.bf16.gmra.mrb[0].mxu0 %v1286
        %v3059 = vpop.f32.mrb[0].mxu0
        %v3060 = vadd.f32 0.0, %v3059
        %v3061 = vpop.f32.mrb[0].mxu0
        %v3062 = vpop.f32.mrb[0].mxu0
        %v3063 = vadd.f32 0.0, %v3062
        %v3064 = vpop.f32.mrb[0].mxu0
        %3065 = vmatprep.mubr.bf16.mxu0 0
        %3066 = vmatmul.mubr.bf16.gmra.mrb[0].mxu0 %v1289
        %v3067 = vpop.f32.mrb[0].mxu0
        %v3068 = vadd.f32 0.0, %v3067
        %v3069 = vpop.f32.mrb[0].mxu0
        %v3070 = vpop.f32.mrb[0].mxu0
        %v3071 = vadd.f32 0.0, %v3070
        %v3072 = vpop.f32.mrb[0].mxu0
        %3073 = vmatprep.mubr.bf16.mxu0 0
        %3074 = vmatmul.mubr.bf16.gmra.mrb[0].mxu0 %v1292
        %v3075 = vpop.f32.mrb[0].mxu0
        %v3076 = vadd.f32 0.0, %v3075
        %v3077 = vpop.f32.mrb[0].mxu0
        %v3078 = vpop.f32.mrb[0].mxu0
        %v3079 = vadd.f32 0.0, %v3078
        %v3080 = vpop.f32.mrb[0].mxu0
        %3081 = vmatprep.mubr.bf16.mxu0 0
        %3082 = vmatmul.mubr.bf16.gmra.mrb[0].mxu0 %v1295
        %v3083 = vpop.f32.mrb[0].mxu0
        %v3084 = vadd.f32 0.0, %v3083
        %v3085 = vpop.f32.mrb[0].mxu0
        %v3086 = vpop.f32.mrb[0].mxu0
        %v3087 = vadd.f32 0.0, %v3086
        %v3088 = vpop.f32.mrb[0].mxu0
        %3089 = vmatprep.mubr.bf16.mxu0 0
        %3090 = vmatmul.mubr.bf16.gmra.mrb[0].mxu0 %v1298
        %v3091 = vpop.f32.mrb[0].mxu0
        %v3092 = vadd.f32 0.0, %v3091
        %v3093 = vpop.f32.mrb[0].mxu0
        %v3094 = vpop.f32.mrb[0].mxu0
        %v3095 = vadd.f32 0.0, %v3094
        %v3096 = vpop.f32.mrb[0].mxu0
        %3097 = vmatprep.mubr.bf16.mxu0 0
        %3098 = vmatmul.mubr.bf16.gmra.mrb[0].mxu0 %v1301
        %v3099 = vpop.f32.mrb[0].mxu0
        %v3100 = vadd.f32 0.0, %v3099
        %v3101 = vpop.f32.mrb[0].mxu0
        %v3102 = vpop.f32.mrb[0].mxu0
        %v3103 = vadd.f32 0.0, %v3102
        %v3104 = vpop.f32.mrb[0].mxu0
        %3105 = vmatprep.mubr.bf16.mxu0 0
        %3106 = vmatmul.mubr.bf16.gmra.mrb[0].mxu0 %v1304
        %v3107 = vpop.f32.mrb[0].mxu0
        %v3108 = vadd.f32 0.0, %v3107
        %v3109 = vpop.f32.mrb[0].mxu0
        %v3110 = vpop.f32.mrb[0].mxu0
        %v3111 = vadd.f32 0.0, %v3110
        %v3112 = vpop.f32.mrb[0].mxu0
        %3113 = vmatprep.mubr.bf16.mxu0 0
        %3114 = vmatmul.mubr.bf16.gmra.mrb[0].mxu0 %v1307
        %v3115 = vpop.f32.mrb[0].mxu0
        %v3116 = vadd.f32 0.0, %v3115
        %v3117 = vpop.f32.mrb[0].mxu0
        %v3118 = vpop.f32.mrb[0].mxu0
        %v3119 = vadd.f32 0.0, %v3118
        %v3120 = vpop.f32.mrb[0].mxu0
        %3121 = vmatprep.mubr.bf16.mxu0 0
        %3122 = vmatmul.mubr.bf16.gmra.mrb[0].mxu0 %v1310
        %v3123 = vpop.f32.mrb[0].mxu0
        %v3124 = vadd.f32 0.0, %v3123
        %v3125 = vpop.f32.mrb[0].mxu0
        %v3126 = vpop.f32.mrb[0].mxu0
        %v3127 = vadd.f32 0.0, %v3126
        %v3128 = vpop.f32.mrb[0].mxu0
        %3129 = vmatprep.mubr.bf16.mxu0 0
        %3130 = vmatmul.mubr.bf16.gmra.mrb[0].mxu0 %v2253
        %v3131 = vpop.f32.mrb[0].mxu0
        %v3132 = vadd.f32 0.0, %v3131
        %v3133 = vpop.f32.mrb[0].mxu0
        %v3134 = vpop.f32.mrb[0].mxu0
        %v3135 = vadd.f32 0.0, %v3134
        %v3136 = vpop.f32.mrb[0].mxu0
        %3137 = vmatprep.mubr.bf16.mxu0 0
        %3138 = vmatmul.mubr.bf16.gmra.mrb[0].mxu0 %v2983
        %v3139 = vpop.f32.mrb[0].mxu0
        %v3140 = vadd.f32 0.0, %v3139
        %v3141 = vpop.f32.mrb[0].mxu0
        %v3142 = vpop.f32.mrb[0].mxu0
        %v3143 = vadd.f32 0.0, %v3142
        %v3144 = vpop.f32.mrb[0].mxu0
        %3145 = vdwg.mxu0
        %v3146 = vadd.f32 %v2890, %v3020
        %v3147 = vadd.f32 %v2891, %v3023
        %v3148 = vadd.f32 %v2892, %v3028
        %v3149 = vadd.f32 %v2893, %v3031
        %v3150 = vadd.f32 %v2894, %v3036
        %v3151 = vadd.f32 %v2895, %v3039
        %v3152 = vadd.f32 %v2896, %v3044
        %v3153 = vadd.f32 %v2897, %v3047
        %v3154 = vadd.f32 %v2898, %v3052
        %v3155 = vadd.f32 %v2899, %v3055
        %v3156 = vadd.f32 %v2900, %v3060
        %v3157 = vadd.f32 %v2901, %v3063
        %v3158 = vadd.f32 %v2902, %v3068
        %v3159 = vadd.f32 %v2903, %v3071
        %v3160 = vadd.f32 %v2904, %v3076
        %v3161 = vadd.f32 %v2905, %v3079
        %v3162 = vadd.f32 %v2906, %v3084
        %v3163 = vadd.f32 %v2907, %v3087
        %v3164 = vadd.f32 %v2908, %v3092
        %v3165 = vadd.f32 %v2909, %v3095
        %v3166 = vadd.f32 %v2910, %v3100
        %v3167 = vadd.f32 %v2911, %v3103
        %v3168 = vadd.f32 %v2912, %v3108
        %v3169 = vadd.f32 %v2913, %v3111
        %v3170 = vadd.f32 %v2914, %v3116
        %v3171 = vadd.f32 %v2915, %v3119
        %v3172 = vadd.f32 %v2916, %v3124
        %v3173 = vadd.f32 %v2917, %v3127
        %v3174 = vadd.f32 %v2918, %v3132
        %v3175 = vadd.f32 %v2919, %v3135
        %v3176 = vadd.f32 %v2920, %v3140
        %v3177 = vadd.f32 %v2921, %v3143
        %v3179 = vrot.slane %v432, 5
        %v3180 = vrot.slane %v3179, 4
        %v3181 = vrot.slane %v433, 5
        %v3182 = vsel %vm1523, %v3180, %v3181
        %v3183 = vrot.slane %v3181, 4
        %v3184 = vrot.slane %v434, 5
        %v3185 = vsel %vm1523, %v3183, %v3184
        %s3186 = scalar_lea.vmem [#allocation3], 256
        %v3187 = vld [vmem:[%s3186] sm:$0xf]
        %v3188 = vld [vmem:[%s3186 + $0x4] sm:$0xf]
        %v3189 = vld [vmem:[%s3186 + $0x8] sm:$0xf]
        %v3190 = vld [vmem:[%s3186 + $0xc] sm:$0xf]
        %v3191 = vld [vmem:[%s3186 + $0x10] sm:$0xf]
        %v3192 = vld [vmem:[%s3186 + $0x14] sm:$0xf]
        %v3193 = vld [vmem:[%s3186 + $0x18] sm:$0xf]
        %v3194 = vld [vmem:[%s3186 + $0x1c] sm:$0xf]
        %v3195 = vunpack.c.l.b16 %v3182
        %v3196 = vunpack.c.l.b16 %v3185
        %v3197 = vpack.c.b16 %v3196, %v3195
        %v3206 = vunpack.c.l.b16 %v3187
        %v3207 = vunpack.c.l.b16 %v3188
        %v3208 = vunpack.c.l.b16 %v3189
        %v3209 = vunpack.c.l.b16 %v3190
        %v3210 = vunpack.c.l.b16 %v3191
        %v3211 = vunpack.c.l.b16 %v3192
        %v3212 = vunpack.c.l.b16 %v3193
        %v3213 = vunpack.c.l.b16 %v3194
        %v3214 = vpack.c.b16 %v3207, %v3206
        %v3215 = vpack.c.b16 %v3209, %v3208
        %v3216 = vpack.c.b16 %v3211, %v3210
        %v3217 = vpack.c.b16 %v3213, %v3212
        %v3223 = vsel %vm554, %v3197, 0
        %3225 = vmatprep.subr.bf16.mxu0 0
        %3226 = vmatpush1.bf16.msra.mxu0 %v3214
        %3227 = vmatprep.subr.bf16.mxu0 0
        %3228 = vmatpush1.bf16.msra.mxu0 %v3215
        %3229 = vmatprep.subr.bf16.mxu0 0
        %3230 = vmatpush1.bf16.msra.mxu0 %v3216
        %3231 = vmatprep.subr.bf16.mxu0 0
        %3232 = vmatpush1.bf16.msra.mxu0 %v3217
        %3233 = vmatprep.subr.bf16.mxu0 0
        %3234 = vmatpush1.bf16.msra.mxu0 0
        %3235 = vmatprep.subr.bf16.mxu0 0
        %3236 = vmatpush1.bf16.msra.mxu0 0
        %3237 = vmatprep.subr.bf16.mxu0 0
        %3238 = vmatpush1.bf16.msra.mxu0 0
        %3239 = vmatprep.subr.bf16.mxu0 0
        %3240 = vmatpush1.bf16.msra.mxu0 0
        %3241 = vmatprep.subr.bf16.mxu0 0
        %3242 = vmatpush1.bf16.msra.mxu0 0
        %3243 = vmatprep.subr.bf16.mxu0 0
        %3244 = vmatpush1.bf16.msra.mxu0 0
        %3245 = vmatprep.subr.bf16.mxu0 0
        %3246 = vmatpush1.bf16.msra.mxu0 0
        %3247 = vmatprep.subr.bf16.mxu0 0
        %3248 = vmatpush1.bf16.msra.mxu0 0
        %3249 = vmatprep.subr.bf16.mxu0 0
        %3250 = vmatpush1.bf16.msra.mxu0 0
        %3251 = vmatprep.subr.bf16.mxu0 0
        %3252 = vmatpush1.bf16.msra.mxu0 0
        %3253 = vmatprep.subr.bf16.mxu0 0
        %3254 = vmatpush1.bf16.msra.mxu0 0
        %3255 = vmatprep.subr.bf16.mxu0 0
        %3256 = vmatpush1.bf16.msra.mxu0 0
        %3257 = vmatprep.mubr.bf16.mxu0 0
        %3258 = vmatmul.mubr.bf16.gmra.mrb[0].mxu0 %v1724
        %v3259 = vpop.f32.mrb[0].mxu0
        %v3260 = vadd.f32 0.0, %v3259
        %v3261 = vpop.f32.mrb[0].mxu0
        %v3262 = vpop.f32.mrb[0].mxu0
        %v3263 = vadd.f32 0.0, %v3262
        %v3264 = vpop.f32.mrb[0].mxu0
        %3265 = vmatprep.mubr.bf16.mxu0 0
        %3266 = vmatmul.mubr.bf16.gmra.mrb[0].mxu0 %v1727
        %v3267 = vpop.f32.mrb[0].mxu0
        %v3268 = vadd.f32 0.0, %v3267
        %v3269 = vpop.f32.mrb[0].mxu0
        %v3270 = vpop.f32.mrb[0].mxu0
        %v3271 = vadd.f32 0.0, %v3270
        %v3272 = vpop.f32.mrb[0].mxu0
        %3273 = vmatprep.mubr.bf16.mxu0 0
        %3274 = vmatmul.mubr.bf16.gmra.mrb[0].mxu0 %v1730
        %v3275 = vpop.f32.mrb[0].mxu0
        %v3276 = vadd.f32 0.0, %v3275
        %v3277 = vpop.f32.mrb[0].mxu0
        %v3278 = vpop.f32.mrb[0].mxu0
        %v3279 = vadd.f32 0.0, %v3278
        %v3280 = vpop.f32.mrb[0].mxu0
        %3281 = vmatprep.mubr.bf16.mxu0 0
        %3282 = vmatmul.mubr.bf16.gmra.mrb[0].mxu0 %v1733
        %v3283 = vpop.f32.mrb[0].mxu0
        %v3284 = vadd.f32 0.0, %v3283
        %v3285 = vpop.f32.mrb[0].mxu0
        %v3286 = vpop.f32.mrb[0].mxu0
        %v3287 = vadd.f32 0.0, %v3286
        %v3288 = vpop.f32.mrb[0].mxu0
        %3289 = vmatprep.mubr.bf16.mxu0 0
        %3290 = vmatmul.mubr.bf16.gmra.mrb[0].mxu0 %v1736
        %v3291 = vpop.f32.mrb[0].mxu0
        %v3292 = vadd.f32 0.0, %v3291
        %v3293 = vpop.f32.mrb[0].mxu0
        %v3294 = vpop.f32.mrb[0].mxu0
        %v3295 = vadd.f32 0.0, %v3294
        %v3296 = vpop.f32.mrb[0].mxu0
        %3297 = vmatprep.mubr.bf16.mxu0 0
        %3298 = vmatmul.mubr.bf16.gmra.mrb[0].mxu0 %v1739
        %v3299 = vpop.f32.mrb[0].mxu0
        %v3300 = vadd.f32 0.0, %v3299
        %v3301 = vpop.f32.mrb[0].mxu0
        %v3302 = vpop.f32.mrb[0].mxu0
        %v3303 = vadd.f32 0.0, %v3302
        %v3304 = vpop.f32.mrb[0].mxu0
        %3305 = vmatprep.mubr.bf16.mxu0 0
        %3306 = vmatmul.mubr.bf16.gmra.mrb[0].mxu0 %v1742
        %v3307 = vpop.f32.mrb[0].mxu0
        %v3308 = vadd.f32 0.0, %v3307
        %v3309 = vpop.f32.mrb[0].mxu0
        %v3310 = vpop.f32.mrb[0].mxu0
        %v3311 = vadd.f32 0.0, %v3310
        %v3312 = vpop.f32.mrb[0].mxu0
        %3313 = vmatprep.mubr.bf16.mxu0 0
        %3314 = vmatmul.mubr.bf16.gmra.mrb[0].mxu0 %v1745
        %v3315 = vpop.f32.mrb[0].mxu0
        %v3316 = vadd.f32 0.0, %v3315
        %v3317 = vpop.f32.mrb[0].mxu0
        %v3318 = vpop.f32.mrb[0].mxu0
        %v3319 = vadd.f32 0.0, %v3318
        %v3320 = vpop.f32.mrb[0].mxu0
        %3321 = vmatprep.mubr.bf16.mxu0 0
        %3322 = vmatmul.mubr.bf16.gmra.mrb[0].mxu0 %v1748
        %v3323 = vpop.f32.mrb[0].mxu0
        %v3324 = vadd.f32 0.0, %v3323
        %v3325 = vpop.f32.mrb[0].mxu0
        %v3326 = vpop.f32.mrb[0].mxu0
        %v3327 = vadd.f32 0.0, %v3326
        %v3328 = vpop.f32.mrb[0].mxu0
        %3329 = vmatprep.mubr.bf16.mxu0 0
        %3330 = vmatmul.mubr.bf16.gmra.mrb[0].mxu0 %v1751
        %v3331 = vpop.f32.mrb[0].mxu0
        %v3332 = vadd.f32 0.0, %v3331
        %v3333 = vpop.f32.mrb[0].mxu0
        %v3334 = vpop.f32.mrb[0].mxu0
        %v3335 = vadd.f32 0.0, %v3334
        %v3336 = vpop.f32.mrb[0].mxu0
        %3337 = vmatprep.mubr.bf16.mxu0 0
        %3338 = vmatmul.mubr.bf16.gmra.mrb[0].mxu0 %v1754
        %v3339 = vpop.f32.mrb[0].mxu0
        %v3340 = vadd.f32 0.0, %v3339
        %v3341 = vpop.f32.mrb[0].mxu0
        %v3342 = vpop.f32.mrb[0].mxu0
        %v3343 = vadd.f32 0.0, %v3342
        %v3344 = vpop.f32.mrb[0].mxu0
        %3345 = vmatprep.mubr.bf16.mxu0 0
        %3346 = vmatmul.mubr.bf16.gmra.mrb[0].mxu0 %v1757
        %v3347 = vpop.f32.mrb[0].mxu0
        %v3348 = vadd.f32 0.0, %v3347
        %v3349 = vpop.f32.mrb[0].mxu0
        %v3350 = vpop.f32.mrb[0].mxu0
        %v3351 = vadd.f32 0.0, %v3350
        %v3352 = vpop.f32.mrb[0].mxu0
        %3353 = vmatprep.mubr.bf16.mxu0 0
        %3354 = vmatmul.mubr.bf16.gmra.mrb[0].mxu0 %v1760
        %v3355 = vpop.f32.mrb[0].mxu0
        %v3356 = vadd.f32 0.0, %v3355
        %v3357 = vpop.f32.mrb[0].mxu0
        %v3358 = vpop.f32.mrb[0].mxu0
        %v3359 = vadd.f32 0.0, %v3358
        %v3360 = vpop.f32.mrb[0].mxu0
        %3361 = vmatprep.mubr.bf16.mxu0 0
        %3362 = vmatmul.mubr.bf16.gmra.mrb[0].mxu0 %v1763
        %v3363 = vpop.f32.mrb[0].mxu0
        %v3364 = vadd.f32 0.0, %v3363
        %v3365 = vpop.f32.mrb[0].mxu0
        %v3366 = vpop.f32.mrb[0].mxu0
        %v3367 = vadd.f32 0.0, %v3366
        %v3368 = vpop.f32.mrb[0].mxu0
        %3369 = vmatprep.mubr.bf16.mxu0 0
        %3370 = vmatmul.mubr.bf16.gmra.mrb[0].mxu0 %v2493
        %v3371 = vpop.f32.mrb[0].mxu0
        %v3372 = vadd.f32 0.0, %v3371
        %v3373 = vpop.f32.mrb[0].mxu0
        %v3374 = vpop.f32.mrb[0].mxu0
        %v3375 = vadd.f32 0.0, %v3374
        %v3376 = vpop.f32.mrb[0].mxu0
        %3377 = vmatprep.mubr.bf16.mxu0 0
        %3378 = vmatmul.mubr.bf16.gmra.mrb[0].mxu0 %v3223
        %v3379 = vpop.f32.mrb[0].mxu0
        %v3380 = vadd.f32 0.0, %v3379
        %v3381 = vpop.f32.mrb[0].mxu0
        %v3382 = vpop.f32.mrb[0].mxu0
        %v3383 = vadd.f32 0.0, %v3382
        %v3384 = vpop.f32.mrb[0].mxu0
        %3385 = vdwg.mxu0
        %v3386 = vadd.f32 %v3146, %v3260
        %v3387 = vadd.f32 %v3147, %v3263
        %v3388 = vadd.f32 %v3148, %v3268
        %v3389 = vadd.f32 %v3149, %v3271
        %v3390 = vadd.f32 %v3150, %v3276
        %v3391 = vadd.f32 %v3151, %v3279
        %v3392 = vadd.f32 %v3152, %v3284
        %v3393 = vadd.f32 %v3153, %v3287
        %v3394 = vadd.f32 %v3154, %v3292
        %v3395 = vadd.f32 %v3155, %v3295
        %v3396 = vadd.f32 %v3156, %v3300
        %v3397 = vadd.f32 %v3157, %v3303
        %v3398 = vadd.f32 %v3158, %v3308
        %v3399 = vadd.f32 %v3159, %v3311
        %v3400 = vadd.f32 %v3160, %v3316
        %v3401 = vadd.f32 %v3161, %v3319
        %v3402 = vadd.f32 %v3162, %v3324
        %v3403 = vadd.f32 %v3163, %v3327
        %v3404 = vadd.f32 %v3164, %v3332
        %v3405 = vadd.f32 %v3165, %v3335
        %v3406 = vadd.f32 %v3166, %v3340
        %v3407 = vadd.f32 %v3167, %v3343
        %v3408 = vadd.f32 %v3168, %v3348
        %v3409 = vadd.f32 %v3169, %v3351
        %v3410 = vadd.f32 %v3170, %v3356
        %v3411 = vadd.f32 %v3171, %v3359
        %v3412 = vadd.f32 %v3172, %v3364
        %v3413 = vadd.f32 %v3173, %v3367
        %v3414 = vadd.f32 %v3174, %v3372
        %v3415 = vadd.f32 %v3175, %v3375
        %v3416 = vadd.f32 %v3176, %v3380
        %v3417 = vadd.f32 %v3177, %v3383
        %v3418 = vxor.u32 %v3386, 2147483648
        %v3419 = vxor.u32 %v3387, 2147483648
        %v3420 = vxor.u32 %v3388, 2147483648
        %v3421 = vxor.u32 %v3389, 2147483648
        %v3422 = vxor.u32 %v3390, 2147483648
        %v3423 = vxor.u32 %v3391, 2147483648
        %v3424 = vxor.u32 %v3392, 2147483648
        %v3425 = vxor.u32 %v3393, 2147483648
        %v3426 = vxor.u32 %v3394, 2147483648
        %v3427 = vxor.u32 %v3395, 2147483648
        %v3428 = vxor.u32 %v3396, 2147483648
        %v3429 = vxor.u32 %v3397, 2147483648
        %v3430 = vxor.u32 %v3398, 2147483648
        %v3431 = vxor.u32 %v3399, 2147483648
        %v3432 = vxor.u32 %v3400, 2147483648
        %v3433 = vxor.u32 %v3401, 2147483648
        %v3434 = vxor.u32 %v3402, 2147483648
        %v3435 = vxor.u32 %v3403, 2147483648
        %v3436 = vxor.u32 %v3404, 2147483648
        %v3437 = vxor.u32 %v3405, 2147483648
        %v3438 = vxor.u32 %v3406, 2147483648
        %v3439 = vxor.u32 %v3407, 2147483648
        %v3440 = vxor.u32 %v3408, 2147483648
        %v3441 = vxor.u32 %v3409, 2147483648
        %v3442 = vxor.u32 %v3410, 2147483648
        %v3443 = vxor.u32 %v3411, 2147483648
        %v3444 = vxor.u32 %v3412, 2147483648
        %v3445 = vxor.u32 %v3413, 2147483648
        %v3446 = vxor.u32 %v3414, 2147483648
        %v3447 = vxor.u32 %v3415, 2147483648
        %v3448 = vxor.u32 %v3416, 2147483648
        %v3449 = vxor.u32 %v3417, 2147483648
        %v3450 = vmul.f32 %v3418, 1.442695
        %v3451 = vpow.pop %v3450
        %v3452 = vmul.f32 %v3419, 1.442695
        %v3453 = vpow.pop %v3452
        %v3454 = vmul.f32 %v3420, 1.442695
        %v3455 = vpow.pop %v3454
        %v3456 = vmul.f32 %v3421, 1.442695
        %v3457 = vpow.pop %v3456
        %v3458 = vmul.f32 %v3422, 1.442695
        %v3459 = vpow.pop %v3458
        %v3460 = vmul.f32 %v3423, 1.442695
        %v3461 = vpow.pop %v3460
        %v3462 = vmul.f32 %v3424, 1.442695
        %v3463 = vpow.pop %v3462
        %v3464 = vmul.f32 %v3425, 1.442695
        %v3465 = vpow.pop %v3464
        %v3466 = vmul.f32 %v3426, 1.442695
        %v3467 = vpow.pop %v3466
        %v3468 = vmul.f32 %v3427, 1.442695
        %v3469 = vpow.pop %v3468
        %v3470 = vmul.f32 %v3428, 1.442695
        %v3471 = vpow.pop %v3470
        %v3472 = vmul.f32 %v3429, 1.442695
        %v3473 = vpow.pop %v3472
        %v3474 = vmul.f32 %v3430, 1.442695
        %v3475 = vpow.pop %v3474
        %v3476 = vmul.f32 %v3431, 1.442695
        %v3477 = vpow.pop %v3476
        %v3478 = vmul.f32 %v3432, 1.442695
        %v3479 = vpow.pop %v3478
        %v3480 = vmul.f32 %v3433, 1.442695
        %v3481 = vpow.pop %v3480
        %v3482 = vmul.f32 %v3434, 1.442695
        %v3483 = vpow.pop %v3482
        %v3484 = vmul.f32 %v3435, 1.442695
        %v3485 = vpow.pop %v3484
        %v3486 = vmul.f32 %v3436, 1.442695
        %v3487 = vpow.pop %v3486
        %v3488 = vmul.f32 %v3437, 1.442695
        %v3489 = vpow.pop %v3488
        %v3490 = vmul.f32 %v3438, 1.442695
        %v3491 = vpow.pop %v3490
        %v3492 = vmul.f32 %v3439, 1.442695
        %v3493 = vpow.pop %v3492
        %v3494 = vmul.f32 %v3440, 1.442695
        %v3495 = vpow.pop %v3494
        %v3496 = vmul.f32 %v3441, 1.442695
        %v3497 = vpow.pop %v3496
        %v3498 = vmul.f32 %v3442, 1.442695
        %v3499 = vpow.pop %v3498
        %v3500 = vmul.f32 %v3443, 1.442695
        %v3501 = vpow.pop %v3500
        %v3502 = vmul.f32 %v3444, 1.442695
        %v3503 = vpow.pop %v3502
        %v3504 = vmul.f32 %v3445, 1.442695
        %v3505 = vpow.pop %v3504
        %v3506 = vmul.f32 %v3446, 1.442695
        %v3507 = vpow.pop %v3506
        %v3508 = vmul.f32 %v3447, 1.442695
        %v3509 = vpow.pop %v3508
        %v3510 = vmul.f32 %v3448, 1.442695
        %v3511 = vpow.pop %v3510
        %v3512 = vmul.f32 %v3449, 1.442695
        %v3513 = vpow.pop %v3512
        %v3514 = vadd.f32 %v3451, 1.0
        %v3515 = vadd.f32 %v3453, 1.0
        %v3516 = vadd.f32 %v3455, 1.0
        %v3517 = vadd.f32 %v3457, 1.0
        %v3518 = vadd.f32 %v3459, 1.0
        %v3519 = vadd.f32 %v3461, 1.0
        %v3520 = vadd.f32 %v3463, 1.0
        %v3521 = vadd.f32 %v3465, 1.0
        %v3522 = vadd.f32 %v3467, 1.0
        %v3523 = vadd.f32 %v3469, 1.0
        %v3524 = vadd.f32 %v3471, 1.0
        %v3525 = vadd.f32 %v3473, 1.0
        %v3526 = vadd.f32 %v3475, 1.0
        %v3527 = vadd.f32 %v3477, 1.0
        %v3528 = vadd.f32 %v3479, 1.0
        %v3529 = vadd.f32 %v3481, 1.0
        %v3530 = vadd.f32 %v3483, 1.0
        %v3531 = vadd.f32 %v3485, 1.0
        %v3532 = vadd.f32 %v3487, 1.0
        %v3533 = vadd.f32 %v3489, 1.0
        %v3534 = vadd.f32 %v3491, 1.0
        %v3535 = vadd.f32 %v3493, 1.0
        %v3536 = vadd.f32 %v3495, 1.0
        %v3537 = vadd.f32 %v3497, 1.0
        %v3538 = vadd.f32 %v3499, 1.0
        %v3539 = vadd.f32 %v3501, 1.0
        %v3540 = vadd.f32 %v3503, 1.0
        %v3541 = vadd.f32 %v3505, 1.0
        %v3542 = vadd.f32 %v3507, 1.0
        %v3543 = vadd.f32 %v3509, 1.0
        %v3544 = vadd.f32 %v3511, 1.0
        %v3545 = vadd.f32 %v3513, 1.0
        %v3546 = vrcp.pop %v3514
        %v3547 = vmul.f32 1.0, %v3546
        %v3548 = vrcp.pop %v3515
        %v3549 = vmul.f32 1.0, %v3548
        %v3550 = vrcp.pop %v3516
        %v3551 = vmul.f32 1.0, %v3550
        %v3552 = vrcp.pop %v3517
        %v3553 = vmul.f32 1.0, %v3552
        %v3554 = vrcp.pop %v3518
        %v3555 = vmul.f32 1.0, %v3554
        %v3556 = vrcp.pop %v3519
        %v3557 = vmul.f32 1.0, %v3556
        %v3558 = vrcp.pop %v3520
        %v3559 = vmul.f32 1.0, %v3558
        %v3560 = vrcp.pop %v3521
        %v3561 = vmul.f32 1.0, %v3560
        %v3562 = vrcp.pop %v3522
        %v3563 = vmul.f32 1.0, %v3562
        %v3564 = vrcp.pop %v3523
        %v3565 = vmul.f32 1.0, %v3564
        %v3566 = vrcp.pop %v3524
        %v3567 = vmul.f32 1.0, %v3566
        %v3568 = vrcp.pop %v3525
        %v3569 = vmul.f32 1.0, %v3568
        %v3570 = vrcp.pop %v3526
        %v3571 = vmul.f32 1.0, %v3570
        %v3572 = vrcp.pop %v3527
        %v3573 = vmul.f32 1.0, %v3572
        %v3574 = vrcp.pop %v3528
        %v3575 = vmul.f32 1.0, %v3574
        %v3576 = vrcp.pop %v3529
        %v3577 = vmul.f32 1.0, %v3576
        %v3578 = vrcp.pop %v3530
        %v3579 = vmul.f32 1.0, %v3578
        %v3580 = vrcp.pop %v3531
        %v3581 = vmul.f32 1.0, %v3580
        %v3582 = vrcp.pop %v3532
        %v3583 = vmul.f32 1.0, %v3582
        %v3584 = vrcp.pop %v3533
        %v3585 = vmul.f32 1.0, %v3584
        %v3586 = vrcp.pop %v3534
        %v3587 = vmul.f32 1.0, %v3586
        %v3588 = vrcp.pop %v3535
        %v3589 = vmul.f32 1.0, %v3588
        %v3590 = vrcp.pop %v3536
        %v3591 = vmul.f32 1.0, %v3590
        %v3592 = vrcp.pop %v3537
        %v3593 = vmul.f32 1.0, %v3592
        %v3594 = vrcp.pop %v3538
        %v3595 = vmul.f32 1.0, %v3594
        %v3596 = vrcp.pop %v3539
        %v3597 = vmul.f32 1.0, %v3596
        %v3598 = vrcp.pop %v3540
        %v3599 = vmul.f32 1.0, %v3598
        %v3600 = vrcp.pop %v3541
        %v3601 = vmul.f32 1.0, %v3600
        %v3602 = vrcp.pop %v3542
        %v3603 = vmul.f32 1.0, %v3602
        %v3604 = vrcp.pop %v3543
        %v3605 = vmul.f32 1.0, %v3604
        %v3606 = vrcp.pop %v3544
        %v3607 = vmul.f32 1.0, %v3606
        %v3608 = vrcp.pop %v3545
        %v3609 = vmul.f32 1.0, %v3608
        %v3610 = vld [vmem:[%s257] sm:$0xff]
        %v3611 = vld [vmem:[%s257 + $0x8] sm:$0xff]
        %v3612 = vld [vmem:[%s257 + $0x10] sm:$0xff]
        %v3613 = vld [vmem:[%s257 + $0x18] sm:$0xff]
        %v3614 = vld [vmem:[%s257 + $0x20] sm:$0xff]
        %v3615 = vld [vmem:[%s257 + $0x28] sm:$0xff]
        %v3616 = vld [vmem:[%s257 + $0x30] sm:$0xff]
        %v3617 = vld [vmem:[%s257 + $0x38] sm:$0xff]
        %v3618 = vld [vmem:[%s257 + $0x40] sm:$0xff]
        %v3619 = vld [vmem:[%s257 + $0x48] sm:$0xff]
        %v3620 = vld [vmem:[%s257 + $0x50] sm:$0xff]
        %v3621 = vld [vmem:[%s257 + $0x58] sm:$0xff]
        %v3622 = vld [vmem:[%s257 + $0x60] sm:$0xff]
        %v3623 = vld [vmem:[%s257 + $0x68] sm:$0xff]
        %v3624 = vld [vmem:[%s257 + $0x70] sm:$0xff]
        %v3625 = vld [vmem:[%s257 + $0x78] sm:$0xff]
        %v3626 = vld [vmem:[%s257 + $0x80] sm:$0xff]
        %v3627 = vld [vmem:[%s257 + $0x88] sm:$0xff]
        %v3628 = vld [vmem:[%s257 + $0x90] sm:$0xff]
        %v3629 = vld [vmem:[%s257 + $0x98] sm:$0xff]
        %v3630 = vld [vmem:[%s257 + $0xa0] sm:$0xff]
        %v3631 = vld [vmem:[%s257 + $0xa8] sm:$0xff]
        %v3632 = vld [vmem:[%s257 + $0xb0] sm:$0xff]
        %v3633 = vld [vmem:[%s257 + $0xb8] sm:$0xff]
        %v3634 = vld [vmem:[%s257 + $0xc0] sm:$0xff]
        %v3635 = vld [vmem:[%s257 + $0xc8] sm:$0xff]
        %v3636 = vld [vmem:[%s257 + $0xd0] sm:$0xff]
        %v3637 = vld [vmem:[%s257 + $0xd8] sm:$0xff]
        %v3638 = vld [vmem:[%s257 + $0xe0] sm:$0xff]
        %v3639 = vld [vmem:[%s257 + $0xe8] sm:$0xff]
        %v3640 = vld [vmem:[%s257 + $0xf0] sm:$0xff]
        %v3641 = vld [vmem:[%s257 + $0xf8] sm:$0xff]
        %3674 = vrot.lane.b32.xlu0 %v3610, 32
        %v3675 = vpop.permute.xlu0 %3674
        %3676 = vrot.lane.b32.xlu0 %v3611, 32
        %v3677 = vpop.permute.xlu0 %3676
        %3678 = vrot.lane.b32.xlu0 %v3612, 32
        %v3679 = vpop.permute.xlu0 %3678
        %3680 = vrot.lane.b32.xlu0 %v3613, 32
        %v3681 = vpop.permute.xlu0 %3680
        %3682 = vrot.lane.b32.xlu0 %v3614, 32
        %v3683 = vpop.permute.xlu0 %3682
        %3684 = vrot.lane.b32.xlu0 %v3615, 32
        %v3685 = vpop.permute.xlu0 %3684
        %3686 = vrot.lane.b32.xlu0 %v3616, 32
        %v3687 = vpop.permute.xlu0 %3686
        %3688 = vrot.lane.b32.xlu0 %v3617, 32
        %v3689 = vpop.permute.xlu0 %3688
        %3690 = vrot.lane.b32.xlu0 %v3618, 32
        %v3691 = vpop.permute.xlu0 %3690
        %3692 = vrot.lane.b32.xlu0 %v3619, 32
        %v3693 = vpop.permute.xlu0 %3692
        %3694 = vrot.lane.b32.xlu0 %v3620, 32
        %v3695 = vpop.permute.xlu0 %3694
        %3696 = vrot.lane.b32.xlu0 %v3621, 32
        %v3697 = vpop.permute.xlu0 %3696
        %3698 = vrot.lane.b32.xlu0 %v3622, 32
        %v3699 = vpop.permute.xlu0 %3698
        %3700 = vrot.lane.b32.xlu0 %v3623, 32
        %v3701 = vpop.permute.xlu0 %3700
        %3702 = vrot.lane.b32.xlu0 %v3624, 32
        %v3703 = vpop.permute.xlu0 %3702
        %3704 = vrot.lane.b32.xlu0 %v3625, 32
        %v3705 = vpop.permute.xlu0 %3704
        %3706 = vrot.lane.b32.xlu0 %v3626, 32
        %v3707 = vpop.permute.xlu0 %3706
        %3708 = vrot.lane.b32.xlu0 %v3627, 32
        %v3709 = vpop.permute.xlu0 %3708
        %3710 = vrot.lane.b32.xlu0 %v3628, 32
        %v3711 = vpop.permute.xlu0 %3710
        %3712 = vrot.lane.b32.xlu0 %v3629, 32
        %v3713 = vpop.permute.xlu0 %3712
        %3714 = vrot.lane.b32.xlu0 %v3630, 32
        %v3715 = vpop.permute.xlu0 %3714
        %3716 = vrot.lane.b32.xlu0 %v3631, 32
        %v3717 = vpop.permute.xlu0 %3716
        %3718 = vrot.lane.b32.xlu0 %v3632, 32
        %v3719 = vpop.permute.xlu0 %3718
        %3720 = vrot.lane.b32.xlu0 %v3633, 32
        %v3721 = vpop.permute.xlu0 %3720
        %3722 = vrot.lane.b32.xlu0 %v3634, 32
        %v3723 = vpop.permute.xlu0 %3722
        %3724 = vrot.lane.b32.xlu0 %v3635, 32
        %v3725 = vpop.permute.xlu0 %3724
        %3726 = vrot.lane.b32.xlu0 %v3636, 32
        %v3727 = vpop.permute.xlu0 %3726
        %3728 = vrot.lane.b32.xlu0 %v3637, 32
        %v3729 = vpop.permute.xlu0 %3728
        %3730 = vrot.lane.b32.xlu0 %v3638, 32
        %v3731 = vpop.permute.xlu0 %3730
        %3732 = vrot.lane.b32.xlu0 %v3639, 32
        %v3733 = vpop.permute.xlu0 %3732
        %3734 = vrot.lane.b32.xlu0 %v3640, 32
        %v3735 = vpop.permute.xlu0 %3734
        %3736 = vrot.lane.b32.xlu0 %v3641, 32
        %v3737 = vpop.permute.xlu0 %3736
        %v3770 = vmul.f32 %v3547, %v3675
        %v3771 = vmul.f32 %v3549, %v3677
        %v3772 = vmul.f32 %v3551, %v3679
        %v3773 = vmul.f32 %v3553, %v3681
        %v3774 = vmul.f32 %v3555, %v3683
        %v3775 = vmul.f32 %v3557, %v3685
        %v3776 = vmul.f32 %v3559, %v3687
        %v3777 = vmul.f32 %v3561, %v3689
        %v3778 = vmul.f32 %v3563, %v3691
        %v3779 = vmul.f32 %v3565, %v3693
        %v3780 = vmul.f32 %v3567, %v3695
        %v3781 = vmul.f32 %v3569, %v3697
        %v3782 = vmul.f32 %v3571, %v3699
        %v3783 = vmul.f32 %v3573, %v3701
        %v3784 = vmul.f32 %v3575, %v3703
        %v3785 = vmul.f32 %v3577, %v3705
        %v3786 = vmul.f32 %v3579, %v3707
        %v3787 = vmul.f32 %v3581, %v3709
        %v3788 = vmul.f32 %v3583, %v3711
        %v3789 = vmul.f32 %v3585, %v3713
        %v3790 = vmul.f32 %v3587, %v3715
        %v3791 = vmul.f32 %v3589, %v3717
        %v3792 = vmul.f32 %v3591, %v3719
        %v3793 = vmul.f32 %v3593, %v3721
        %v3794 = vmul.f32 %v3595, %v3723
        %v3795 = vmul.f32 %v3597, %v3725
        %v3796 = vmul.f32 %v3599, %v3727
        %v3797 = vmul.f32 %v3601, %v3729
        %v3798 = vmul.f32 %v3603, %v3731
        %v3799 = vmul.f32 %v3605, %v3733
        %v3800 = vmul.f32 %v3607, %v3735
        %v3801 = vmul.f32 %v3609, %v3737
        %v3802 = vpack.c.bf16 %v3771, %v3770
        %v3803 = vpack.c.bf16 %v3773, %v3772
        %v3804 = vpack.c.bf16 %v3775, %v3774
        %v3805 = vpack.c.bf16 %v3777, %v3776
        %v3806 = vpack.c.bf16 %v3779, %v3778
        %v3807 = vpack.c.bf16 %v3781, %v3780
        %v3808 = vpack.c.bf16 %v3783, %v3782
        %v3809 = vpack.c.bf16 %v3785, %v3784
        %v3810 = vpack.c.bf16 %v3787, %v3786
        %v3811 = vpack.c.bf16 %v3789, %v3788
        %v3812 = vpack.c.bf16 %v3791, %v3790
        %v3813 = vpack.c.bf16 %v3793, %v3792
        %v3814 = vpack.c.bf16 %v3795, %v3794
        %v3815 = vpack.c.bf16 %v3797, %v3796
        %v3816 = vpack.c.bf16 %v3799, %v3798
        %v3817 = vpack.c.bf16 %v3801, %v3800
        %v3834 = vunpack.c.l.b16 %v3802
        %v3835 = vunpack.c.h.b16 %v3802
        %v3836 = vunpack.c.l.b16 %v3803
        %v3837 = vunpack.c.h.b16 %v3803
        %v3838 = vunpack.c.l.b16 %v3804
        %v3839 = vunpack.c.h.b16 %v3804
        %v3840 = vunpack.c.l.b16 %v3805
        %v3841 = vunpack.c.h.b16 %v3805
        %v3842 = vunpack.c.l.b16 %v3806
        %v3843 = vunpack.c.h.b16 %v3806
        %v3844 = vunpack.c.l.b16 %v3807
        %v3845 = vunpack.c.h.b16 %v3807
        %v3846 = vunpack.c.l.b16 %v3808
        %v3847 = vunpack.c.h.b16 %v3808
        %v3848 = vunpack.c.l.b16 %v3809
        %v3849 = vunpack.c.h.b16 %v3809
        %v3850 = vunpack.c.l.b16 %v3810
        %v3851 = vunpack.c.h.b16 %v3810
        %v3852 = vunpack.c.l.b16 %v3811
        %v3853 = vunpack.c.h.b16 %v3811
        %v3854 = vunpack.c.l.b16 %v3812
        %v3855 = vunpack.c.h.b16 %v3812
        %v3856 = vunpack.c.l.b16 %v3813
        %v3857 = vunpack.c.h.b16 %v3813
        %v3858 = vunpack.c.l.b16 %v3814
        %v3859 = vunpack.c.h.b16 %v3814
        %v3860 = vunpack.c.l.b16 %v3815
        %v3861 = vunpack.c.h.b16 %v3815
        %v3862 = vunpack.c.l.b16 %v3816
        %v3863 = vunpack.c.h.b16 %v3816
        %v3864 = vunpack.c.l.b16 %v3817
        %v3865 = vunpack.c.h.b16 %v3817
        %v3866 = vpack.c.b16 %v3834, %v3834
        %v3867 = vpack.c.b16 %v3835, %v3835
        %v3868 = vpack.c.b16 %v3836, %v3836
        %v3869 = vpack.c.b16 %v3837, %v3837
        %v3870 = vpack.c.b16 %v3838, %v3838
        %v3871 = vpack.c.b16 %v3839, %v3839
        %v3872 = vpack.c.b16 %v3840, %v3840
        %v3873 = vpack.c.b16 %v3841, %v3841
        %v3874 = vpack.c.b16 %v3842, %v3842
        %v3875 = vpack.c.b16 %v3843, %v3843
        %v3876 = vpack.c.b16 %v3844, %v3844
        %v3877 = vpack.c.b16 %v3845, %v3845
        %v3878 = vpack.c.b16 %v3846, %v3846
        %v3879 = vpack.c.b16 %v3847, %v3847
        %v3880 = vpack.c.b16 %v3848, %v3848
        %v3881 = vpack.c.b16 %v3849, %v3849
        %v3882 = vpack.c.b16 %v3850, %v3850
        %v3883 = vpack.c.b16 %v3851, %v3851
        %v3884 = vpack.c.b16 %v3852, %v3852
        %v3885 = vpack.c.b16 %v3853, %v3853
        %v3886 = vpack.c.b16 %v3854, %v3854
        %v3887 = vpack.c.b16 %v3855, %v3855
        %v3888 = vpack.c.b16 %v3856, %v3856
        %v3889 = vpack.c.b16 %v3857, %v3857
        %v3890 = vpack.c.b16 %v3858, %v3858
        %v3891 = vpack.c.b16 %v3859, %v3859
        %v3892 = vpack.c.b16 %v3860, %v3860
        %v3893 = vpack.c.b16 %v3861, %v3861
        %v3894 = vpack.c.b16 %v3862, %v3862
        %v3895 = vpack.c.b16 %v3863, %v3863
        %v3896 = vpack.c.b16 %v3864, %v3864
        %v3897 = vpack.c.b16 %v3865, %v3865
        %vm3898 = vsmask.f32 4368
        %vm3899 = vmor %vm269, %vm3898
        %v3901 = vshrl.u32 %v3866, 16
        %v3903 = vrot.slane %v3901, 7
        %v3904 = vshll.u32 %v3866, 16
        %v3906 = vor.u32 %v3903, %v3904
        %v3907 = vrot.slane %v3903, 4
        %v3909 = vshrl.u32 %v3867, 16
        %v3911 = vrot.slane %v3909, 7
        %v3912 = vshll.u32 %v3867, 16
        %v3914 = vor.u32 %v3911, %v3912
        %v3915 = vsel %vm3899, %v3907, %v3914
        %v3916 = vrot.slane %v3911, 4
        %v3918 = vshrl.u32 %v3868, 16
        %v3920 = vrot.slane %v3918, 7
        %v3921 = vshll.u32 %v3868, 16
        %v3923 = vor.u32 %v3920, %v3921
        %v3924 = vrot.slane %v3920, 4
        %v3926 = vshrl.u32 %v3869, 16
        %v3928 = vrot.slane %v3926, 7
        %v3929 = vshll.u32 %v3869, 16
        %v3931 = vor.u32 %v3928, %v3929
        %v3932 = vsel %vm3899, %v3924, %v3931
        %v3933 = vrot.slane %v3928, 4
        %v3935 = vshrl.u32 %v3870, 16
        %v3937 = vrot.slane %v3935, 7
        %v3938 = vshll.u32 %v3870, 16
        %v3940 = vor.u32 %v3937, %v3938
        %v3941 = vrot.slane %v3937, 4
        %v3943 = vshrl.u32 %v3871, 16
        %v3945 = vrot.slane %v3943, 7
        %v3946 = vshll.u32 %v3871, 16
        %v3948 = vor.u32 %v3945, %v3946
        %v3949 = vsel %vm3899, %v3941, %v3948
        %v3950 = vrot.slane %v3945, 4
        %v3952 = vshrl.u32 %v3872, 16
        %v3954 = vrot.slane %v3952, 7
        %v3955 = vshll.u32 %v3872, 16
        %v3957 = vor.u32 %v3954, %v3955
        %v3958 = vrot.slane %v3954, 4
        %v3960 = vshrl.u32 %v3873, 16
        %v3962 = vrot.slane %v3960, 7
        %v3963 = vshll.u32 %v3873, 16
        %v3965 = vor.u32 %v3962, %v3963
        %v3966 = vsel %vm3899, %v3958, %v3965
        %v3967 = vrot.slane %v3962, 4
        %v3969 = vshrl.u32 %v3874, 16
        %v3971 = vrot.slane %v3969, 7
        %v3972 = vshll.u32 %v3874, 16
        %v3974 = vor.u32 %v3971, %v3972
        %v3975 = vrot.slane %v3971, 4
        %v3977 = vshrl.u32 %v3875, 16
        %v3979 = vrot.slane %v3977, 7
        %v3980 = vshll.u32 %v3875, 16
        %v3982 = vor.u32 %v3979, %v3980
        %v3983 = vsel %vm3899, %v3975, %v3982
        %v3984 = vrot.slane %v3979, 4
        %v3986 = vshrl.u32 %v3876, 16
        %v3988 = vrot.slane %v3986, 7
        %v3989 = vshll.u32 %v3876, 16
        %v3991 = vor.u32 %v3988, %v3989
        %v3992 = vrot.slane %v3988, 4
        %v3994 = vshrl.u32 %v3877, 16
        %v3996 = vrot.slane %v3994, 7
        %v3997 = vshll.u32 %v3877, 16
        %v3999 = vor.u32 %v3996, %v3997
        %v4000 = vsel %vm3899, %v3992, %v3999
        %v4001 = vrot.slane %v3996, 4
        %v4003 = vshrl.u32 %v3878, 16
        %v4005 = vrot.slane %v4003, 7
        %v4006 = vshll.u32 %v3878, 16
        %v4008 = vor.u32 %v4005, %v4006
        %v4009 = vrot.slane %v4005, 4
        %v4011 = vshrl.u32 %v3879, 16
        %v4013 = vrot.slane %v4011, 7
        %v4014 = vshll.u32 %v3879, 16
        %v4016 = vor.u32 %v4013, %v4014
        %v4017 = vsel %vm3899, %v4009, %v4016
        %v4018 = vrot.slane %v4013, 4
        %v4020 = vshrl.u32 %v3880, 16
        %v4022 = vrot.slane %v4020, 7
        %v4023 = vshll.u32 %v3880, 16
        %v4025 = vor.u32 %v4022, %v4023
        %v4026 = vrot.slane %v4022, 4
        %v4028 = vshrl.u32 %v3881, 16
        %v4030 = vrot.slane %v4028, 7
        %v4031 = vshll.u32 %v3881, 16
        %v4033 = vor.u32 %v4030, %v4031
        %v4034 = vsel %vm3899, %v4026, %v4033
        %v4035 = vrot.slane %v4030, 4
        %v4037 = vshrl.u32 %v3882, 16
        %v4039 = vrot.slane %v4037, 7
        %v4040 = vshll.u32 %v3882, 16
        %v4042 = vor.u32 %v4039, %v4040
        %v4043 = vrot.slane %v4039, 4
        %v4045 = vshrl.u32 %v3883, 16
        %v4047 = vrot.slane %v4045, 7
        %v4048 = vshll.u32 %v3883, 16
        %v4050 = vor.u32 %v4047, %v4048
        %v4051 = vsel %vm3899, %v4043, %v4050
        %v4052 = vrot.slane %v4047, 4
        %v4054 = vshrl.u32 %v3884, 16
        %v4056 = vrot.slane %v4054, 7
        %v4057 = vshll.u32 %v3884, 16
        %v4059 = vor.u32 %v4056, %v4057
        %v4060 = vrot.slane %v4056, 4
        %v4062 = vshrl.u32 %v3885, 16
        %v4064 = vrot.slane %v4062, 7
        %v4065 = vshll.u32 %v3885, 16
        %v4067 = vor.u32 %v4064, %v4065
        %v4068 = vsel %vm3899, %v4060, %v4067
        %v4069 = vrot.slane %v4064, 4
        %v4071 = vshrl.u32 %v3886, 16
        %v4073 = vrot.slane %v4071, 7
        %v4074 = vshll.u32 %v3886, 16
        %v4076 = vor.u32 %v4073, %v4074
        %v4077 = vrot.slane %v4073, 4
        %v4079 = vshrl.u32 %v3887, 16
        %v4081 = vrot.slane %v4079, 7
        %v4082 = vshll.u32 %v3887, 16
        %v4084 = vor.u32 %v4081, %v4082
        %v4085 = vsel %vm3899, %v4077, %v4084
        %v4086 = vrot.slane %v4081, 4
        %v4088 = vshrl.u32 %v3888, 16
        %v4090 = vrot.slane %v4088, 7
        %v4091 = vshll.u32 %v3888, 16
        %v4093 = vor.u32 %v4090, %v4091
        %v4094 = vrot.slane %v4090, 4
        %v4096 = vshrl.u32 %v3889, 16
        %v4098 = vrot.slane %v4096, 7
        %v4099 = vshll.u32 %v3889, 16
        %v4101 = vor.u32 %v4098, %v4099
        %v4102 = vsel %vm3899, %v4094, %v4101
        %v4103 = vrot.slane %v4098, 4
        %v4105 = vshrl.u32 %v3890, 16
        %v4107 = vrot.slane %v4105, 7
        %v4108 = vshll.u32 %v3890, 16
        %v4110 = vor.u32 %v4107, %v4108
        %v4111 = vrot.slane %v4107, 4
        %v4113 = vshrl.u32 %v3891, 16
        %v4115 = vrot.slane %v4113, 7
        %v4116 = vshll.u32 %v3891, 16
        %v4118 = vor.u32 %v4115, %v4116
        %v4119 = vsel %vm3899, %v4111, %v4118
        %v4120 = vrot.slane %v4115, 4
        %v4122 = vshrl.u32 %v3892, 16
        %v4124 = vrot.slane %v4122, 7
        %v4125 = vshll.u32 %v3892, 16
        %v4127 = vor.u32 %v4124, %v4125
        %v4128 = vrot.slane %v4124, 4
        %v4130 = vshrl.u32 %v3893, 16
        %v4132 = vrot.slane %v4130, 7
        %v4133 = vshll.u32 %v3893, 16
        %v4135 = vor.u32 %v4132, %v4133
        %v4136 = vsel %vm3899, %v4128, %v4135
        %v4137 = vrot.slane %v4132, 4
        %v4139 = vshrl.u32 %v3894, 16
        %v4141 = vrot.slane %v4139, 7
        %v4142 = vshll.u32 %v3894, 16
        %v4144 = vor.u32 %v4141, %v4142
        %v4145 = vrot.slane %v4141, 4
        %v4147 = vshrl.u32 %v3895, 16
        %v4149 = vrot.slane %v4147, 7
        %v4150 = vshll.u32 %v3895, 16
        %v4152 = vor.u32 %v4149, %v4150
        %v4153 = vsel %vm3899, %v4145, %v4152
        %v4154 = vrot.slane %v4149, 4
        %v4156 = vshrl.u32 %v3896, 16
        %v4158 = vrot.slane %v4156, 7
        %v4159 = vshll.u32 %v3896, 16
        %v4161 = vor.u32 %v4158, %v4159
        %v4162 = vrot.slane %v4158, 4
        %v4164 = vshrl.u32 %v3897, 16
        %v4166 = vrot.slane %v4164, 7
        %v4167 = vshll.u32 %v3897, 16
        %v4169 = vor.u32 %v4166, %v4167
        %v4170 = vsel %vm3899, %v4162, %v4169
        %v4171 = vrot.slane %v4166, 4
        %4172 = vrot.lane.b32.xlu0 %v3906, 96
        %v4173 = vpop.permute.xlu0 %4172
        %4174 = vrot.lane.b32.xlu0 %v3915, 96
        %v4175 = vpop.permute.xlu0 %4174
        %4176 = vrot.lane.b32.xlu0 %v3916, 96
        %v4177 = vpop.permute.xlu0 %4176
        %4178 = vrot.lane.b32.xlu0 %v3923, 96
        %v4179 = vpop.permute.xlu0 %4178
        %4180 = vrot.lane.b32.xlu0 %v3932, 96
        %v4181 = vpop.permute.xlu0 %4180
        %4182 = vrot.lane.b32.xlu0 %v3933, 96
        %v4183 = vpop.permute.xlu0 %4182
        %4184 = vrot.lane.b32.xlu0 %v3940, 96
        %v4185 = vpop.permute.xlu0 %4184
        %4186 = vrot.lane.b32.xlu0 %v3949, 96
        %v4187 = vpop.permute.xlu0 %4186
        %4188 = vrot.lane.b32.xlu0 %v3950, 96
        %v4189 = vpop.permute.xlu0 %4188
        %4190 = vrot.lane.b32.xlu0 %v3957, 96
        %v4191 = vpop.permute.xlu0 %4190
        %4192 = vrot.lane.b32.xlu0 %v3966, 96
        %v4193 = vpop.permute.xlu0 %4192
        %4194 = vrot.lane.b32.xlu0 %v3967, 96
        %v4195 = vpop.permute.xlu0 %4194
        %4196 = vrot.lane.b32.xlu0 %v3974, 96
        %v4197 = vpop.permute.xlu0 %4196
        %4198 = vrot.lane.b32.xlu0 %v3983, 96
        %v4199 = vpop.permute.xlu0 %4198
        %4200 = vrot.lane.b32.xlu0 %v3984, 96
        %v4201 = vpop.permute.xlu0 %4200
        %4202 = vrot.lane.b32.xlu0 %v3991, 96
        %v4203 = vpop.permute.xlu0 %4202
        %4204 = vrot.lane.b32.xlu0 %v4000, 96
        %v4205 = vpop.permute.xlu0 %4204
        %4206 = vrot.lane.b32.xlu0 %v4001, 96
        %v4207 = vpop.permute.xlu0 %4206
        %4208 = vrot.lane.b32.xlu0 %v4008, 96
        %v4209 = vpop.permute.xlu0 %4208
        %4210 = vrot.lane.b32.xlu0 %v4017, 96
        %v4211 = vpop.permute.xlu0 %4210
        %4212 = vrot.lane.b32.xlu0 %v4018, 96
        %v4213 = vpop.permute.xlu0 %4212
        %4214 = vrot.lane.b32.xlu0 %v4025, 96
        %v4215 = vpop.permute.xlu0 %4214
        %4216 = vrot.lane.b32.xlu0 %v4034, 96
        %v4217 = vpop.permute.xlu0 %4216
        %4218 = vrot.lane.b32.xlu0 %v4035, 96
        %v4219 = vpop.permute.xlu0 %4218
        %4220 = vrot.lane.b32.xlu0 %v4042, 96
        %v4221 = vpop.permute.xlu0 %4220
        %4222 = vrot.lane.b32.xlu0 %v4051, 96
        %v4223 = vpop.permute.xlu0 %4222
        %4224 = vrot.lane.b32.xlu0 %v4052, 96
        %v4225 = vpop.permute.xlu0 %4224
        %4226 = vrot.lane.b32.xlu0 %v4059, 96
        %v4227 = vpop.permute.xlu0 %4226
        %4228 = vrot.lane.b32.xlu0 %v4068, 96
        %v4229 = vpop.permute.xlu0 %4228
        %4230 = vrot.lane.b32.xlu0 %v4069, 96
        %v4231 = vpop.permute.xlu0 %4230
        %4232 = vrot.lane.b32.xlu0 %v4076, 96
        %v4233 = vpop.permute.xlu0 %4232
        %4234 = vrot.lane.b32.xlu0 %v4085, 96
        %v4235 = vpop.permute.xlu0 %4234
        %4236 = vrot.lane.b32.xlu0 %v4086, 96
        %v4237 = vpop.permute.xlu0 %4236
        %4238 = vrot.lane.b32.xlu0 %v4093, 96
        %v4239 = vpop.permute.xlu0 %4238
        %4240 = vrot.lane.b32.xlu0 %v4102, 96
        %v4241 = vpop.permute.xlu0 %4240
        %4242 = vrot.lane.b32.xlu0 %v4103, 96
        %v4243 = vpop.permute.xlu0 %4242
        %4244 = vrot.lane.b32.xlu0 %v4110, 96
        %v4245 = vpop.permute.xlu0 %4244
        %4246 = vrot.lane.b32.xlu0 %v4119, 96
        %v4247 = vpop.permute.xlu0 %4246
        %4248 = vrot.lane.b32.xlu0 %v4120, 96
        %v4249 = vpop.permute.xlu0 %4248
        %4250 = vrot.lane.b32.xlu0 %v4127, 96
        %v4251 = vpop.permute.xlu0 %4250
        %4252 = vrot.lane.b32.xlu0 %v4136, 96
        %v4253 = vpop.permute.xlu0 %4252
        %4254 = vrot.lane.b32.xlu0 %v4137, 96
        %v4255 = vpop.permute.xlu0 %4254
        %4256 = vrot.lane.b32.xlu0 %v4144, 96
        %v4257 = vpop.permute.xlu0 %4256
        %4258 = vrot.lane.b32.xlu0 %v4153, 96
        %v4259 = vpop.permute.xlu0 %4258
        %4260 = vrot.lane.b32.xlu0 %v4154, 96
        %v4261 = vpop.permute.xlu0 %4260
        %4262 = vrot.lane.b32.xlu0 %v4161, 96
        %v4263 = vpop.permute.xlu0 %4262
        %4264 = vrot.lane.b32.xlu0 %v4170, 96
        %v4265 = vpop.permute.xlu0 %4264
        %4266 = vrot.lane.b32.xlu0 %v4171, 96
        %v4267 = vpop.permute.xlu0 %4266
        %s4316 = scalar_lea.vmem [#allocation2], 12
        %vm4317 = vcmask 257024
        %vm4318 = vmand %vm4317, %vm325
        %v4319 = vld [vmem:[%s4316] sm:$0xf]
        %v4320 = vsel %vm4318, %v4173, %v4319
        %4321 = vst [vmem:[%s4316] sm:$0xf] %v4320
        %4322 = vst.msk [vmem:[%s4316 + $0x4] sm:$0xf] %vm259, %v4175
        %v4323 = vld [vmem:[%s4316 + $0x8] sm:$0x1]
        %v4324 = vsel %vm270, %v4177, %v4323
        %4325 = vst [vmem:[%s4316 + $0x8] sm:$0x1] %v4324
        %v4326 = vld [vmem:[%s4316 + $0xc] sm:$0xf]
        %v4327 = vsel %vm4318, %v4179, %v4326
        %4328 = vst [vmem:[%s4316 + $0xc] sm:$0xf] %v4327
        %4329 = vst.msk [vmem:[%s4316 + $0x10] sm:$0xf] %vm259, %v4181
        %v4330 = vld [vmem:[%s4316 + $0x14] sm:$0x1]
        %v4331 = vsel %vm270, %v4183, %v4330
        %4332 = vst [vmem:[%s4316 + $0x14] sm:$0x1] %v4331
        %v4333 = vld [vmem:[%s4316 + $0x18] sm:$0xf]
        %v4334 = vsel %vm4318, %v4185, %v4333
        %4335 = vst [vmem:[%s4316 + $0x18] sm:$0xf] %v4334
        %4336 = vst.msk [vmem:[%s4316 + $0x1c] sm:$0xf] %vm259, %v4187
        %v4337 = vld [vmem:[%s4316 + $0x20] sm:$0x1]
        %v4338 = vsel %vm270, %v4189, %v4337
        %4339 = vst [vmem:[%s4316 + $0x20] sm:$0x1] %v4338
        %v4340 = vld [vmem:[%s4316 + $0x24] sm:$0xf]
        %v4341 = vsel %vm4318, %v4191, %v4340
        %4342 = vst [vmem:[%s4316 + $0x24] sm:$0xf] %v4341
        %4343 = vst.msk [vmem:[%s4316 + $0x28] sm:$0xf] %vm259, %v4193
        %v4344 = vld [vmem:[%s4316 + $0x2c] sm:$0x1]
        %v4345 = vsel %vm270, %v4195, %v4344
        %4346 = vst [vmem:[%s4316 + $0x2c] sm:$0x1] %v4345
        %v4347 = vld [vmem:[%s4316 + $0x30] sm:$0xf]
        %v4348 = vsel %vm4318, %v4197, %v4347
        %4349 = vst [vmem:[%s4316 + $0x30] sm:$0xf] %v4348
        %4350 = vst.msk [vmem:[%s4316 + $0x34] sm:$0xf] %vm259, %v4199
        %v4351 = vld [vmem:[%s4316 + $0x38] sm:$0x1]
        %v4352 = vsel %vm270, %v4201, %v4351
        %4353 = vst [vmem:[%s4316 + $0x38] sm:$0x1] %v4352
        %v4354 = vld [vmem:[%s4316 + $0x3c] sm:$0xf]
        %v4355 = vsel %vm4318, %v4203, %v4354
        %4356 = vst [vmem:[%s4316 + $0x3c] sm:$0xf] %v4355
        %4357 = vst.msk [vmem:[%s4316 + $0x40] sm:$0xf] %vm259, %v4205
        %v4358 = vld [vmem:[%s4316 + $0x44] sm:$0x1]
        %v4359 = vsel %vm270, %v4207, %v4358
        %4360 = vst [vmem:[%s4316 + $0x44] sm:$0x1] %v4359
        %v4361 = vld [vmem:[%s4316 + $0x48] sm:$0xf]
        %v4362 = vsel %vm4318, %v4209, %v4361
        %4363 = vst [vmem:[%s4316 + $0x48] sm:$0xf] %v4362
        %4364 = vst.msk [vmem:[%s4316 + $0x4c] sm:$0xf] %vm259, %v4211
        %v4365 = vld [vmem:[%s4316 + $0x50] sm:$0x1]
        %v4366 = vsel %vm270, %v4213, %v4365
        %4367 = vst [vmem:[%s4316 + $0x50] sm:$0x1] %v4366
        %v4368 = vld [vmem:[%s4316 + $0x54] sm:$0xf]
        %v4369 = vsel %vm4318, %v4215, %v4368
        %4370 = vst [vmem:[%s4316 + $0x54] sm:$0xf] %v4369
        %4371 = vst.msk [vmem:[%s4316 + $0x58] sm:$0xf] %vm259, %v4217
        %v4372 = vld [vmem:[%s4316 + $0x5c] sm:$0x1]
        %v4373 = vsel %vm270, %v4219, %v4372
        %4374 = vst [vmem:[%s4316 + $0x5c] sm:$0x1] %v4373
        %v4375 = vld [vmem:[%s4316 + $0x60] sm:$0xf]
        %v4376 = vsel %vm4318, %v4221, %v4375
        %4377 = vst [vmem:[%s4316 + $0x60] sm:$0xf] %v4376
        %4378 = vst.msk [vmem:[%s4316 + $0x64] sm:$0xf] %vm259, %v4223
        %v4379 = vld [vmem:[%s4316 + $0x68] sm:$0x1]
        %v4380 = vsel %vm270, %v4225, %v4379
        %4381 = vst [vmem:[%s4316 + $0x68] sm:$0x1] %v4380
        %v4382 = vld [vmem:[%s4316 + $0x6c] sm:$0xf]
        %v4383 = vsel %vm4318, %v4227, %v4382
        %4384 = vst [vmem:[%s4316 + $0x6c] sm:$0xf] %v4383
        %4385 = vst.msk [vmem:[%s4316 + $0x70] sm:$0xf] %vm259, %v4229
        %v4386 = vld [vmem:[%s4316 + $0x74] sm:$0x1]
        %v4387 = vsel %vm270, %v4231, %v4386
        %4388 = vst [vmem:[%s4316 + $0x74] sm:$0x1] %v4387
        %v4389 = vld [vmem:[%s4316 + $0x78] sm:$0xf]
        %v4390 = vsel %vm4318, %v4233, %v4389
        %4391 = vst [vmem:[%s4316 + $0x78] sm:$0xf] %v4390
        %4392 = vst.msk [vmem:[%s4316 + $0x7c] sm:$0xf] %vm259, %v4235
        %v4393 = vld [vmem:[%s4316 + $0x80] sm:$0x1]
        %v4394 = vsel %vm270, %v4237, %v4393
        %4395 = vst [vmem:[%s4316 + $0x80] sm:$0x1] %v4394
        %v4396 = vld [vmem:[%s4316 + $0x84] sm:$0xf]
        %v4397 = vsel %vm4318, %v4239, %v4396
        %4398 = vst [vmem:[%s4316 + $0x84] sm:$0xf] %v4397
        %4399 = vst.msk [vmem:[%s4316 + $0x88] sm:$0xf] %vm259, %v4241
        %v4400 = vld [vmem:[%s4316 + $0x8c] sm:$0x1]
        %v4401 = vsel %vm270, %v4243, %v4400
        %4402 = vst [vmem:[%s4316 + $0x8c] sm:$0x1] %v4401
        %v4403 = vld [vmem:[%s4316 + $0x90] sm:$0xf]
        %v4404 = vsel %vm4318, %v4245, %v4403
        %4405 = vst [vmem:[%s4316 + $0x90] sm:$0xf] %v4404
        %4406 = vst.msk [vmem:[%s4316 + $0x94] sm:$0xf] %vm259, %v4247
        %v4407 = vld [vmem:[%s4316 + $0x98] sm:$0x1]
        %v4408 = vsel %vm270, %v4249, %v4407
        %4409 = vst [vmem:[%s4316 + $0x98] sm:$0x1] %v4408
        %v4410 = vld [vmem:[%s4316 + $0x9c] sm:$0xf]
        %v4411 = vsel %vm4318, %v4251, %v4410
        %4412 = vst [vmem:[%s4316 + $0x9c] sm:$0xf] %v4411
        %4413 = vst.msk [vmem:[%s4316 + $0xa0] sm:$0xf] %vm259, %v4253
        %v4414 = vld [vmem:[%s4316 + $0xa4] sm:$0x1]
        %v4415 = vsel %vm270, %v4255, %v4414
        %4416 = vst [vmem:[%s4316 + $0xa4] sm:$0x1] %v4415
        %v4417 = vld [vmem:[%s4316 + $0xa8] sm:$0xf]
        %v4418 = vsel %vm4318, %v4257, %v4417
        %4419 = vst [vmem:[%s4316 + $0xa8] sm:$0xf] %v4418
        %4420 = vst.msk [vmem:[%s4316 + $0xac] sm:$0xf] %vm259, %v4259
        %v4421 = vld [vmem:[%s4316 + $0xb0] sm:$0x1]
        %v4422 = vsel %vm270, %v4261, %v4421
        %4423 = vst [vmem:[%s4316 + $0xb0] sm:$0x1] %v4422
        %v4424 = vld [vmem:[%s4316 + $0xb4] sm:$0xf]
        %v4425 = vsel %vm4318, %v4263, %v4424
        %4426 = vst [vmem:[%s4316 + $0xb4] sm:$0xf] %v4425
        %4427 = vst.msk [vmem:[%s4316 + $0xb8] sm:$0xf] %vm259, %v4265
        %v4428 = vld [vmem:[%s4316 + $0xbc] sm:$0x1]
        %v4429 = vsel %vm270, %v4267, %v4428
        %4430 = vst [vmem:[%s4316 + $0xbc] sm:$0x1] %v4429
        %v4431 = vld [vmem:[#allocation2] sm:$0xf]
        %v4432 = vld [vmem:[#allocation2 + $0x4] sm:$0xf]
        %v4433 = vld [vmem:[#allocation2 + $0x8] sm:$0x1]
        %v4434 = vld [vmem:[#allocation2 + $0xc] sm:$0xf]
        %v4435 = vld [vmem:[#allocation2 + $0x10] sm:$0xf]
        %v4436 = vld [vmem:[#allocation2 + $0x14] sm:$0x1]
        %v4437 = vld [vmem:[#allocation2 + $0x18] sm:$0xf]
        %v4438 = vld [vmem:[#allocation2 + $0x1c] sm:$0xf]
        %v4439 = vld [vmem:[#allocation2 + $0x20] sm:$0x1]
        %v4440 = vld [vmem:[#allocation2 + $0x24] sm:$0xf]
        %v4441 = vld [vmem:[#allocation2 + $0x28] sm:$0xf]
        %v4442 = vld [vmem:[#allocation2 + $0x2c] sm:$0x1]
        %v4443 = vld [vmem:[#allocation2 + $0x30] sm:$0xf]
        %v4444 = vld [vmem:[#allocation2 + $0x34] sm:$0xf]
        %v4445 = vld [vmem:[#allocation2 + $0x38] sm:$0x1]
        %v4446 = vld [vmem:[#allocation2 + $0x3c] sm:$0xf]
        %v4447 = vld [vmem:[#allocation2 + $0x40] sm:$0xf]
        %v4448 = vld [vmem:[#allocation2 + $0x44] sm:$0x1]
        %v4449 = vld [vmem:[#allocation2 + $0x48] sm:$0xf]
        %v4450 = vld [vmem:[#allocation2 + $0x4c] sm:$0xf]
        %v4451 = vld [vmem:[#allocation2 + $0x50] sm:$0x1]
        %v4452 = vld [vmem:[#allocation2 + $0x54] sm:$0xf]
        %v4453 = vld [vmem:[#allocation2 + $0x58] sm:$0xf]
        %v4454 = vld [vmem:[#allocation2 + $0x5c] sm:$0x1]
        %v4455 = vld [vmem:[#allocation2 + $0x60] sm:$0xf]
        %v4456 = vld [vmem:[#allocation2 + $0x64] sm:$0xf]
        %v4457 = vld [vmem:[#allocation2 + $0x68] sm:$0x1]
        %v4458 = vld [vmem:[#allocation2 + $0x6c] sm:$0xf]
        %v4459 = vld [vmem:[#allocation2 + $0x70] sm:$0xf]
        %v4460 = vld [vmem:[#allocation2 + $0x74] sm:$0x1]
        %v4461 = vld [vmem:[#allocation2 + $0x78] sm:$0xf]
        %v4462 = vld [vmem:[#allocation2 + $0x7c] sm:$0xf]
        %v4463 = vld [vmem:[#allocation2 + $0x80] sm:$0x1]
        %v4464 = vld [vmem:[#allocation2 + $0x84] sm:$0xf]
        %v4465 = vld [vmem:[#allocation2 + $0x88] sm:$0xf]
        %v4466 = vld [vmem:[#allocation2 + $0x8c] sm:$0x1]
        %v4467 = vld [vmem:[#allocation2 + $0x90] sm:$0xf]
        %v4468 = vld [vmem:[#allocation2 + $0x94] sm:$0xf]
        %v4469 = vld [vmem:[#allocation2 + $0x98] sm:$0x1]
        %v4470 = vld [vmem:[#allocation2 + $0x9c] sm:$0xf]
        %v4471 = vld [vmem:[#allocation2 + $0xa0] sm:$0xf]
        %v4472 = vld [vmem:[#allocation2 + $0xa4] sm:$0x1]
        %v4473 = vld [vmem:[#allocation2 + $0xa8] sm:$0xf]
        %v4474 = vld [vmem:[#allocation2 + $0xac] sm:$0xf]
        %v4475 = vld [vmem:[#allocation2 + $0xb0] sm:$0x1]
        %v4476 = vld [vmem:[#allocation2 + $0xb4] sm:$0xf]
        %v4477 = vld [vmem:[#allocation2 + $0xb8] sm:$0xf]
        %v4478 = vld [vmem:[#allocation2 + $0xbc] sm:$0x1]
        %v4479 = vld [vmem:[#allocation2 + $0xc0] sm:$0xf]
        %v4480 = vld [vmem:[#allocation2 + $0xc4] sm:$0xf]
        %v4481 = vld [vmem:[#allocation2 + $0xc8] sm:$0x1]
        %v4482 = vld [vmem:[#allocation2 + $0xcc] sm:$0xf]
        %v4483 = vld [vmem:[#allocation2 + $0xd0] sm:$0xf]
        %v4484 = vld [vmem:[#allocation2 + $0xd4] sm:$0x1]
        %v4485 = vld [vmem:[%s4] sm:$0xf]
        %v4486 = vld [vmem:[%s4 + $0x4] sm:$0xf]
        %v4487 = vld [vmem:[%s4 + $0x8] sm:$0xf]
        %v4488 = vld [vmem:[%s4 + $0xc] sm:$0xf]
        %v4521 = vunpack.c.l.b16 %v4431
        %v4522 = vunpack.c.l.b16 %v4432
        %v4523 = vunpack.c.l.b16 %v4434
        %v4524 = vunpack.c.l.b16 %v4435
        %v4525 = vunpack.c.l.b16 %v4437
        %v4526 = vunpack.c.l.b16 %v4438
        %v4527 = vunpack.c.l.b16 %v4440
        %v4528 = vunpack.c.l.b16 %v4441
        %v4529 = vunpack.c.l.b16 %v4443
        %v4530 = vunpack.c.l.b16 %v4444
        %v4531 = vunpack.c.l.b16 %v4446
        %v4532 = vunpack.c.l.b16 %v4447
        %v4533 = vunpack.c.l.b16 %v4449
        %v4534 = vunpack.c.l.b16 %v4450
        %v4535 = vunpack.c.l.b16 %v4452
        %v4536 = vunpack.c.l.b16 %v4453
        %v4537 = vunpack.c.l.b16 %v4455
        %v4538 = vunpack.c.l.b16 %v4456
        %v4539 = vunpack.c.l.b16 %v4458
        %v4540 = vunpack.c.l.b16 %v4459
        %v4541 = vunpack.c.l.b16 %v4461
        %v4542 = vunpack.c.l.b16 %v4462
        %v4543 = vunpack.c.l.b16 %v4464
        %v4544 = vunpack.c.l.b16 %v4465
        %v4545 = vunpack.c.l.b16 %v4467
        %v4546 = vunpack.c.l.b16 %v4468
        %v4547 = vunpack.c.l.b16 %v4470
        %v4548 = vunpack.c.l.b16 %v4471
        %v4549 = vunpack.c.l.b16 %v4473
        %v4550 = vunpack.c.l.b16 %v4474
        %v4551 = vunpack.c.l.b16 %v4476
        %v4552 = vunpack.c.l.b16 %v4477
        %v4553 = vpack.c.b16 %v4522, %v4521
        %v4554 = vpack.c.b16 %v4524, %v4523
        %v4555 = vpack.c.b16 %v4526, %v4525
        %v4556 = vpack.c.b16 %v4528, %v4527
        %v4557 = vpack.c.b16 %v4530, %v4529
        %v4558 = vpack.c.b16 %v4532, %v4531
        %v4559 = vpack.c.b16 %v4534, %v4533
        %v4560 = vpack.c.b16 %v4536, %v4535
        %v4561 = vpack.c.b16 %v4538, %v4537
        %v4562 = vpack.c.b16 %v4540, %v4539
        %v4563 = vpack.c.b16 %v4542, %v4541
        %v4564 = vpack.c.b16 %v4544, %v4543
        %v4565 = vpack.c.b16 %v4546, %v4545
        %v4566 = vpack.c.b16 %v4548, %v4547
        %v4567 = vpack.c.b16 %v4550, %v4549
        %v4568 = vpack.c.b16 %v4552, %v4551
        %v4573 = vunpack.c.l.b16 %v4485
        %v4574 = vunpack.c.l.b16 %v4486
        %v4575 = vunpack.c.l.b16 %v4487
        %v4576 = vunpack.c.l.b16 %v4488
        %v4577 = vpack.c.b16 %v4574, %v4573
        %v4578 = vpack.c.b16 %v4576, %v4575
        %vm4581 = vcmask 261120
        %v4583 = vsel %vm4581, %v4553, 0
        %v4586 = vsel %vm4581, %v4554, 0
        %v4589 = vsel %vm4581, %v4555, 0
        %v4592 = vsel %vm4581, %v4556, 0
        %v4595 = vsel %vm4581, %v4557, 0
        %v4598 = vsel %vm4581, %v4558, 0
        %v4601 = vsel %vm4581, %v4559, 0
        %v4604 = vsel %vm4581, %v4560, 0
        %v4607 = vsel %vm4581, %v4561, 0
        %v4610 = vsel %vm4581, %v4562, 0
        %v4613 = vsel %vm4581, %v4563, 0
        %v4616 = vsel %vm4581, %v4564, 0
        %v4619 = vsel %vm4581, %v4565, 0
        %v4622 = vsel %vm4581, %v4566, 0
        %v4625 = vsel %vm4581, %v4567, 0
        %v4628 = vsel %vm4581, %v4568, 0
        %4630 = vmatprep.subr.bf16.mxu0 0
        %4631 = vmatpush1.bf16.msra.mxu0 %v4577
        %4632 = vmatprep.subr.bf16.mxu0 0
        %4633 = vmatpush1.bf16.msra.mxu0 %v4578
        %4634 = vmatprep.subr.bf16.mxu0 0
        %4635 = vmatpush1.bf16.msra.mxu0 0
        %4636 = vmatprep.subr.bf16.mxu0 0
        %4637 = vmatpush1.bf16.msra.mxu0 0
        %4638 = vmatprep.subr.bf16.mxu0 0
        %4639 = vmatpush1.bf16.msra.mxu0 0
        %4640 = vmatprep.subr.bf16.mxu0 0
        %4641 = vmatpush1.bf16.msra.mxu0 0
        %4642 = vmatprep.subr.bf16.mxu0 0
        %4643 = vmatpush1.bf16.msra.mxu0 0
        %4644 = vmatprep.subr.bf16.mxu0 0
        %4645 = vmatpush1.bf16.msra.mxu0 0
        %4646 = vmatprep.subr.bf16.mxu0 0
        %4647 = vmatpush1.bf16.msra.mxu0 0
        %4648 = vmatprep.subr.bf16.mxu0 0
        %4649 = vmatpush1.bf16.msra.mxu0 0
        %4650 = vmatprep.subr.bf16.mxu0 0
        %4651 = vmatpush1.bf16.msra.mxu0 0
        %4652 = vmatprep.subr.bf16.mxu0 0
        %4653 = vmatpush1.bf16.msra.mxu0 0
        %4654 = vmatprep.subr.bf16.mxu0 0
        %4655 = vmatpush1.bf16.msra.mxu0 0
        %4656 = vmatprep.subr.bf16.mxu0 0
        %4657 = vmatpush1.bf16.msra.mxu0 0
        %4658 = vmatprep.subr.bf16.mxu0 0
        %4659 = vmatpush1.bf16.msra.mxu0 0
        %4660 = vmatprep.subr.bf16.mxu0 0
        %4661 = vmatpush1.bf16.msra.mxu0 0
        %4662 = vmatprep.mubr.bf16.mxu0 0
        %4663 = vmatmul.mubr.bf16.gmra.mrb[0].mxu0 %v4583
        %v4664 = vpop.f32.mrb[0].mxu0
        %v4665 = vadd.f32 0.0, %v4664
        %v4666 = vpop.f32.mrb[0].mxu0
        %v4667 = vpop.f32.mrb[0].mxu0
        %v4668 = vadd.f32 0.0, %v4667
        %v4669 = vpop.f32.mrb[0].mxu0
        %4670 = vmatprep.mubr.bf16.mxu0 0
        %4671 = vmatmul.mubr.bf16.gmra.mrb[0].mxu0 %v4586
        %v4672 = vpop.f32.mrb[0].mxu0
        %v4673 = vadd.f32 0.0, %v4672
        %v4674 = vpop.f32.mrb[0].mxu0
        %v4675 = vpop.f32.mrb[0].mxu0
        %v4676 = vadd.f32 0.0, %v4675
        %v4677 = vpop.f32.mrb[0].mxu0
        %4678 = vmatprep.mubr.bf16.mxu0 0
        %4679 = vmatmul.mubr.bf16.gmra.mrb[0].mxu0 %v4589
        %v4680 = vpop.f32.mrb[0].mxu0
        %v4681 = vadd.f32 0.0, %v4680
        %v4682 = vpop.f32.mrb[0].mxu0
        %v4683 = vpop.f32.mrb[0].mxu0
        %v4684 = vadd.f32 0.0, %v4683
        %v4685 = vpop.f32.mrb[0].mxu0
        %4686 = vmatprep.mubr.bf16.mxu0 0
        %4687 = vmatmul.mubr.bf16.gmra.mrb[0].mxu0 %v4592
        %v4688 = vpop.f32.mrb[0].mxu0
        %v4689 = vadd.f32 0.0, %v4688
        %v4690 = vpop.f32.mrb[0].mxu0
        %v4691 = vpop.f32.mrb[0].mxu0
        %v4692 = vadd.f32 0.0, %v4691
        %v4693 = vpop.f32.mrb[0].mxu0
        %4694 = vmatprep.mubr.bf16.mxu0 0
        %4695 = vmatmul.mubr.bf16.gmra.mrb[0].mxu0 %v4595
        %v4696 = vpop.f32.mrb[0].mxu0
        %v4697 = vadd.f32 0.0, %v4696
        %v4698 = vpop.f32.mrb[0].mxu0
        %v4699 = vpop.f32.mrb[0].mxu0
        %v4700 = vadd.f32 0.0, %v4699
        %v4701 = vpop.f32.mrb[0].mxu0
        %4702 = vmatprep.mubr.bf16.mxu0 0
        %4703 = vmatmul.mubr.bf16.gmra.mrb[0].mxu0 %v4598
        %v4704 = vpop.f32.mrb[0].mxu0
        %v4705 = vadd.f32 0.0, %v4704
        %v4706 = vpop.f32.mrb[0].mxu0
        %v4707 = vpop.f32.mrb[0].mxu0
        %v4708 = vadd.f32 0.0, %v4707
        %v4709 = vpop.f32.mrb[0].mxu0
        %4710 = vmatprep.mubr.bf16.mxu0 0
        %4711 = vmatmul.mubr.bf16.gmra.mrb[0].mxu0 %v4601
        %v4712 = vpop.f32.mrb[0].mxu0
        %v4713 = vadd.f32 0.0, %v4712
        %v4714 = vpop.f32.mrb[0].mxu0
        %v4715 = vpop.f32.mrb[0].mxu0
        %v4716 = vadd.f32 0.0, %v4715
        %v4717 = vpop.f32.mrb[0].mxu0
        %4718 = vmatprep.mubr.bf16.mxu0 0
        %4719 = vmatmul.mubr.bf16.gmra.mrb[0].mxu0 %v4604
        %v4720 = vpop.f32.mrb[0].mxu0
        %v4721 = vadd.f32 0.0, %v4720
        %v4722 = vpop.f32.mrb[0].mxu0
        %v4723 = vpop.f32.mrb[0].mxu0
        %v4724 = vadd.f32 0.0, %v4723
        %v4725 = vpop.f32.mrb[0].mxu0
        %4726 = vmatprep.mubr.bf16.mxu0 0
        %4727 = vmatmul.mubr.bf16.gmra.mrb[0].mxu0 %v4607
        %v4728 = vpop.f32.mrb[0].mxu0
        %v4729 = vadd.f32 0.0, %v4728
        %v4730 = vpop.f32.mrb[0].mxu0
        %v4731 = vpop.f32.mrb[0].mxu0
        %v4732 = vadd.f32 0.0, %v4731
        %v4733 = vpop.f32.mrb[0].mxu0
        %4734 = vmatprep.mubr.bf16.mxu0 0
        %4735 = vmatmul.mubr.bf16.gmra.mrb[0].mxu0 %v4610
        %v4736 = vpop.f32.mrb[0].mxu0
        %v4737 = vadd.f32 0.0, %v4736
        %v4738 = vpop.f32.mrb[0].mxu0
        %v4739 = vpop.f32.mrb[0].mxu0
        %v4740 = vadd.f32 0.0, %v4739
        %v4741 = vpop.f32.mrb[0].mxu0
        %4742 = vmatprep.mubr.bf16.mxu0 0
        %4743 = vmatmul.mubr.bf16.gmra.mrb[0].mxu0 %v4613
        %v4744 = vpop.f32.mrb[0].mxu0
        %v4745 = vadd.f32 0.0, %v4744
        %v4746 = vpop.f32.mrb[0].mxu0
        %v4747 = vpop.f32.mrb[0].mxu0
        %v4748 = vadd.f32 0.0, %v4747
        %v4749 = vpop.f32.mrb[0].mxu0
        %4750 = vmatprep.mubr.bf16.mxu0 0
        %4751 = vmatmul.mubr.bf16.gmra.mrb[0].mxu0 %v4616
        %v4752 = vpop.f32.mrb[0].mxu0
        %v4753 = vadd.f32 0.0, %v4752
        %v4754 = vpop.f32.mrb[0].mxu0
        %v4755 = vpop.f32.mrb[0].mxu0
        %v4756 = vadd.f32 0.0, %v4755
        %v4757 = vpop.f32.mrb[0].mxu0
        %4758 = vmatprep.mubr.bf16.mxu0 0
        %4759 = vmatmul.mubr.bf16.gmra.mrb[0].mxu0 %v4619
        %v4760 = vpop.f32.mrb[0].mxu0
        %v4761 = vadd.f32 0.0, %v4760
        %v4762 = vpop.f32.mrb[0].mxu0
        %v4763 = vpop.f32.mrb[0].mxu0
        %v4764 = vadd.f32 0.0, %v4763
        %v4765 = vpop.f32.mrb[0].mxu0
        %4766 = vmatprep.mubr.bf16.mxu0 0
        %4767 = vmatmul.mubr.bf16.gmra.mrb[0].mxu0 %v4622
        %v4768 = vpop.f32.mrb[0].mxu0
        %v4769 = vadd.f32 0.0, %v4768
        %v4770 = vpop.f32.mrb[0].mxu0
        %v4771 = vpop.f32.mrb[0].mxu0
        %v4772 = vadd.f32 0.0, %v4771
        %v4773 = vpop.f32.mrb[0].mxu0
        %4774 = vmatprep.mubr.bf16.mxu0 0
        %4775 = vmatmul.mubr.bf16.gmra.mrb[0].mxu0 %v4625
        %v4776 = vpop.f32.mrb[0].mxu0
        %v4777 = vadd.f32 0.0, %v4776
        %v4778 = vpop.f32.mrb[0].mxu0
        %v4779 = vpop.f32.mrb[0].mxu0
        %v4780 = vadd.f32 0.0, %v4779
        %v4781 = vpop.f32.mrb[0].mxu0
        %4782 = vmatprep.mubr.bf16.mxu0 0
        %4783 = vmatmul.mubr.bf16.gmra.mrb[0].mxu0 %v4628
        %v4784 = vpop.f32.mrb[0].mxu0
        %v4785 = vadd.f32 0.0, %v4784
        %v4786 = vpop.f32.mrb[0].mxu0
        %v4787 = vpop.f32.mrb[0].mxu0
        %v4788 = vadd.f32 0.0, %v4787
        %v4789 = vpop.f32.mrb[0].mxu0
        %4790 = vdwg.mxu0
        %4823 = vrot.lane.b32.xlu0 %v4665, 64
        %v4824 = vpop.permute.xlu0 %4823
        %4825 = vrot.lane.b32.xlu0 %v4668, 64
        %v4826 = vpop.permute.xlu0 %4825
        %4827 = vrot.lane.b32.xlu0 %v4673, 64
        %v4828 = vpop.permute.xlu0 %4827
        %4829 = vrot.lane.b32.xlu0 %v4676, 64
        %v4830 = vpop.permute.xlu0 %4829
        %4831 = vrot.lane.b32.xlu0 %v4681, 64
        %v4832 = vpop.permute.xlu0 %4831
        %4833 = vrot.lane.b32.xlu0 %v4684, 64
        %v4834 = vpop.permute.xlu0 %4833
        %4835 = vrot.lane.b32.xlu0 %v4689, 64
        %v4836 = vpop.permute.xlu0 %4835
        %4837 = vrot.lane.b32.xlu0 %v4692, 64
        %v4838 = vpop.permute.xlu0 %4837
        %4839 = vrot.lane.b32.xlu0 %v4697, 64
        %v4840 = vpop.permute.xlu0 %4839
        %4841 = vrot.lane.b32.xlu0 %v4700, 64
        %v4842 = vpop.permute.xlu0 %4841
        %4843 = vrot.lane.b32.xlu0 %v4705, 64
        %v4844 = vpop.permute.xlu0 %4843
        %4845 = vrot.lane.b32.xlu0 %v4708, 64
        %v4846 = vpop.permute.xlu0 %4845
        %4847 = vrot.lane.b32.xlu0 %v4713, 64
        %v4848 = vpop.permute.xlu0 %4847
        %4849 = vrot.lane.b32.xlu0 %v4716, 64
        %v4850 = vpop.permute.xlu0 %4849
        %4851 = vrot.lane.b32.xlu0 %v4721, 64
        %v4852 = vpop.permute.xlu0 %4851
        %4853 = vrot.lane.b32.xlu0 %v4724, 64
        %v4854 = vpop.permute.xlu0 %4853
        %4855 = vrot.lane.b32.xlu0 %v4729, 64
        %v4856 = vpop.permute.xlu0 %4855
        %4857 = vrot.lane.b32.xlu0 %v4732, 64
        %v4858 = vpop.permute.xlu0 %4857
        %4859 = vrot.lane.b32.xlu0 %v4737, 64
        %v4860 = vpop.permute.xlu0 %4859
        %4861 = vrot.lane.b32.xlu0 %v4740, 64
        %v4862 = vpop.permute.xlu0 %4861
        %4863 = vrot.lane.b32.xlu0 %v4745, 64
        %v4864 = vpop.permute.xlu0 %4863
        %4865 = vrot.lane.b32.xlu0 %v4748, 64
        %v4866 = vpop.permute.xlu0 %4865
        %4867 = vrot.lane.b32.xlu0 %v4753, 64
        %v4868 = vpop.permute.xlu0 %4867
        %4869 = vrot.lane.b32.xlu0 %v4756, 64
        %v4870 = vpop.permute.xlu0 %4869
        %4871 = vrot.lane.b32.xlu0 %v4761, 64
        %v4872 = vpop.permute.xlu0 %4871
        %4873 = vrot.lane.b32.xlu0 %v4764, 64
        %v4874 = vpop.permute.xlu0 %4873
        %4875 = vrot.lane.b32.xlu0 %v4769, 64
        %v4876 = vpop.permute.xlu0 %4875
        %4877 = vrot.lane.b32.xlu0 %v4772, 64
        %v4878 = vpop.permute.xlu0 %4877
        %4879 = vrot.lane.b32.xlu0 %v4777, 64
        %v4880 = vpop.permute.xlu0 %4879
        %4881 = vrot.lane.b32.xlu0 %v4780, 64
        %v4882 = vpop.permute.xlu0 %4881
        %4883 = vrot.lane.b32.xlu0 %v4785, 64
        %v4884 = vpop.permute.xlu0 %4883
        %4885 = vrot.lane.b32.xlu0 %v4788, 64
        %v4886 = vpop.permute.xlu0 %4885
        %v4919 = vadd.f32 %v3386, %v4824
        %v4920 = vadd.f32 %v3387, %v4826
        %v4921 = vadd.f32 %v3388, %v4828
        %v4922 = vadd.f32 %v3389, %v4830
        %v4923 = vadd.f32 %v3390, %v4832
        %v4924 = vadd.f32 %v3391, %v4834
        %v4925 = vadd.f32 %v3392, %v4836
        %v4926 = vadd.f32 %v3393, %v4838
        %v4927 = vadd.f32 %v3394, %v4840
        %v4928 = vadd.f32 %v3395, %v4842
        %v4929 = vadd.f32 %v3396, %v4844
        %v4930 = vadd.f32 %v3397, %v4846
        %v4931 = vadd.f32 %v3398, %v4848
        %v4932 = vadd.f32 %v3399, %v4850
        %v4933 = vadd.f32 %v3400, %v4852
        %v4934 = vadd.f32 %v3401, %v4854
        %v4935 = vadd.f32 %v3402, %v4856
        %v4936 = vadd.f32 %v3403, %v4858
        %v4937 = vadd.f32 %v3404, %v4860
        %v4938 = vadd.f32 %v3405, %v4862
        %v4939 = vadd.f32 %v3406, %v4864
        %v4940 = vadd.f32 %v3407, %v4866
        %v4941 = vadd.f32 %v3408, %v4868
        %v4942 = vadd.f32 %v3409, %v4870
        %v4943 = vadd.f32 %v3410, %v4872
        %v4944 = vadd.f32 %v3411, %v4874
        %v4945 = vadd.f32 %v3412, %v4876
        %v4946 = vadd.f32 %v3413, %v4878
        %v4947 = vadd.f32 %v3414, %v4880
        %v4948 = vadd.f32 %v3415, %v4882
        %v4949 = vadd.f32 %v3416, %v4884
        %v4950 = vadd.f32 %v3417, %v4886
        %v4952 = vshrl.u32 %v4431, 16
        %v4954 = vrot.slane %v4952, 4
        %v4955 = vshll.u32 %v4431, 16
        %v4957 = vrot.slane %v4955, 5
        %v4958 = vor.u32 %v4954, %v4957
        %v4959 = vrot.slane %v4958, 4
        %v4961 = vshll.u32 %v4432, 16
        %v4963 = vrot.slane %v4961, 5
        %v4964 = vsel %vm798, %v4959, %v4963
        %v4965 = vshrl.u32 %v4432, 16
        %v4967 = vrot.slane %v4965, 4
        %v4968 = vor.u32 %v4967, %v4963
        %v4969 = vrot.slane %v4968, 4
        %v4971 = vshll.u32 %v4433, 16
        %v4973 = vrot.slane %v4971, 5
        %v4974 = vsel %vm798, %v4969, %v4973
        %v4976 = vshrl.u32 %v4434, 16
        %v4978 = vrot.slane %v4976, 4
        %v4979 = vshll.u32 %v4434, 16
        %v4981 = vrot.slane %v4979, 5
        %v4982 = vor.u32 %v4978, %v4981
        %v4983 = vrot.slane %v4982, 4
        %v4985 = vshll.u32 %v4435, 16
        %v4987 = vrot.slane %v4985, 5
        %v4988 = vsel %vm798, %v4983, %v4987
        %v4989 = vshrl.u32 %v4435, 16
        %v4991 = vrot.slane %v4989, 4
        %v4992 = vor.u32 %v4991, %v4987
        %v4993 = vrot.slane %v4992, 4
        %v4995 = vshll.u32 %v4436, 16
        %v4997 = vrot.slane %v4995, 5
        %v4998 = vsel %vm798, %v4993, %v4997
        %v5000 = vshrl.u32 %v4437, 16
        %v5002 = vrot.slane %v5000, 4
        %v5003 = vshll.u32 %v4437, 16
        %v5005 = vrot.slane %v5003, 5
        %v5006 = vor.u32 %v5002, %v5005
        %v5007 = vrot.slane %v5006, 4
        %v5009 = vshll.u32 %v4438, 16
        %v5011 = vrot.slane %v5009, 5
        %v5012 = vsel %vm798, %v5007, %v5011
        %v5013 = vshrl.u32 %v4438, 16
        %v5015 = vrot.slane %v5013, 4
        %v5016 = vor.u32 %v5015, %v5011
        %v5017 = vrot.slane %v5016, 4
        %v5019 = vshll.u32 %v4439, 16
        %v5021 = vrot.slane %v5019, 5
        %v5022 = vsel %vm798, %v5017, %v5021
        %v5024 = vshrl.u32 %v4440, 16
        %v5026 = vrot.slane %v5024, 4
        %v5027 = vshll.u32 %v4440, 16
        %v5029 = vrot.slane %v5027, 5
        %v5030 = vor.u32 %v5026, %v5029
        %v5031 = vrot.slane %v5030, 4
        %v5033 = vshll.u32 %v4441, 16
        %v5035 = vrot.slane %v5033, 5
        %v5036 = vsel %vm798, %v5031, %v5035
        %v5037 = vshrl.u32 %v4441, 16
        %v5039 = vrot.slane %v5037, 4
        %v5040 = vor.u32 %v5039, %v5035
        %v5041 = vrot.slane %v5040, 4
        %v5043 = vshll.u32 %v4442, 16
        %v5045 = vrot.slane %v5043, 5
        %v5046 = vsel %vm798, %v5041, %v5045
        %v5048 = vshrl.u32 %v4443, 16
        %v5050 = vrot.slane %v5048, 4
        %v5051 = vshll.u32 %v4443, 16
        %v5053 = vrot.slane %v5051, 5
        %v5054 = vor.u32 %v5050, %v5053
        %v5055 = vrot.slane %v5054, 4
        %v5057 = vshll.u32 %v4444, 16
        %v5059 = vrot.slane %v5057, 5
        %v5060 = vsel %vm798, %v5055, %v5059
        %v5061 = vshrl.u32 %v4444, 16
        %v5063 = vrot.slane %v5061, 4
        %v5064 = vor.u32 %v5063, %v5059
        %v5065 = vrot.slane %v5064, 4
        %v5067 = vshll.u32 %v4445, 16
        %v5069 = vrot.slane %v5067, 5
        %v5070 = vsel %vm798, %v5065, %v5069
        %v5072 = vshrl.u32 %v4446, 16
        %v5074 = vrot.slane %v5072, 4
        %v5075 = vshll.u32 %v4446, 16
        %v5077 = vrot.slane %v5075, 5
        %v5078 = vor.u32 %v5074, %v5077
        %v5079 = vrot.slane %v5078, 4
        %v5081 = vshll.u32 %v4447, 16
        %v5083 = vrot.slane %v5081, 5
        %v5084 = vsel %vm798, %v5079, %v5083
        %v5085 = vshrl.u32 %v4447, 16
        %v5087 = vrot.slane %v5085, 4
        %v5088 = vor.u32 %v5087, %v5083
        %v5089 = vrot.slane %v5088, 4
        %v5091 = vshll.u32 %v4448, 16
        %v5093 = vrot.slane %v5091, 5
        %v5094 = vsel %vm798, %v5089, %v5093
        %v5096 = vshrl.u32 %v4449, 16
        %v5098 = vrot.slane %v5096, 4
        %v5099 = vshll.u32 %v4449, 16
        %v5101 = vrot.slane %v5099, 5
        %v5102 = vor.u32 %v5098, %v5101
        %v5103 = vrot.slane %v5102, 4
        %v5105 = vshll.u32 %v4450, 16
        %v5107 = vrot.slane %v5105, 5
        %v5108 = vsel %vm798, %v5103, %v5107
        %v5109 = vshrl.u32 %v4450, 16
        %v5111 = vrot.slane %v5109, 4
        %v5112 = vor.u32 %v5111, %v5107
        %v5113 = vrot.slane %v5112, 4
        %v5115 = vshll.u32 %v4451, 16
        %v5117 = vrot.slane %v5115, 5
        %v5118 = vsel %vm798, %v5113, %v5117
        %v5120 = vshrl.u32 %v4452, 16
        %v5122 = vrot.slane %v5120, 4
        %v5123 = vshll.u32 %v4452, 16
        %v5125 = vrot.slane %v5123, 5
        %v5126 = vor.u32 %v5122, %v5125
        %v5127 = vrot.slane %v5126, 4
        %v5129 = vshll.u32 %v4453, 16
        %v5131 = vrot.slane %v5129, 5
        %v5132 = vsel %vm798, %v5127, %v5131
        %v5133 = vshrl.u32 %v4453, 16
        %v5135 = vrot.slane %v5133, 4
        %v5136 = vor.u32 %v5135, %v5131
        %v5137 = vrot.slane %v5136, 4
        %v5139 = vshll.u32 %v4454, 16
        %v5141 = vrot.slane %v5139, 5
        %v5142 = vsel %vm798, %v5137, %v5141
        %v5144 = vshrl.u32 %v4455, 16
        %v5146 = vrot.slane %v5144, 4
        %v5147 = vshll.u32 %v4455, 16
        %v5149 = vrot.slane %v5147, 5
        %v5150 = vor.u32 %v5146, %v5149
        %v5151 = vrot.slane %v5150, 4
        %v5153 = vshll.u32 %v4456, 16
        %v5155 = vrot.slane %v5153, 5
        %v5156 = vsel %vm798, %v5151, %v5155
        %v5157 = vshrl.u32 %v4456, 16
        %v5159 = vrot.slane %v5157, 4
        %v5160 = vor.u32 %v5159, %v5155
        %v5161 = vrot.slane %v5160, 4
        %v5163 = vshll.u32 %v4457, 16
        %v5165 = vrot.slane %v5163, 5
        %v5166 = vsel %vm798, %v5161, %v5165
        %v5168 = vshrl.u32 %v4458, 16
        %v5170 = vrot.slane %v5168, 4
        %v5171 = vshll.u32 %v4458, 16
        %v5173 = vrot.slane %v5171, 5
        %v5174 = vor.u32 %v5170, %v5173
        %v5175 = vrot.slane %v5174, 4
        %v5177 = vshll.u32 %v4459, 16
        %v5179 = vrot.slane %v5177, 5
        %v5180 = vsel %vm798, %v5175, %v5179
        %v5181 = vshrl.u32 %v4459, 16
        %v5183 = vrot.slane %v5181, 4
        %v5184 = vor.u32 %v5183, %v5179
        %v5185 = vrot.slane %v5184, 4
        %v5187 = vshll.u32 %v4460, 16
        %v5189 = vrot.slane %v5187, 5
        %v5190 = vsel %vm798, %v5185, %v5189
        %v5192 = vshrl.u32 %v4461, 16
        %v5194 = vrot.slane %v5192, 4
        %v5195 = vshll.u32 %v4461, 16
        %v5197 = vrot.slane %v5195, 5
        %v5198 = vor.u32 %v5194, %v5197
        %v5199 = vrot.slane %v5198, 4
        %v5201 = vshll.u32 %v4462, 16
        %v5203 = vrot.slane %v5201, 5
        %v5204 = vsel %vm798, %v5199, %v5203
        %v5205 = vshrl.u32 %v4462, 16
        %v5207 = vrot.slane %v5205, 4
        %v5208 = vor.u32 %v5207, %v5203
        %v5209 = vrot.slane %v5208, 4
        %v5211 = vshll.u32 %v4463, 16
        %v5213 = vrot.slane %v5211, 5
        %v5214 = vsel %vm798, %v5209, %v5213
        %v5216 = vshrl.u32 %v4464, 16
        %v5218 = vrot.slane %v5216, 4
        %v5219 = vshll.u32 %v4464, 16
        %v5221 = vrot.slane %v5219, 5
        %v5222 = vor.u32 %v5218, %v5221
        %v5223 = vrot.slane %v5222, 4
        %v5225 = vshll.u32 %v4465, 16
        %v5227 = vrot.slane %v5225, 5
        %v5228 = vsel %vm798, %v5223, %v5227
        %v5229 = vshrl.u32 %v4465, 16
        %v5231 = vrot.slane %v5229, 4
        %v5232 = vor.u32 %v5231, %v5227
        %v5233 = vrot.slane %v5232, 4
        %v5235 = vshll.u32 %v4466, 16
        %v5237 = vrot.slane %v5235, 5
        %v5238 = vsel %vm798, %v5233, %v5237
        %v5240 = vshrl.u32 %v4467, 16
        %v5242 = vrot.slane %v5240, 4
        %v5243 = vshll.u32 %v4467, 16
        %v5245 = vrot.slane %v5243, 5
        %v5246 = vor.u32 %v5242, %v5245
        %v5247 = vrot.slane %v5246, 4
        %v5249 = vshll.u32 %v4468, 16
        %v5251 = vrot.slane %v5249, 5
        %v5252 = vsel %vm798, %v5247, %v5251
        %v5253 = vshrl.u32 %v4468, 16
        %v5255 = vrot.slane %v5253, 4
        %v5256 = vor.u32 %v5255, %v5251
        %v5257 = vrot.slane %v5256, 4
        %v5259 = vshll.u32 %v4469, 16
        %v5261 = vrot.slane %v5259, 5
        %v5262 = vsel %vm798, %v5257, %v5261
        %v5264 = vshrl.u32 %v4470, 16
        %v5266 = vrot.slane %v5264, 4
        %v5267 = vshll.u32 %v4470, 16
        %v5269 = vrot.slane %v5267, 5
        %v5270 = vor.u32 %v5266, %v5269
        %v5271 = vrot.slane %v5270, 4
        %v5273 = vshll.u32 %v4471, 16
        %v5275 = vrot.slane %v5273, 5
        %v5276 = vsel %vm798, %v5271, %v5275
        %v5277 = vshrl.u32 %v4471, 16
        %v5279 = vrot.slane %v5277, 4
        %v5280 = vor.u32 %v5279, %v5275
        %v5281 = vrot.slane %v5280, 4
        %v5283 = vshll.u32 %v4472, 16
        %v5285 = vrot.slane %v5283, 5
        %v5286 = vsel %vm798, %v5281, %v5285
        %v5288 = vshrl.u32 %v4473, 16
        %v5290 = vrot.slane %v5288, 4
        %v5291 = vshll.u32 %v4473, 16
        %v5293 = vrot.slane %v5291, 5
        %v5294 = vor.u32 %v5290, %v5293
        %v5295 = vrot.slane %v5294, 4
        %v5297 = vshll.u32 %v4474, 16
        %v5299 = vrot.slane %v5297, 5
        %v5300 = vsel %vm798, %v5295, %v5299
        %v5301 = vshrl.u32 %v4474, 16
        %v5303 = vrot.slane %v5301, 4
        %v5304 = vor.u32 %v5303, %v5299
        %v5305 = vrot.slane %v5304, 4
        %v5307 = vshll.u32 %v4475, 16
        %v5309 = vrot.slane %v5307, 5
        %v5310 = vsel %vm798, %v5305, %v5309
        %v5312 = vshrl.u32 %v4476, 16
        %v5314 = vrot.slane %v5312, 4
        %v5315 = vshll.u32 %v4476, 16
        %v5317 = vrot.slane %v5315, 5
        %v5318 = vor.u32 %v5314, %v5317
        %v5319 = vrot.slane %v5318, 4
        %v5321 = vshll.u32 %v4477, 16
        %v5323 = vrot.slane %v5321, 5
        %v5324 = vsel %vm798, %v5319, %v5323
        %v5325 = vshrl.u32 %v4477, 16
        %v5327 = vrot.slane %v5325, 4
        %v5328 = vor.u32 %v5327, %v5323
        %v5329 = vrot.slane %v5328, 4
        %v5331 = vshll.u32 %v4478, 16
        %v5333 = vrot.slane %v5331, 5
        %v5334 = vsel %vm798, %v5329, %v5333
        %s5335 = scalar_lea.vmem %s4, 16
        %v5336 = vld [vmem:[%s5335] sm:$0xf]
        %v5337 = vld [vmem:[%s5335 + $0x4] sm:$0xf]
        %v5338 = vld [vmem:[%s5335 + $0x8] sm:$0xf]
        %v5339 = vld [vmem:[%s5335 + $0xc] sm:$0xf]
        %v5340 = vunpack.c.l.b16 %v4964
        %v5341 = vunpack.c.l.b16 %v4974
        %v5342 = vunpack.c.l.b16 %v4988
        %v5343 = vunpack.c.l.b16 %v4998
        %v5344 = vunpack.c.l.b16 %v5012
        %v5345 = vunpack.c.l.b16 %v5022
        %v5346 = vunpack.c.l.b16 %v5036
        %v5347 = vunpack.c.l.b16 %v5046
        %v5348 = vunpack.c.l.b16 %v5060
        %v5349 = vunpack.c.l.b16 %v5070
        %v5350 = vunpack.c.l.b16 %v5084
        %v5351 = vunpack.c.l.b16 %v5094
        %v5352 = vunpack.c.l.b16 %v5108
        %v5353 = vunpack.c.l.b16 %v5118
        %v5354 = vunpack.c.l.b16 %v5132
        %v5355 = vunpack.c.l.b16 %v5142
        %v5356 = vunpack.c.l.b16 %v5156
        %v5357 = vunpack.c.l.b16 %v5166
        %v5358 = vunpack.c.l.b16 %v5180
        %v5359 = vunpack.c.l.b16 %v5190
        %v5360 = vunpack.c.l.b16 %v5204
        %v5361 = vunpack.c.l.b16 %v5214
        %v5362 = vunpack.c.l.b16 %v5228
        %v5363 = vunpack.c.l.b16 %v5238
        %v5364 = vunpack.c.l.b16 %v5252
        %v5365 = vunpack.c.l.b16 %v5262
        %v5366 = vunpack.c.l.b16 %v5276
        %v5367 = vunpack.c.l.b16 %v5286
        %v5368 = vunpack.c.l.b16 %v5300
        %v5369 = vunpack.c.l.b16 %v5310
        %v5370 = vunpack.c.l.b16 %v5324
        %v5371 = vunpack.c.l.b16 %v5334
        %v5372 = vpack.c.b16 %v5341, %v5340
        %v5373 = vpack.c.b16 %v5343, %v5342
        %v5374 = vpack.c.b16 %v5345, %v5344
        %v5375 = vpack.c.b16 %v5347, %v5346
        %v5376 = vpack.c.b16 %v5349, %v5348
        %v5377 = vpack.c.b16 %v5351, %v5350
        %v5378 = vpack.c.b16 %v5353, %v5352
        %v5379 = vpack.c.b16 %v5355, %v5354
        %v5380 = vpack.c.b16 %v5357, %v5356
        %v5381 = vpack.c.b16 %v5359, %v5358
        %v5382 = vpack.c.b16 %v5361, %v5360
        %v5383 = vpack.c.b16 %v5363, %v5362
        %v5384 = vpack.c.b16 %v5365, %v5364
        %v5385 = vpack.c.b16 %v5367, %v5366
        %v5386 = vpack.c.b16 %v5369, %v5368
        %v5387 = vpack.c.b16 %v5371, %v5370
        %v5392 = vunpack.c.l.b16 %v5336
        %v5393 = vunpack.c.l.b16 %v5337
        %v5394 = vunpack.c.l.b16 %v5338
        %v5395 = vunpack.c.l.b16 %v5339
        %v5396 = vpack.c.b16 %v5393, %v5392
        %v5397 = vpack.c.b16 %v5395, %v5394
        %v5401 = vsel %vm4581, %v5372, 0
        %v5404 = vsel %vm4581, %v5373, 0
        %v5407 = vsel %vm4581, %v5374, 0
        %v5410 = vsel %vm4581, %v5375, 0
        %v5413 = vsel %vm4581, %v5376, 0
        %v5416 = vsel %vm4581, %v5377, 0
        %v5419 = vsel %vm4581, %v5378, 0
        %v5422 = vsel %vm4581, %v5379, 0
        %v5425 = vsel %vm4581, %v5380, 0
        %v5428 = vsel %vm4581, %v5381, 0
        %v5431 = vsel %vm4581, %v5382, 0
        %v5434 = vsel %vm4581, %v5383, 0
        %v5437 = vsel %vm4581, %v5384, 0
        %v5440 = vsel %vm4581, %v5385, 0
        %v5443 = vsel %vm4581, %v5386, 0
        %v5446 = vsel %vm4581, %v5387, 0
        %5448 = vmatprep.subr.bf16.mxu0 0
        %5449 = vmatpush1.bf16.msra.mxu0 %v5396
        %5450 = vmatprep.subr.bf16.mxu0 0
        %5451 = vmatpush1.bf16.msra.mxu0 %v5397
        %5452 = vmatprep.subr.bf16.mxu0 0
        %5453 = vmatpush1.bf16.msra.mxu0 0
        %5454 = vmatprep.subr.bf16.mxu0 0
        %5455 = vmatpush1.bf16.msra.mxu0 0
        %5456 = vmatprep.subr.bf16.mxu0 0
        %5457 = vmatpush1.bf16.msra.mxu0 0
        %5458 = vmatprep.subr.bf16.mxu0 0
        %5459 = vmatpush1.bf16.msra.mxu0 0
        %5460 = vmatprep.subr.bf16.mxu0 0
        %5461 = vmatpush1.bf16.msra.mxu0 0
        %5462 = vmatprep.subr.bf16.mxu0 0
        %5463 = vmatpush1.bf16.msra.mxu0 0
        %5464 = vmatprep.subr.bf16.mxu0 0
        %5465 = vmatpush1.bf16.msra.mxu0 0
        %5466 = vmatprep.subr.bf16.mxu0 0
        %5467 = vmatpush1.bf16.msra.mxu0 0
        %5468 = vmatprep.subr.bf16.mxu0 0
        %5469 = vmatpush1.bf16.msra.mxu0 0
        %5470 = vmatprep.subr.bf16.mxu0 0
        %5471 = vmatpush1.bf16.msra.mxu0 0
        %5472 = vmatprep.subr.bf16.mxu0 0
        %5473 = vmatpush1.bf16.msra.mxu0 0
        %5474 = vmatprep.subr.bf16.mxu0 0
        %5475 = vmatpush1.bf16.msra.mxu0 0
        %5476 = vmatprep.subr.bf16.mxu0 0
        %5477 = vmatpush1.bf16.msra.mxu0 0
        %5478 = vmatprep.subr.bf16.mxu0 0
        %5479 = vmatpush1.bf16.msra.mxu0 0
        %5480 = vmatprep.mubr.bf16.mxu0 0
        %5481 = vmatmul.mubr.bf16.gmra.mrb[0].mxu0 %v5401
        %v5482 = vpop.f32.mrb[0].mxu0
        %v5483 = vadd.f32 0.0, %v5482
        %v5484 = vpop.f32.mrb[0].mxu0
        %v5485 = vpop.f32.mrb[0].mxu0
        %v5486 = vadd.f32 0.0, %v5485
        %v5487 = vpop.f32.mrb[0].mxu0
        %5488 = vmatprep.mubr.bf16.mxu0 0
        %5489 = vmatmul.mubr.bf16.gmra.mrb[0].mxu0 %v5404
        %v5490 = vpop.f32.mrb[0].mxu0
        %v5491 = vadd.f32 0.0, %v5490
        %v5492 = vpop.f32.mrb[0].mxu0
        %v5493 = vpop.f32.mrb[0].mxu0
        %v5494 = vadd.f32 0.0, %v5493
        %v5495 = vpop.f32.mrb[0].mxu0
        %5496 = vmatprep.mubr.bf16.mxu0 0
        %5497 = vmatmul.mubr.bf16.gmra.mrb[0].mxu0 %v5407
        %v5498 = vpop.f32.mrb[0].mxu0
        %v5499 = vadd.f32 0.0, %v5498
        %v5500 = vpop.f32.mrb[0].mxu0
        %v5501 = vpop.f32.mrb[0].mxu0
        %v5502 = vadd.f32 0.0, %v5501
        %v5503 = vpop.f32.mrb[0].mxu0
        %5504 = vmatprep.mubr.bf16.mxu0 0
        %5505 = vmatmul.mubr.bf16.gmra.mrb[0].mxu0 %v5410
        %v5506 = vpop.f32.mrb[0].mxu0
        %v5507 = vadd.f32 0.0, %v5506
        %v5508 = vpop.f32.mrb[0].mxu0
        %v5509 = vpop.f32.mrb[0].mxu0
        %v5510 = vadd.f32 0.0, %v5509
        %v5511 = vpop.f32.mrb[0].mxu0
        %5512 = vmatprep.mubr.bf16.mxu0 0
        %5513 = vmatmul.mubr.bf16.gmra.mrb[0].mxu0 %v5413
        %v5514 = vpop.f32.mrb[0].mxu0
        %v5515 = vadd.f32 0.0, %v5514
        %v5516 = vpop.f32.mrb[0].mxu0
        %v5517 = vpop.f32.mrb[0].mxu0
        %v5518 = vadd.f32 0.0, %v5517
        %v5519 = vpop.f32.mrb[0].mxu0
        %5520 = vmatprep.mubr.bf16.mxu0 0
        %5521 = vmatmul.mubr.bf16.gmra.mrb[0].mxu0 %v5416
        %v5522 = vpop.f32.mrb[0].mxu0
        %v5523 = vadd.f32 0.0, %v5522
        %v5524 = vpop.f32.mrb[0].mxu0
        %v5525 = vpop.f32.mrb[0].mxu0
        %v5526 = vadd.f32 0.0, %v5525
        %v5527 = vpop.f32.mrb[0].mxu0
        %5528 = vmatprep.mubr.bf16.mxu0 0
        %5529 = vmatmul.mubr.bf16.gmra.mrb[0].mxu0 %v5419
        %v5530 = vpop.f32.mrb[0].mxu0
        %v5531 = vadd.f32 0.0, %v5530
        %v5532 = vpop.f32.mrb[0].mxu0
        %v5533 = vpop.f32.mrb[0].mxu0
        %v5534 = vadd.f32 0.0, %v5533
        %v5535 = vpop.f32.mrb[0].mxu0
        %5536 = vmatprep.mubr.bf16.mxu0 0
        %5537 = vmatmul.mubr.bf16.gmra.mrb[0].mxu0 %v5422
        %v5538 = vpop.f32.mrb[0].mxu0
        %v5539 = vadd.f32 0.0, %v5538
        %v5540 = vpop.f32.mrb[0].mxu0
        %v5541 = vpop.f32.mrb[0].mxu0
        %v5542 = vadd.f32 0.0, %v5541
        %v5543 = vpop.f32.mrb[0].mxu0
        %5544 = vmatprep.mubr.bf16.mxu0 0
        %5545 = vmatmul.mubr.bf16.gmra.mrb[0].mxu0 %v5425
        %v5546 = vpop.f32.mrb[0].mxu0
        %v5547 = vadd.f32 0.0, %v5546
        %v5548 = vpop.f32.mrb[0].mxu0
        %v5549 = vpop.f32.mrb[0].mxu0
        %v5550 = vadd.f32 0.0, %v5549
        %v5551 = vpop.f32.mrb[0].mxu0
        %5552 = vmatprep.mubr.bf16.mxu0 0
        %5553 = vmatmul.mubr.bf16.gmra.mrb[0].mxu0 %v5428
        %v5554 = vpop.f32.mrb[0].mxu0
        %v5555 = vadd.f32 0.0, %v5554
        %v5556 = vpop.f32.mrb[0].mxu0
        %v5557 = vpop.f32.mrb[0].mxu0
        %v5558 = vadd.f32 0.0, %v5557
        %v5559 = vpop.f32.mrb[0].mxu0
        %5560 = vmatprep.mubr.bf16.mxu0 0
        %5561 = vmatmul.mubr.bf16.gmra.mrb[0].mxu0 %v5431
        %v5562 = vpop.f32.mrb[0].mxu0
        %v5563 = vadd.f32 0.0, %v5562
        %v5564 = vpop.f32.mrb[0].mxu0
        %v5565 = vpop.f32.mrb[0].mxu0
        %v5566 = vadd.f32 0.0, %v5565
        %v5567 = vpop.f32.mrb[0].mxu0
        %5568 = vmatprep.mubr.bf16.mxu0 0
        %5569 = vmatmul.mubr.bf16.gmra.mrb[0].mxu0 %v5434
        %v5570 = vpop.f32.mrb[0].mxu0
        %v5571 = vadd.f32 0.0, %v5570
        %v5572 = vpop.f32.mrb[0].mxu0
        %v5573 = vpop.f32.mrb[0].mxu0
        %v5574 = vadd.f32 0.0, %v5573
        %v5575 = vpop.f32.mrb[0].mxu0
        %5576 = vmatprep.mubr.bf16.mxu0 0
        %5577 = vmatmul.mubr.bf16.gmra.mrb[0].mxu0 %v5437
        %v5578 = vpop.f32.mrb[0].mxu0
        %v5579 = vadd.f32 0.0, %v5578
        %v5580 = vpop.f32.mrb[0].mxu0
        %v5581 = vpop.f32.mrb[0].mxu0
        %v5582 = vadd.f32 0.0, %v5581
        %v5583 = vpop.f32.mrb[0].mxu0
        %5584 = vmatprep.mubr.bf16.mxu0 0
        %5585 = vmatmul.mubr.bf16.gmra.mrb[0].mxu0 %v5440
        %v5586 = vpop.f32.mrb[0].mxu0
        %v5587 = vadd.f32 0.0, %v5586
        %v5588 = vpop.f32.mrb[0].mxu0
        %v5589 = vpop.f32.mrb[0].mxu0
        %v5590 = vadd.f32 0.0, %v5589
        %v5591 = vpop.f32.mrb[0].mxu0
        %5592 = vmatprep.mubr.bf16.mxu0 0
        %5593 = vmatmul.mubr.bf16.gmra.mrb[0].mxu0 %v5443
        %v5594 = vpop.f32.mrb[0].mxu0
        %v5595 = vadd.f32 0.0, %v5594
        %v5596 = vpop.f32.mrb[0].mxu0
        %v5597 = vpop.f32.mrb[0].mxu0
        %v5598 = vadd.f32 0.0, %v5597
        %v5599 = vpop.f32.mrb[0].mxu0
        %5600 = vmatprep.mubr.bf16.mxu0 0
        %5601 = vmatmul.mubr.bf16.gmra.mrb[0].mxu0 %v5446
        %v5602 = vpop.f32.mrb[0].mxu0
        %v5603 = vadd.f32 0.0, %v5602
        %v5604 = vpop.f32.mrb[0].mxu0
        %v5605 = vpop.f32.mrb[0].mxu0
        %v5606 = vadd.f32 0.0, %v5605
        %v5607 = vpop.f32.mrb[0].mxu0
        %5608 = vdwg.mxu0
        %5641 = vrot.lane.b32.xlu0 %v5483, 64
        %v5642 = vpop.permute.xlu0 %5641
        %5643 = vrot.lane.b32.xlu0 %v5486, 64
        %v5644 = vpop.permute.xlu0 %5643
        %5645 = vrot.lane.b32.xlu0 %v5491, 64
        %v5646 = vpop.permute.xlu0 %5645
        %5647 = vrot.lane.b32.xlu0 %v5494, 64
        %v5648 = vpop.permute.xlu0 %5647
        %5649 = vrot.lane.b32.xlu0 %v5499, 64
        %v5650 = vpop.permute.xlu0 %5649
        %5651 = vrot.lane.b32.xlu0 %v5502, 64
        %v5652 = vpop.permute.xlu0 %5651
        %5653 = vrot.lane.b32.xlu0 %v5507, 64
        %v5654 = vpop.permute.xlu0 %5653
        %5655 = vrot.lane.b32.xlu0 %v5510, 64
        %v5656 = vpop.permute.xlu0 %5655
        %5657 = vrot.lane.b32.xlu0 %v5515, 64
        %v5658 = vpop.permute.xlu0 %5657
        %5659 = vrot.lane.b32.xlu0 %v5518, 64
        %v5660 = vpop.permute.xlu0 %5659
        %5661 = vrot.lane.b32.xlu0 %v5523, 64
        %v5662 = vpop.permute.xlu0 %5661
        %5663 = vrot.lane.b32.xlu0 %v5526, 64
        %v5664 = vpop.permute.xlu0 %5663
        %5665 = vrot.lane.b32.xlu0 %v5531, 64
        %v5666 = vpop.permute.xlu0 %5665
        %5667 = vrot.lane.b32.xlu0 %v5534, 64
        %v5668 = vpop.permute.xlu0 %5667
        %5669 = vrot.lane.b32.xlu0 %v5539, 64
        %v5670 = vpop.permute.xlu0 %5669
        %5671 = vrot.lane.b32.xlu0 %v5542, 64
        %v5672 = vpop.permute.xlu0 %5671
        %5673 = vrot.lane.b32.xlu0 %v5547, 64
        %v5674 = vpop.permute.xlu0 %5673
        %5675 = vrot.lane.b32.xlu0 %v5550, 64
        %v5676 = vpop.permute.xlu0 %5675
        %5677 = vrot.lane.b32.xlu0 %v5555, 64
        %v5678 = vpop.permute.xlu0 %5677
        %5679 = vrot.lane.b32.xlu0 %v5558, 64
        %v5680 = vpop.permute.xlu0 %5679
        %5681 = vrot.lane.b32.xlu0 %v5563, 64
        %v5682 = vpop.permute.xlu0 %5681
        %5683 = vrot.lane.b32.xlu0 %v5566, 64
        %v5684 = vpop.permute.xlu0 %5683
        %5685 = vrot.lane.b32.xlu0 %v5571, 64
        %v5686 = vpop.permute.xlu0 %5685
        %5687 = vrot.lane.b32.xlu0 %v5574, 64
        %v5688 = vpop.permute.xlu0 %5687
        %5689 = vrot.lane.b32.xlu0 %v5579, 64
        %v5690 = vpop.permute.xlu0 %5689
        %5691 = vrot.lane.b32.xlu0 %v5582, 64
        %v5692 = vpop.permute.xlu0 %5691
        %5693 = vrot.lane.b32.xlu0 %v5587, 64
        %v5694 = vpop.permute.xlu0 %5693
        %5695 = vrot.lane.b32.xlu0 %v5590, 64
        %v5696 = vpop.permute.xlu0 %5695
        %5697 = vrot.lane.b32.xlu0 %v5595, 64
        %v5698 = vpop.permute.xlu0 %5697
        %5699 = vrot.lane.b32.xlu0 %v5598, 64
        %v5700 = vpop.permute.xlu0 %5699
        %5701 = vrot.lane.b32.xlu0 %v5603, 64
        %v5702 = vpop.permute.xlu0 %5701
        %5703 = vrot.lane.b32.xlu0 %v5606, 64
        %v5704 = vpop.permute.xlu0 %5703
        %v5737 = vadd.f32 %v4919, %v5642
        %v5738 = vadd.f32 %v4920, %v5644
        %v5739 = vadd.f32 %v4921, %v5646
        %v5740 = vadd.f32 %v4922, %v5648
        %v5741 = vadd.f32 %v4923, %v5650
        %v5742 = vadd.f32 %v4924, %v5652
        %v5743 = vadd.f32 %v4925, %v5654
        %v5744 = vadd.f32 %v4926, %v5656
        %v5745 = vadd.f32 %v4927, %v5658
        %v5746 = vadd.f32 %v4928, %v5660
        %v5747 = vadd.f32 %v4929, %v5662
        %v5748 = vadd.f32 %v4930, %v5664
        %v5749 = vadd.f32 %v4931, %v5666
        %v5750 = vadd.f32 %v4932, %v5668
        %v5751 = vadd.f32 %v4933, %v5670
        %v5752 = vadd.f32 %v4934, %v5672
        %v5753 = vadd.f32 %v4935, %v5674
        %v5754 = vadd.f32 %v4936, %v5676
        %v5755 = vadd.f32 %v4937, %v5678
        %v5756 = vadd.f32 %v4938, %v5680
        %v5757 = vadd.f32 %v4939, %v5682
        %v5758 = vadd.f32 %v4940, %v5684
        %v5759 = vadd.f32 %v4941, %v5686
        %v5760 = vadd.f32 %v4942, %v5688
        %v5761 = vadd.f32 %v4943, %v5690
        %v5762 = vadd.f32 %v4944, %v5692
        %v5763 = vadd.f32 %v4945, %v5694
        %v5764 = vadd.f32 %v4946, %v5696
        %v5765 = vadd.f32 %v4947, %v5698
        %v5766 = vadd.f32 %v4948, %v5700
        %v5767 = vadd.f32 %v4949, %v5702
        %v5768 = vadd.f32 %v4950, %v5704
        %v5785 = vrot.slane %v4431, 5
        %v5786 = vrot.slane %v5785, 4
        %v5787 = vrot.slane %v4432, 5
        %v5788 = vsel %vm1523, %v5786, %v5787
        %v5789 = vrot.slane %v5787, 4
        %v5790 = vrot.slane %v4433, 5
        %v5791 = vsel %vm1523, %v5789, %v5790
        %v5792 = vrot.slane %v4434, 5
        %v5793 = vrot.slane %v5792, 4
        %v5794 = vrot.slane %v4435, 5
        %v5795 = vsel %vm1523, %v5793, %v5794
        %v5796 = vrot.slane %v5794, 4
        %v5797 = vrot.slane %v4436, 5
        %v5798 = vsel %vm1523, %v5796, %v5797
        %v5799 = vrot.slane %v4437, 5
        %v5800 = vrot.slane %v5799, 4
        %v5801 = vrot.slane %v4438, 5
        %v5802 = vsel %vm1523, %v5800, %v5801
        %v5803 = vrot.slane %v5801, 4
        %v5804 = vrot.slane %v4439, 5
        %v5805 = vsel %vm1523, %v5803, %v5804
        %v5806 = vrot.slane %v4440, 5
        %v5807 = vrot.slane %v5806, 4
        %v5808 = vrot.slane %v4441, 5
        %v5809 = vsel %vm1523, %v5807, %v5808
        %v5810 = vrot.slane %v5808, 4
        %v5811 = vrot.slane %v4442, 5
        %v5812 = vsel %vm1523, %v5810, %v5811
        %v5813 = vrot.slane %v4443, 5
        %v5814 = vrot.slane %v5813, 4
        %v5815 = vrot.slane %v4444, 5
        %v5816 = vsel %vm1523, %v5814, %v5815
        %v5817 = vrot.slane %v5815, 4
        %v5818 = vrot.slane %v4445, 5
        %v5819 = vsel %vm1523, %v5817, %v5818
        %v5820 = vrot.slane %v4446, 5
        %v5821 = vrot.slane %v5820, 4
        %v5822 = vrot.slane %v4447, 5
        %v5823 = vsel %vm1523, %v5821, %v5822
        %v5824 = vrot.slane %v5822, 4
        %v5825 = vrot.slane %v4448, 5
        %v5826 = vsel %vm1523, %v5824, %v5825
        %v5827 = vrot.slane %v4449, 5
        %v5828 = vrot.slane %v5827, 4
        %v5829 = vrot.slane %v4450, 5
        %v5830 = vsel %vm1523, %v5828, %v5829
        %v5831 = vrot.slane %v5829, 4
        %v5832 = vrot.slane %v4451, 5
        %v5833 = vsel %vm1523, %v5831, %v5832
        %v5834 = vrot.slane %v4452, 5
        %v5835 = vrot.slane %v5834, 4
        %v5836 = vrot.slane %v4453, 5
        %v5837 = vsel %vm1523, %v5835, %v5836
        %v5838 = vrot.slane %v5836, 4
        %v5839 = vrot.slane %v4454, 5
        %v5840 = vsel %vm1523, %v5838, %v5839
        %v5841 = vrot.slane %v4455, 5
        %v5842 = vrot.slane %v5841, 4
        %v5843 = vrot.slane %v4456, 5
        %v5844 = vsel %vm1523, %v5842, %v5843
        %v5845 = vrot.slane %v5843, 4
        %v5846 = vrot.slane %v4457, 5
        %v5847 = vsel %vm1523, %v5845, %v5846
        %v5848 = vrot.slane %v4458, 5
        %v5849 = vrot.slane %v5848, 4
        %v5850 = vrot.slane %v4459, 5
        %v5851 = vsel %vm1523, %v5849, %v5850
        %v5852 = vrot.slane %v5850, 4
        %v5853 = vrot.slane %v4460, 5
        %v5854 = vsel %vm1523, %v5852, %v5853
        %v5855 = vrot.slane %v4461, 5
        %v5856 = vrot.slane %v5855, 4
        %v5857 = vrot.slane %v4462, 5
        %v5858 = vsel %vm1523, %v5856, %v5857
        %v5859 = vrot.slane %v5857, 4
        %v5860 = vrot.slane %v4463, 5
        %v5861 = vsel %vm1523, %v5859, %v5860
        %v5862 = vrot.slane %v4464, 5
        %v5863 = vrot.slane %v5862, 4
        %v5864 = vrot.slane %v4465, 5
        %v5865 = vsel %vm1523, %v5863, %v5864
        %v5866 = vrot.slane %v5864, 4
        %v5867 = vrot.slane %v4466, 5
        %v5868 = vsel %vm1523, %v5866, %v5867
        %v5869 = vrot.slane %v4467, 5
        %v5870 = vrot.slane %v5869, 4
        %v5871 = vrot.slane %v4468, 5
        %v5872 = vsel %vm1523, %v5870, %v5871
        %v5873 = vrot.slane %v5871, 4
        %v5874 = vrot.slane %v4469, 5
        %v5875 = vsel %vm1523, %v5873, %v5874
        %v5876 = vrot.slane %v4470, 5
        %v5877 = vrot.slane %v5876, 4
        %v5878 = vrot.slane %v4471, 5
        %v5879 = vsel %vm1523, %v5877, %v5878
        %v5880 = vrot.slane %v5878, 4
        %v5881 = vrot.slane %v4472, 5
        %v5882 = vsel %vm1523, %v5880, %v5881
        %v5883 = vrot.slane %v4473, 5
        %v5884 = vrot.slane %v5883, 4
        %v5885 = vrot.slane %v4474, 5
        %v5886 = vsel %vm1523, %v5884, %v5885
        %v5887 = vrot.slane %v5885, 4
        %v5888 = vrot.slane %v4475, 5
        %v5889 = vsel %vm1523, %v5887, %v5888
        %v5890 = vrot.slane %v4476, 5
        %v5891 = vrot.slane %v5890, 4
        %v5892 = vrot.slane %v4477, 5
        %v5893 = vsel %vm1523, %v5891, %v5892
        %v5894 = vrot.slane %v5892, 4
        %v5895 = vrot.slane %v4478, 5
        %v5896 = vsel %vm1523, %v5894, %v5895
        %s5897 = scalar_lea.vmem %s4, 32
        %v5898 = vld [vmem:[%s5897] sm:$0xf]
        %v5899 = vld [vmem:[%s5897 + $0x4] sm:$0xf]
        %v5900 = vld [vmem:[%s5897 + $0x8] sm:$0xf]
        %v5901 = vld [vmem:[%s5897 + $0xc] sm:$0xf]
        %v5902 = vunpack.c.l.b16 %v5788
        %v5903 = vunpack.c.l.b16 %v5791
        %v5904 = vunpack.c.l.b16 %v5795
        %v5905 = vunpack.c.l.b16 %v5798
        %v5906 = vunpack.c.l.b16 %v5802
        %v5907 = vunpack.c.l.b16 %v5805
        %v5908 = vunpack.c.l.b16 %v5809
        %v5909 = vunpack.c.l.b16 %v5812
        %v5910 = vunpack.c.l.b16 %v5816
        %v5911 = vunpack.c.l.b16 %v5819
        %v5912 = vunpack.c.l.b16 %v5823
        %v5913 = vunpack.c.l.b16 %v5826
        %v5914 = vunpack.c.l.b16 %v5830
        %v5915 = vunpack.c.l.b16 %v5833
        %v5916 = vunpack.c.l.b16 %v5837
        %v5917 = vunpack.c.l.b16 %v5840
        %v5918 = vunpack.c.l.b16 %v5844
        %v5919 = vunpack.c.l.b16 %v5847
        %v5920 = vunpack.c.l.b16 %v5851
        %v5921 = vunpack.c.l.b16 %v5854
        %v5922 = vunpack.c.l.b16 %v5858
        %v5923 = vunpack.c.l.b16 %v5861
        %v5924 = vunpack.c.l.b16 %v5865
        %v5925 = vunpack.c.l.b16 %v5868
        %v5926 = vunpack.c.l.b16 %v5872
        %v5927 = vunpack.c.l.b16 %v5875
        %v5928 = vunpack.c.l.b16 %v5879
        %v5929 = vunpack.c.l.b16 %v5882
        %v5930 = vunpack.c.l.b16 %v5886
        %v5931 = vunpack.c.l.b16 %v5889
        %v5932 = vunpack.c.l.b16 %v5893
        %v5933 = vunpack.c.l.b16 %v5896
        %v5934 = vpack.c.b16 %v5903, %v5902
        %v5935 = vpack.c.b16 %v5905, %v5904
        %v5936 = vpack.c.b16 %v5907, %v5906
        %v5937 = vpack.c.b16 %v5909, %v5908
        %v5938 = vpack.c.b16 %v5911, %v5910
        %v5939 = vpack.c.b16 %v5913, %v5912
        %v5940 = vpack.c.b16 %v5915, %v5914
        %v5941 = vpack.c.b16 %v5917, %v5916
        %v5942 = vpack.c.b16 %v5919, %v5918
        %v5943 = vpack.c.b16 %v5921, %v5920
        %v5944 = vpack.c.b16 %v5923, %v5922
        %v5945 = vpack.c.b16 %v5925, %v5924
        %v5946 = vpack.c.b16 %v5927, %v5926
        %v5947 = vpack.c.b16 %v5929, %v5928
        %v5948 = vpack.c.b16 %v5931, %v5930
        %v5949 = vpack.c.b16 %v5933, %v5932
        %v5954 = vunpack.c.l.b16 %v5898
        %v5955 = vunpack.c.l.b16 %v5899
        %v5956 = vunpack.c.l.b16 %v5900
        %v5957 = vunpack.c.l.b16 %v5901
        %v5958 = vpack.c.b16 %v5955, %v5954
        %v5959 = vpack.c.b16 %v5957, %v5956
        %v5963 = vsel %vm4581, %v5934, 0
        %v5966 = vsel %vm4581, %v5935, 0
        %v5969 = vsel %vm4581, %v5936, 0
        %v5972 = vsel %vm4581, %v5937, 0
        %v5975 = vsel %vm4581, %v5938, 0
        %v5978 = vsel %vm4581, %v5939, 0
        %v5981 = vsel %vm4581, %v5940, 0
        %v5984 = vsel %vm4581, %v5941, 0
        %v5987 = vsel %vm4581, %v5942, 0
        %v5990 = vsel %vm4581, %v5943, 0
        %v5993 = vsel %vm4581, %v5944, 0
        %v5996 = vsel %vm4581, %v5945, 0
        %v5999 = vsel %vm4581, %v5946, 0
        %v6002 = vsel %vm4581, %v5947, 0
        %v6005 = vsel %vm4581, %v5948, 0
        %v6008 = vsel %vm4581, %v5949, 0
        %6010 = vmatprep.subr.bf16.mxu0 0
        %6011 = vmatpush1.bf16.msra.mxu0 %v5958
        %6012 = vmatprep.subr.bf16.mxu0 0
        %6013 = vmatpush1.bf16.msra.mxu0 %v5959
        %6014 = vmatprep.subr.bf16.mxu0 0
        %6015 = vmatpush1.bf16.msra.mxu0 0
        %6016 = vmatprep.subr.bf16.mxu0 0
        %6017 = vmatpush1.bf16.msra.mxu0 0
        %6018 = vmatprep.subr.bf16.mxu0 0
        %6019 = vmatpush1.bf16.msra.mxu0 0
        %6020 = vmatprep.subr.bf16.mxu0 0
        %6021 = vmatpush1.bf16.msra.mxu0 0
        %6022 = vmatprep.subr.bf16.mxu0 0
        %6023 = vmatpush1.bf16.msra.mxu0 0
        %6024 = vmatprep.subr.bf16.mxu0 0
        %6025 = vmatpush1.bf16.msra.mxu0 0
        %6026 = vmatprep.subr.bf16.mxu0 0
        %6027 = vmatpush1.bf16.msra.mxu0 0
        %6028 = vmatprep.subr.bf16.mxu0 0
        %6029 = vmatpush1.bf16.msra.mxu0 0
        %6030 = vmatprep.subr.bf16.mxu0 0
        %6031 = vmatpush1.bf16.msra.mxu0 0
        %6032 = vmatprep.subr.bf16.mxu0 0
        %6033 = vmatpush1.bf16.msra.mxu0 0
        %6034 = vmatprep.subr.bf16.mxu0 0
        %6035 = vmatpush1.bf16.msra.mxu0 0
        %6036 = vmatprep.subr.bf16.mxu0 0
        %6037 = vmatpush1.bf16.msra.mxu0 0
        %6038 = vmatprep.subr.bf16.mxu0 0
        %6039 = vmatpush1.bf16.msra.mxu0 0
        %6040 = vmatprep.subr.bf16.mxu0 0
        %6041 = vmatpush1.bf16.msra.mxu0 0
        %6042 = vmatprep.mubr.bf16.mxu0 0
        %6043 = vmatmul.mubr.bf16.gmra.mrb[0].mxu0 %v5963
        %v6044 = vpop.f32.mrb[0].mxu0
        %v6045 = vadd.f32 0.0, %v6044
        %v6046 = vpop.f32.mrb[0].mxu0
        %v6047 = vpop.f32.mrb[0].mxu0
        %v6048 = vadd.f32 0.0, %v6047
        %v6049 = vpop.f32.mrb[0].mxu0
        %6050 = vmatprep.mubr.bf16.mxu0 0
        %6051 = vmatmul.mubr.bf16.gmra.mrb[0].mxu0 %v5966
        %v6052 = vpop.f32.mrb[0].mxu0
        %v6053 = vadd.f32 0.0, %v6052
        %v6054 = vpop.f32.mrb[0].mxu0
        %v6055 = vpop.f32.mrb[0].mxu0
        %v6056 = vadd.f32 0.0, %v6055
        %v6057 = vpop.f32.mrb[0].mxu0
        %6058 = vmatprep.mubr.bf16.mxu0 0
        %6059 = vmatmul.mubr.bf16.gmra.mrb[0].mxu0 %v5969
        %v6060 = vpop.f32.mrb[0].mxu0
        %v6061 = vadd.f32 0.0, %v6060
        %v6062 = vpop.f32.mrb[0].mxu0
        %v6063 = vpop.f32.mrb[0].mxu0
        %v6064 = vadd.f32 0.0, %v6063
        %v6065 = vpop.f32.mrb[0].mxu0
        %6066 = vmatprep.mubr.bf16.mxu0 0
        %6067 = vmatmul.mubr.bf16.gmra.mrb[0].mxu0 %v5972
        %v6068 = vpop.f32.mrb[0].mxu0
        %v6069 = vadd.f32 0.0, %v6068
        %v6070 = vpop.f32.mrb[0].mxu0
        %v6071 = vpop.f32.mrb[0].mxu0
        %v6072 = vadd.f32 0.0, %v6071
        %v6073 = vpop.f32.mrb[0].mxu0
        %6074 = vmatprep.mubr.bf16.mxu0 0
        %6075 = vmatmul.mubr.bf16.gmra.mrb[0].mxu0 %v5975
        %v6076 = vpop.f32.mrb[0].mxu0
        %v6077 = vadd.f32 0.0, %v6076
        %v6078 = vpop.f32.mrb[0].mxu0
        %v6079 = vpop.f32.mrb[0].mxu0
        %v6080 = vadd.f32 0.0, %v6079
        %v6081 = vpop.f32.mrb[0].mxu0
        %6082 = vmatprep.mubr.bf16.mxu0 0
        %6083 = vmatmul.mubr.bf16.gmra.mrb[0].mxu0 %v5978
        %v6084 = vpop.f32.mrb[0].mxu0
        %v6085 = vadd.f32 0.0, %v6084
        %v6086 = vpop.f32.mrb[0].mxu0
        %v6087 = vpop.f32.mrb[0].mxu0
        %v6088 = vadd.f32 0.0, %v6087
        %v6089 = vpop.f32.mrb[0].mxu0
        %6090 = vmatprep.mubr.bf16.mxu0 0
        %6091 = vmatmul.mubr.bf16.gmra.mrb[0].mxu0 %v5981
        %v6092 = vpop.f32.mrb[0].mxu0
        %v6093 = vadd.f32 0.0, %v6092
        %v6094 = vpop.f32.mrb[0].mxu0
        %v6095 = vpop.f32.mrb[0].mxu0
        %v6096 = vadd.f32 0.0, %v6095
        %v6097 = vpop.f32.mrb[0].mxu0
        %6098 = vmatprep.mubr.bf16.mxu0 0
        %6099 = vmatmul.mubr.bf16.gmra.mrb[0].mxu0 %v5984
        %v6100 = vpop.f32.mrb[0].mxu0
        %v6101 = vadd.f32 0.0, %v6100
        %v6102 = vpop.f32.mrb[0].mxu0
        %v6103 = vpop.f32.mrb[0].mxu0
        %v6104 = vadd.f32 0.0, %v6103
        %v6105 = vpop.f32.mrb[0].mxu0
        %6106 = vmatprep.mubr.bf16.mxu0 0
        %6107 = vmatmul.mubr.bf16.gmra.mrb[0].mxu0 %v5987
        %v6108 = vpop.f32.mrb[0].mxu0
        %v6109 = vadd.f32 0.0, %v6108
        %v6110 = vpop.f32.mrb[0].mxu0
        %v6111 = vpop.f32.mrb[0].mxu0
        %v6112 = vadd.f32 0.0, %v6111
        %v6113 = vpop.f32.mrb[0].mxu0
        %6114 = vmatprep.mubr.bf16.mxu0 0
        %6115 = vmatmul.mubr.bf16.gmra.mrb[0].mxu0 %v5990
        %v6116 = vpop.f32.mrb[0].mxu0
        %v6117 = vadd.f32 0.0, %v6116
        %v6118 = vpop.f32.mrb[0].mxu0
        %v6119 = vpop.f32.mrb[0].mxu0
        %v6120 = vadd.f32 0.0, %v6119
        %v6121 = vpop.f32.mrb[0].mxu0
        %6122 = vmatprep.mubr.bf16.mxu0 0
        %6123 = vmatmul.mubr.bf16.gmra.mrb[0].mxu0 %v5993
        %v6124 = vpop.f32.mrb[0].mxu0
        %v6125 = vadd.f32 0.0, %v6124
        %v6126 = vpop.f32.mrb[0].mxu0
        %v6127 = vpop.f32.mrb[0].mxu0
        %v6128 = vadd.f32 0.0, %v6127
        %v6129 = vpop.f32.mrb[0].mxu0
        %6130 = vmatprep.mubr.bf16.mxu0 0
        %6131 = vmatmul.mubr.bf16.gmra.mrb[0].mxu0 %v5996
        %v6132 = vpop.f32.mrb[0].mxu0
        %v6133 = vadd.f32 0.0, %v6132
        %v6134 = vpop.f32.mrb[0].mxu0
        %v6135 = vpop.f32.mrb[0].mxu0
        %v6136 = vadd.f32 0.0, %v6135
        %v6137 = vpop.f32.mrb[0].mxu0
        %6138 = vmatprep.mubr.bf16.mxu0 0
        %6139 = vmatmul.mubr.bf16.gmra.mrb[0].mxu0 %v5999
        %v6140 = vpop.f32.mrb[0].mxu0
        %v6141 = vadd.f32 0.0, %v6140
        %v6142 = vpop.f32.mrb[0].mxu0
        %v6143 = vpop.f32.mrb[0].mxu0
        %v6144 = vadd.f32 0.0, %v6143
        %v6145 = vpop.f32.mrb[0].mxu0
        %6146 = vmatprep.mubr.bf16.mxu0 0
        %6147 = vmatmul.mubr.bf16.gmra.mrb[0].mxu0 %v6002
        %v6148 = vpop.f32.mrb[0].mxu0
        %v6149 = vadd.f32 0.0, %v6148
        %v6150 = vpop.f32.mrb[0].mxu0
        %v6151 = vpop.f32.mrb[0].mxu0
        %v6152 = vadd.f32 0.0, %v6151
        %v6153 = vpop.f32.mrb[0].mxu0
        %6154 = vmatprep.mubr.bf16.mxu0 0
        %6155 = vmatmul.mubr.bf16.gmra.mrb[0].mxu0 %v6005
        %v6156 = vpop.f32.mrb[0].mxu0
        %v6157 = vadd.f32 0.0, %v6156
        %v6158 = vpop.f32.mrb[0].mxu0
        %v6159 = vpop.f32.mrb[0].mxu0
        %v6160 = vadd.f32 0.0, %v6159
        %v6161 = vpop.f32.mrb[0].mxu0
        %6162 = vmatprep.mubr.bf16.mxu0 0
        %6163 = vmatmul.mubr.bf16.gmra.mrb[0].mxu0 %v6008
        %v6164 = vpop.f32.mrb[0].mxu0
        %v6165 = vadd.f32 0.0, %v6164
        %v6166 = vpop.f32.mrb[0].mxu0
        %v6167 = vpop.f32.mrb[0].mxu0
        %v6168 = vadd.f32 0.0, %v6167
        %v6169 = vpop.f32.mrb[0].mxu0
        %6170 = vdwg.mxu0
        %6203 = vrot.lane.b32.xlu0 %v6045, 64
        %v6204 = vpop.permute.xlu0 %6203
        %6205 = vrot.lane.b32.xlu0 %v6048, 64
        %v6206 = vpop.permute.xlu0 %6205
        %6207 = vrot.lane.b32.xlu0 %v6053, 64
        %v6208 = vpop.permute.xlu0 %6207
        %6209 = vrot.lane.b32.xlu0 %v6056, 64
        %v6210 = vpop.permute.xlu0 %6209
        %6211 = vrot.lane.b32.xlu0 %v6061, 64
        %v6212 = vpop.permute.xlu0 %6211
        %6213 = vrot.lane.b32.xlu0 %v6064, 64
        %v6214 = vpop.permute.xlu0 %6213
        %6215 = vrot.lane.b32.xlu0 %v6069, 64
        %v6216 = vpop.permute.xlu0 %6215
        %6217 = vrot.lane.b32.xlu0 %v6072, 64
        %v6218 = vpop.permute.xlu0 %6217
        %6219 = vrot.lane.b32.xlu0 %v6077, 64
        %v6220 = vpop.permute.xlu0 %6219
        %6221 = vrot.lane.b32.xlu0 %v6080, 64
        %v6222 = vpop.permute.xlu0 %6221
        %6223 = vrot.lane.b32.xlu0 %v6085, 64
        %v6224 = vpop.permute.xlu0 %6223
        %6225 = vrot.lane.b32.xlu0 %v6088, 64
        %v6226 = vpop.permute.xlu0 %6225
        %6227 = vrot.lane.b32.xlu0 %v6093, 64
        %v6228 = vpop.permute.xlu0 %6227
        %6229 = vrot.lane.b32.xlu0 %v6096, 64
        %v6230 = vpop.permute.xlu0 %6229
        %6231 = vrot.lane.b32.xlu0 %v6101, 64
        %v6232 = vpop.permute.xlu0 %6231
        %6233 = vrot.lane.b32.xlu0 %v6104, 64
        %v6234 = vpop.permute.xlu0 %6233
        %6235 = vrot.lane.b32.xlu0 %v6109, 64
        %v6236 = vpop.permute.xlu0 %6235
        %6237 = vrot.lane.b32.xlu0 %v6112, 64
        %v6238 = vpop.permute.xlu0 %6237
        %6239 = vrot.lane.b32.xlu0 %v6117, 64
        %v6240 = vpop.permute.xlu0 %6239
        %6241 = vrot.lane.b32.xlu0 %v6120, 64
        %v6242 = vpop.permute.xlu0 %6241
        %6243 = vrot.lane.b32.xlu0 %v6125, 64
        %v6244 = vpop.permute.xlu0 %6243
        %6245 = vrot.lane.b32.xlu0 %v6128, 64
        %v6246 = vpop.permute.xlu0 %6245
        %6247 = vrot.lane.b32.xlu0 %v6133, 64
        %v6248 = vpop.permute.xlu0 %6247
        %6249 = vrot.lane.b32.xlu0 %v6136, 64
        %v6250 = vpop.permute.xlu0 %6249
        %6251 = vrot.lane.b32.xlu0 %v6141, 64
        %v6252 = vpop.permute.xlu0 %6251
        %6253 = vrot.lane.b32.xlu0 %v6144, 64
        %v6254 = vpop.permute.xlu0 %6253
        %6255 = vrot.lane.b32.xlu0 %v6149, 64
        %v6256 = vpop.permute.xlu0 %6255
        %6257 = vrot.lane.b32.xlu0 %v6152, 64
        %v6258 = vpop.permute.xlu0 %6257
        %6259 = vrot.lane.b32.xlu0 %v6157, 64
        %v6260 = vpop.permute.xlu0 %6259
        %6261 = vrot.lane.b32.xlu0 %v6160, 64
        %v6262 = vpop.permute.xlu0 %6261
        %6263 = vrot.lane.b32.xlu0 %v6165, 64
        %v6264 = vpop.permute.xlu0 %6263
        %6265 = vrot.lane.b32.xlu0 %v6168, 64
        %v6266 = vpop.permute.xlu0 %6265
        %v6299 = vadd.f32 %v5737, %v6204
        %v6300 = vadd.f32 %v5738, %v6206
        %v6301 = vadd.f32 %v5739, %v6208
        %v6302 = vadd.f32 %v5740, %v6210
        %v6303 = vadd.f32 %v5741, %v6212
        %v6304 = vadd.f32 %v5742, %v6214
        %v6305 = vadd.f32 %v5743, %v6216
        %v6306 = vadd.f32 %v5744, %v6218
        %v6307 = vadd.f32 %v5745, %v6220
        %v6308 = vadd.f32 %v5746, %v6222
        %v6309 = vadd.f32 %v5747, %v6224
        %v6310 = vadd.f32 %v5748, %v6226
        %v6311 = vadd.f32 %v5749, %v6228
        %v6312 = vadd.f32 %v5750, %v6230
        %v6313 = vadd.f32 %v5751, %v6232
        %v6314 = vadd.f32 %v5752, %v6234
        %v6315 = vadd.f32 %v5753, %v6236
        %v6316 = vadd.f32 %v5754, %v6238
        %v6317 = vadd.f32 %v5755, %v6240
        %v6318 = vadd.f32 %v5756, %v6242
        %v6319 = vadd.f32 %v5757, %v6244
        %v6320 = vadd.f32 %v5758, %v6246
        %v6321 = vadd.f32 %v5759, %v6248
        %v6322 = vadd.f32 %v5760, %v6250
        %v6323 = vadd.f32 %v5761, %v6252
        %v6324 = vadd.f32 %v5762, %v6254
        %v6325 = vadd.f32 %v5763, %v6256
        %v6326 = vadd.f32 %v5764, %v6258
        %v6327 = vadd.f32 %v5765, %v6260
        %v6328 = vadd.f32 %v5766, %v6262
        %v6329 = vadd.f32 %v5767, %v6264
        %v6330 = vadd.f32 %v5768, %v6266
        %s6331 = scalar_lea.vmem %s4, 48
        %v6332 = vld [vmem:[%s6331] sm:$0xf]
        %v6333 = vld [vmem:[%s6331 + $0x4] sm:$0xf]
        %v6334 = vld [vmem:[%s6331 + $0x8] sm:$0xf]
        %v6335 = vld [vmem:[%s6331 + $0xc] sm:$0xf]
        %v6338 = vunpack.c.l.b16 %v4479
        %v6339 = vunpack.c.l.b16 %v4480
        %v6340 = vpack.c.b16 %v6339, %v6338
        %v6345 = vunpack.c.l.b16 %v6332
        %v6346 = vunpack.c.l.b16 %v6333
        %v6347 = vunpack.c.l.b16 %v6334
        %v6348 = vunpack.c.l.b16 %v6335
        %v6349 = vpack.c.b16 %v6346, %v6345
        %v6350 = vpack.c.b16 %v6348, %v6347
        %v6354 = vsel %vm4581, %v6340, 0
        %6356 = vmatprep.subr.bf16.mxu0 0
        %6357 = vmatpush1.bf16.msra.mxu0 %v6349
        %6358 = vmatprep.subr.bf16.mxu0 0
        %6359 = vmatpush1.bf16.msra.mxu0 %v6350
        %6360 = vmatprep.subr.bf16.mxu0 0
        %6361 = vmatpush1.bf16.msra.mxu0 0
        %6362 = vmatprep.subr.bf16.mxu0 0
        %6363 = vmatpush1.bf16.msra.mxu0 0
        %6364 = vmatprep.subr.bf16.mxu0 0
        %6365 = vmatpush1.bf16.msra.mxu0 0
        %6366 = vmatprep.subr.bf16.mxu0 0
        %6367 = vmatpush1.bf16.msra.mxu0 0
        %6368 = vmatprep.subr.bf16.mxu0 0
        %6369 = vmatpush1.bf16.msra.mxu0 0
        %6370 = vmatprep.subr.bf16.mxu0 0
        %6371 = vmatpush1.bf16.msra.mxu0 0
        %6372 = vmatprep.subr.bf16.mxu0 0
        %6373 = vmatpush1.bf16.msra.mxu0 0
        %6374 = vmatprep.subr.bf16.mxu0 0
        %6375 = vmatpush1.bf16.msra.mxu0 0
        %6376 = vmatprep.subr.bf16.mxu0 0
        %6377 = vmatpush1.bf16.msra.mxu0 0
        %6378 = vmatprep.subr.bf16.mxu0 0
        %6379 = vmatpush1.bf16.msra.mxu0 0
        %6380 = vmatprep.subr.bf16.mxu0 0
        %6381 = vmatpush1.bf16.msra.mxu0 0
        %6382 = vmatprep.subr.bf16.mxu0 0
        %6383 = vmatpush1.bf16.msra.mxu0 0
        %6384 = vmatprep.subr.bf16.mxu0 0
        %6385 = vmatpush1.bf16.msra.mxu0 0
        %6386 = vmatprep.subr.bf16.mxu0 0
        %6387 = vmatpush1.bf16.msra.mxu0 0
        %6388 = vmatprep.mubr.bf16.mxu0 0
        %6389 = vmatmul.mubr.bf16.gmra.mrb[0].mxu0 %v4586
        %v6390 = vpop.f32.mrb[0].mxu0
        %v6391 = vadd.f32 0.0, %v6390
        %v6392 = vpop.f32.mrb[0].mxu0
        %v6393 = vpop.f32.mrb[0].mxu0
        %v6394 = vadd.f32 0.0, %v6393
        %v6395 = vpop.f32.mrb[0].mxu0
        %6396 = vmatprep.mubr.bf16.mxu0 0
        %6397 = vmatmul.mubr.bf16.gmra.mrb[0].mxu0 %v4589
        %v6398 = vpop.f32.mrb[0].mxu0
        %v6399 = vadd.f32 0.0, %v6398
        %v6400 = vpop.f32.mrb[0].mxu0
        %v6401 = vpop.f32.mrb[0].mxu0
        %v6402 = vadd.f32 0.0, %v6401
        %v6403 = vpop.f32.mrb[0].mxu0
        %6404 = vmatprep.mubr.bf16.mxu0 0
        %6405 = vmatmul.mubr.bf16.gmra.mrb[0].mxu0 %v4592
        %v6406 = vpop.f32.mrb[0].mxu0
        %v6407 = vadd.f32 0.0, %v6406
        %v6408 = vpop.f32.mrb[0].mxu0
        %v6409 = vpop.f32.mrb[0].mxu0
        %v6410 = vadd.f32 0.0, %v6409
        %v6411 = vpop.f32.mrb[0].mxu0
        %6412 = vmatprep.mubr.bf16.mxu0 0
        %6413 = vmatmul.mubr.bf16.gmra.mrb[0].mxu0 %v4595
        %v6414 = vpop.f32.mrb[0].mxu0
        %v6415 = vadd.f32 0.0, %v6414
        %v6416 = vpop.f32.mrb[0].mxu0
        %v6417 = vpop.f32.mrb[0].mxu0
        %v6418 = vadd.f32 0.0, %v6417
        %v6419 = vpop.f32.mrb[0].mxu0
        %6420 = vmatprep.mubr.bf16.mxu0 0
        %6421 = vmatmul.mubr.bf16.gmra.mrb[0].mxu0 %v4598
        %v6422 = vpop.f32.mrb[0].mxu0
        %v6423 = vadd.f32 0.0, %v6422
        %v6424 = vpop.f32.mrb[0].mxu0
        %v6425 = vpop.f32.mrb[0].mxu0
        %v6426 = vadd.f32 0.0, %v6425
        %v6427 = vpop.f32.mrb[0].mxu0
        %6428 = vmatprep.mubr.bf16.mxu0 0
        %6429 = vmatmul.mubr.bf16.gmra.mrb[0].mxu0 %v4601
        %v6430 = vpop.f32.mrb[0].mxu0
        %v6431 = vadd.f32 0.0, %v6430
        %v6432 = vpop.f32.mrb[0].mxu0
        %v6433 = vpop.f32.mrb[0].mxu0
        %v6434 = vadd.f32 0.0, %v6433
        %v6435 = vpop.f32.mrb[0].mxu0
        %6436 = vmatprep.mubr.bf16.mxu0 0
        %6437 = vmatmul.mubr.bf16.gmra.mrb[0].mxu0 %v4604
        %v6438 = vpop.f32.mrb[0].mxu0
        %v6439 = vadd.f32 0.0, %v6438
        %v6440 = vpop.f32.mrb[0].mxu0
        %v6441 = vpop.f32.mrb[0].mxu0
        %v6442 = vadd.f32 0.0, %v6441
        %v6443 = vpop.f32.mrb[0].mxu0
        %6444 = vmatprep.mubr.bf16.mxu0 0
        %6445 = vmatmul.mubr.bf16.gmra.mrb[0].mxu0 %v4607
        %v6446 = vpop.f32.mrb[0].mxu0
        %v6447 = vadd.f32 0.0, %v6446
        %v6448 = vpop.f32.mrb[0].mxu0
        %v6449 = vpop.f32.mrb[0].mxu0
        %v6450 = vadd.f32 0.0, %v6449
        %v6451 = vpop.f32.mrb[0].mxu0
        %6452 = vmatprep.mubr.bf16.mxu0 0
        %6453 = vmatmul.mubr.bf16.gmra.mrb[0].mxu0 %v4610
        %v6454 = vpop.f32.mrb[0].mxu0
        %v6455 = vadd.f32 0.0, %v6454
        %v6456 = vpop.f32.mrb[0].mxu0
        %v6457 = vpop.f32.mrb[0].mxu0
        %v6458 = vadd.f32 0.0, %v6457
        %v6459 = vpop.f32.mrb[0].mxu0
        %6460 = vmatprep.mubr.bf16.mxu0 0
        %6461 = vmatmul.mubr.bf16.gmra.mrb[0].mxu0 %v4613
        %v6462 = vpop.f32.mrb[0].mxu0
        %v6463 = vadd.f32 0.0, %v6462
        %v6464 = vpop.f32.mrb[0].mxu0
        %v6465 = vpop.f32.mrb[0].mxu0
        %v6466 = vadd.f32 0.0, %v6465
        %v6467 = vpop.f32.mrb[0].mxu0
        %6468 = vmatprep.mubr.bf16.mxu0 0
        %6469 = vmatmul.mubr.bf16.gmra.mrb[0].mxu0 %v4616
        %v6470 = vpop.f32.mrb[0].mxu0
        %v6471 = vadd.f32 0.0, %v6470
        %v6472 = vpop.f32.mrb[0].mxu0
        %v6473 = vpop.f32.mrb[0].mxu0
        %v6474 = vadd.f32 0.0, %v6473
        %v6475 = vpop.f32.mrb[0].mxu0
        %6476 = vmatprep.mubr.bf16.mxu0 0
        %6477 = vmatmul.mubr.bf16.gmra.mrb[0].mxu0 %v4619
        %v6478 = vpop.f32.mrb[0].mxu0
        %v6479 = vadd.f32 0.0, %v6478
        %v6480 = vpop.f32.mrb[0].mxu0
        %v6481 = vpop.f32.mrb[0].mxu0
        %v6482 = vadd.f32 0.0, %v6481
        %v6483 = vpop.f32.mrb[0].mxu0
        %6484 = vmatprep.mubr.bf16.mxu0 0
        %6485 = vmatmul.mubr.bf16.gmra.mrb[0].mxu0 %v4622
        %v6486 = vpop.f32.mrb[0].mxu0
        %v6487 = vadd.f32 0.0, %v6486
        %v6488 = vpop.f32.mrb[0].mxu0
        %v6489 = vpop.f32.mrb[0].mxu0
        %v6490 = vadd.f32 0.0, %v6489
        %v6491 = vpop.f32.mrb[0].mxu0
        %6492 = vmatprep.mubr.bf16.mxu0 0
        %6493 = vmatmul.mubr.bf16.gmra.mrb[0].mxu0 %v4625
        %v6494 = vpop.f32.mrb[0].mxu0
        %v6495 = vadd.f32 0.0, %v6494
        %v6496 = vpop.f32.mrb[0].mxu0
        %v6497 = vpop.f32.mrb[0].mxu0
        %v6498 = vadd.f32 0.0, %v6497
        %v6499 = vpop.f32.mrb[0].mxu0
        %6500 = vmatprep.mubr.bf16.mxu0 0
        %6501 = vmatmul.mubr.bf16.gmra.mrb[0].mxu0 %v4628
        %v6502 = vpop.f32.mrb[0].mxu0
        %v6503 = vadd.f32 0.0, %v6502
        %v6504 = vpop.f32.mrb[0].mxu0
        %v6505 = vpop.f32.mrb[0].mxu0
        %v6506 = vadd.f32 0.0, %v6505
        %v6507 = vpop.f32.mrb[0].mxu0
        %6508 = vmatprep.mubr.bf16.mxu0 0
        %6509 = vmatmul.mubr.bf16.gmra.mrb[0].mxu0 %v6354
        %v6510 = vpop.f32.mrb[0].mxu0
        %v6511 = vadd.f32 0.0, %v6510
        %v6512 = vpop.f32.mrb[0].mxu0
        %v6513 = vpop.f32.mrb[0].mxu0
        %v6514 = vadd.f32 0.0, %v6513
        %v6515 = vpop.f32.mrb[0].mxu0
        %6516 = vdwg.mxu0
        %6549 = vrot.lane.b32.xlu0 %v6391, 64
        %v6550 = vpop.permute.xlu0 %6549
        %6551 = vrot.lane.b32.xlu0 %v6394, 64
        %v6552 = vpop.permute.xlu0 %6551
        %6553 = vrot.lane.b32.xlu0 %v6399, 64
        %v6554 = vpop.permute.xlu0 %6553
        %6555 = vrot.lane.b32.xlu0 %v6402, 64
        %v6556 = vpop.permute.xlu0 %6555
        %6557 = vrot.lane.b32.xlu0 %v6407, 64
        %v6558 = vpop.permute.xlu0 %6557
        %6559 = vrot.lane.b32.xlu0 %v6410, 64
        %v6560 = vpop.permute.xlu0 %6559
        %6561 = vrot.lane.b32.xlu0 %v6415, 64
        %v6562 = vpop.permute.xlu0 %6561
        %6563 = vrot.lane.b32.xlu0 %v6418, 64
        %v6564 = vpop.permute.xlu0 %6563
        %6565 = vrot.lane.b32.xlu0 %v6423, 64
        %v6566 = vpop.permute.xlu0 %6565
        %6567 = vrot.lane.b32.xlu0 %v6426, 64
        %v6568 = vpop.permute.xlu0 %6567
        %6569 = vrot.lane.b32.xlu0 %v6431, 64
        %v6570 = vpop.permute.xlu0 %6569
        %6571 = vrot.lane.b32.xlu0 %v6434, 64
        %v6572 = vpop.permute.xlu0 %6571
        %6573 = vrot.lane.b32.xlu0 %v6439, 64
        %v6574 = vpop.permute.xlu0 %6573
        %6575 = vrot.lane.b32.xlu0 %v6442, 64
        %v6576 = vpop.permute.xlu0 %6575
        %6577 = vrot.lane.b32.xlu0 %v6447, 64
        %v6578 = vpop.permute.xlu0 %6577
        %6579 = vrot.lane.b32.xlu0 %v6450, 64
        %v6580 = vpop.permute.xlu0 %6579
        %6581 = vrot.lane.b32.xlu0 %v6455, 64
        %v6582 = vpop.permute.xlu0 %6581
        %6583 = vrot.lane.b32.xlu0 %v6458, 64
        %v6584 = vpop.permute.xlu0 %6583
        %6585 = vrot.lane.b32.xlu0 %v6463, 64
        %v6586 = vpop.permute.xlu0 %6585
        %6587 = vrot.lane.b32.xlu0 %v6466, 64
        %v6588 = vpop.permute.xlu0 %6587
        %6589 = vrot.lane.b32.xlu0 %v6471, 64
        %v6590 = vpop.permute.xlu0 %6589
        %6591 = vrot.lane.b32.xlu0 %v6474, 64
        %v6592 = vpop.permute.xlu0 %6591
        %6593 = vrot.lane.b32.xlu0 %v6479, 64
        %v6594 = vpop.permute.xlu0 %6593
        %6595 = vrot.lane.b32.xlu0 %v6482, 64
        %v6596 = vpop.permute.xlu0 %6595
        %6597 = vrot.lane.b32.xlu0 %v6487, 64
        %v6598 = vpop.permute.xlu0 %6597
        %6599 = vrot.lane.b32.xlu0 %v6490, 64
        %v6600 = vpop.permute.xlu0 %6599
        %6601 = vrot.lane.b32.xlu0 %v6495, 64
        %v6602 = vpop.permute.xlu0 %6601
        %6603 = vrot.lane.b32.xlu0 %v6498, 64
        %v6604 = vpop.permute.xlu0 %6603
        %6605 = vrot.lane.b32.xlu0 %v6503, 64
        %v6606 = vpop.permute.xlu0 %6605
        %6607 = vrot.lane.b32.xlu0 %v6506, 64
        %v6608 = vpop.permute.xlu0 %6607
        %6609 = vrot.lane.b32.xlu0 %v6511, 64
        %v6610 = vpop.permute.xlu0 %6609
        %6611 = vrot.lane.b32.xlu0 %v6514, 64
        %v6612 = vpop.permute.xlu0 %6611
        %v6645 = vadd.f32 %v6299, %v6550
        %v6646 = vadd.f32 %v6300, %v6552
        %v6647 = vadd.f32 %v6301, %v6554
        %v6648 = vadd.f32 %v6302, %v6556
        %v6649 = vadd.f32 %v6303, %v6558
        %v6650 = vadd.f32 %v6304, %v6560
        %v6651 = vadd.f32 %v6305, %v6562
        %v6652 = vadd.f32 %v6306, %v6564
        %v6653 = vadd.f32 %v6307, %v6566
        %v6654 = vadd.f32 %v6308, %v6568
        %v6655 = vadd.f32 %v6309, %v6570
        %v6656 = vadd.f32 %v6310, %v6572
        %v6657 = vadd.f32 %v6311, %v6574
        %v6658 = vadd.f32 %v6312, %v6576
        %v6659 = vadd.f32 %v6313, %v6578
        %v6660 = vadd.f32 %v6314, %v6580
        %v6661 = vadd.f32 %v6315, %v6582
        %v6662 = vadd.f32 %v6316, %v6584
        %v6663 = vadd.f32 %v6317, %v6586
        %v6664 = vadd.f32 %v6318, %v6588
        %v6665 = vadd.f32 %v6319, %v6590
        %v6666 = vadd.f32 %v6320, %v6592
        %v6667 = vadd.f32 %v6321, %v6594
        %v6668 = vadd.f32 %v6322, %v6596
        %v6669 = vadd.f32 %v6323, %v6598
        %v6670 = vadd.f32 %v6324, %v6600
        %v6671 = vadd.f32 %v6325, %v6602
        %v6672 = vadd.f32 %v6326, %v6604
        %v6673 = vadd.f32 %v6327, %v6606
        %v6674 = vadd.f32 %v6328, %v6608
        %v6675 = vadd.f32 %v6329, %v6610
        %v6676 = vadd.f32 %v6330, %v6612
        %v6678 = vshrl.u32 %v4479, 16
        %v6680 = vrot.slane %v6678, 4
        %v6681 = vshll.u32 %v4479, 16
        %v6683 = vrot.slane %v6681, 5
        %v6684 = vor.u32 %v6680, %v6683
        %v6685 = vrot.slane %v6684, 4
        %v6687 = vshll.u32 %v4480, 16
        %v6689 = vrot.slane %v6687, 5
        %v6690 = vsel %vm798, %v6685, %v6689
        %v6691 = vshrl.u32 %v4480, 16
        %v6693 = vrot.slane %v6691, 4
        %v6694 = vor.u32 %v6693, %v6689
        %v6695 = vrot.slane %v6694, 4
        %v6697 = vshll.u32 %v4481, 16
        %v6699 = vrot.slane %v6697, 5
        %v6700 = vsel %vm798, %v6695, %v6699
        %s6701 = scalar_lea.vmem %s4, 64
        %v6702 = vld [vmem:[%s6701] sm:$0xf]
        %v6703 = vld [vmem:[%s6701 + $0x4] sm:$0xf]
        %v6704 = vld [vmem:[%s6701 + $0x8] sm:$0xf]
        %v6705 = vld [vmem:[%s6701 + $0xc] sm:$0xf]
        %v6706 = vunpack.c.l.b16 %v6690
        %v6707 = vunpack.c.l.b16 %v6700
        %v6708 = vpack.c.b16 %v6707, %v6706
        %v6713 = vunpack.c.l.b16 %v6702
        %v6714 = vunpack.c.l.b16 %v6703
        %v6715 = vunpack.c.l.b16 %v6704
        %v6716 = vunpack.c.l.b16 %v6705
        %v6717 = vpack.c.b16 %v6714, %v6713
        %v6718 = vpack.c.b16 %v6716, %v6715
        %v6722 = vsel %vm4581, %v6708, 0
        %6724 = vmatprep.subr.bf16.mxu0 0
        %6725 = vmatpush1.bf16.msra.mxu0 %v6717
        %6726 = vmatprep.subr.bf16.mxu0 0
        %6727 = vmatpush1.bf16.msra.mxu0 %v6718
        %6728 = vmatprep.subr.bf16.mxu0 0
        %6729 = vmatpush1.bf16.msra.mxu0 0
        %6730 = vmatprep.subr.bf16.mxu0 0
        %6731 = vmatpush1.bf16.msra.mxu0 0
        %6732 = vmatprep.subr.bf16.mxu0 0
        %6733 = vmatpush1.bf16.msra.mxu0 0
        %6734 = vmatprep.subr.bf16.mxu0 0
        %6735 = vmatpush1.bf16.msra.mxu0 0
        %6736 = vmatprep.subr.bf16.mxu0 0
        %6737 = vmatpush1.bf16.msra.mxu0 0
        %6738 = vmatprep.subr.bf16.mxu0 0
        %6739 = vmatpush1.bf16.msra.mxu0 0
        %6740 = vmatprep.subr.bf16.mxu0 0
        %6741 = vmatpush1.bf16.msra.mxu0 0
        %6742 = vmatprep.subr.bf16.mxu0 0
        %6743 = vmatpush1.bf16.msra.mxu0 0
        %6744 = vmatprep.subr.bf16.mxu0 0
        %6745 = vmatpush1.bf16.msra.mxu0 0
        %6746 = vmatprep.subr.bf16.mxu0 0
        %6747 = vmatpush1.bf16.msra.mxu0 0
        %6748 = vmatprep.subr.bf16.mxu0 0
        %6749 = vmatpush1.bf16.msra.mxu0 0
        %6750 = vmatprep.subr.bf16.mxu0 0
        %6751 = vmatpush1.bf16.msra.mxu0 0
        %6752 = vmatprep.subr.bf16.mxu0 0
        %6753 = vmatpush1.bf16.msra.mxu0 0
        %6754 = vmatprep.subr.bf16.mxu0 0
        %6755 = vmatpush1.bf16.msra.mxu0 0
        %6756 = vmatprep.mubr.bf16.mxu0 0
        %6757 = vmatmul.mubr.bf16.gmra.mrb[0].mxu0 %v5404
        %v6758 = vpop.f32.mrb[0].mxu0
        %v6759 = vadd.f32 0.0, %v6758
        %v6760 = vpop.f32.mrb[0].mxu0
        %v6761 = vpop.f32.mrb[0].mxu0
        %v6762 = vadd.f32 0.0, %v6761
        %v6763 = vpop.f32.mrb[0].mxu0
        %6764 = vmatprep.mubr.bf16.mxu0 0
        %6765 = vmatmul.mubr.bf16.gmra.mrb[0].mxu0 %v5407
        %v6766 = vpop.f32.mrb[0].mxu0
        %v6767 = vadd.f32 0.0, %v6766
        %v6768 = vpop.f32.mrb[0].mxu0
        %v6769 = vpop.f32.mrb[0].mxu0
        %v6770 = vadd.f32 0.0, %v6769
        %v6771 = vpop.f32.mrb[0].mxu0
        %6772 = vmatprep.mubr.bf16.mxu0 0
        %6773 = vmatmul.mubr.bf16.gmra.mrb[0].mxu0 %v5410
        %v6774 = vpop.f32.mrb[0].mxu0
        %v6775 = vadd.f32 0.0, %v6774
        %v6776 = vpop.f32.mrb[0].mxu0
        %v6777 = vpop.f32.mrb[0].mxu0
        %v6778 = vadd.f32 0.0, %v6777
        %v6779 = vpop.f32.mrb[0].mxu0
        %6780 = vmatprep.mubr.bf16.mxu0 0
        %6781 = vmatmul.mubr.bf16.gmra.mrb[0].mxu0 %v5413
        %v6782 = vpop.f32.mrb[0].mxu0
        %v6783 = vadd.f32 0.0, %v6782
        %v6784 = vpop.f32.mrb[0].mxu0
        %v6785 = vpop.f32.mrb[0].mxu0
        %v6786 = vadd.f32 0.0, %v6785
        %v6787 = vpop.f32.mrb[0].mxu0
        %6788 = vmatprep.mubr.bf16.mxu0 0
        %6789 = vmatmul.mubr.bf16.gmra.mrb[0].mxu0 %v5416
        %v6790 = vpop.f32.mrb[0].mxu0
        %v6791 = vadd.f32 0.0, %v6790
        %v6792 = vpop.f32.mrb[0].mxu0
        %v6793 = vpop.f32.mrb[0].mxu0
        %v6794 = vadd.f32 0.0, %v6793
        %v6795 = vpop.f32.mrb[0].mxu0
        %6796 = vmatprep.mubr.bf16.mxu0 0
        %6797 = vmatmul.mubr.bf16.gmra.mrb[0].mxu0 %v5419
        %v6798 = vpop.f32.mrb[0].mxu0
        %v6799 = vadd.f32 0.0, %v6798
        %v6800 = vpop.f32.mrb[0].mxu0
        %v6801 = vpop.f32.mrb[0].mxu0
        %v6802 = vadd.f32 0.0, %v6801
        %v6803 = vpop.f32.mrb[0].mxu0
        %6804 = vmatprep.mubr.bf16.mxu0 0
        %6805 = vmatmul.mubr.bf16.gmra.mrb[0].mxu0 %v5422
        %v6806 = vpop.f32.mrb[0].mxu0
        %v6807 = vadd.f32 0.0, %v6806
        %v6808 = vpop.f32.mrb[0].mxu0
        %v6809 = vpop.f32.mrb[0].mxu0
        %v6810 = vadd.f32 0.0, %v6809
        %v6811 = vpop.f32.mrb[0].mxu0
        %6812 = vmatprep.mubr.bf16.mxu0 0
        %6813 = vmatmul.mubr.bf16.gmra.mrb[0].mxu0 %v5425
        %v6814 = vpop.f32.mrb[0].mxu0
        %v6815 = vadd.f32 0.0, %v6814
        %v6816 = vpop.f32.mrb[0].mxu0
        %v6817 = vpop.f32.mrb[0].mxu0
        %v6818 = vadd.f32 0.0, %v6817
        %v6819 = vpop.f32.mrb[0].mxu0
        %6820 = vmatprep.mubr.bf16.mxu0 0
        %6821 = vmatmul.mubr.bf16.gmra.mrb[0].mxu0 %v5428
        %v6822 = vpop.f32.mrb[0].mxu0
        %v6823 = vadd.f32 0.0, %v6822
        %v6824 = vpop.f32.mrb[0].mxu0
        %v6825 = vpop.f32.mrb[0].mxu0
        %v6826 = vadd.f32 0.0, %v6825
        %v6827 = vpop.f32.mrb[0].mxu0
        %6828 = vmatprep.mubr.bf16.mxu0 0
        %6829 = vmatmul.mubr.bf16.gmra.mrb[0].mxu0 %v5431
        %v6830 = vpop.f32.mrb[0].mxu0
        %v6831 = vadd.f32 0.0, %v6830
        %v6832 = vpop.f32.mrb[0].mxu0
        %v6833 = vpop.f32.mrb[0].mxu0
        %v6834 = vadd.f32 0.0, %v6833
        %v6835 = vpop.f32.mrb[0].mxu0
        %6836 = vmatprep.mubr.bf16.mxu0 0
        %6837 = vmatmul.mubr.bf16.gmra.mrb[0].mxu0 %v5434
        %v6838 = vpop.f32.mrb[0].mxu0
        %v6839 = vadd.f32 0.0, %v6838
        %v6840 = vpop.f32.mrb[0].mxu0
        %v6841 = vpop.f32.mrb[0].mxu0
        %v6842 = vadd.f32 0.0, %v6841
        %v6843 = vpop.f32.mrb[0].mxu0
        %6844 = vmatprep.mubr.bf16.mxu0 0
        %6845 = vmatmul.mubr.bf16.gmra.mrb[0].mxu0 %v5437
        %v6846 = vpop.f32.mrb[0].mxu0
        %v6847 = vadd.f32 0.0, %v6846
        %v6848 = vpop.f32.mrb[0].mxu0
        %v6849 = vpop.f32.mrb[0].mxu0
        %v6850 = vadd.f32 0.0, %v6849
        %v6851 = vpop.f32.mrb[0].mxu0
        %6852 = vmatprep.mubr.bf16.mxu0 0
        %6853 = vmatmul.mubr.bf16.gmra.mrb[0].mxu0 %v5440
        %v6854 = vpop.f32.mrb[0].mxu0
        %v6855 = vadd.f32 0.0, %v6854
        %v6856 = vpop.f32.mrb[0].mxu0
        %v6857 = vpop.f32.mrb[0].mxu0
        %v6858 = vadd.f32 0.0, %v6857
        %v6859 = vpop.f32.mrb[0].mxu0
        %6860 = vmatprep.mubr.bf16.mxu0 0
        %6861 = vmatmul.mubr.bf16.gmra.mrb[0].mxu0 %v5443
        %v6862 = vpop.f32.mrb[0].mxu0
        %v6863 = vadd.f32 0.0, %v6862
        %v6864 = vpop.f32.mrb[0].mxu0
        %v6865 = vpop.f32.mrb[0].mxu0
        %v6866 = vadd.f32 0.0, %v6865
        %v6867 = vpop.f32.mrb[0].mxu0
        %6868 = vmatprep.mubr.bf16.mxu0 0
        %6869 = vmatmul.mubr.bf16.gmra.mrb[0].mxu0 %v5446
        %v6870 = vpop.f32.mrb[0].mxu0
        %v6871 = vadd.f32 0.0, %v6870
        %v6872 = vpop.f32.mrb[0].mxu0
        %v6873 = vpop.f32.mrb[0].mxu0
        %v6874 = vadd.f32 0.0, %v6873
        %v6875 = vpop.f32.mrb[0].mxu0
        %6876 = vmatprep.mubr.bf16.mxu0 0
        %6877 = vmatmul.mubr.bf16.gmra.mrb[0].mxu0 %v6722
        %v6878 = vpop.f32.mrb[0].mxu0
        %v6879 = vadd.f32 0.0, %v6878
        %v6880 = vpop.f32.mrb[0].mxu0
        %v6881 = vpop.f32.mrb[0].mxu0
        %v6882 = vadd.f32 0.0, %v6881
        %v6883 = vpop.f32.mrb[0].mxu0
        %6884 = vdwg.mxu0
        %6917 = vrot.lane.b32.xlu0 %v6759, 64
        %v6918 = vpop.permute.xlu0 %6917
        %6919 = vrot.lane.b32.xlu0 %v6762, 64
        %v6920 = vpop.permute.xlu0 %6919
        %6921 = vrot.lane.b32.xlu0 %v6767, 64
        %v6922 = vpop.permute.xlu0 %6921
        %6923 = vrot.lane.b32.xlu0 %v6770, 64
        %v6924 = vpop.permute.xlu0 %6923
        %6925 = vrot.lane.b32.xlu0 %v6775, 64
        %v6926 = vpop.permute.xlu0 %6925
        %6927 = vrot.lane.b32.xlu0 %v6778, 64
        %v6928 = vpop.permute.xlu0 %6927
        %6929 = vrot.lane.b32.xlu0 %v6783, 64
        %v6930 = vpop.permute.xlu0 %6929
        %6931 = vrot.lane.b32.xlu0 %v6786, 64
        %v6932 = vpop.permute.xlu0 %6931
        %6933 = vrot.lane.b32.xlu0 %v6791, 64
        %v6934 = vpop.permute.xlu0 %6933
        %6935 = vrot.lane.b32.xlu0 %v6794, 64
        %v6936 = vpop.permute.xlu0 %6935
        %6937 = vrot.lane.b32.xlu0 %v6799, 64
        %v6938 = vpop.permute.xlu0 %6937
        %6939 = vrot.lane.b32.xlu0 %v6802, 64
        %v6940 = vpop.permute.xlu0 %6939
        %6941 = vrot.lane.b32.xlu0 %v6807, 64
        %v6942 = vpop.permute.xlu0 %6941
        %6943 = vrot.lane.b32.xlu0 %v6810, 64
        %v6944 = vpop.permute.xlu0 %6943
        %6945 = vrot.lane.b32.xlu0 %v6815, 64
        %v6946 = vpop.permute.xlu0 %6945
        %6947 = vrot.lane.b32.xlu0 %v6818, 64
        %v6948 = vpop.permute.xlu0 %6947
        %6949 = vrot.lane.b32.xlu0 %v6823, 64
        %v6950 = vpop.permute.xlu0 %6949
        %6951 = vrot.lane.b32.xlu0 %v6826, 64
        %v6952 = vpop.permute.xlu0 %6951
        %6953 = vrot.lane.b32.xlu0 %v6831, 64
        %v6954 = vpop.permute.xlu0 %6953
        %6955 = vrot.lane.b32.xlu0 %v6834, 64
        %v6956 = vpop.permute.xlu0 %6955
        %6957 = vrot.lane.b32.xlu0 %v6839, 64
        %v6958 = vpop.permute.xlu0 %6957
        %6959 = vrot.lane.b32.xlu0 %v6842, 64
        %v6960 = vpop.permute.xlu0 %6959
        %6961 = vrot.lane.b32.xlu0 %v6847, 64
        %v6962 = vpop.permute.xlu0 %6961
        %6963 = vrot.lane.b32.xlu0 %v6850, 64
        %v6964 = vpop.permute.xlu0 %6963
        %6965 = vrot.lane.b32.xlu0 %v6855, 64
        %v6966 = vpop.permute.xlu0 %6965
        %6967 = vrot.lane.b32.xlu0 %v6858, 64
        %v6968 = vpop.permute.xlu0 %6967
        %6969 = vrot.lane.b32.xlu0 %v6863, 64
        %v6970 = vpop.permute.xlu0 %6969
        %6971 = vrot.lane.b32.xlu0 %v6866, 64
        %v6972 = vpop.permute.xlu0 %6971
        %6973 = vrot.lane.b32.xlu0 %v6871, 64
        %v6974 = vpop.permute.xlu0 %6973
        %6975 = vrot.lane.b32.xlu0 %v6874, 64
        %v6976 = vpop.permute.xlu0 %6975
        %6977 = vrot.lane.b32.xlu0 %v6879, 64
        %v6978 = vpop.permute.xlu0 %6977
        %6979 = vrot.lane.b32.xlu0 %v6882, 64
        %v6980 = vpop.permute.xlu0 %6979
        %v7013 = vadd.f32 %v6645, %v6918
        %v7014 = vadd.f32 %v6646, %v6920
        %v7015 = vadd.f32 %v6647, %v6922
        %v7016 = vadd.f32 %v6648, %v6924
        %v7017 = vadd.f32 %v6649, %v6926
        %v7018 = vadd.f32 %v6650, %v6928
        %v7019 = vadd.f32 %v6651, %v6930
        %v7020 = vadd.f32 %v6652, %v6932
        %v7021 = vadd.f32 %v6653, %v6934
        %v7022 = vadd.f32 %v6654, %v6936
        %v7023 = vadd.f32 %v6655, %v6938
        %v7024 = vadd.f32 %v6656, %v6940
        %v7025 = vadd.f32 %v6657, %v6942
        %v7026 = vadd.f32 %v6658, %v6944
        %v7027 = vadd.f32 %v6659, %v6946
        %v7028 = vadd.f32 %v6660, %v6948
        %v7029 = vadd.f32 %v6661, %v6950
        %v7030 = vadd.f32 %v6662, %v6952
        %v7031 = vadd.f32 %v6663, %v6954
        %v7032 = vadd.f32 %v6664, %v6956
        %v7033 = vadd.f32 %v6665, %v6958
        %v7034 = vadd.f32 %v6666, %v6960
        %v7035 = vadd.f32 %v6667, %v6962
        %v7036 = vadd.f32 %v6668, %v6964
        %v7037 = vadd.f32 %v6669, %v6966
        %v7038 = vadd.f32 %v6670, %v6968
        %v7039 = vadd.f32 %v6671, %v6970
        %v7040 = vadd.f32 %v6672, %v6972
        %v7041 = vadd.f32 %v6673, %v6974
        %v7042 = vadd.f32 %v6674, %v6976
        %v7043 = vadd.f32 %v6675, %v6978
        %v7044 = vadd.f32 %v6676, %v6980
        %v7046 = vrot.slane %v4479, 5
        %v7047 = vrot.slane %v7046, 4
        %v7048 = vrot.slane %v4480, 5
        %v7049 = vsel %vm1523, %v7047, %v7048
        %v7050 = vrot.slane %v7048, 4
        %v7051 = vrot.slane %v4481, 5
        %v7052 = vsel %vm1523, %v7050, %v7051
        %s7053 = scalar_lea.vmem %s4, 80
        %v7054 = vld [vmem:[%s7053] sm:$0xf]
        %v7055 = vld [vmem:[%s7053 + $0x4] sm:$0xf]
        %v7056 = vld [vmem:[%s7053 + $0x8] sm:$0xf]
        %v7057 = vld [vmem:[%s7053 + $0xc] sm:$0xf]
        %v7058 = vunpack.c.l.b16 %v7049
        %v7059 = vunpack.c.l.b16 %v7052
        %v7060 = vpack.c.b16 %v7059, %v7058
        %v7065 = vunpack.c.l.b16 %v7054
        %v7066 = vunpack.c.l.b16 %v7055
        %v7067 = vunpack.c.l.b16 %v7056
        %v7068 = vunpack.c.l.b16 %v7057
        %v7069 = vpack.c.b16 %v7066, %v7065
        %v7070 = vpack.c.b16 %v7068, %v7067
        %v7074 = vsel %vm4581, %v7060, 0
        %7076 = vmatprep.subr.bf16.mxu0 0
        %7077 = vmatpush1.bf16.msra.mxu0 %v7069
        %7078 = vmatprep.subr.bf16.mxu0 0
        %7079 = vmatpush1.bf16.msra.mxu0 %v7070
        %7080 = vmatprep.subr.bf16.mxu0 0
        %7081 = vmatpush1.bf16.msra.mxu0 0
        %7082 = vmatprep.subr.bf16.mxu0 0
        %7083 = vmatpush1.bf16.msra.mxu0 0
        %7084 = vmatprep.subr.bf16.mxu0 0
        %7085 = vmatpush1.bf16.msra.mxu0 0
        %7086 = vmatprep.subr.bf16.mxu0 0
        %7087 = vmatpush1.bf16.msra.mxu0 0
        %7088 = vmatprep.subr.bf16.mxu0 0
        %7089 = vmatpush1.bf16.msra.mxu0 0
        %7090 = vmatprep.subr.bf16.mxu0 0
        %7091 = vmatpush1.bf16.msra.mxu0 0
        %7092 = vmatprep.subr.bf16.mxu0 0
        %7093 = vmatpush1.bf16.msra.mxu0 0
        %7094 = vmatprep.subr.bf16.mxu0 0
        %7095 = vmatpush1.bf16.msra.mxu0 0
        %7096 = vmatprep.subr.bf16.mxu0 0
        %7097 = vmatpush1.bf16.msra.mxu0 0
        %7098 = vmatprep.subr.bf16.mxu0 0
        %7099 = vmatpush1.bf16.msra.mxu0 0
        %7100 = vmatprep.subr.bf16.mxu0 0
        %7101 = vmatpush1.bf16.msra.mxu0 0
        %7102 = vmatprep.subr.bf16.mxu0 0
        %7103 = vmatpush1.bf16.msra.mxu0 0
        %7104 = vmatprep.subr.bf16.mxu0 0
        %7105 = vmatpush1.bf16.msra.mxu0 0
        %7106 = vmatprep.subr.bf16.mxu0 0
        %7107 = vmatpush1.bf16.msra.mxu0 0
        %7108 = vmatprep.mubr.bf16.mxu0 0
        %7109 = vmatmul.mubr.bf16.gmra.mrb[0].mxu0 %v5966
        %v7110 = vpop.f32.mrb[0].mxu0
        %v7111 = vadd.f32 0.0, %v7110
        %v7112 = vpop.f32.mrb[0].mxu0
        %v7113 = vpop.f32.mrb[0].mxu0
        %v7114 = vadd.f32 0.0, %v7113
        %v7115 = vpop.f32.mrb[0].mxu0
        %7116 = vmatprep.mubr.bf16.mxu0 0
        %7117 = vmatmul.mubr.bf16.gmra.mrb[0].mxu0 %v5969
        %v7118 = vpop.f32.mrb[0].mxu0
        %v7119 = vadd.f32 0.0, %v7118
        %v7120 = vpop.f32.mrb[0].mxu0
        %v7121 = vpop.f32.mrb[0].mxu0
        %v7122 = vadd.f32 0.0, %v7121
        %v7123 = vpop.f32.mrb[0].mxu0
        %7124 = vmatprep.mubr.bf16.mxu0 0
        %7125 = vmatmul.mubr.bf16.gmra.mrb[0].mxu0 %v5972
        %v7126 = vpop.f32.mrb[0].mxu0
        %v7127 = vadd.f32 0.0, %v7126
        %v7128 = vpop.f32.mrb[0].mxu0
        %v7129 = vpop.f32.mrb[0].mxu0
        %v7130 = vadd.f32 0.0, %v7129
        %v7131 = vpop.f32.mrb[0].mxu0
        %7132 = vmatprep.mubr.bf16.mxu0 0
        %7133 = vmatmul.mubr.bf16.gmra.mrb[0].mxu0 %v5975
        %v7134 = vpop.f32.mrb[0].mxu0
        %v7135 = vadd.f32 0.0, %v7134
        %v7136 = vpop.f32.mrb[0].mxu0
        %v7137 = vpop.f32.mrb[0].mxu0
        %v7138 = vadd.f32 0.0, %v7137
        %v7139 = vpop.f32.mrb[0].mxu0
        %7140 = vmatprep.mubr.bf16.mxu0 0
        %7141 = vmatmul.mubr.bf16.gmra.mrb[0].mxu0 %v5978
        %v7142 = vpop.f32.mrb[0].mxu0
        %v7143 = vadd.f32 0.0, %v7142
        %v7144 = vpop.f32.mrb[0].mxu0
        %v7145 = vpop.f32.mrb[0].mxu0
        %v7146 = vadd.f32 0.0, %v7145
        %v7147 = vpop.f32.mrb[0].mxu0
        %7148 = vmatprep.mubr.bf16.mxu0 0
        %7149 = vmatmul.mubr.bf16.gmra.mrb[0].mxu0 %v5981
        %v7150 = vpop.f32.mrb[0].mxu0
        %v7151 = vadd.f32 0.0, %v7150
        %v7152 = vpop.f32.mrb[0].mxu0
        %v7153 = vpop.f32.mrb[0].mxu0
        %v7154 = vadd.f32 0.0, %v7153
        %v7155 = vpop.f32.mrb[0].mxu0
        %7156 = vmatprep.mubr.bf16.mxu0 0
        %7157 = vmatmul.mubr.bf16.gmra.mrb[0].mxu0 %v5984
        %v7158 = vpop.f32.mrb[0].mxu0
        %v7159 = vadd.f32 0.0, %v7158
        %v7160 = vpop.f32.mrb[0].mxu0
        %v7161 = vpop.f32.mrb[0].mxu0
        %v7162 = vadd.f32 0.0, %v7161
        %v7163 = vpop.f32.mrb[0].mxu0
        %7164 = vmatprep.mubr.bf16.mxu0 0
        %7165 = vmatmul.mubr.bf16.gmra.mrb[0].mxu0 %v5987
        %v7166 = vpop.f32.mrb[0].mxu0
        %v7167 = vadd.f32 0.0, %v7166
        %v7168 = vpop.f32.mrb[0].mxu0
        %v7169 = vpop.f32.mrb[0].mxu0
        %v7170 = vadd.f32 0.0, %v7169
        %v7171 = vpop.f32.mrb[0].mxu0
        %7172 = vmatprep.mubr.bf16.mxu0 0
        %7173 = vmatmul.mubr.bf16.gmra.mrb[0].mxu0 %v5990
        %v7174 = vpop.f32.mrb[0].mxu0
        %v7175 = vadd.f32 0.0, %v7174
        %v7176 = vpop.f32.mrb[0].mxu0
        %v7177 = vpop.f32.mrb[0].mxu0
        %v7178 = vadd.f32 0.0, %v7177
        %v7179 = vpop.f32.mrb[0].mxu0
        %7180 = vmatprep.mubr.bf16.mxu0 0
        %7181 = vmatmul.mubr.bf16.gmra.mrb[0].mxu0 %v5993
        %v7182 = vpop.f32.mrb[0].mxu0
        %v7183 = vadd.f32 0.0, %v7182
        %v7184 = vpop.f32.mrb[0].mxu0
        %v7185 = vpop.f32.mrb[0].mxu0
        %v7186 = vadd.f32 0.0, %v7185
        %v7187 = vpop.f32.mrb[0].mxu0
        %7188 = vmatprep.mubr.bf16.mxu0 0
        %7189 = vmatmul.mubr.bf16.gmra.mrb[0].mxu0 %v5996
        %v7190 = vpop.f32.mrb[0].mxu0
        %v7191 = vadd.f32 0.0, %v7190
        %v7192 = vpop.f32.mrb[0].mxu0
        %v7193 = vpop.f32.mrb[0].mxu0
        %v7194 = vadd.f32 0.0, %v7193
        %v7195 = vpop.f32.mrb[0].mxu0
        %7196 = vmatprep.mubr.bf16.mxu0 0
        %7197 = vmatmul.mubr.bf16.gmra.mrb[0].mxu0 %v5999
        %v7198 = vpop.f32.mrb[0].mxu0
        %v7199 = vadd.f32 0.0, %v7198
        %v7200 = vpop.f32.mrb[0].mxu0
        %v7201 = vpop.f32.mrb[0].mxu0
        %v7202 = vadd.f32 0.0, %v7201
        %v7203 = vpop.f32.mrb[0].mxu0
        %7204 = vmatprep.mubr.bf16.mxu0 0
        %7205 = vmatmul.mubr.bf16.gmra.mrb[0].mxu0 %v6002
        %v7206 = vpop.f32.mrb[0].mxu0
        %v7207 = vadd.f32 0.0, %v7206
        %v7208 = vpop.f32.mrb[0].mxu0
        %v7209 = vpop.f32.mrb[0].mxu0
        %v7210 = vadd.f32 0.0, %v7209
        %v7211 = vpop.f32.mrb[0].mxu0
        %7212 = vmatprep.mubr.bf16.mxu0 0
        %7213 = vmatmul.mubr.bf16.gmra.mrb[0].mxu0 %v6005
        %v7214 = vpop.f32.mrb[0].mxu0
        %v7215 = vadd.f32 0.0, %v7214
        %v7216 = vpop.f32.mrb[0].mxu0
        %v7217 = vpop.f32.mrb[0].mxu0
        %v7218 = vadd.f32 0.0, %v7217
        %v7219 = vpop.f32.mrb[0].mxu0
        %7220 = vmatprep.mubr.bf16.mxu0 0
        %7221 = vmatmul.mubr.bf16.gmra.mrb[0].mxu0 %v6008
        %v7222 = vpop.f32.mrb[0].mxu0
        %v7223 = vadd.f32 0.0, %v7222
        %v7224 = vpop.f32.mrb[0].mxu0
        %v7225 = vpop.f32.mrb[0].mxu0
        %v7226 = vadd.f32 0.0, %v7225
        %v7227 = vpop.f32.mrb[0].mxu0
        %7228 = vmatprep.mubr.bf16.mxu0 0
        %7229 = vmatmul.mubr.bf16.gmra.mrb[0].mxu0 %v7074
        %v7230 = vpop.f32.mrb[0].mxu0
        %v7231 = vadd.f32 0.0, %v7230
        %v7232 = vpop.f32.mrb[0].mxu0
        %v7233 = vpop.f32.mrb[0].mxu0
        %v7234 = vadd.f32 0.0, %v7233
        %v7235 = vpop.f32.mrb[0].mxu0
        %7236 = vdwg.mxu0
        %7269 = vrot.lane.b32.xlu0 %v7111, 64
        %v7270 = vpop.permute.xlu0 %7269
        %7271 = vrot.lane.b32.xlu0 %v7114, 64
        %v7272 = vpop.permute.xlu0 %7271
        %7273 = vrot.lane.b32.xlu0 %v7119, 64
        %v7274 = vpop.permute.xlu0 %7273
        %7275 = vrot.lane.b32.xlu0 %v7122, 64
        %v7276 = vpop.permute.xlu0 %7275
        %7277 = vrot.lane.b32.xlu0 %v7127, 64
        %v7278 = vpop.permute.xlu0 %7277
        %7279 = vrot.lane.b32.xlu0 %v7130, 64
        %v7280 = vpop.permute.xlu0 %7279
        %7281 = vrot.lane.b32.xlu0 %v7135, 64
        %v7282 = vpop.permute.xlu0 %7281
        %7283 = vrot.lane.b32.xlu0 %v7138, 64
        %v7284 = vpop.permute.xlu0 %7283
        %7285 = vrot.lane.b32.xlu0 %v7143, 64
        %v7286 = vpop.permute.xlu0 %7285
        %7287 = vrot.lane.b32.xlu0 %v7146, 64
        %v7288 = vpop.permute.xlu0 %7287
        %7289 = vrot.lane.b32.xlu0 %v7151, 64
        %v7290 = vpop.permute.xlu0 %7289
        %7291 = vrot.lane.b32.xlu0 %v7154, 64
        %v7292 = vpop.permute.xlu0 %7291
        %7293 = vrot.lane.b32.xlu0 %v7159, 64
        %v7294 = vpop.permute.xlu0 %7293
        %7295 = vrot.lane.b32.xlu0 %v7162, 64
        %v7296 = vpop.permute.xlu0 %7295
        %7297 = vrot.lane.b32.xlu0 %v7167, 64
        %v7298 = vpop.permute.xlu0 %7297
        %7299 = vrot.lane.b32.xlu0 %v7170, 64
        %v7300 = vpop.permute.xlu0 %7299
        %7301 = vrot.lane.b32.xlu0 %v7175, 64
        %v7302 = vpop.permute.xlu0 %7301
        %7303 = vrot.lane.b32.xlu0 %v7178, 64
        %v7304 = vpop.permute.xlu0 %7303
        %7305 = vrot.lane.b32.xlu0 %v7183, 64
        %v7306 = vpop.permute.xlu0 %7305
        %7307 = vrot.lane.b32.xlu0 %v7186, 64
        %v7308 = vpop.permute.xlu0 %7307
        %7309 = vrot.lane.b32.xlu0 %v7191, 64
        %v7310 = vpop.permute.xlu0 %7309
        %7311 = vrot.lane.b32.xlu0 %v7194, 64
        %v7312 = vpop.permute.xlu0 %7311
        %7313 = vrot.lane.b32.xlu0 %v7199, 64
        %v7314 = vpop.permute.xlu0 %7313
        %7315 = vrot.lane.b32.xlu0 %v7202, 64
        %v7316 = vpop.permute.xlu0 %7315
        %7317 = vrot.lane.b32.xlu0 %v7207, 64
        %v7318 = vpop.permute.xlu0 %7317
        %7319 = vrot.lane.b32.xlu0 %v7210, 64
        %v7320 = vpop.permute.xlu0 %7319
        %7321 = vrot.lane.b32.xlu0 %v7215, 64
        %v7322 = vpop.permute.xlu0 %7321
        %7323 = vrot.lane.b32.xlu0 %v7218, 64
        %v7324 = vpop.permute.xlu0 %7323
        %7325 = vrot.lane.b32.xlu0 %v7223, 64
        %v7326 = vpop.permute.xlu0 %7325
        %7327 = vrot.lane.b32.xlu0 %v7226, 64
        %v7328 = vpop.permute.xlu0 %7327
        %7329 = vrot.lane.b32.xlu0 %v7231, 64
        %v7330 = vpop.permute.xlu0 %7329
        %7331 = vrot.lane.b32.xlu0 %v7234, 64
        %v7332 = vpop.permute.xlu0 %7331
        %v7365 = vadd.f32 %v7013, %v7270
        %v7366 = vadd.f32 %v7014, %v7272
        %v7367 = vadd.f32 %v7015, %v7274
        %v7368 = vadd.f32 %v7016, %v7276
        %v7369 = vadd.f32 %v7017, %v7278
        %v7370 = vadd.f32 %v7018, %v7280
        %v7371 = vadd.f32 %v7019, %v7282
        %v7372 = vadd.f32 %v7020, %v7284
        %v7373 = vadd.f32 %v7021, %v7286
        %v7374 = vadd.f32 %v7022, %v7288
        %v7375 = vadd.f32 %v7023, %v7290
        %v7376 = vadd.f32 %v7024, %v7292
        %v7377 = vadd.f32 %v7025, %v7294
        %v7378 = vadd.f32 %v7026, %v7296
        %v7379 = vadd.f32 %v7027, %v7298
        %v7380 = vadd.f32 %v7028, %v7300
        %v7381 = vadd.f32 %v7029, %v7302
        %v7382 = vadd.f32 %v7030, %v7304
        %v7383 = vadd.f32 %v7031, %v7306
        %v7384 = vadd.f32 %v7032, %v7308
        %v7385 = vadd.f32 %v7033, %v7310
        %v7386 = vadd.f32 %v7034, %v7312
        %v7387 = vadd.f32 %v7035, %v7314
        %v7388 = vadd.f32 %v7036, %v7316
        %v7389 = vadd.f32 %v7037, %v7318
        %v7390 = vadd.f32 %v7038, %v7320
        %v7391 = vadd.f32 %v7039, %v7322
        %v7392 = vadd.f32 %v7040, %v7324
        %v7393 = vadd.f32 %v7041, %v7326
        %v7394 = vadd.f32 %v7042, %v7328
        %v7395 = vadd.f32 %v7043, %v7330
        %v7396 = vadd.f32 %v7044, %v7332
        %s7397 = scalar_lea.vmem %s4, 96
        %v7398 = vld [vmem:[%s7397] sm:$0xf]
        %v7399 = vld [vmem:[%s7397 + $0x4] sm:$0xf]
        %v7400 = vld [vmem:[%s7397 + $0x8] sm:$0xf]
        %v7401 = vld [vmem:[%s7397 + $0xc] sm:$0xf]
        %v7404 = vunpack.c.l.b16 %v4482
        %v7405 = vunpack.c.l.b16 %v4483
        %v7406 = vpack.c.b16 %v7405, %v7404
        %v7411 = vunpack.c.l.b16 %v7398
        %v7412 = vunpack.c.l.b16 %v7399
        %v7413 = vunpack.c.l.b16 %v7400
        %v7414 = vunpack.c.l.b16 %v7401
        %v7415 = vpack.c.b16 %v7412, %v7411
        %v7416 = vpack.c.b16 %v7414, %v7413
        %v7420 = vsel %vm4581, %v7406, 0
        %7422 = vmatprep.subr.bf16.mxu0 0
        %7423 = vmatpush1.bf16.msra.mxu0 %v7415
        %7424 = vmatprep.subr.bf16.mxu0 0
        %7425 = vmatpush1.bf16.msra.mxu0 %v7416
        %7426 = vmatprep.subr.bf16.mxu0 0
        %7427 = vmatpush1.bf16.msra.mxu0 0
        %7428 = vmatprep.subr.bf16.mxu0 0
        %7429 = vmatpush1.bf16.msra.mxu0 0
        %7430 = vmatprep.subr.bf16.mxu0 0
        %7431 = vmatpush1.bf16.msra.mxu0 0
        %7432 = vmatprep.subr.bf16.mxu0 0
        %7433 = vmatpush1.bf16.msra.mxu0 0
        %7434 = vmatprep.subr.bf16.mxu0 0
        %7435 = vmatpush1.bf16.msra.mxu0 0
        %7436 = vmatprep.subr.bf16.mxu0 0
        %7437 = vmatpush1.bf16.msra.mxu0 0
        %7438 = vmatprep.subr.bf16.mxu0 0
        %7439 = vmatpush1.bf16.msra.mxu0 0
        %7440 = vmatprep.subr.bf16.mxu0 0
        %7441 = vmatpush1.bf16.msra.mxu0 0
        %7442 = vmatprep.subr.bf16.mxu0 0
        %7443 = vmatpush1.bf16.msra.mxu0 0
        %7444 = vmatprep.subr.bf16.mxu0 0
        %7445 = vmatpush1.bf16.msra.mxu0 0
        %7446 = vmatprep.subr.bf16.mxu0 0
        %7447 = vmatpush1.bf16.msra.mxu0 0
        %7448 = vmatprep.subr.bf16.mxu0 0
        %7449 = vmatpush1.bf16.msra.mxu0 0
        %7450 = vmatprep.subr.bf16.mxu0 0
        %7451 = vmatpush1.bf16.msra.mxu0 0
        %7452 = vmatprep.subr.bf16.mxu0 0
        %7453 = vmatpush1.bf16.msra.mxu0 0
        %7454 = vmatprep.mubr.bf16.mxu0 0
        %7455 = vmatmul.mubr.bf16.gmra.mrb[0].mxu0 %v4589
        %v7456 = vpop.f32.mrb[0].mxu0
        %v7457 = vadd.f32 0.0, %v7456
        %v7458 = vpop.f32.mrb[0].mxu0
        %v7459 = vpop.f32.mrb[0].mxu0
        %v7460 = vadd.f32 0.0, %v7459
        %v7461 = vpop.f32.mrb[0].mxu0
        %7462 = vmatprep.mubr.bf16.mxu0 0
        %7463 = vmatmul.mubr.bf16.gmra.mrb[0].mxu0 %v4592
        %v7464 = vpop.f32.mrb[0].mxu0
        %v7465 = vadd.f32 0.0, %v7464
        %v7466 = vpop.f32.mrb[0].mxu0
        %v7467 = vpop.f32.mrb[0].mxu0
        %v7468 = vadd.f32 0.0, %v7467
        %v7469 = vpop.f32.mrb[0].mxu0
        %7470 = vmatprep.mubr.bf16.mxu0 0
        %7471 = vmatmul.mubr.bf16.gmra.mrb[0].mxu0 %v4595
        %v7472 = vpop.f32.mrb[0].mxu0
        %v7473 = vadd.f32 0.0, %v7472
        %v7474 = vpop.f32.mrb[0].mxu0
        %v7475 = vpop.f32.mrb[0].mxu0
        %v7476 = vadd.f32 0.0, %v7475
        %v7477 = vpop.f32.mrb[0].mxu0
        %7478 = vmatprep.mubr.bf16.mxu0 0
        %7479 = vmatmul.mubr.bf16.gmra.mrb[0].mxu0 %v4598
        %v7480 = vpop.f32.mrb[0].mxu0
        %v7481 = vadd.f32 0.0, %v7480
        %v7482 = vpop.f32.mrb[0].mxu0
        %v7483 = vpop.f32.mrb[0].mxu0
        %v7484 = vadd.f32 0.0, %v7483
        %v7485 = vpop.f32.mrb[0].mxu0
        %7486 = vmatprep.mubr.bf16.mxu0 0
        %7487 = vmatmul.mubr.bf16.gmra.mrb[0].mxu0 %v4601
        %v7488 = vpop.f32.mrb[0].mxu0
        %v7489 = vadd.f32 0.0, %v7488
        %v7490 = vpop.f32.mrb[0].mxu0
        %v7491 = vpop.f32.mrb[0].mxu0
        %v7492 = vadd.f32 0.0, %v7491
        %v7493 = vpop.f32.mrb[0].mxu0
        %7494 = vmatprep.mubr.bf16.mxu0 0
        %7495 = vmatmul.mubr.bf16.gmra.mrb[0].mxu0 %v4604
        %v7496 = vpop.f32.mrb[0].mxu0
        %v7497 = vadd.f32 0.0, %v7496
        %v7498 = vpop.f32.mrb[0].mxu0
        %v7499 = vpop.f32.mrb[0].mxu0
        %v7500 = vadd.f32 0.0, %v7499
        %v7501 = vpop.f32.mrb[0].mxu0
        %7502 = vmatprep.mubr.bf16.mxu0 0
        %7503 = vmatmul.mubr.bf16.gmra.mrb[0].mxu0 %v4607
        %v7504 = vpop.f32.mrb[0].mxu0
        %v7505 = vadd.f32 0.0, %v7504
        %v7506 = vpop.f32.mrb[0].mxu0
        %v7507 = vpop.f32.mrb[0].mxu0
        %v7508 = vadd.f32 0.0, %v7507
        %v7509 = vpop.f32.mrb[0].mxu0
        %7510 = vmatprep.mubr.bf16.mxu0 0
        %7511 = vmatmul.mubr.bf16.gmra.mrb[0].mxu0 %v4610
        %v7512 = vpop.f32.mrb[0].mxu0
        %v7513 = vadd.f32 0.0, %v7512
        %v7514 = vpop.f32.mrb[0].mxu0
        %v7515 = vpop.f32.mrb[0].mxu0
        %v7516 = vadd.f32 0.0, %v7515
        %v7517 = vpop.f32.mrb[0].mxu0
        %7518 = vmatprep.mubr.bf16.mxu0 0
        %7519 = vmatmul.mubr.bf16.gmra.mrb[0].mxu0 %v4613
        %v7520 = vpop.f32.mrb[0].mxu0
        %v7521 = vadd.f32 0.0, %v7520
        %v7522 = vpop.f32.mrb[0].mxu0
        %v7523 = vpop.f32.mrb[0].mxu0
        %v7524 = vadd.f32 0.0, %v7523
        %v7525 = vpop.f32.mrb[0].mxu0
        %7526 = vmatprep.mubr.bf16.mxu0 0
        %7527 = vmatmul.mubr.bf16.gmra.mrb[0].mxu0 %v4616
        %v7528 = vpop.f32.mrb[0].mxu0
        %v7529 = vadd.f32 0.0, %v7528
        %v7530 = vpop.f32.mrb[0].mxu0
        %v7531 = vpop.f32.mrb[0].mxu0
        %v7532 = vadd.f32 0.0, %v7531
        %v7533 = vpop.f32.mrb[0].mxu0
        %7534 = vmatprep.mubr.bf16.mxu0 0
        %7535 = vmatmul.mubr.bf16.gmra.mrb[0].mxu0 %v4619
        %v7536 = vpop.f32.mrb[0].mxu0
        %v7537 = vadd.f32 0.0, %v7536
        %v7538 = vpop.f32.mrb[0].mxu0
        %v7539 = vpop.f32.mrb[0].mxu0
        %v7540 = vadd.f32 0.0, %v7539
        %v7541 = vpop.f32.mrb[0].mxu0
        %7542 = vmatprep.mubr.bf16.mxu0 0
        %7543 = vmatmul.mubr.bf16.gmra.mrb[0].mxu0 %v4622
        %v7544 = vpop.f32.mrb[0].mxu0
        %v7545 = vadd.f32 0.0, %v7544
        %v7546 = vpop.f32.mrb[0].mxu0
        %v7547 = vpop.f32.mrb[0].mxu0
        %v7548 = vadd.f32 0.0, %v7547
        %v7549 = vpop.f32.mrb[0].mxu0
        %7550 = vmatprep.mubr.bf16.mxu0 0
        %7551 = vmatmul.mubr.bf16.gmra.mrb[0].mxu0 %v4625
        %v7552 = vpop.f32.mrb[0].mxu0
        %v7553 = vadd.f32 0.0, %v7552
        %v7554 = vpop.f32.mrb[0].mxu0
        %v7555 = vpop.f32.mrb[0].mxu0
        %v7556 = vadd.f32 0.0, %v7555
        %v7557 = vpop.f32.mrb[0].mxu0
        %7558 = vmatprep.mubr.bf16.mxu0 0
        %7559 = vmatmul.mubr.bf16.gmra.mrb[0].mxu0 %v4628
        %v7560 = vpop.f32.mrb[0].mxu0
        %v7561 = vadd.f32 0.0, %v7560
        %v7562 = vpop.f32.mrb[0].mxu0
        %v7563 = vpop.f32.mrb[0].mxu0
        %v7564 = vadd.f32 0.0, %v7563
        %v7565 = vpop.f32.mrb[0].mxu0
        %7566 = vmatprep.mubr.bf16.mxu0 0
        %7567 = vmatmul.mubr.bf16.gmra.mrb[0].mxu0 %v6354
        %v7568 = vpop.f32.mrb[0].mxu0
        %v7569 = vadd.f32 0.0, %v7568
        %v7570 = vpop.f32.mrb[0].mxu0
        %v7571 = vpop.f32.mrb[0].mxu0
        %v7572 = vadd.f32 0.0, %v7571
        %v7573 = vpop.f32.mrb[0].mxu0
        %7574 = vmatprep.mubr.bf16.mxu0 0
        %7575 = vmatmul.mubr.bf16.gmra.mrb[0].mxu0 %v7420
        %v7576 = vpop.f32.mrb[0].mxu0
        %v7577 = vadd.f32 0.0, %v7576
        %v7578 = vpop.f32.mrb[0].mxu0
        %v7579 = vpop.f32.mrb[0].mxu0
        %v7580 = vadd.f32 0.0, %v7579
        %v7581 = vpop.f32.mrb[0].mxu0
        %7582 = vdwg.mxu0
        %7615 = vrot.lane.b32.xlu0 %v7457, 64
        %v7616 = vpop.permute.xlu0 %7615
        %7617 = vrot.lane.b32.xlu0 %v7460, 64
        %v7618 = vpop.permute.xlu0 %7617
        %7619 = vrot.lane.b32.xlu0 %v7465, 64
        %v7620 = vpop.permute.xlu0 %7619
        %7621 = vrot.lane.b32.xlu0 %v7468, 64
        %v7622 = vpop.permute.xlu0 %7621
        %7623 = vrot.lane.b32.xlu0 %v7473, 64
        %v7624 = vpop.permute.xlu0 %7623
        %7625 = vrot.lane.b32.xlu0 %v7476, 64
        %v7626 = vpop.permute.xlu0 %7625
        %7627 = vrot.lane.b32.xlu0 %v7481, 64
        %v7628 = vpop.permute.xlu0 %7627
        %7629 = vrot.lane.b32.xlu0 %v7484, 64
        %v7630 = vpop.permute.xlu0 %7629
        %7631 = vrot.lane.b32.xlu0 %v7489, 64
        %v7632 = vpop.permute.xlu0 %7631
        %7633 = vrot.lane.b32.xlu0 %v7492, 64
        %v7634 = vpop.permute.xlu0 %7633
        %7635 = vrot.lane.b32.xlu0 %v7497, 64
        %v7636 = vpop.permute.xlu0 %7635
        %7637 = vrot.lane.b32.xlu0 %v7500, 64
        %v7638 = vpop.permute.xlu0 %7637
        %7639 = vrot.lane.b32.xlu0 %v7505, 64
        %v7640 = vpop.permute.xlu0 %7639
        %7641 = vrot.lane.b32.xlu0 %v7508, 64
        %v7642 = vpop.permute.xlu0 %7641
        %7643 = vrot.lane.b32.xlu0 %v7513, 64
        %v7644 = vpop.permute.xlu0 %7643
        %7645 = vrot.lane.b32.xlu0 %v7516, 64
        %v7646 = vpop.permute.xlu0 %7645
        %7647 = vrot.lane.b32.xlu0 %v7521, 64
        %v7648 = vpop.permute.xlu0 %7647
        %7649 = vrot.lane.b32.xlu0 %v7524, 64
        %v7650 = vpop.permute.xlu0 %7649
        %7651 = vrot.lane.b32.xlu0 %v7529, 64
        %v7652 = vpop.permute.xlu0 %7651
        %7653 = vrot.lane.b32.xlu0 %v7532, 64
        %v7654 = vpop.permute.xlu0 %7653
        %7655 = vrot.lane.b32.xlu0 %v7537, 64
        %v7656 = vpop.permute.xlu0 %7655
        %7657 = vrot.lane.b32.xlu0 %v7540, 64
        %v7658 = vpop.permute.xlu0 %7657
        %7659 = vrot.lane.b32.xlu0 %v7545, 64
        %v7660 = vpop.permute.xlu0 %7659
        %7661 = vrot.lane.b32.xlu0 %v7548, 64
        %v7662 = vpop.permute.xlu0 %7661
        %7663 = vrot.lane.b32.xlu0 %v7553, 64
        %v7664 = vpop.permute.xlu0 %7663
        %7665 = vrot.lane.b32.xlu0 %v7556, 64
        %v7666 = vpop.permute.xlu0 %7665
        %7667 = vrot.lane.b32.xlu0 %v7561, 64
        %v7668 = vpop.permute.xlu0 %7667
        %7669 = vrot.lane.b32.xlu0 %v7564, 64
        %v7670 = vpop.permute.xlu0 %7669
        %7671 = vrot.lane.b32.xlu0 %v7569, 64
        %v7672 = vpop.permute.xlu0 %7671
        %7673 = vrot.lane.b32.xlu0 %v7572, 64
        %v7674 = vpop.permute.xlu0 %7673
        %7675 = vrot.lane.b32.xlu0 %v7577, 64
        %v7676 = vpop.permute.xlu0 %7675
        %7677 = vrot.lane.b32.xlu0 %v7580, 64
        %v7678 = vpop.permute.xlu0 %7677
        %v7711 = vadd.f32 %v7365, %v7616
        %v7712 = vadd.f32 %v7366, %v7618
        %v7713 = vadd.f32 %v7367, %v7620
        %v7714 = vadd.f32 %v7368, %v7622
        %v7715 = vadd.f32 %v7369, %v7624
        %v7716 = vadd.f32 %v7370, %v7626
        %v7717 = vadd.f32 %v7371, %v7628
        %v7718 = vadd.f32 %v7372, %v7630
        %v7719 = vadd.f32 %v7373, %v7632
        %v7720 = vadd.f32 %v7374, %v7634
        %v7721 = vadd.f32 %v7375, %v7636
        %v7722 = vadd.f32 %v7376, %v7638
        %v7723 = vadd.f32 %v7377, %v7640
        %v7724 = vadd.f32 %v7378, %v7642
        %v7725 = vadd.f32 %v7379, %v7644
        %v7726 = vadd.f32 %v7380, %v7646
        %v7727 = vadd.f32 %v7381, %v7648
        %v7728 = vadd.f32 %v7382, %v7650
        %v7729 = vadd.f32 %v7383, %v7652
        %v7730 = vadd.f32 %v7384, %v7654
        %v7731 = vadd.f32 %v7385, %v7656
        %v7732 = vadd.f32 %v7386, %v7658
        %v7733 = vadd.f32 %v7387, %v7660
        %v7734 = vadd.f32 %v7388, %v7662
        %v7735 = vadd.f32 %v7389, %v7664
        %v7736 = vadd.f32 %v7390, %v7666
        %v7737 = vadd.f32 %v7391, %v7668
        %v7738 = vadd.f32 %v7392, %v7670
        %v7739 = vadd.f32 %v7393, %v7672
        %v7740 = vadd.f32 %v7394, %v7674
        %v7741 = vadd.f32 %v7395, %v7676
        %v7742 = vadd.f32 %v7396, %v7678
        %v7744 = vshrl.u32 %v4482, 16
        %v7746 = vrot.slane %v7744, 4
        %v7747 = vshll.u32 %v4482, 16
        %v7749 = vrot.slane %v7747, 5
        %v7750 = vor.u32 %v7746, %v7749
        %v7751 = vrot.slane %v7750, 4
        %v7753 = vshll.u32 %v4483, 16
        %v7755 = vrot.slane %v7753, 5
        %v7756 = vsel %vm798, %v7751, %v7755
        %v7757 = vshrl.u32 %v4483, 16
        %v7759 = vrot.slane %v7757, 4
        %v7760 = vor.u32 %v7759, %v7755
        %v7761 = vrot.slane %v7760, 4
        %v7763 = vshll.u32 %v4484, 16
        %v7765 = vrot.slane %v7763, 5
        %v7766 = vsel %vm798, %v7761, %v7765
        %s7767 = scalar_lea.vmem %s4, 112
        %v7768 = vld [vmem:[%s7767] sm:$0xf]
        %v7769 = vld [vmem:[%s7767 + $0x4] sm:$0xf]
        %v7770 = vld [vmem:[%s7767 + $0x8] sm:$0xf]
        %v7771 = vld [vmem:[%s7767 + $0xc] sm:$0xf]
        %v7772 = vunpack.c.l.b16 %v7756
        %v7773 = vunpack.c.l.b16 %v7766
        %v7774 = vpack.c.b16 %v7773, %v7772
        %v7779 = vunpack.c.l.b16 %v7768
        %v7780 = vunpack.c.l.b16 %v7769
        %v7781 = vunpack.c.l.b16 %v7770
        %v7782 = vunpack.c.l.b16 %v7771
        %v7783 = vpack.c.b16 %v7780, %v7779
        %v7784 = vpack.c.b16 %v7782, %v7781
        %v7788 = vsel %vm4581, %v7774, 0
        %7790 = vmatprep.subr.bf16.mxu0 0
        %7791 = vmatpush1.bf16.msra.mxu0 %v7783
        %7792 = vmatprep.subr.bf16.mxu0 0
        %7793 = vmatpush1.bf16.msra.mxu0 %v7784
        %7794 = vmatprep.subr.bf16.mxu0 0
        %7795 = vmatpush1.bf16.msra.mxu0 0
        %7796 = vmatprep.subr.bf16.mxu0 0
        %7797 = vmatpush1.bf16.msra.mxu0 0
        %7798 = vmatprep.subr.bf16.mxu0 0
        %7799 = vmatpush1.bf16.msra.mxu0 0
        %7800 = vmatprep.subr.bf16.mxu0 0
        %7801 = vmatpush1.bf16.msra.mxu0 0
        %7802 = vmatprep.subr.bf16.mxu0 0
        %7803 = vmatpush1.bf16.msra.mxu0 0
        %7804 = vmatprep.subr.bf16.mxu0 0
        %7805 = vmatpush1.bf16.msra.mxu0 0
        %7806 = vmatprep.subr.bf16.mxu0 0
        %7807 = vmatpush1.bf16.msra.mxu0 0
        %7808 = vmatprep.subr.bf16.mxu0 0
        %7809 = vmatpush1.bf16.msra.mxu0 0
        %7810 = vmatprep.subr.bf16.mxu0 0
        %7811 = vmatpush1.bf16.msra.mxu0 0
        %7812 = vmatprep.subr.bf16.mxu0 0
        %7813 = vmatpush1.bf16.msra.mxu0 0
        %7814 = vmatprep.subr.bf16.mxu0 0
        %7815 = vmatpush1.bf16.msra.mxu0 0
        %7816 = vmatprep.subr.bf16.mxu0 0
        %7817 = vmatpush1.bf16.msra.mxu0 0
        %7818 = vmatprep.subr.bf16.mxu0 0
        %7819 = vmatpush1.bf16.msra.mxu0 0
        %7820 = vmatprep.subr.bf16.mxu0 0
        %7821 = vmatpush1.bf16.msra.mxu0 0
        %7822 = vmatprep.mubr.bf16.mxu0 0
        %7823 = vmatmul.mubr.bf16.gmra.mrb[0].mxu0 %v5407
        %v7824 = vpop.f32.mrb[0].mxu0
        %v7825 = vadd.f32 0.0, %v7824
        %v7826 = vpop.f32.mrb[0].mxu0
        %v7827 = vpop.f32.mrb[0].mxu0
        %v7828 = vadd.f32 0.0, %v7827
        %v7829 = vpop.f32.mrb[0].mxu0
        %7830 = vmatprep.mubr.bf16.mxu0 0
        %7831 = vmatmul.mubr.bf16.gmra.mrb[0].mxu0 %v5410
        %v7832 = vpop.f32.mrb[0].mxu0
        %v7833 = vadd.f32 0.0, %v7832
        %v7834 = vpop.f32.mrb[0].mxu0
        %v7835 = vpop.f32.mrb[0].mxu0
        %v7836 = vadd.f32 0.0, %v7835
        %v7837 = vpop.f32.mrb[0].mxu0
        %7838 = vmatprep.mubr.bf16.mxu0 0
        %7839 = vmatmul.mubr.bf16.gmra.mrb[0].mxu0 %v5413
        %v7840 = vpop.f32.mrb[0].mxu0
        %v7841 = vadd.f32 0.0, %v7840
        %v7842 = vpop.f32.mrb[0].mxu0
        %v7843 = vpop.f32.mrb[0].mxu0
        %v7844 = vadd.f32 0.0, %v7843
        %v7845 = vpop.f32.mrb[0].mxu0
        %7846 = vmatprep.mubr.bf16.mxu0 0
        %7847 = vmatmul.mubr.bf16.gmra.mrb[0].mxu0 %v5416
        %v7848 = vpop.f32.mrb[0].mxu0
        %v7849 = vadd.f32 0.0, %v7848
        %v7850 = vpop.f32.mrb[0].mxu0
        %v7851 = vpop.f32.mrb[0].mxu0
        %v7852 = vadd.f32 0.0, %v7851
        %v7853 = vpop.f32.mrb[0].mxu0
        %7854 = vmatprep.mubr.bf16.mxu0 0
        %7855 = vmatmul.mubr.bf16.gmra.mrb[0].mxu0 %v5419
        %v7856 = vpop.f32.mrb[0].mxu0
        %v7857 = vadd.f32 0.0, %v7856
        %v7858 = vpop.f32.mrb[0].mxu0
        %v7859 = vpop.f32.mrb[0].mxu0
        %v7860 = vadd.f32 0.0, %v7859
        %v7861 = vpop.f32.mrb[0].mxu0
        %7862 = vmatprep.mubr.bf16.mxu0 0
        %7863 = vmatmul.mubr.bf16.gmra.mrb[0].mxu0 %v5422
        %v7864 = vpop.f32.mrb[0].mxu0
        %v7865 = vadd.f32 0.0, %v7864
        %v7866 = vpop.f32.mrb[0].mxu0
        %v7867 = vpop.f32.mrb[0].mxu0
        %v7868 = vadd.f32 0.0, %v7867
        %v7869 = vpop.f32.mrb[0].mxu0
        %7870 = vmatprep.mubr.bf16.mxu0 0
        %7871 = vmatmul.mubr.bf16.gmra.mrb[0].mxu0 %v5425
        %v7872 = vpop.f32.mrb[0].mxu0
        %v7873 = vadd.f32 0.0, %v7872
        %v7874 = vpop.f32.mrb[0].mxu0
        %v7875 = vpop.f32.mrb[0].mxu0
        %v7876 = vadd.f32 0.0, %v7875
        %v7877 = vpop.f32.mrb[0].mxu0
        %7878 = vmatprep.mubr.bf16.mxu0 0
        %7879 = vmatmul.mubr.bf16.gmra.mrb[0].mxu0 %v5428
        %v7880 = vpop.f32.mrb[0].mxu0
        %v7881 = vadd.f32 0.0, %v7880
        %v7882 = vpop.f32.mrb[0].mxu0
        %v7883 = vpop.f32.mrb[0].mxu0
        %v7884 = vadd.f32 0.0, %v7883
        %v7885 = vpop.f32.mrb[0].mxu0
        %7886 = vmatprep.mubr.bf16.mxu0 0
        %7887 = vmatmul.mubr.bf16.gmra.mrb[0].mxu0 %v5431
        %v7888 = vpop.f32.mrb[0].mxu0
        %v7889 = vadd.f32 0.0, %v7888
        %v7890 = vpop.f32.mrb[0].mxu0
        %v7891 = vpop.f32.mrb[0].mxu0
        %v7892 = vadd.f32 0.0, %v7891
        %v7893 = vpop.f32.mrb[0].mxu0
        %7894 = vmatprep.mubr.bf16.mxu0 0
        %7895 = vmatmul.mubr.bf16.gmra.mrb[0].mxu0 %v5434
        %v7896 = vpop.f32.mrb[0].mxu0
        %v7897 = vadd.f32 0.0, %v7896
        %v7898 = vpop.f32.mrb[0].mxu0
        %v7899 = vpop.f32.mrb[0].mxu0
        %v7900 = vadd.f32 0.0, %v7899
        %v7901 = vpop.f32.mrb[0].mxu0
        %7902 = vmatprep.mubr.bf16.mxu0 0
        %7903 = vmatmul.mubr.bf16.gmra.mrb[0].mxu0 %v5437
        %v7904 = vpop.f32.mrb[0].mxu0
        %v7905 = vadd.f32 0.0, %v7904
        %v7906 = vpop.f32.mrb[0].mxu0
        %v7907 = vpop.f32.mrb[0].mxu0
        %v7908 = vadd.f32 0.0, %v7907
        %v7909 = vpop.f32.mrb[0].mxu0
        %7910 = vmatprep.mubr.bf16.mxu0 0
        %7911 = vmatmul.mubr.bf16.gmra.mrb[0].mxu0 %v5440
        %v7912 = vpop.f32.mrb[0].mxu0
        %v7913 = vadd.f32 0.0, %v7912
        %v7914 = vpop.f32.mrb[0].mxu0
        %v7915 = vpop.f32.mrb[0].mxu0
        %v7916 = vadd.f32 0.0, %v7915
        %v7917 = vpop.f32.mrb[0].mxu0
        %7918 = vmatprep.mubr.bf16.mxu0 0
        %7919 = vmatmul.mubr.bf16.gmra.mrb[0].mxu0 %v5443
        %v7920 = vpop.f32.mrb[0].mxu0
        %v7921 = vadd.f32 0.0, %v7920
        %v7922 = vpop.f32.mrb[0].mxu0
        %v7923 = vpop.f32.mrb[0].mxu0
        %v7924 = vadd.f32 0.0, %v7923
        %v7925 = vpop.f32.mrb[0].mxu0
        %7926 = vmatprep.mubr.bf16.mxu0 0
        %7927 = vmatmul.mubr.bf16.gmra.mrb[0].mxu0 %v5446
        %v7928 = vpop.f32.mrb[0].mxu0
        %v7929 = vadd.f32 0.0, %v7928
        %v7930 = vpop.f32.mrb[0].mxu0
        %v7931 = vpop.f32.mrb[0].mxu0
        %v7932 = vadd.f32 0.0, %v7931
        %v7933 = vpop.f32.mrb[0].mxu0
        %7934 = vmatprep.mubr.bf16.mxu0 0
        %7935 = vmatmul.mubr.bf16.gmra.mrb[0].mxu0 %v6722
        %v7936 = vpop.f32.mrb[0].mxu0
        %v7937 = vadd.f32 0.0, %v7936
        %v7938 = vpop.f32.mrb[0].mxu0
        %v7939 = vpop.f32.mrb[0].mxu0
        %v7940 = vadd.f32 0.0, %v7939
        %v7941 = vpop.f32.mrb[0].mxu0
        %7942 = vmatprep.mubr.bf16.mxu0 0
        %7943 = vmatmul.mubr.bf16.gmra.mrb[0].mxu0 %v7788
        %v7944 = vpop.f32.mrb[0].mxu0
        %v7945 = vadd.f32 0.0, %v7944
        %v7946 = vpop.f32.mrb[0].mxu0
        %v7947 = vpop.f32.mrb[0].mxu0
        %v7948 = vadd.f32 0.0, %v7947
        %v7949 = vpop.f32.mrb[0].mxu0
        %7950 = vdwg.mxu0
        %7983 = vrot.lane.b32.xlu0 %v7825, 64
        %v7984 = vpop.permute.xlu0 %7983
        %7985 = vrot.lane.b32.xlu0 %v7828, 64
        %v7986 = vpop.permute.xlu0 %7985
        %7987 = vrot.lane.b32.xlu0 %v7833, 64
        %v7988 = vpop.permute.xlu0 %7987
        %7989 = vrot.lane.b32.xlu0 %v7836, 64
        %v7990 = vpop.permute.xlu0 %7989
        %7991 = vrot.lane.b32.xlu0 %v7841, 64
        %v7992 = vpop.permute.xlu0 %7991
        %7993 = vrot.lane.b32.xlu0 %v7844, 64
        %v7994 = vpop.permute.xlu0 %7993
        %7995 = vrot.lane.b32.xlu0 %v7849, 64
        %v7996 = vpop.permute.xlu0 %7995
        %7997 = vrot.lane.b32.xlu0 %v7852, 64
        %v7998 = vpop.permute.xlu0 %7997
        %7999 = vrot.lane.b32.xlu0 %v7857, 64
        %v8000 = vpop.permute.xlu0 %7999
        %8001 = vrot.lane.b32.xlu0 %v7860, 64
        %v8002 = vpop.permute.xlu0 %8001
        %8003 = vrot.lane.b32.xlu0 %v7865, 64
        %v8004 = vpop.permute.xlu0 %8003
        %8005 = vrot.lane.b32.xlu0 %v7868, 64
        %v8006 = vpop.permute.xlu0 %8005
        %8007 = vrot.lane.b32.xlu0 %v7873, 64
        %v8008 = vpop.permute.xlu0 %8007
        %8009 = vrot.lane.b32.xlu0 %v7876, 64
        %v8010 = vpop.permute.xlu0 %8009
        %8011 = vrot.lane.b32.xlu0 %v7881, 64
        %v8012 = vpop.permute.xlu0 %8011
        %8013 = vrot.lane.b32.xlu0 %v7884, 64
        %v8014 = vpop.permute.xlu0 %8013
        %8015 = vrot.lane.b32.xlu0 %v7889, 64
        %v8016 = vpop.permute.xlu0 %8015
        %8017 = vrot.lane.b32.xlu0 %v7892, 64
        %v8018 = vpop.permute.xlu0 %8017
        %8019 = vrot.lane.b32.xlu0 %v7897, 64
        %v8020 = vpop.permute.xlu0 %8019
        %8021 = vrot.lane.b32.xlu0 %v7900, 64
        %v8022 = vpop.permute.xlu0 %8021
        %8023 = vrot.lane.b32.xlu0 %v7905, 64
        %v8024 = vpop.permute.xlu0 %8023
        %8025 = vrot.lane.b32.xlu0 %v7908, 64
        %v8026 = vpop.permute.xlu0 %8025
        %8027 = vrot.lane.b32.xlu0 %v7913, 64
        %v8028 = vpop.permute.xlu0 %8027
        %8029 = vrot.lane.b32.xlu0 %v7916, 64
        %v8030 = vpop.permute.xlu0 %8029
        %8031 = vrot.lane.b32.xlu0 %v7921, 64
        %v8032 = vpop.permute.xlu0 %8031
        %8033 = vrot.lane.b32.xlu0 %v7924, 64
        %v8034 = vpop.permute.xlu0 %8033
        %8035 = vrot.lane.b32.xlu0 %v7929, 64
        %v8036 = vpop.permute.xlu0 %8035
        %8037 = vrot.lane.b32.xlu0 %v7932, 64
        %v8038 = vpop.permute.xlu0 %8037
        %8039 = vrot.lane.b32.xlu0 %v7937, 64
        %v8040 = vpop.permute.xlu0 %8039
        %8041 = vrot.lane.b32.xlu0 %v7940, 64
        %v8042 = vpop.permute.xlu0 %8041
        %8043 = vrot.lane.b32.xlu0 %v7945, 64
        %v8044 = vpop.permute.xlu0 %8043
        %8045 = vrot.lane.b32.xlu0 %v7948, 64
        %v8046 = vpop.permute.xlu0 %8045
        %v8079 = vadd.f32 %v7711, %v7984
        %v8080 = vadd.f32 %v7712, %v7986
        %v8081 = vadd.f32 %v7713, %v7988
        %v8082 = vadd.f32 %v7714, %v7990
        %v8083 = vadd.f32 %v7715, %v7992
        %v8084 = vadd.f32 %v7716, %v7994
        %v8085 = vadd.f32 %v7717, %v7996
        %v8086 = vadd.f32 %v7718, %v7998
        %v8087 = vadd.f32 %v7719, %v8000
        %v8088 = vadd.f32 %v7720, %v8002
        %v8089 = vadd.f32 %v7721, %v8004
        %v8090 = vadd.f32 %v7722, %v8006
        %v8091 = vadd.f32 %v7723, %v8008
        %v8092 = vadd.f32 %v7724, %v8010
        %v8093 = vadd.f32 %v7725, %v8012
        %v8094 = vadd.f32 %v7726, %v8014
        %v8095 = vadd.f32 %v7727, %v8016
        %v8096 = vadd.f32 %v7728, %v8018
        %v8097 = vadd.f32 %v7729, %v8020
        %v8098 = vadd.f32 %v7730, %v8022
        %v8099 = vadd.f32 %v7731, %v8024
        %v8100 = vadd.f32 %v7732, %v8026
        %v8101 = vadd.f32 %v7733, %v8028
        %v8102 = vadd.f32 %v7734, %v8030
        %v8103 = vadd.f32 %v7735, %v8032
        %v8104 = vadd.f32 %v7736, %v8034
        %v8105 = vadd.f32 %v7737, %v8036
        %v8106 = vadd.f32 %v7738, %v8038
        %v8107 = vadd.f32 %v7739, %v8040
        %v8108 = vadd.f32 %v7740, %v8042
        %v8109 = vadd.f32 %v7741, %v8044
        %v8110 = vadd.f32 %v7742, %v8046
        %v8112 = vrot.slane %v4482, 5
        %v8113 = vrot.slane %v8112, 4
        %v8114 = vrot.slane %v4483, 5
        %v8115 = vsel %vm1523, %v8113, %v8114
        %v8116 = vrot.slane %v8114, 4
        %v8117 = vrot.slane %v4484, 5
        %v8118 = vsel %vm1523, %v8116, %v8117
        %s8119 = scalar_lea.vmem %s4, 128
        %v8120 = vld [vmem:[%s8119] sm:$0xf]
        %v8121 = vld [vmem:[%s8119 + $0x4] sm:$0xf]
        %v8122 = vld [vmem:[%s8119 + $0x8] sm:$0xf]
        %v8123 = vld [vmem:[%s8119 + $0xc] sm:$0xf]
        %v8124 = vunpack.c.l.b16 %v8115
        %v8125 = vunpack.c.l.b16 %v8118
        %v8126 = vpack.c.b16 %v8125, %v8124
        %v8131 = vunpack.c.l.b16 %v8120
        %v8132 = vunpack.c.l.b16 %v8121
        %v8133 = vunpack.c.l.b16 %v8122
        %v8134 = vunpack.c.l.b16 %v8123
        %v8135 = vpack.c.b16 %v8132, %v8131
        %v8136 = vpack.c.b16 %v8134, %v8133
        %v8140 = vsel %vm4581, %v8126, 0
        %8142 = vmatprep.subr.bf16.mxu0 0
        %8143 = vmatpush1.bf16.msra.mxu0 %v8135
        %8144 = vmatprep.subr.bf16.mxu0 0
        %8145 = vmatpush1.bf16.msra.mxu0 %v8136
        %8146 = vmatprep.subr.bf16.mxu0 0
        %8147 = vmatpush1.bf16.msra.mxu0 0
        %8148 = vmatprep.subr.bf16.mxu0 0
        %8149 = vmatpush1.bf16.msra.mxu0 0
        %8150 = vmatprep.subr.bf16.mxu0 0
        %8151 = vmatpush1.bf16.msra.mxu0 0
        %8152 = vmatprep.subr.bf16.mxu0 0
        %8153 = vmatpush1.bf16.msra.mxu0 0
        %8154 = vmatprep.subr.bf16.mxu0 0
        %8155 = vmatpush1.bf16.msra.mxu0 0
        %8156 = vmatprep.subr.bf16.mxu0 0
        %8157 = vmatpush1.bf16.msra.mxu0 0
        %8158 = vmatprep.subr.bf16.mxu0 0
        %8159 = vmatpush1.bf16.msra.mxu0 0
        %8160 = vmatprep.subr.bf16.mxu0 0
        %8161 = vmatpush1.bf16.msra.mxu0 0
        %8162 = vmatprep.subr.bf16.mxu0 0
        %8163 = vmatpush1.bf16.msra.mxu0 0
        %8164 = vmatprep.subr.bf16.mxu0 0
        %8165 = vmatpush1.bf16.msra.mxu0 0
        %8166 = vmatprep.subr.bf16.mxu0 0
        %8167 = vmatpush1.bf16.msra.mxu0 0
        %8168 = vmatprep.subr.bf16.mxu0 0
        %8169 = vmatpush1.bf16.msra.mxu0 0
        %8170 = vmatprep.subr.bf16.mxu0 0
        %8171 = vmatpush1.bf16.msra.mxu0 0
        %8172 = vmatprep.subr.bf16.mxu0 0
        %8173 = vmatpush1.bf16.msra.mxu0 0
        %8174 = vmatprep.mubr.bf16.mxu0 0
        %8175 = vmatmul.mubr.bf16.gmra.mrb[0].mxu0 %v5969
        %v8176 = vpop.f32.mrb[0].mxu0
        %v8177 = vadd.f32 0.0, %v8176
        %v8178 = vpop.f32.mrb[0].mxu0
        %v8179 = vpop.f32.mrb[0].mxu0
        %v8180 = vadd.f32 0.0, %v8179
        %v8181 = vpop.f32.mrb[0].mxu0
        %8182 = vmatprep.mubr.bf16.mxu0 0
        %8183 = vmatmul.mubr.bf16.gmra.mrb[0].mxu0 %v5972
        %v8184 = vpop.f32.mrb[0].mxu0
        %v8185 = vadd.f32 0.0, %v8184
        %v8186 = vpop.f32.mrb[0].mxu0
        %v8187 = vpop.f32.mrb[0].mxu0
        %v8188 = vadd.f32 0.0, %v8187
        %v8189 = vpop.f32.mrb[0].mxu0
        %8190 = vmatprep.mubr.bf16.mxu0 0
        %8191 = vmatmul.mubr.bf16.gmra.mrb[0].mxu0 %v5975
        %v8192 = vpop.f32.mrb[0].mxu0
        %v8193 = vadd.f32 0.0, %v8192
        %v8194 = vpop.f32.mrb[0].mxu0
        %v8195 = vpop.f32.mrb[0].mxu0
        %v8196 = vadd.f32 0.0, %v8195
        %v8197 = vpop.f32.mrb[0].mxu0
        %8198 = vmatprep.mubr.bf16.mxu0 0
        %8199 = vmatmul.mubr.bf16.gmra.mrb[0].mxu0 %v5978
        %v8200 = vpop.f32.mrb[0].mxu0
        %v8201 = vadd.f32 0.0, %v8200
        %v8202 = vpop.f32.mrb[0].mxu0
        %v8203 = vpop.f32.mrb[0].mxu0
        %v8204 = vadd.f32 0.0, %v8203
        %v8205 = vpop.f32.mrb[0].mxu0
        %8206 = vmatprep.mubr.bf16.mxu0 0
        %8207 = vmatmul.mubr.bf16.gmra.mrb[0].mxu0 %v5981
        %v8208 = vpop.f32.mrb[0].mxu0
        %v8209 = vadd.f32 0.0, %v8208
        %v8210 = vpop.f32.mrb[0].mxu0
        %v8211 = vpop.f32.mrb[0].mxu0
        %v8212 = vadd.f32 0.0, %v8211
        %v8213 = vpop.f32.mrb[0].mxu0
        %8214 = vmatprep.mubr.bf16.mxu0 0
        %8215 = vmatmul.mubr.bf16.gmra.mrb[0].mxu0 %v5984
        %v8216 = vpop.f32.mrb[0].mxu0
        %v8217 = vadd.f32 0.0, %v8216
        %v8218 = vpop.f32.mrb[0].mxu0
        %v8219 = vpop.f32.mrb[0].mxu0
        %v8220 = vadd.f32 0.0, %v8219
        %v8221 = vpop.f32.mrb[0].mxu0
        %8222 = vmatprep.mubr.bf16.mxu0 0
        %8223 = vmatmul.mubr.bf16.gmra.mrb[0].mxu0 %v5987
        %v8224 = vpop.f32.mrb[0].mxu0
        %v8225 = vadd.f32 0.0, %v8224
        %v8226 = vpop.f32.mrb[0].mxu0
        %v8227 = vpop.f32.mrb[0].mxu0
        %v8228 = vadd.f32 0.0, %v8227
        %v8229 = vpop.f32.mrb[0].mxu0
        %8230 = vmatprep.mubr.bf16.mxu0 0
        %8231 = vmatmul.mubr.bf16.gmra.mrb[0].mxu0 %v5990
        %v8232 = vpop.f32.mrb[0].mxu0
        %v8233 = vadd.f32 0.0, %v8232
        %v8234 = vpop.f32.mrb[0].mxu0
        %v8235 = vpop.f32.mrb[0].mxu0
        %v8236 = vadd.f32 0.0, %v8235
        %v8237 = vpop.f32.mrb[0].mxu0
        %8238 = vmatprep.mubr.bf16.mxu0 0
        %8239 = vmatmul.mubr.bf16.gmra.mrb[0].mxu0 %v5993
        %v8240 = vpop.f32.mrb[0].mxu0
        %v8241 = vadd.f32 0.0, %v8240
        %v8242 = vpop.f32.mrb[0].mxu0
        %v8243 = vpop.f32.mrb[0].mxu0
        %v8244 = vadd.f32 0.0, %v8243
        %v8245 = vpop.f32.mrb[0].mxu0
        %8246 = vmatprep.mubr.bf16.mxu0 0
        %8247 = vmatmul.mubr.bf16.gmra.mrb[0].mxu0 %v5996
        %v8248 = vpop.f32.mrb[0].mxu0
        %v8249 = vadd.f32 0.0, %v8248
        %v8250 = vpop.f32.mrb[0].mxu0
        %v8251 = vpop.f32.mrb[0].mxu0
        %v8252 = vadd.f32 0.0, %v8251
        %v8253 = vpop.f32.mrb[0].mxu0
        %8254 = vmatprep.mubr.bf16.mxu0 0
        %8255 = vmatmul.mubr.bf16.gmra.mrb[0].mxu0 %v5999
        %v8256 = vpop.f32.mrb[0].mxu0
        %v8257 = vadd.f32 0.0, %v8256
        %v8258 = vpop.f32.mrb[0].mxu0
        %v8259 = vpop.f32.mrb[0].mxu0
        %v8260 = vadd.f32 0.0, %v8259
        %v8261 = vpop.f32.mrb[0].mxu0
        %8262 = vmatprep.mubr.bf16.mxu0 0
        %8263 = vmatmul.mubr.bf16.gmra.mrb[0].mxu0 %v6002
        %v8264 = vpop.f32.mrb[0].mxu0
        %v8265 = vadd.f32 0.0, %v8264
        %v8266 = vpop.f32.mrb[0].mxu0
        %v8267 = vpop.f32.mrb[0].mxu0
        %v8268 = vadd.f32 0.0, %v8267
        %v8269 = vpop.f32.mrb[0].mxu0
        %8270 = vmatprep.mubr.bf16.mxu0 0
        %8271 = vmatmul.mubr.bf16.gmra.mrb[0].mxu0 %v6005
        %v8272 = vpop.f32.mrb[0].mxu0
        %v8273 = vadd.f32 0.0, %v8272
        %v8274 = vpop.f32.mrb[0].mxu0
        %v8275 = vpop.f32.mrb[0].mxu0
        %v8276 = vadd.f32 0.0, %v8275
        %v8277 = vpop.f32.mrb[0].mxu0
        %8278 = vmatprep.mubr.bf16.mxu0 0
        %8279 = vmatmul.mubr.bf16.gmra.mrb[0].mxu0 %v6008
        %v8280 = vpop.f32.mrb[0].mxu0
        %v8281 = vadd.f32 0.0, %v8280
        %v8282 = vpop.f32.mrb[0].mxu0
        %v8283 = vpop.f32.mrb[0].mxu0
        %v8284 = vadd.f32 0.0, %v8283
        %v8285 = vpop.f32.mrb[0].mxu0
        %8286 = vmatprep.mubr.bf16.mxu0 0
        %8287 = vmatmul.mubr.bf16.gmra.mrb[0].mxu0 %v7074
        %v8288 = vpop.f32.mrb[0].mxu0
        %v8289 = vadd.f32 0.0, %v8288
        %v8290 = vpop.f32.mrb[0].mxu0
        %v8291 = vpop.f32.mrb[0].mxu0
        %v8292 = vadd.f32 0.0, %v8291
        %v8293 = vpop.f32.mrb[0].mxu0
        %8294 = vmatprep.mubr.bf16.mxu0 0
        %8295 = vmatmul.mubr.bf16.gmra.mrb[0].mxu0 %v8140
        %v8296 = vpop.f32.mrb[0].mxu0
        %v8297 = vadd.f32 0.0, %v8296
        %v8298 = vpop.f32.mrb[0].mxu0
        %v8299 = vpop.f32.mrb[0].mxu0
        %v8300 = vadd.f32 0.0, %v8299
        %v8301 = vpop.f32.mrb[0].mxu0
        %8302 = vdwg.mxu0
        %8335 = vrot.lane.b32.xlu0 %v8177, 64
        %v8336 = vpop.permute.xlu0 %8335
        %8337 = vrot.lane.b32.xlu0 %v8180, 64
        %v8338 = vpop.permute.xlu0 %8337
        %8339 = vrot.lane.b32.xlu0 %v8185, 64
        %v8340 = vpop.permute.xlu0 %8339
        %8341 = vrot.lane.b32.xlu0 %v8188, 64
        %v8342 = vpop.permute.xlu0 %8341
        %8343 = vrot.lane.b32.xlu0 %v8193, 64
        %v8344 = vpop.permute.xlu0 %8343
        %8345 = vrot.lane.b32.xlu0 %v8196, 64
        %v8346 = vpop.permute.xlu0 %8345
        %8347 = vrot.lane.b32.xlu0 %v8201, 64
        %v8348 = vpop.permute.xlu0 %8347
        %8349 = vrot.lane.b32.xlu0 %v8204, 64
        %v8350 = vpop.permute.xlu0 %8349
        %8351 = vrot.lane.b32.xlu0 %v8209, 64
        %v8352 = vpop.permute.xlu0 %8351
        %8353 = vrot.lane.b32.xlu0 %v8212, 64
        %v8354 = vpop.permute.xlu0 %8353
        %8355 = vrot.lane.b32.xlu0 %v8217, 64
        %v8356 = vpop.permute.xlu0 %8355
        %8357 = vrot.lane.b32.xlu0 %v8220, 64
        %v8358 = vpop.permute.xlu0 %8357
        %8359 = vrot.lane.b32.xlu0 %v8225, 64
        %v8360 = vpop.permute.xlu0 %8359
        %8361 = vrot.lane.b32.xlu0 %v8228, 64
        %v8362 = vpop.permute.xlu0 %8361
        %8363 = vrot.lane.b32.xlu0 %v8233, 64
        %v8364 = vpop.permute.xlu0 %8363
        %8365 = vrot.lane.b32.xlu0 %v8236, 64
        %v8366 = vpop.permute.xlu0 %8365
        %8367 = vrot.lane.b32.xlu0 %v8241, 64
        %v8368 = vpop.permute.xlu0 %8367
        %8369 = vrot.lane.b32.xlu0 %v8244, 64
        %v8370 = vpop.permute.xlu0 %8369
        %8371 = vrot.lane.b32.xlu0 %v8249, 64
        %v8372 = vpop.permute.xlu0 %8371
        %8373 = vrot.lane.b32.xlu0 %v8252, 64
        %v8374 = vpop.permute.xlu0 %8373
        %8375 = vrot.lane.b32.xlu0 %v8257, 64
        %v8376 = vpop.permute.xlu0 %8375
        %8377 = vrot.lane.b32.xlu0 %v8260, 64
        %v8378 = vpop.permute.xlu0 %8377
        %8379 = vrot.lane.b32.xlu0 %v8265, 64
        %v8380 = vpop.permute.xlu0 %8379
        %8381 = vrot.lane.b32.xlu0 %v8268, 64
        %v8382 = vpop.permute.xlu0 %8381
        %8383 = vrot.lane.b32.xlu0 %v8273, 64
        %v8384 = vpop.permute.xlu0 %8383
        %8385 = vrot.lane.b32.xlu0 %v8276, 64
        %v8386 = vpop.permute.xlu0 %8385
        %8387 = vrot.lane.b32.xlu0 %v8281, 64
        %v8388 = vpop.permute.xlu0 %8387
        %8389 = vrot.lane.b32.xlu0 %v8284, 64
        %v8390 = vpop.permute.xlu0 %8389
        %8391 = vrot.lane.b32.xlu0 %v8289, 64
        %v8392 = vpop.permute.xlu0 %8391
        %8393 = vrot.lane.b32.xlu0 %v8292, 64
        %v8394 = vpop.permute.xlu0 %8393
        %8395 = vrot.lane.b32.xlu0 %v8297, 64
        %v8396 = vpop.permute.xlu0 %8395
        %8397 = vrot.lane.b32.xlu0 %v8300, 64
        %v8398 = vpop.permute.xlu0 %8397
        %v8431 = vadd.f32 %v8079, %v8336
        %v8432 = vadd.f32 %v8080, %v8338
        %v8433 = vadd.f32 %v8081, %v8340
        %v8434 = vadd.f32 %v8082, %v8342
        %v8435 = vadd.f32 %v8083, %v8344
        %v8436 = vadd.f32 %v8084, %v8346
        %v8437 = vadd.f32 %v8085, %v8348
        %v8438 = vadd.f32 %v8086, %v8350
        %v8439 = vadd.f32 %v8087, %v8352
        %v8440 = vadd.f32 %v8088, %v8354
        %v8441 = vadd.f32 %v8089, %v8356
        %v8442 = vadd.f32 %v8090, %v8358
        %v8443 = vadd.f32 %v8091, %v8360
        %v8444 = vadd.f32 %v8092, %v8362
        %v8445 = vadd.f32 %v8093, %v8364
        %v8446 = vadd.f32 %v8094, %v8366
        %v8447 = vadd.f32 %v8095, %v8368
        %v8448 = vadd.f32 %v8096, %v8370
        %v8449 = vadd.f32 %v8097, %v8372
        %v8450 = vadd.f32 %v8098, %v8374
        %v8451 = vadd.f32 %v8099, %v8376
        %v8452 = vadd.f32 %v8100, %v8378
        %v8453 = vadd.f32 %v8101, %v8380
        %v8454 = vadd.f32 %v8102, %v8382
        %v8455 = vadd.f32 %v8103, %v8384
        %v8456 = vadd.f32 %v8104, %v8386
        %v8457 = vadd.f32 %v8105, %v8388
        %v8458 = vadd.f32 %v8106, %v8390
        %v8459 = vadd.f32 %v8107, %v8392
        %v8460 = vadd.f32 %v8108, %v8394
        %v8461 = vadd.f32 %v8109, %v8396
        %v8462 = vadd.f32 %v8110, %v8398
        %v8463 = vtanh.pop %v8431
        %v8464 = vtanh.pop %v8432
        %v8465 = vtanh.pop %v8433
        %v8466 = vtanh.pop %v8434
        %v8467 = vtanh.pop %v8435
        %v8468 = vtanh.pop %v8436
        %v8469 = vtanh.pop %v8437
        %v8470 = vtanh.pop %v8438
        %v8471 = vtanh.pop %v8439
        %v8472 = vtanh.pop %v8440
        %v8473 = vtanh.pop %v8441
        %v8474 = vtanh.pop %v8442
        %v8475 = vtanh.pop %v8443
        %v8476 = vtanh.pop %v8444
        %v8477 = vtanh.pop %v8445
        %v8478 = vtanh.pop %v8446
        %v8479 = vtanh.pop %v8447
        %v8480 = vtanh.pop %v8448
        %v8481 = vtanh.pop %v8449
        %v8482 = vtanh.pop %v8450
        %v8483 = vtanh.pop %v8451
        %v8484 = vtanh.pop %v8452
        %v8485 = vtanh.pop %v8453
        %v8486 = vtanh.pop %v8454
        %v8487 = vtanh.pop %v8455
        %v8488 = vtanh.pop %v8456
        %v8489 = vtanh.pop %v8457
        %v8490 = vtanh.pop %v8458
        %v8491 = vtanh.pop %v8459
        %v8492 = vtanh.pop %v8460
        %v8493 = vtanh.pop %v8461
        %v8494 = vtanh.pop %v8462
        %8495 = vrot.lane.b32.xlu0 %v3610, 64
        %v8496 = vpop.permute.xlu0 %8495
        %8497 = vrot.lane.b32.xlu0 %v3611, 64
        %v8498 = vpop.permute.xlu0 %8497
        %8499 = vrot.lane.b32.xlu0 %v3612, 64
        %v8500 = vpop.permute.xlu0 %8499
        %8501 = vrot.lane.b32.xlu0 %v3613, 64
        %v8502 = vpop.permute.xlu0 %8501
        %8503 = vrot.lane.b32.xlu0 %v3614, 64
        %v8504 = vpop.permute.xlu0 %8503
        %8505 = vrot.lane.b32.xlu0 %v3615, 64
        %v8506 = vpop.permute.xlu0 %8505
        %8507 = vrot.lane.b32.xlu0 %v3616, 64
        %v8508 = vpop.permute.xlu0 %8507
        %8509 = vrot.lane.b32.xlu0 %v3617, 64
        %v8510 = vpop.permute.xlu0 %8509
        %8511 = vrot.lane.b32.xlu0 %v3618, 64
        %v8512 = vpop.permute.xlu0 %8511
        %8513 = vrot.lane.b32.xlu0 %v3619, 64
        %v8514 = vpop.permute.xlu0 %8513
        %8515 = vrot.lane.b32.xlu0 %v3620, 64
        %v8516 = vpop.permute.xlu0 %8515
        %8517 = vrot.lane.b32.xlu0 %v3621, 64
        %v8518 = vpop.permute.xlu0 %8517
        %8519 = vrot.lane.b32.xlu0 %v3622, 64
        %v8520 = vpop.permute.xlu0 %8519
        %8521 = vrot.lane.b32.xlu0 %v3623, 64
        %v8522 = vpop.permute.xlu0 %8521
        %8523 = vrot.lane.b32.xlu0 %v3624, 64
        %v8524 = vpop.permute.xlu0 %8523
        %8525 = vrot.lane.b32.xlu0 %v3625, 64
        %v8526 = vpop.permute.xlu0 %8525
        %8527 = vrot.lane.b32.xlu0 %v3626, 64
        %v8528 = vpop.permute.xlu0 %8527
        %8529 = vrot.lane.b32.xlu0 %v3627, 64
        %v8530 = vpop.permute.xlu0 %8529
        %8531 = vrot.lane.b32.xlu0 %v3628, 64
        %v8532 = vpop.permute.xlu0 %8531
        %8533 = vrot.lane.b32.xlu0 %v3629, 64
        %v8534 = vpop.permute.xlu0 %8533
        %8535 = vrot.lane.b32.xlu0 %v3630, 64
        %v8536 = vpop.permute.xlu0 %8535
        %8537 = vrot.lane.b32.xlu0 %v3631, 64
        %v8538 = vpop.permute.xlu0 %8537
        %8539 = vrot.lane.b32.xlu0 %v3632, 64
        %v8540 = vpop.permute.xlu0 %8539
        %8541 = vrot.lane.b32.xlu0 %v3633, 64
        %v8542 = vpop.permute.xlu0 %8541
        %8543 = vrot.lane.b32.xlu0 %v3634, 64
        %v8544 = vpop.permute.xlu0 %8543
        %8545 = vrot.lane.b32.xlu0 %v3635, 64
        %v8546 = vpop.permute.xlu0 %8545
        %8547 = vrot.lane.b32.xlu0 %v3636, 64
        %v8548 = vpop.permute.xlu0 %8547
        %8549 = vrot.lane.b32.xlu0 %v3637, 64
        %v8550 = vpop.permute.xlu0 %8549
        %8551 = vrot.lane.b32.xlu0 %v3638, 64
        %v8552 = vpop.permute.xlu0 %8551
        %8553 = vrot.lane.b32.xlu0 %v3639, 64
        %v8554 = vpop.permute.xlu0 %8553
        %8555 = vrot.lane.b32.xlu0 %v3640, 64
        %v8556 = vpop.permute.xlu0 %8555
        %8557 = vrot.lane.b32.xlu0 %v3641, 64
        %v8558 = vpop.permute.xlu0 %8557
        %v8591 = vsub.f32 %v8463, %v8496
        %v8592 = vsub.f32 %v8464, %v8498
        %v8593 = vsub.f32 %v8465, %v8500
        %v8594 = vsub.f32 %v8466, %v8502
        %v8595 = vsub.f32 %v8467, %v8504
        %v8596 = vsub.f32 %v8468, %v8506
        %v8597 = vsub.f32 %v8469, %v8508
        %v8598 = vsub.f32 %v8470, %v8510
        %v8599 = vsub.f32 %v8471, %v8512
        %v8600 = vsub.f32 %v8472, %v8514
        %v8601 = vsub.f32 %v8473, %v8516
        %v8602 = vsub.f32 %v8474, %v8518
        %v8603 = vsub.f32 %v8475, %v8520
        %v8604 = vsub.f32 %v8476, %v8522
        %v8605 = vsub.f32 %v8477, %v8524
        %v8606 = vsub.f32 %v8478, %v8526
        %v8607 = vsub.f32 %v8479, %v8528
        %v8608 = vsub.f32 %v8480, %v8530
        %v8609 = vsub.f32 %v8481, %v8532
        %v8610 = vsub.f32 %v8482, %v8534
        %v8611 = vsub.f32 %v8483, %v8536
        %v8612 = vsub.f32 %v8484, %v8538
        %v8613 = vsub.f32 %v8485, %v8540
        %v8614 = vsub.f32 %v8486, %v8542
        %v8615 = vsub.f32 %v8487, %v8544
        %v8616 = vsub.f32 %v8488, %v8546
        %v8617 = vsub.f32 %v8489, %v8548
        %v8618 = vsub.f32 %v8490, %v8550
        %v8619 = vsub.f32 %v8491, %v8552
        %v8620 = vsub.f32 %v8492, %v8554
        %v8621 = vsub.f32 %v8493, %v8556
        %v8622 = vsub.f32 %v8494, %v8558
        %8655 = vrot.lane.b32.xlu0 %v8591, 64
        %v8656 = vpop.permute.xlu0 %8655
        %8657 = vrot.lane.b32.xlu0 %v8592, 64
        %v8658 = vpop.permute.xlu0 %8657
        %8659 = vrot.lane.b32.xlu0 %v8593, 64
        %v8660 = vpop.permute.xlu0 %8659
        %8661 = vrot.lane.b32.xlu0 %v8594, 64
        %v8662 = vpop.permute.xlu0 %8661
        %8663 = vrot.lane.b32.xlu0 %v8595, 64
        %v8664 = vpop.permute.xlu0 %8663
        %8665 = vrot.lane.b32.xlu0 %v8596, 64
        %v8666 = vpop.permute.xlu0 %8665
        %8667 = vrot.lane.b32.xlu0 %v8597, 64
        %v8668 = vpop.permute.xlu0 %8667
        %8669 = vrot.lane.b32.xlu0 %v8598, 64
        %v8670 = vpop.permute.xlu0 %8669
        %8671 = vrot.lane.b32.xlu0 %v8599, 64
        %v8672 = vpop.permute.xlu0 %8671
        %8673 = vrot.lane.b32.xlu0 %v8600, 64
        %v8674 = vpop.permute.xlu0 %8673
        %8675 = vrot.lane.b32.xlu0 %v8601, 64
        %v8676 = vpop.permute.xlu0 %8675
        %8677 = vrot.lane.b32.xlu0 %v8602, 64
        %v8678 = vpop.permute.xlu0 %8677
        %8679 = vrot.lane.b32.xlu0 %v8603, 64
        %v8680 = vpop.permute.xlu0 %8679
        %8681 = vrot.lane.b32.xlu0 %v8604, 64
        %v8682 = vpop.permute.xlu0 %8681
        %8683 = vrot.lane.b32.xlu0 %v8605, 64
        %v8684 = vpop.permute.xlu0 %8683
        %8685 = vrot.lane.b32.xlu0 %v8606, 64
        %v8686 = vpop.permute.xlu0 %8685
        %8687 = vrot.lane.b32.xlu0 %v8607, 64
        %v8688 = vpop.permute.xlu0 %8687
        %8689 = vrot.lane.b32.xlu0 %v8608, 64
        %v8690 = vpop.permute.xlu0 %8689
        %8691 = vrot.lane.b32.xlu0 %v8609, 64
        %v8692 = vpop.permute.xlu0 %8691
        %8693 = vrot.lane.b32.xlu0 %v8610, 64
        %v8694 = vpop.permute.xlu0 %8693
        %8695 = vrot.lane.b32.xlu0 %v8611, 64
        %v8696 = vpop.permute.xlu0 %8695
        %8697 = vrot.lane.b32.xlu0 %v8612, 64
        %v8698 = vpop.permute.xlu0 %8697
        %8699 = vrot.lane.b32.xlu0 %v8613, 64
        %v8700 = vpop.permute.xlu0 %8699
        %8701 = vrot.lane.b32.xlu0 %v8614, 64
        %v8702 = vpop.permute.xlu0 %8701
        %8703 = vrot.lane.b32.xlu0 %v8615, 64
        %v8704 = vpop.permute.xlu0 %8703
        %8705 = vrot.lane.b32.xlu0 %v8616, 64
        %v8706 = vpop.permute.xlu0 %8705
        %8707 = vrot.lane.b32.xlu0 %v8617, 64
        %v8708 = vpop.permute.xlu0 %8707
        %8709 = vrot.lane.b32.xlu0 %v8618, 64
        %v8710 = vpop.permute.xlu0 %8709
        %8711 = vrot.lane.b32.xlu0 %v8619, 64
        %v8712 = vpop.permute.xlu0 %8711
        %8713 = vrot.lane.b32.xlu0 %v8620, 64
        %v8714 = vpop.permute.xlu0 %8713
        %8715 = vrot.lane.b32.xlu0 %v8621, 64
        %v8716 = vpop.permute.xlu0 %8715
        %8717 = vrot.lane.b32.xlu0 %v8622, 64
        %v8718 = vpop.permute.xlu0 %8717
        %v8751 = vmul.f32 %v3547, %v8656
        %v8752 = vmul.f32 %v3549, %v8658
        %v8753 = vmul.f32 %v3551, %v8660
        %v8754 = vmul.f32 %v3553, %v8662
        %v8755 = vmul.f32 %v3555, %v8664
        %v8756 = vmul.f32 %v3557, %v8666
        %v8757 = vmul.f32 %v3559, %v8668
        %v8758 = vmul.f32 %v3561, %v8670
        %v8759 = vmul.f32 %v3563, %v8672
        %v8760 = vmul.f32 %v3565, %v8674
        %v8761 = vmul.f32 %v3567, %v8676
        %v8762 = vmul.f32 %v3569, %v8678
        %v8763 = vmul.f32 %v3571, %v8680
        %v8764 = vmul.f32 %v3573, %v8682
        %v8765 = vmul.f32 %v3575, %v8684
        %v8766 = vmul.f32 %v3577, %v8686
        %v8767 = vmul.f32 %v3579, %v8688
        %v8768 = vmul.f32 %v3581, %v8690
        %v8769 = vmul.f32 %v3583, %v8692
        %v8770 = vmul.f32 %v3585, %v8694
        %v8771 = vmul.f32 %v3587, %v8696
        %v8772 = vmul.f32 %v3589, %v8698
        %v8773 = vmul.f32 %v3591, %v8700
        %v8774 = vmul.f32 %v3593, %v8702
        %v8775 = vmul.f32 %v3595, %v8704
        %v8776 = vmul.f32 %v3597, %v8706
        %v8777 = vmul.f32 %v3599, %v8708
        %v8778 = vmul.f32 %v3601, %v8710
        %v8779 = vmul.f32 %v3603, %v8712
        %v8780 = vmul.f32 %v3605, %v8714
        %v8781 = vmul.f32 %v3607, %v8716
        %v8782 = vmul.f32 %v3609, %v8718
        %v8783 = vadd.f32 %v3610, %v8751
        %v8784 = vadd.f32 %v3611, %v8752
        %v8785 = vadd.f32 %v3612, %v8753
        %v8786 = vadd.f32 %v3613, %v8754
        %v8787 = vadd.f32 %v3614, %v8755
        %v8788 = vadd.f32 %v3615, %v8756
        %v8789 = vadd.f32 %v3616, %v8757
        %v8790 = vadd.f32 %v3617, %v8758
        %v8791 = vadd.f32 %v3618, %v8759
        %v8792 = vadd.f32 %v3619, %v8760
        %v8793 = vadd.f32 %v3620, %v8761
        %v8794 = vadd.f32 %v3621, %v8762
        %v8795 = vadd.f32 %v3622, %v8763
        %v8796 = vadd.f32 %v3623, %v8764
        %v8797 = vadd.f32 %v3624, %v8765
        %v8798 = vadd.f32 %v3625, %v8766
        %v8799 = vadd.f32 %v3626, %v8767
        %v8800 = vadd.f32 %v3627, %v8768
        %v8801 = vadd.f32 %v3628, %v8769
        %v8802 = vadd.f32 %v3629, %v8770
        %v8803 = vadd.f32 %v3630, %v8771
        %v8804 = vadd.f32 %v3631, %v8772
        %v8805 = vadd.f32 %v3632, %v8773
        %v8806 = vadd.f32 %v3633, %v8774
        %v8807 = vadd.f32 %v3634, %v8775
        %v8808 = vadd.f32 %v3635, %v8776
        %v8809 = vadd.f32 %v3636, %v8777
        %v8810 = vadd.f32 %v3637, %v8778
        %v8811 = vadd.f32 %v3638, %v8779
        %v8812 = vadd.f32 %v3639, %v8780
        %v8813 = vadd.f32 %v3640, %v8781
        %v8814 = vadd.f32 %v3641, %v8782
        %8815 = vst.msk [vmem:[%s247] sm:$0xff] %vm4581, %v8783
        %8816 = vst.msk [vmem:[%s247 + $0x8] sm:$0xff] %vm4581, %v8784
        %8817 = vst.msk [vmem:[%s247 + $0x10] sm:$0xff] %vm4581, %v8785
        %8818 = vst.msk [vmem:[%s247 + $0x18] sm:$0xff] %vm4581, %v8786
        %8819 = vst.msk [vmem:[%s247 + $0x20] sm:$0xff] %vm4581, %v8787
        %8820 = vst.msk [vmem:[%s247 + $0x28] sm:$0xff] %vm4581, %v8788
        %8821 = vst.msk [vmem:[%s247 + $0x30] sm:$0xff] %vm4581, %v8789
        %8822 = vst.msk [vmem:[%s247 + $0x38] sm:$0xff] %vm4581, %v8790
        %8823 = vst.msk [vmem:[%s247 + $0x40] sm:$0xff] %vm4581, %v8791
        %8824 = vst.msk [vmem:[%s247 + $0x48] sm:$0xff] %vm4581, %v8792
        %8825 = vst.msk [vmem:[%s247 + $0x50] sm:$0xff] %vm4581, %v8793
        %8826 = vst.msk [vmem:[%s247 + $0x58] sm:$0xff] %vm4581, %v8794
        %8827 = vst.msk [vmem:[%s247 + $0x60] sm:$0xff] %vm4581, %v8795
        %8828 = vst.msk [vmem:[%s247 + $0x68] sm:$0xff] %vm4581, %v8796
        %8829 = vst.msk [vmem:[%s247 + $0x70] sm:$0xff] %vm4581, %v8797
        %8830 = vst.msk [vmem:[%s247 + $0x78] sm:$0xff] %vm4581, %v8798
        %8831 = vst.msk [vmem:[%s247 + $0x80] sm:$0xff] %vm4581, %v8799
        %8832 = vst.msk [vmem:[%s247 + $0x88] sm:$0xff] %vm4581, %v8800
        %8833 = vst.msk [vmem:[%s247 + $0x90] sm:$0xff] %vm4581, %v8801
        %8834 = vst.msk [vmem:[%s247 + $0x98] sm:$0xff] %vm4581, %v8802
        %8835 = vst.msk [vmem:[%s247 + $0xa0] sm:$0xff] %vm4581, %v8803
        %8836 = vst.msk [vmem:[%s247 + $0xa8] sm:$0xff] %vm4581, %v8804
        %8837 = vst.msk [vmem:[%s247 + $0xb0] sm:$0xff] %vm4581, %v8805
        %8838 = vst.msk [vmem:[%s247 + $0xb8] sm:$0xff] %vm4581, %v8806
        %8839 = vst.msk [vmem:[%s247 + $0xc0] sm:$0xff] %vm4581, %v8807
        %8840 = vst.msk [vmem:[%s247 + $0xc8] sm:$0xff] %vm4581, %v8808
        %8841 = vst.msk [vmem:[%s247 + $0xd0] sm:$0xff] %vm4581, %v8809
        %8842 = vst.msk [vmem:[%s247 + $0xd8] sm:$0xff] %vm4581, %v8810
        %8843 = vst.msk [vmem:[%s247 + $0xe0] sm:$0xff] %vm4581, %v8811
        %8844 = vst.msk [vmem:[%s247 + $0xe8] sm:$0xff] %vm4581, %v8812
        %8845 = vst.msk [vmem:[%s247 + $0xf0] sm:$0xff] %vm4581, %v8813
        %8846 = vst.msk [vmem:[%s247 + $0xf8] sm:$0xff] %vm4581, %v8814
        %s8847 = sand.u32 %s143, 1
        %s8848 = scalar_lea.sflag [#allocation5], %s8847
        %s8849 = sand.u32 %s143, 1
        %s8850 = smul.addr %s8849, 256
        %s8851 = scalar_lea.vmem [#allocation6], %s8850
        // Predicated region
        $region45: #{tpu_custom_call.1} parent=39 // pred_check
          %p8852 = pneg %p153
        $region46: #{tpu_custom_call.1} parent=39 // pred_check_branch
          %8854 = sbr.rel (%p8852) target = $region48
        $region47: #{tpu_custom_call.1} parent=39 // pred_region
          %s8856 = ssub.s32 4096, 4096
          %8857 = vsyncadd %s8848, %s8856
          %s8858 = smul.addr %s20, 32
          %s8859 = smul.addr %s8858, 128
          %s8860 = scalar_lea.hbm %s5, %s8859
          %s8861 = sshll.u32 %s8851, 4
          %s8862 = int_to_ptr.vmem [resolvable:$true] %s8861
          %8867 = dma.vmem_to_hbm [thread:$0]  %s8862, 4096, %s8860, %s8848, 128, 128, 8
        $region48: #{tpu_custom_call.1} parent=39 // pred_fallthru
          _
      $region40: #{tpu_custom_call.1} parent=5 // pred_fallthru
        _
      %p8868 = scmp.le.s32.totalorder 2, %s15
      // Predicated region
      $region49: #{tpu_custom_call.1} parent=5 // pred_check
        %p8869 = pneg %p8868
      $region50: #{tpu_custom_call.1} parent=5 // pred_check_branch
        %8871 = sbr.rel (%p8869) target = $region52
      $region51: #{tpu_custom_call.1} parent=5 // pred_region
        %s8872 = ssub.s32 %s15, 2
        // Predicated region
        $region53: #{tpu_custom_call.1} parent=51 // pred_check
          %p8873 = pneg %p159
        $region54: #{tpu_custom_call.1} parent=51 // pred_check_branch
          %8875 = sbr.rel (%p8873) target = $region56
        $region55: #{tpu_custom_call.1} parent=51 // pred_region
          %s8876 = sand.u32 %s144, 1
          %s8877 = scalar_lea.sflag [#allocation5], %s8876
          %s8878 = sand.u32 %s144, 1
          %s8879 = smul.addr %s8878, 256
          %s8880 = scalar_lea.vmem [#allocation6], %s8879
          %8881 = dma.done %s8877, 4096
        $region56: #{tpu_custom_call.1} parent=51 // pred_fallthru
          _
      $region52: #{tpu_custom_call.1} parent=5 // pred_fallthru
        _
    $region6: #{tpu_custom_call.1} parent=1 // loop_footer
      %s19 = sadd.s32 1, %s15
    $region7: #{tpu_custom_call.1} parent=1 // loop_footer_branch
      %14 = sbr.rel target = $region3
    $region8: #{tpu_custom_call.1} parent=1 // loop_exit
      _
    %8882 = vsyncpa [#allocation4], 1
    %s8883 = scalar_lea.sflag [#allocation4], 1
    %8884 = vsyncpa %s8883, 1
    %8885 = vsyncpa [#allocation5], 1
    %s8886 = scalar_lea.sflag [#allocation5], 1
    %8887 = vsyncpa %s8886, 1

</llo_original>
